<compile_context>
chip_gen: v6e
topology: v6e:2x2x1
jax: 0.10.0
libtpu: 0.0.40
codegen_flags: <defaults>
</compile_context>

<pallas_src>
import jax
import jax.numpy as jnp
import numpy as np
from jax import lax
from jax.experimental import pallas as pl
from jax.experimental.pallas import tpu as pltpu

SENSORY_OUTPUTS = 7
IN_FEATURES = 30000 + 25 + 2                      # 30027
BIAS_COL = IN_FEATURES                            # padded column carrying the bias
F_PAD = ((IN_FEATURES + 1 + 127) // 128) * 128    # 30080 — lane-aligned feature dim
N_PAD = 8                                         # 7 real outputs + 1 zero row (sublane-aligned)


def linear_sigmoid_kernel(x_ref, w_ref, o_ref):
    # x_ref: [B, F_PAD] f32 — column BIAS_COL holds 1.0, columns > BIAS_COL hold 0.
    # w_ref: [N_PAD, F_PAD] f32 — torch layout (lane-dense features); column
    #        BIAS_COL holds the bias; all other padding (row 7, tail cols) is 0.
    # o_ref: [B, N_PAD] f32
    #
    # Contract the LAST axis of both operands (x @ W^T).  These NT dimension
    # numbers are the flash-attention q.k^T pattern: W goes to the MXU in its
    # lane-dense layout, no transpose relayout.  Bias arrives through the
    # matmul itself (1 * b), so no extra input/add is needed.
    z = lax.dot_general(
        x_ref[...],
        w_ref[...],
        dimension_numbers=(((1,), (1,)), ((), ())),
        preferred_element_type=jnp.float32,
    )
    # Explicit sigmoid (exp + add + div only — all guaranteed Mosaic-lowerable).
    o_ref[...] = (1.0 / (1.0 + jnp.exp(-z))).astype(o_ref.dtype)


def prepare_params(weight, bias):
    """One-time layout prep (call at parameter init/load time, NOT per forward).

    weight [7, 30027], bias [7] -> w_p [8, 30080] with the bias folded into
    column BIAS_COL.  All other padding is zero, so padded lanes/rows contribute
    nothing; the padded output row is sigmoid(0) and gets sliced off.
    """
    w_p = jnp.zeros((N_PAD, F_PAD), jnp.float32)
    w_p = w_p.at[:SENSORY_OUTPUTS, :IN_FEATURES].set(weight.astype(jnp.float32))
    w_p = w_p.at[:SENSORY_OUTPUTS, BIAS_COL].set(bias.astype(jnp.float32))
    return w_p


@jax.jit
def visual_sensory_forward(x, w_p):
    """x: [B, 30027] f32; w_p: output of prepare_params ([8, 30080], bias folded in)."""
    B, _ = x.shape
    # Append the constant-1 bias lane and the zero tail (30027 -> 30080).
    # With allow_input_fusion below, XLA may fuse this directly into the kernel
    # operand instead of a separate HBM round trip.
    x_p = jnp.concatenate(
        [
            x.astype(jnp.float32),
            jnp.ones((B, 1), jnp.float32),
            jnp.zeros((B, F_PAD - IN_FEATURES - 1), jnp.float32),
        ],
        axis=1,
    )

    out_padded = pl.pallas_call(
        linear_sigmoid_kernel,
        out_shape=jax.ShapeDtypeStruct((B, N_PAD), jnp.float32),
        grid_spec=pltpu.PrefetchScalarGridSpec(
            num_scalar_prefetch=0,
            grid=(1,),  # single step: whole reduction in one block (~1.2 MB in VMEM)
            in_specs=[
                pl.BlockSpec((B, F_PAD), lambda k: (0, 0)),
                pl.BlockSpec((N_PAD, F_PAD), lambda k: (0, 0)),
            ],
            out_specs=pl.BlockSpec((B, N_PAD), lambda k: (0, 0)),
        ),
        compiler_params=pltpu.CompilerParams(
            dimension_semantics=("arbitrary",),
            allow_input_fusion=[True, False],  # let the tiny x pad fuse into the call
        ),
    )(x_p, w_p)

    return out_padded[:, :SENSORY_OUTPUTS]


def init_params(key):
    """Deterministic init mirroring torch.nn.Linear defaults (uniform +/- 1/sqrt(fan_in))."""
    kw, kb = jax.random.split(key)
    bound = 1.0 / np.sqrt(IN_FEATURES)
    weight = jax.random.uniform(
        kw, (SENSORY_OUTPUTS, IN_FEATURES), jnp.float32, -bound, bound
    )
    bias = jax.random.uniform(kb, (SENSORY_OUTPUTS,), jnp.float32, -bound, bound)
    return weight, bias


if __name__ == "__main__":
    key = jax.random.PRNGKey(0)
    k_x, k_p = jax.random.split(key)

    B = 2
    x = jax.random.normal(k_x, (B, IN_FEATURES), jnp.float32)
    weight, bias = init_params(k_p)

    # Layout prep happens once, outside the per-call forward.
    w_p = prepare_params(weight, bias)

    out = visual_sensory_forward(x, w_p)
    out = jax.block_until_ready(out)
    assert out.shape == (B, SENSORY_OUTPUTS), out.shape

    # Reference in float64 numpy (same math as torch: sigmoid(x @ W.T + b)).
    x64 = np.asarray(x, dtype=np.float64)
    w64 = np.asarray(weight, dtype=np.float64)
    b64 = np.asarray(bias, dtype=np.float64)
    ref = 1.0 / (1.0 + np.exp(-(x64 @ w64.T + b64)))

    # The f32 MXU path typically lands ~1e-6 off the f64 reference; 5e-4 leaves
    # headroom for backend default-precision differences on the long (K=30027) sum.
    np.testing.assert_allclose(
        np.asarray(out, dtype=np.float64), ref, rtol=5e-4, atol=5e-4
    )

    print("KERNEL_OK")
</pallas_src>

<mosaic_0001>
module attributes {stable_mosaic.version = 11 : i64} {
  func.func @linear_sigmoid_kernel(%arg0: i32, %arg1: memref<2x30080xf32, #tpu.memory_space<vmem>>, %arg2: memref<8x30080xf32, #tpu.memory_space<vmem>>, %arg3: memref<2x8xf32, #tpu.memory_space<vmem>>) attributes {dimension_semantics = [#tpu.dimension_semantics<arbitrary>], iteration_bounds = array<i64: 1>, scalar_prefetch = 0 : i64, scratch_operands = 0 : i64, tpu.core_type = #tpu.core_type<tc>, window_params = [{pipeline_mode = #tpu.pipeline_mode<synchronous>, transform_indices = @transform_0, window_bounds = array<i64: 2, 30080>}, {pipeline_mode = #tpu.pipeline_mode<synchronous>, transform_indices = @transform_1, window_bounds = array<i64: 8, 30080>}, {pipeline_mode = #tpu.pipeline_mode<synchronous>, transform_indices = @transform_2, window_bounds = array<i64: 2, 8>}]} {
    %c0 = arith.constant 0 : index
    %c0_0 = arith.constant 0 : index
    %0 = vector.load %arg1[%c0, %c0_0] : memref<2x30080xf32, #tpu.memory_space<vmem>>, vector<2x30080xf32>
    %c0_1 = arith.constant 0 : index
    %c0_2 = arith.constant 0 : index
    %1 = vector.load %arg2[%c0_1, %c0_2] : memref<8x30080xf32, #tpu.memory_space<vmem>>, vector<8x30080xf32>
    %cst = arith.constant dense<0.000000e+00> : vector<2x8xf32>
    %2 = tpu.matmul %0, %1, %cst {dimension_numbers = #tpu.dot_dimension_numbers<[1], [1], [0], [0], [0, 0, 1, 0], [], []>} : vector<2x30080xf32>, vector<8x30080xf32>, vector<2x8xf32> -> vector<2x8xf32>
    %cst_3 = arith.constant 0.000000e+00 : f32
    %3 = vector.broadcast %cst_3 : f32 to vector<2x8xf32>
    %4 = arith.subf %3, %2 : vector<2x8xf32>
    %5 = math.exp %4 : vector<2x8xf32>
    %cst_4 = arith.constant 1.000000e+00 : f32
    %6 = vector.broadcast %cst_4 : f32 to vector<2x8xf32>
    %7 = arith.addf %6, %5 : vector<2x8xf32>
    %cst_5 = arith.constant 1.000000e+00 : f32
    %8 = vector.broadcast %cst_5 : f32 to vector<2x8xf32>
    %9 = arith.divf %8, %7 : vector<2x8xf32>
    %c0_6 = arith.constant 0 : index
    %c0_7 = arith.constant 0 : index
    %10 = vector.load %arg3[%c0_6, %c0_7] : memref<2x8xf32, #tpu.memory_space<vmem>>, vector<2x8xf32>
    tpu.vector_store %arg3[%c0_6, %c0_7], %9 {strides = array<i32>} : memref<2x8xf32, #tpu.memory_space<vmem>>, vector<2x8xf32>,
    return
  }
  func.func @transform_0(%arg0: i32) -> (i32, i32) {
    %c0_i32 = arith.constant 0 : i32
    %c0_i32_0 = arith.constant 0 : i32
    %c0_i32_1 = arith.constant 0 : i32
    return %c0_i32, %c0_i32_0 : i32, i32
  }
  func.func @transform_1(%arg0: i32) -> (i32, i32) {
    %c0_i32 = arith.constant 0 : i32
    %c0_i32_0 = arith.constant 0 : i32
    %c0_i32_1 = arith.constant 0 : i32
    return %c0_i32, %c0_i32_0 : i32, i32
  }
  func.func @transform_2(%arg0: i32) -> (i32, i32) {
    %c0_i32 = arith.constant 0 : i32
    %c0_i32_0 = arith.constant 0 : i32
    %c0_i32_1 = arith.constant 0 : i32
    return %c0_i32, %c0_i32_0 : i32, i32
  }
}

</mosaic_0001>

<llo_original>
// kernel: visual_sensory_forward.1
$region0: #{visual_sensory_forward.1}
  #allocation0 [shape = 'u32[]', space=smem, size = 0x4, offset = 0x4, fixed_abs, tag = 'smem constant byte address 0x4 - core index']
  #allocation1 [shape = 'u32[144,128]{1,0:T(1,128)}', space=vmem, size = 0x12000, scoped, tag = 'internal scratch']
  %s0 = inlined_call_operand.vmem [shape: f32[2,30080], index: 0, kind: input, shape index: {}]
  %s1 = inlined_call_operand.hbm [shape: f32[8,30080], index: 1, kind: input, shape index: {}]
  %s2 = inlined_call_operand.hbm [shape: f32[2,8], index: 2, kind: output, shape index: {}]
  %s3 = sld [smem:[#allocation0]]
  $region22: #{visual_sensory_forward.1} parent=0
    _
  %s5 = ssub.s32 1, %s3
  %s6 = scalar_select 0, %s5, %s3
  $region1: #{visual_sensory_forward.1} parent=0
    #allocation2 [shape = 'u8[962560]{0}', space=vmem, size = 0xeb000, scoped, tag = 'input window, operand 1, single buffered']
    #allocation3 [shape = 's32[1]{0}', space=sflag, size = 0x4, scoped, tag = 'scoped memory for visual_sensory_forward.1']
    #allocation4 [shape = 's32[1]{0}', space=sflag, size = 0x4, scoped, tag = 'scoped memory for visual_sensory_forward.1']
    #allocation5 [shape = 'u8[1024]{0}', space=vmem, size = 0x400, scoped, tag = 'output window, operand 0, single buffered']
    %7 = vsyncpa [#allocation3], 0
    %8 = vsyncpa [#allocation4], 0
    // Predicated region
    $region2: #{visual_sensory_forward.1} parent=1 // pred_check
      _
    $region3: #{visual_sensory_forward.1} parent=1 // pred_check_branch
      %10 = sbr.rel (0) target = $region5
    $region4: #{visual_sensory_forward.1} parent=1 // pred_region
      _
    $region5: #{visual_sensory_forward.1} parent=1 // pred_fallthru
      _
    // Predicated region
    $region6: #{visual_sensory_forward.1} parent=1 // pred_check
      _
    $region7: #{visual_sensory_forward.1} parent=1 // pred_check_branch
      %12 = sbr.rel (0) target = $region9
    $region8: #{visual_sensory_forward.1} parent=1 // pred_region
      %s14 = ssub.s32 30080, 30080
      %15 = vsyncadd [#allocation3], %s14
      %s17 = sshll.u32 [#allocation2], 4
      %s18 = int_to_ptr.vmem [resolvable:$true] %s17
      %20 = dma.hbm_to_vmem [thread:$0]  %s1, 30080, %s18, [#allocation3]
    $region9: #{visual_sensory_forward.1} parent=1 // pred_fallthru
      _
    // Predicated region
    $region10: #{visual_sensory_forward.1} parent=1 // pred_check
      _
    $region11: #{visual_sensory_forward.1} parent=1 // pred_check_branch
      %22 = sbr.rel (0) target = $region13
    $region12: #{visual_sensory_forward.1} parent=1 // pred_region
      %23 = dma.done [#allocation3], 30080
    $region13: #{visual_sensory_forward.1} parent=1 // pred_fallthru
      _
    %v24 = vld [vmem:[%s0] sm:$0xff]
    %v25 = vld [vmem:[%s0 + $0x8] sm:$0xff]
    %v26 = vld [vmem:[%s0 + $0x10] sm:$0xff]
    %v27 = vld [vmem:[%s0 + $0x18] sm:$0xff]
    %v28 = vld [vmem:[%s0 + $0x20] sm:$0xff]
    %v29 = vld [vmem:[%s0 + $0x28] sm:$0xff]
    %v30 = vld [vmem:[%s0 + $0x30] sm:$0xff]
    %v31 = vld [vmem:[%s0 + $0x38] sm:$0xff]
    %v32 = vld [vmem:[%s0 + $0x40] sm:$0xff]
    %v33 = vld [vmem:[%s0 + $0x48] sm:$0xff]
    %v34 = vld [vmem:[%s0 + $0x50] sm:$0xff]
    %v35 = vld [vmem:[%s0 + $0x58] sm:$0xff]
    %v36 = vld [vmem:[%s0 + $0x60] sm:$0xff]
    %v37 = vld [vmem:[%s0 + $0x68] sm:$0xff]
    %v38 = vld [vmem:[%s0 + $0x70] sm:$0xff]
    %v39 = vld [vmem:[%s0 + $0x78] sm:$0xff]
    %v40 = vld [vmem:[%s0 + $0x80] sm:$0xff]
    %v41 = vld [vmem:[%s0 + $0x88] sm:$0xff]
    %v42 = vld [vmem:[%s0 + $0x90] sm:$0xff]
    %v43 = vld [vmem:[%s0 + $0x98] sm:$0xff]
    %v44 = vld [vmem:[%s0 + $0xa0] sm:$0xff]
    %v45 = vld [vmem:[%s0 + $0xa8] sm:$0xff]
    %v46 = vld [vmem:[%s0 + $0xb0] sm:$0xff]
    %v47 = vld [vmem:[%s0 + $0xb8] sm:$0xff]
    %v48 = vld [vmem:[%s0 + $0xc0] sm:$0xff]
    %v49 = vld [vmem:[%s0 + $0xc8] sm:$0xff]
    %v50 = vld [vmem:[%s0 + $0xd0] sm:$0xff]
    %v51 = vld [vmem:[%s0 + $0xd8] sm:$0xff]
    %v52 = vld [vmem:[%s0 + $0xe0] sm:$0xff]
    %v53 = vld [vmem:[%s0 + $0xe8] sm:$0xff]
    %v54 = vld [vmem:[%s0 + $0xf0] sm:$0xff]
    %v55 = vld [vmem:[%s0 + $0xf8] sm:$0xff]
    %v56 = vld [vmem:[%s0 + $0x100] sm:$0xff]
    %v57 = vld [vmem:[%s0 + $0x108] sm:$0xff]
    %v58 = vld [vmem:[%s0 + $0x110] sm:$0xff]
    %v59 = vld [vmem:[%s0 + $0x118] sm:$0xff]
    %v60 = vld [vmem:[%s0 + $0x120] sm:$0xff]
    %v61 = vld [vmem:[%s0 + $0x128] sm:$0xff]
    %v62 = vld [vmem:[%s0 + $0x130] sm:$0xff]
    %v63 = vld [vmem:[%s0 + $0x138] sm:$0xff]
    %v64 = vld [vmem:[%s0 + $0x140] sm:$0xff]
    %v65 = vld [vmem:[%s0 + $0x148] sm:$0xff]
    %v66 = vld [vmem:[%s0 + $0x150] sm:$0xff]
    %v67 = vld [vmem:[%s0 + $0x158] sm:$0xff]
    %v68 = vld [vmem:[%s0 + $0x160] sm:$0xff]
    %v69 = vld [vmem:[%s0 + $0x168] sm:$0xff]
    %v70 = vld [vmem:[%s0 + $0x170] sm:$0xff]
    %v71 = vld [vmem:[%s0 + $0x178] sm:$0xff]
    %v72 = vld [vmem:[%s0 + $0x180] sm:$0xff]
    %v73 = vld [vmem:[%s0 + $0x188] sm:$0xff]
    %v74 = vld [vmem:[%s0 + $0x190] sm:$0xff]
    %v75 = vld [vmem:[%s0 + $0x198] sm:$0xff]
    %v76 = vld [vmem:[%s0 + $0x1a0] sm:$0xff]
    %v77 = vld [vmem:[%s0 + $0x1a8] sm:$0xff]
    %v78 = vld [vmem:[%s0 + $0x1b0] sm:$0xff]
    %v79 = vld [vmem:[%s0 + $0x1b8] sm:$0xff]
    %v80 = vld [vmem:[%s0 + $0x1c0] sm:$0xff]
    %v81 = vld [vmem:[%s0 + $0x1c8] sm:$0xff]
    %v82 = vld [vmem:[%s0 + $0x1d0] sm:$0x3f]
    %v83 = vld [vmem:[#allocation2] sm:$0xff]
    %v84 = vld [vmem:[#allocation2 + $0x8] sm:$0xff]
    %v85 = vld [vmem:[#allocation2 + $0x10] sm:$0xff]
    %v86 = vld [vmem:[#allocation2 + $0x18] sm:$0xff]
    %v87 = vld [vmem:[#allocation2 + $0x20] sm:$0xff]
    %v88 = vld [vmem:[#allocation2 + $0x28] sm:$0xff]
    %v89 = vld [vmem:[#allocation2 + $0x30] sm:$0xff]
    %v90 = vld [vmem:[#allocation2 + $0x38] sm:$0xff]
    %v91 = vld [vmem:[#allocation2 + $0x40] sm:$0xff]
    %v92 = vld [vmem:[#allocation2 + $0x48] sm:$0xff]
    %v93 = vld [vmem:[#allocation2 + $0x50] sm:$0xff]
    %v94 = vld [vmem:[#allocation2 + $0x58] sm:$0xff]
    %v95 = vld [vmem:[#allocation2 + $0x60] sm:$0xff]
    %v96 = vld [vmem:[#allocation2 + $0x68] sm:$0xff]
    %v97 = vld [vmem:[#allocation2 + $0x70] sm:$0xff]
    %v98 = vld [vmem:[#allocation2 + $0x78] sm:$0xff]
    %v99 = vld [vmem:[#allocation2 + $0x80] sm:$0xff]
    %v100 = vld [vmem:[#allocation2 + $0x88] sm:$0xff]
    %v101 = vld [vmem:[#allocation2 + $0x90] sm:$0xff]
    %v102 = vld [vmem:[#allocation2 + $0x98] sm:$0xff]
    %v103 = vld [vmem:[#allocation2 + $0xa0] sm:$0xff]
    %v104 = vld [vmem:[#allocation2 + $0xa8] sm:$0xff]
    %v105 = vld [vmem:[#allocation2 + $0xb0] sm:$0xff]
    %v106 = vld [vmem:[#allocation2 + $0xb8] sm:$0xff]
    %v107 = vld [vmem:[#allocation2 + $0xc0] sm:$0xff]
    %v108 = vld [vmem:[#allocation2 + $0xc8] sm:$0xff]
    %v109 = vld [vmem:[#allocation2 + $0xd0] sm:$0xff]
    %v110 = vld [vmem:[#allocation2 + $0xd8] sm:$0xff]
    %v111 = vld [vmem:[#allocation2 + $0xe0] sm:$0xff]
    %v112 = vld [vmem:[#allocation2 + $0xe8] sm:$0xff]
    %v113 = vld [vmem:[#allocation2 + $0xf0] sm:$0xff]
    %v114 = vld [vmem:[#allocation2 + $0xf8] sm:$0xff]
    %v115 = vld [vmem:[#allocation2 + $0x100] sm:$0xff]
    %v116 = vld [vmem:[#allocation2 + $0x108] sm:$0xff]
    %v117 = vld [vmem:[#allocation2 + $0x110] sm:$0xff]
    %v118 = vld [vmem:[#allocation2 + $0x118] sm:$0xff]
    %v119 = vld [vmem:[#allocation2 + $0x120] sm:$0xff]
    %v120 = vld [vmem:[#allocation2 + $0x128] sm:$0xff]
    %v121 = vld [vmem:[#allocation2 + $0x130] sm:$0xff]
    %v122 = vld [vmem:[#allocation2 + $0x138] sm:$0xff]
    %v123 = vld [vmem:[#allocation2 + $0x140] sm:$0xff]
    %v124 = vld [vmem:[#allocation2 + $0x148] sm:$0xff]
    %v125 = vld [vmem:[#allocation2 + $0x150] sm:$0xff]
    %v126 = vld [vmem:[#allocation2 + $0x158] sm:$0xff]
    %v127 = vld [vmem:[#allocation2 + $0x160] sm:$0xff]
    %v128 = vld [vmem:[#allocation2 + $0x168] sm:$0xff]
    %v129 = vld [vmem:[#allocation2 + $0x170] sm:$0xff]
    %v130 = vld [vmem:[#allocation2 + $0x178] sm:$0xff]
    %v131 = vld [vmem:[#allocation2 + $0x180] sm:$0xff]
    %v132 = vld [vmem:[#allocation2 + $0x188] sm:$0xff]
    %v133 = vld [vmem:[#allocation2 + $0x190] sm:$0xff]
    %v134 = vld [vmem:[#allocation2 + $0x198] sm:$0xff]
    %v135 = vld [vmem:[#allocation2 + $0x1a0] sm:$0xff]
    %v136 = vld [vmem:[#allocation2 + $0x1a8] sm:$0xff]
    %v137 = vld [vmem:[#allocation2 + $0x1b0] sm:$0xff]
    %v138 = vld [vmem:[#allocation2 + $0x1b8] sm:$0xff]
    %v139 = vld [vmem:[#allocation2 + $0x1c0] sm:$0xff]
    %v140 = vld [vmem:[#allocation2 + $0x1c8] sm:$0xff]
    %v141 = vld [vmem:[#allocation2 + $0x1d0] sm:$0xff]
    %v142 = vld [vmem:[#allocation2 + $0x1d8] sm:$0xff]
    %v143 = vld [vmem:[#allocation2 + $0x1e0] sm:$0xff]
    %v144 = vld [vmem:[#allocation2 + $0x1e8] sm:$0xff]
    %v145 = vld [vmem:[#allocation2 + $0x1f0] sm:$0xff]
    %v146 = vld [vmem:[#allocation2 + $0x1f8] sm:$0xff]
    %v147 = vld [vmem:[#allocation2 + $0x200] sm:$0xff]
    %v148 = vld [vmem:[#allocation2 + $0x208] sm:$0xff]
    %v149 = vld [vmem:[#allocation2 + $0x210] sm:$0xff]
    %v150 = vld [vmem:[#allocation2 + $0x218] sm:$0xff]
    %v151 = vld [vmem:[#allocation2 + $0x220] sm:$0xff]
    %v152 = vld [vmem:[#allocation2 + $0x228] sm:$0xff]
    %v153 = vld [vmem:[#allocation2 + $0x230] sm:$0xff]
    %v154 = vld [vmem:[#allocation2 + $0x238] sm:$0xff]
    %v155 = vld [vmem:[#allocation2 + $0x240] sm:$0xff]
    %v156 = vld [vmem:[#allocation2 + $0x248] sm:$0xff]
    %v157 = vld [vmem:[#allocation2 + $0x250] sm:$0xff]
    %v158 = vld [vmem:[#allocation2 + $0x258] sm:$0xff]
    %v159 = vld [vmem:[#allocation2 + $0x260] sm:$0xff]
    %v160 = vld [vmem:[#allocation2 + $0x268] sm:$0xff]
    %v161 = vld [vmem:[#allocation2 + $0x270] sm:$0xff]
    %v162 = vld [vmem:[#allocation2 + $0x278] sm:$0xff]
    %v163 = vld [vmem:[#allocation2 + $0x280] sm:$0xff]
    %v164 = vld [vmem:[#allocation2 + $0x288] sm:$0xff]
    %v165 = vld [vmem:[#allocation2 + $0x290] sm:$0xff]
    %v166 = vld [vmem:[#allocation2 + $0x298] sm:$0xff]
    %v167 = vld [vmem:[#allocation2 + $0x2a0] sm:$0xff]
    %v168 = vld [vmem:[#allocation2 + $0x2a8] sm:$0xff]
    %v169 = vld [vmem:[#allocation2 + $0x2b0] sm:$0xff]
    %v170 = vld [vmem:[#allocation2 + $0x2b8] sm:$0xff]
    %v171 = vld [vmem:[#allocation2 + $0x2c0] sm:$0xff]
    %v172 = vld [vmem:[#allocation2 + $0x2c8] sm:$0xff]
    %v173 = vld [vmem:[#allocation2 + $0x2d0] sm:$0xff]
    %v174 = vld [vmem:[#allocation2 + $0x2d8] sm:$0xff]
    %v175 = vld [vmem:[#allocation2 + $0x2e0] sm:$0xff]
    %v176 = vld [vmem:[#allocation2 + $0x2e8] sm:$0xff]
    %v177 = vld [vmem:[#allocation2 + $0x2f0] sm:$0xff]
    %v178 = vld [vmem:[#allocation2 + $0x2f8] sm:$0xff]
    %v179 = vld [vmem:[#allocation2 + $0x300] sm:$0xff]
    %v180 = vld [vmem:[#allocation2 + $0x308] sm:$0xff]
    %v181 = vld [vmem:[#allocation2 + $0x310] sm:$0xff]
    %v182 = vld [vmem:[#allocation2 + $0x318] sm:$0xff]
    %v183 = vld [vmem:[#allocation2 + $0x320] sm:$0xff]
    %v184 = vld [vmem:[#allocation2 + $0x328] sm:$0xff]
    %v185 = vld [vmem:[#allocation2 + $0x330] sm:$0xff]
    %v186 = vld [vmem:[#allocation2 + $0x338] sm:$0xff]
    %v187 = vld [vmem:[#allocation2 + $0x340] sm:$0xff]
    %v188 = vld [vmem:[#allocation2 + $0x348] sm:$0xff]
    %v189 = vld [vmem:[#allocation2 + $0x350] sm:$0xff]
    %v190 = vld [vmem:[#allocation2 + $0x358] sm:$0xff]
    %v191 = vld [vmem:[#allocation2 + $0x360] sm:$0xff]
    %v192 = vld [vmem:[#allocation2 + $0x368] sm:$0xff]
    %v193 = vld [vmem:[#allocation2 + $0x370] sm:$0xff]
    %v194 = vld [vmem:[#allocation2 + $0x378] sm:$0xff]
    %v195 = vld [vmem:[#allocation2 + $0x380] sm:$0xff]
    %v196 = vld [vmem:[#allocation2 + $0x388] sm:$0xff]
    %v197 = vld [vmem:[#allocation2 + $0x390] sm:$0xff]
    %v198 = vld [vmem:[#allocation2 + $0x398] sm:$0xff]
    %v199 = vld [vmem:[#allocation2 + $0x3a0] sm:$0xff]
    %v200 = vld [vmem:[#allocation2 + $0x3a8] sm:$0xff]
    %v201 = vld [vmem:[#allocation2 + $0x3b0] sm:$0xff]
    %v202 = vld [vmem:[#allocation2 + $0x3b8] sm:$0xff]
    %v203 = vld [vmem:[#allocation2 + $0x3c0] sm:$0xff]
    %v204 = vld [vmem:[#allocation2 + $0x3c8] sm:$0xff]
    %v205 = vld [vmem:[#allocation2 + $0x3d0] sm:$0xff]
    %v206 = vld [vmem:[#allocation2 + $0x3d8] sm:$0xff]
    %v207 = vld [vmem:[#allocation2 + $0x3e0] sm:$0xff]
    %v208 = vld [vmem:[#allocation2 + $0x3e8] sm:$0xff]
    %v209 = vld [vmem:[#allocation2 + $0x3f0] sm:$0xff]
    %v210 = vld [vmem:[#allocation2 + $0x3f8] sm:$0xff]
    %v211 = vld [vmem:[#allocation2 + $0x400] sm:$0xff]
    %v212 = vld [vmem:[#allocation2 + $0x408] sm:$0xff]
    %v213 = vld [vmem:[#allocation2 + $0x410] sm:$0xff]
    %v214 = vld [vmem:[#allocation2 + $0x418] sm:$0xff]
    %v215 = vld [vmem:[#allocation2 + $0x420] sm:$0xff]
    %v216 = vld [vmem:[#allocation2 + $0x428] sm:$0xff]
    %v217 = vld [vmem:[#allocation2 + $0x430] sm:$0xff]
    %v218 = vld [vmem:[#allocation2 + $0x438] sm:$0xff]
    %v219 = vld [vmem:[#allocation2 + $0x440] sm:$0xff]
    %v220 = vld [vmem:[#allocation2 + $0x448] sm:$0xff]
    %v221 = vld [vmem:[#allocation2 + $0x450] sm:$0xff]
    %v222 = vld [vmem:[#allocation2 + $0x458] sm:$0xff]
    %v223 = vld [vmem:[#allocation2 + $0x460] sm:$0xff]
    %v224 = vld [vmem:[#allocation2 + $0x468] sm:$0xff]
    %v225 = vld [vmem:[#allocation2 + $0x470] sm:$0xff]
    %v226 = vld [vmem:[#allocation2 + $0x478] sm:$0xff]
    %v227 = vld [vmem:[#allocation2 + $0x480] sm:$0xff]
    %v228 = vld [vmem:[#allocation2 + $0x488] sm:$0xff]
    %v229 = vld [vmem:[#allocation2 + $0x490] sm:$0xff]
    %v230 = vld [vmem:[#allocation2 + $0x498] sm:$0xff]
    %v231 = vld [vmem:[#allocation2 + $0x4a0] sm:$0xff]
    %v232 = vld [vmem:[#allocation2 + $0x4a8] sm:$0xff]
    %v233 = vld [vmem:[#allocation2 + $0x4b0] sm:$0xff]
    %v234 = vld [vmem:[#allocation2 + $0x4b8] sm:$0xff]
    %v235 = vld [vmem:[#allocation2 + $0x4c0] sm:$0xff]
    %v236 = vld [vmem:[#allocation2 + $0x4c8] sm:$0xff]
    %v237 = vld [vmem:[#allocation2 + $0x4d0] sm:$0xff]
    %v238 = vld [vmem:[#allocation2 + $0x4d8] sm:$0xff]
    %v239 = vld [vmem:[#allocation2 + $0x4e0] sm:$0xff]
    %v240 = vld [vmem:[#allocation2 + $0x4e8] sm:$0xff]
    %v241 = vld [vmem:[#allocation2 + $0x4f0] sm:$0xff]
    %v242 = vld [vmem:[#allocation2 + $0x4f8] sm:$0xff]
    %v243 = vld [vmem:[#allocation2 + $0x500] sm:$0xff]
    %v244 = vld [vmem:[#allocation2 + $0x508] sm:$0xff]
    %v245 = vld [vmem:[#allocation2 + $0x510] sm:$0xff]
    %v246 = vld [vmem:[#allocation2 + $0x518] sm:$0xff]
    %v247 = vld [vmem:[#allocation2 + $0x520] sm:$0xff]
    %v248 = vld [vmem:[#allocation2 + $0x528] sm:$0xff]
    %v249 = vld [vmem:[#allocation2 + $0x530] sm:$0xff]
    %v250 = vld [vmem:[#allocation2 + $0x538] sm:$0xff]
    %v251 = vld [vmem:[#allocation2 + $0x540] sm:$0xff]
    %v252 = vld [vmem:[#allocation2 + $0x548] sm:$0xff]
    %v253 = vld [vmem:[#allocation2 + $0x550] sm:$0xff]
    %v254 = vld [vmem:[#allocation2 + $0x558] sm:$0xff]
    %v255 = vld [vmem:[#allocation2 + $0x560] sm:$0xff]
    %v256 = vld [vmem:[#allocation2 + $0x568] sm:$0xff]
    %v257 = vld [vmem:[#allocation2 + $0x570] sm:$0xff]
    %v258 = vld [vmem:[#allocation2 + $0x578] sm:$0xff]
    %v259 = vld [vmem:[#allocation2 + $0x580] sm:$0xff]
    %v260 = vld [vmem:[#allocation2 + $0x588] sm:$0xff]
    %v261 = vld [vmem:[#allocation2 + $0x590] sm:$0xff]
    %v262 = vld [vmem:[#allocation2 + $0x598] sm:$0xff]
    %v263 = vld [vmem:[#allocation2 + $0x5a0] sm:$0xff]
    %v264 = vld [vmem:[#allocation2 + $0x5a8] sm:$0xff]
    %v265 = vld [vmem:[#allocation2 + $0x5b0] sm:$0xff]
    %v266 = vld [vmem:[#allocation2 + $0x5b8] sm:$0xff]
    %v267 = vld [vmem:[#allocation2 + $0x5c0] sm:$0xff]
    %v268 = vld [vmem:[#allocation2 + $0x5c8] sm:$0xff]
    %v269 = vld [vmem:[#allocation2 + $0x5d0] sm:$0xff]
    %v270 = vld [vmem:[#allocation2 + $0x5d8] sm:$0xff]
    %v271 = vld [vmem:[#allocation2 + $0x5e0] sm:$0xff]
    %v272 = vld [vmem:[#allocation2 + $0x5e8] sm:$0xff]
    %v273 = vld [vmem:[#allocation2 + $0x5f0] sm:$0xff]
    %v274 = vld [vmem:[#allocation2 + $0x5f8] sm:$0xff]
    %v275 = vld [vmem:[#allocation2 + $0x600] sm:$0xff]
    %v276 = vld [vmem:[#allocation2 + $0x608] sm:$0xff]
    %v277 = vld [vmem:[#allocation2 + $0x610] sm:$0xff]
    %v278 = vld [vmem:[#allocation2 + $0x618] sm:$0xff]
    %v279 = vld [vmem:[#allocation2 + $0x620] sm:$0xff]
    %v280 = vld [vmem:[#allocation2 + $0x628] sm:$0xff]
    %v281 = vld [vmem:[#allocation2 + $0x630] sm:$0xff]
    %v282 = vld [vmem:[#allocation2 + $0x638] sm:$0xff]
    %v283 = vld [vmem:[#allocation2 + $0x640] sm:$0xff]
    %v284 = vld [vmem:[#allocation2 + $0x648] sm:$0xff]
    %v285 = vld [vmem:[#allocation2 + $0x650] sm:$0xff]
    %v286 = vld [vmem:[#allocation2 + $0x658] sm:$0xff]
    %v287 = vld [vmem:[#allocation2 + $0x660] sm:$0xff]
    %v288 = vld [vmem:[#allocation2 + $0x668] sm:$0xff]
    %v289 = vld [vmem:[#allocation2 + $0x670] sm:$0xff]
    %v290 = vld [vmem:[#allocation2 + $0x678] sm:$0xff]
    %v291 = vld [vmem:[#allocation2 + $0x680] sm:$0xff]
    %v292 = vld [vmem:[#allocation2 + $0x688] sm:$0xff]
    %v293 = vld [vmem:[#allocation2 + $0x690] sm:$0xff]
    %v294 = vld [vmem:[#allocation2 + $0x698] sm:$0xff]
    %v295 = vld [vmem:[#allocation2 + $0x6a0] sm:$0xff]
    %v296 = vld [vmem:[#allocation2 + $0x6a8] sm:$0xff]
    %v297 = vld [vmem:[#allocation2 + $0x6b0] sm:$0xff]
    %v298 = vld [vmem:[#allocation2 + $0x6b8] sm:$0xff]
    %v299 = vld [vmem:[#allocation2 + $0x6c0] sm:$0xff]
    %v300 = vld [vmem:[#allocation2 + $0x6c8] sm:$0xff]
    %v301 = vld [vmem:[#allocation2 + $0x6d0] sm:$0xff]
    %v302 = vld [vmem:[#allocation2 + $0x6d8] sm:$0xff]
    %v303 = vld [vmem:[#allocation2 + $0x6e0] sm:$0xff]
    %v304 = vld [vmem:[#allocation2 + $0x6e8] sm:$0xff]
    %v305 = vld [vmem:[#allocation2 + $0x6f0] sm:$0xff]
    %v306 = vld [vmem:[#allocation2 + $0x6f8] sm:$0xff]
    %v307 = vld [vmem:[#allocation2 + $0x700] sm:$0xff]
    %v308 = vld [vmem:[#allocation2 + $0x708] sm:$0xff]
    %v309 = vld [vmem:[#allocation2 + $0x710] sm:$0xff]
    %v310 = vld [vmem:[#allocation2 + $0x718] sm:$0xff]
    %v311 = vld [vmem:[#allocation2 + $0x720] sm:$0xff]
    %v312 = vld [vmem:[#allocation2 + $0x728] sm:$0xff]
    %v313 = vld [vmem:[#allocation2 + $0x730] sm:$0xff]
    %v314 = vld [vmem:[#allocation2 + $0x738] sm:$0xff]
    %v315 = vld [vmem:[#allocation2 + $0x740] sm:$0xff]
    %v316 = vld [vmem:[#allocation2 + $0x748] sm:$0xff]
    %v317 = vld [vmem:[#allocation2 + $0x750] sm:$0xff]
    %v377 = vcombine.high %v24, %v24
    %v379 = vunpack.c.l.s4 1983009808
    %v380 = vunpack.c.0.s8 %v379
    %v381 = vlaneseq
    %v382 = vshrl.u32 %v381, 7
    %v383 = vsub.s32 %v380, %v382
    %v384 = vrot.slane %v24, %v383
    %v386 = vunpack.c.l.s4 1983009808
    %v387 = vunpack.c.0.s8 %v386
    %v388 = vlaneseq
    %v389 = vshrl.u32 %v388, 7
    %v390 = vsub.s32 %v387, %v389
    %v391 = vrot.slane %v377, %v390
    %v392 = vcombine.high %v384, %v384
    %v393 = vcombine.high %v391, %v391
    %v394 = vcombine.high %v25, %v25
    %v396 = vunpack.c.l.s4 1983009808
    %v397 = vunpack.c.0.s8 %v396
    %v398 = vlaneseq
    %v399 = vshrl.u32 %v398, 7
    %v400 = vsub.s32 %v397, %v399
    %v401 = vrot.slane %v25, %v400
    %v403 = vunpack.c.l.s4 1983009808
    %v404 = vunpack.c.0.s8 %v403
    %v405 = vlaneseq
    %v406 = vshrl.u32 %v405, 7
    %v407 = vsub.s32 %v404, %v406
    %v408 = vrot.slane %v394, %v407
    %v409 = vcombine.high %v401, %v401
    %v410 = vcombine.high %v408, %v408
    %v411 = vcombine.high %v26, %v26
    %v413 = vunpack.c.l.s4 1983009808
    %v414 = vunpack.c.0.s8 %v413
    %v415 = vlaneseq
    %v416 = vshrl.u32 %v415, 7
    %v417 = vsub.s32 %v414, %v416
    %v418 = vrot.slane %v26, %v417
    %v420 = vunpack.c.l.s4 1983009808
    %v421 = vunpack.c.0.s8 %v420
    %v422 = vlaneseq
    %v423 = vshrl.u32 %v422, 7
    %v424 = vsub.s32 %v421, %v423
    %v425 = vrot.slane %v411, %v424
    %v426 = vcombine.high %v418, %v418
    %v427 = vcombine.high %v425, %v425
    %v428 = vcombine.high %v27, %v27
    %v430 = vunpack.c.l.s4 1983009808
    %v431 = vunpack.c.0.s8 %v430
    %v432 = vlaneseq
    %v433 = vshrl.u32 %v432, 7
    %v434 = vsub.s32 %v431, %v433
    %v435 = vrot.slane %v27, %v434
    %v437 = vunpack.c.l.s4 1983009808
    %v438 = vunpack.c.0.s8 %v437
    %v439 = vlaneseq
    %v440 = vshrl.u32 %v439, 7
    %v441 = vsub.s32 %v438, %v440
    %v442 = vrot.slane %v428, %v441
    %v443 = vcombine.high %v435, %v435
    %v444 = vcombine.high %v442, %v442
    %v445 = vcombine.high %v28, %v28
    %v447 = vunpack.c.l.s4 1983009808
    %v448 = vunpack.c.0.s8 %v447
    %v449 = vlaneseq
    %v450 = vshrl.u32 %v449, 7
    %v451 = vsub.s32 %v448, %v450
    %v452 = vrot.slane %v28, %v451
    %v454 = vunpack.c.l.s4 1983009808
    %v455 = vunpack.c.0.s8 %v454
    %v456 = vlaneseq
    %v457 = vshrl.u32 %v456, 7
    %v458 = vsub.s32 %v455, %v457
    %v459 = vrot.slane %v445, %v458
    %v460 = vcombine.high %v452, %v452
    %v461 = vcombine.high %v459, %v459
    %v462 = vcombine.high %v29, %v29
    %v464 = vunpack.c.l.s4 1983009808
    %v465 = vunpack.c.0.s8 %v464
    %v466 = vlaneseq
    %v467 = vshrl.u32 %v466, 7
    %v468 = vsub.s32 %v465, %v467
    %v469 = vrot.slane %v29, %v468
    %v471 = vunpack.c.l.s4 1983009808
    %v472 = vunpack.c.0.s8 %v471
    %v473 = vlaneseq
    %v474 = vshrl.u32 %v473, 7
    %v475 = vsub.s32 %v472, %v474
    %v476 = vrot.slane %v462, %v475
    %v477 = vcombine.high %v469, %v469
    %v478 = vcombine.high %v476, %v476
    %v479 = vcombine.high %v30, %v30
    %v481 = vunpack.c.l.s4 1983009808
    %v482 = vunpack.c.0.s8 %v481
    %v483 = vlaneseq
    %v484 = vshrl.u32 %v483, 7
    %v485 = vsub.s32 %v482, %v484
    %v486 = vrot.slane %v30, %v485
    %v488 = vunpack.c.l.s4 1983009808
    %v489 = vunpack.c.0.s8 %v488
    %v490 = vlaneseq
    %v491 = vshrl.u32 %v490, 7
    %v492 = vsub.s32 %v489, %v491
    %v493 = vrot.slane %v479, %v492
    %v494 = vcombine.high %v486, %v486
    %v495 = vcombine.high %v493, %v493
    %v496 = vcombine.high %v31, %v31
    %v498 = vunpack.c.l.s4 1983009808
    %v499 = vunpack.c.0.s8 %v498
    %v500 = vlaneseq
    %v501 = vshrl.u32 %v500, 7
    %v502 = vsub.s32 %v499, %v501
    %v503 = vrot.slane %v31, %v502
    %v505 = vunpack.c.l.s4 1983009808
    %v506 = vunpack.c.0.s8 %v505
    %v507 = vlaneseq
    %v508 = vshrl.u32 %v507, 7
    %v509 = vsub.s32 %v506, %v508
    %v510 = vrot.slane %v496, %v509
    %v511 = vcombine.high %v503, %v503
    %v512 = vcombine.high %v510, %v510
    %v513 = vcombine.high %v32, %v32
    %v515 = vunpack.c.l.s4 1983009808
    %v516 = vunpack.c.0.s8 %v515
    %v517 = vlaneseq
    %v518 = vshrl.u32 %v517, 7
    %v519 = vsub.s32 %v516, %v518
    %v520 = vrot.slane %v32, %v519
    %v522 = vunpack.c.l.s4 1983009808
    %v523 = vunpack.c.0.s8 %v522
    %v524 = vlaneseq
    %v525 = vshrl.u32 %v524, 7
    %v526 = vsub.s32 %v523, %v525
    %v527 = vrot.slane %v513, %v526
    %v528 = vcombine.high %v520, %v520
    %v529 = vcombine.high %v527, %v527
    %v530 = vcombine.high %v33, %v33
    %v532 = vunpack.c.l.s4 1983009808
    %v533 = vunpack.c.0.s8 %v532
    %v534 = vlaneseq
    %v535 = vshrl.u32 %v534, 7
    %v536 = vsub.s32 %v533, %v535
    %v537 = vrot.slane %v33, %v536
    %v539 = vunpack.c.l.s4 1983009808
    %v540 = vunpack.c.0.s8 %v539
    %v541 = vlaneseq
    %v542 = vshrl.u32 %v541, 7
    %v543 = vsub.s32 %v540, %v542
    %v544 = vrot.slane %v530, %v543
    %v545 = vcombine.high %v537, %v537
    %v546 = vcombine.high %v544, %v544
    %v547 = vcombine.high %v34, %v34
    %v549 = vunpack.c.l.s4 1983009808
    %v550 = vunpack.c.0.s8 %v549
    %v551 = vlaneseq
    %v552 = vshrl.u32 %v551, 7
    %v553 = vsub.s32 %v550, %v552
    %v554 = vrot.slane %v34, %v553
    %v556 = vunpack.c.l.s4 1983009808
    %v557 = vunpack.c.0.s8 %v556
    %v558 = vlaneseq
    %v559 = vshrl.u32 %v558, 7
    %v560 = vsub.s32 %v557, %v559
    %v561 = vrot.slane %v547, %v560
    %v562 = vcombine.high %v554, %v554
    %v563 = vcombine.high %v561, %v561
    %v564 = vcombine.high %v35, %v35
    %v566 = vunpack.c.l.s4 1983009808
    %v567 = vunpack.c.0.s8 %v566
    %v568 = vlaneseq
    %v569 = vshrl.u32 %v568, 7
    %v570 = vsub.s32 %v567, %v569
    %v571 = vrot.slane %v35, %v570
    %v573 = vunpack.c.l.s4 1983009808
    %v574 = vunpack.c.0.s8 %v573
    %v575 = vlaneseq
    %v576 = vshrl.u32 %v575, 7
    %v577 = vsub.s32 %v574, %v576
    %v578 = vrot.slane %v564, %v577
    %v579 = vcombine.high %v571, %v571
    %v580 = vcombine.high %v578, %v578
    %v581 = vcombine.high %v36, %v36
    %v583 = vunpack.c.l.s4 1983009808
    %v584 = vunpack.c.0.s8 %v583
    %v585 = vlaneseq
    %v586 = vshrl.u32 %v585, 7
    %v587 = vsub.s32 %v584, %v586
    %v588 = vrot.slane %v36, %v587
    %v590 = vunpack.c.l.s4 1983009808
    %v591 = vunpack.c.0.s8 %v590
    %v592 = vlaneseq
    %v593 = vshrl.u32 %v592, 7
    %v594 = vsub.s32 %v591, %v593
    %v595 = vrot.slane %v581, %v594
    %v596 = vcombine.high %v588, %v588
    %v597 = vcombine.high %v595, %v595
    %v598 = vcombine.high %v37, %v37
    %v600 = vunpack.c.l.s4 1983009808
    %v601 = vunpack.c.0.s8 %v600
    %v602 = vlaneseq
    %v603 = vshrl.u32 %v602, 7
    %v604 = vsub.s32 %v601, %v603
    %v605 = vrot.slane %v37, %v604
    %v607 = vunpack.c.l.s4 1983009808
    %v608 = vunpack.c.0.s8 %v607
    %v609 = vlaneseq
    %v610 = vshrl.u32 %v609, 7
    %v611 = vsub.s32 %v608, %v610
    %v612 = vrot.slane %v598, %v611
    %v613 = vcombine.high %v605, %v605
    %v614 = vcombine.high %v612, %v612
    %v615 = vcombine.high %v38, %v38
    %v617 = vunpack.c.l.s4 1983009808
    %v618 = vunpack.c.0.s8 %v617
    %v619 = vlaneseq
    %v620 = vshrl.u32 %v619, 7
    %v621 = vsub.s32 %v618, %v620
    %v622 = vrot.slane %v38, %v621
    %v624 = vunpack.c.l.s4 1983009808
    %v625 = vunpack.c.0.s8 %v624
    %v626 = vlaneseq
    %v627 = vshrl.u32 %v626, 7
    %v628 = vsub.s32 %v625, %v627
    %v629 = vrot.slane %v615, %v628
    %v630 = vcombine.high %v622, %v622
    %v631 = vcombine.high %v629, %v629
    %v632 = vcombine.high %v39, %v39
    %v634 = vunpack.c.l.s4 1983009808
    %v635 = vunpack.c.0.s8 %v634
    %v636 = vlaneseq
    %v637 = vshrl.u32 %v636, 7
    %v638 = vsub.s32 %v635, %v637
    %v639 = vrot.slane %v39, %v638
    %v641 = vunpack.c.l.s4 1983009808
    %v642 = vunpack.c.0.s8 %v641
    %v643 = vlaneseq
    %v644 = vshrl.u32 %v643, 7
    %v645 = vsub.s32 %v642, %v644
    %v646 = vrot.slane %v632, %v645
    %v647 = vcombine.high %v639, %v639
    %v648 = vcombine.high %v646, %v646
    %v649 = vcombine.high %v40, %v40
    %v651 = vunpack.c.l.s4 1983009808
    %v652 = vunpack.c.0.s8 %v651
    %v653 = vlaneseq
    %v654 = vshrl.u32 %v653, 7
    %v655 = vsub.s32 %v652, %v654
    %v656 = vrot.slane %v40, %v655
    %v658 = vunpack.c.l.s4 1983009808
    %v659 = vunpack.c.0.s8 %v658
    %v660 = vlaneseq
    %v661 = vshrl.u32 %v660, 7
    %v662 = vsub.s32 %v659, %v661
    %v663 = vrot.slane %v649, %v662
    %v664 = vcombine.high %v656, %v656
    %v665 = vcombine.high %v663, %v663
    %v666 = vcombine.high %v41, %v41
    %v668 = vunpack.c.l.s4 1983009808
    %v669 = vunpack.c.0.s8 %v668
    %v670 = vlaneseq
    %v671 = vshrl.u32 %v670, 7
    %v672 = vsub.s32 %v669, %v671
    %v673 = vrot.slane %v41, %v672
    %v675 = vunpack.c.l.s4 1983009808
    %v676 = vunpack.c.0.s8 %v675
    %v677 = vlaneseq
    %v678 = vshrl.u32 %v677, 7
    %v679 = vsub.s32 %v676, %v678
    %v680 = vrot.slane %v666, %v679
    %v681 = vcombine.high %v673, %v673
    %v682 = vcombine.high %v680, %v680
    %v683 = vcombine.high %v42, %v42
    %v685 = vunpack.c.l.s4 1983009808
    %v686 = vunpack.c.0.s8 %v685
    %v687 = vlaneseq
    %v688 = vshrl.u32 %v687, 7
    %v689 = vsub.s32 %v686, %v688
    %v690 = vrot.slane %v42, %v689
    %v692 = vunpack.c.l.s4 1983009808
    %v693 = vunpack.c.0.s8 %v692
    %v694 = vlaneseq
    %v695 = vshrl.u32 %v694, 7
    %v696 = vsub.s32 %v693, %v695
    %v697 = vrot.slane %v683, %v696
    %v698 = vcombine.high %v690, %v690
    %v699 = vcombine.high %v697, %v697
    %v700 = vcombine.high %v43, %v43
    %v702 = vunpack.c.l.s4 1983009808
    %v703 = vunpack.c.0.s8 %v702
    %v704 = vlaneseq
    %v705 = vshrl.u32 %v704, 7
    %v706 = vsub.s32 %v703, %v705
    %v707 = vrot.slane %v43, %v706
    %v709 = vunpack.c.l.s4 1983009808
    %v710 = vunpack.c.0.s8 %v709
    %v711 = vlaneseq
    %v712 = vshrl.u32 %v711, 7
    %v713 = vsub.s32 %v710, %v712
    %v714 = vrot.slane %v700, %v713
    %v715 = vcombine.high %v707, %v707
    %v716 = vcombine.high %v714, %v714
    %v717 = vcombine.high %v44, %v44
    %v719 = vunpack.c.l.s4 1983009808
    %v720 = vunpack.c.0.s8 %v719
    %v721 = vlaneseq
    %v722 = vshrl.u32 %v721, 7
    %v723 = vsub.s32 %v720, %v722
    %v724 = vrot.slane %v44, %v723
    %v726 = vunpack.c.l.s4 1983009808
    %v727 = vunpack.c.0.s8 %v726
    %v728 = vlaneseq
    %v729 = vshrl.u32 %v728, 7
    %v730 = vsub.s32 %v727, %v729
    %v731 = vrot.slane %v717, %v730
    %v732 = vcombine.high %v724, %v724
    %v733 = vcombine.high %v731, %v731
    %v734 = vcombine.high %v45, %v45
    %v736 = vunpack.c.l.s4 1983009808
    %v737 = vunpack.c.0.s8 %v736
    %v738 = vlaneseq
    %v739 = vshrl.u32 %v738, 7
    %v740 = vsub.s32 %v737, %v739
    %v741 = vrot.slane %v45, %v740
    %v743 = vunpack.c.l.s4 1983009808
    %v744 = vunpack.c.0.s8 %v743
    %v745 = vlaneseq
    %v746 = vshrl.u32 %v745, 7
    %v747 = vsub.s32 %v744, %v746
    %v748 = vrot.slane %v734, %v747
    %v749 = vcombine.high %v741, %v741
    %v750 = vcombine.high %v748, %v748
    %v751 = vcombine.high %v46, %v46
    %v753 = vunpack.c.l.s4 1983009808
    %v754 = vunpack.c.0.s8 %v753
    %v755 = vlaneseq
    %v756 = vshrl.u32 %v755, 7
    %v757 = vsub.s32 %v754, %v756
    %v758 = vrot.slane %v46, %v757
    %v760 = vunpack.c.l.s4 1983009808
    %v761 = vunpack.c.0.s8 %v760
    %v762 = vlaneseq
    %v763 = vshrl.u32 %v762, 7
    %v764 = vsub.s32 %v761, %v763
    %v765 = vrot.slane %v751, %v764
    %v766 = vcombine.high %v758, %v758
    %v767 = vcombine.high %v765, %v765
    %v768 = vcombine.high %v47, %v47
    %v770 = vunpack.c.l.s4 1983009808
    %v771 = vunpack.c.0.s8 %v770
    %v772 = vlaneseq
    %v773 = vshrl.u32 %v772, 7
    %v774 = vsub.s32 %v771, %v773
    %v775 = vrot.slane %v47, %v774
    %v777 = vunpack.c.l.s4 1983009808
    %v778 = vunpack.c.0.s8 %v777
    %v779 = vlaneseq
    %v780 = vshrl.u32 %v779, 7
    %v781 = vsub.s32 %v778, %v780
    %v782 = vrot.slane %v768, %v781
    %v783 = vcombine.high %v775, %v775
    %v784 = vcombine.high %v782, %v782
    %v785 = vcombine.high %v48, %v48
    %v787 = vunpack.c.l.s4 1983009808
    %v788 = vunpack.c.0.s8 %v787
    %v789 = vlaneseq
    %v790 = vshrl.u32 %v789, 7
    %v791 = vsub.s32 %v788, %v790
    %v792 = vrot.slane %v48, %v791
    %v794 = vunpack.c.l.s4 1983009808
    %v795 = vunpack.c.0.s8 %v794
    %v796 = vlaneseq
    %v797 = vshrl.u32 %v796, 7
    %v798 = vsub.s32 %v795, %v797
    %v799 = vrot.slane %v785, %v798
    %v800 = vcombine.high %v792, %v792
    %v801 = vcombine.high %v799, %v799
    %v802 = vcombine.high %v49, %v49
    %v804 = vunpack.c.l.s4 1983009808
    %v805 = vunpack.c.0.s8 %v804
    %v806 = vlaneseq
    %v807 = vshrl.u32 %v806, 7
    %v808 = vsub.s32 %v805, %v807
    %v809 = vrot.slane %v49, %v808
    %v811 = vunpack.c.l.s4 1983009808
    %v812 = vunpack.c.0.s8 %v811
    %v813 = vlaneseq
    %v814 = vshrl.u32 %v813, 7
    %v815 = vsub.s32 %v812, %v814
    %v816 = vrot.slane %v802, %v815
    %v817 = vcombine.high %v809, %v809
    %v818 = vcombine.high %v816, %v816
    %v819 = vcombine.high %v50, %v50
    %v821 = vunpack.c.l.s4 1983009808
    %v822 = vunpack.c.0.s8 %v821
    %v823 = vlaneseq
    %v824 = vshrl.u32 %v823, 7
    %v825 = vsub.s32 %v822, %v824
    %v826 = vrot.slane %v50, %v825
    %v828 = vunpack.c.l.s4 1983009808
    %v829 = vunpack.c.0.s8 %v828
    %v830 = vlaneseq
    %v831 = vshrl.u32 %v830, 7
    %v832 = vsub.s32 %v829, %v831
    %v833 = vrot.slane %v819, %v832
    %v834 = vcombine.high %v826, %v826
    %v835 = vcombine.high %v833, %v833
    %v836 = vcombine.high %v51, %v51
    %v838 = vunpack.c.l.s4 1983009808
    %v839 = vunpack.c.0.s8 %v838
    %v840 = vlaneseq
    %v841 = vshrl.u32 %v840, 7
    %v842 = vsub.s32 %v839, %v841
    %v843 = vrot.slane %v51, %v842
    %v845 = vunpack.c.l.s4 1983009808
    %v846 = vunpack.c.0.s8 %v845
    %v847 = vlaneseq
    %v848 = vshrl.u32 %v847, 7
    %v849 = vsub.s32 %v846, %v848
    %v850 = vrot.slane %v836, %v849
    %v851 = vcombine.high %v843, %v843
    %v852 = vcombine.high %v850, %v850
    %v853 = vcombine.high %v52, %v52
    %v855 = vunpack.c.l.s4 1983009808
    %v856 = vunpack.c.0.s8 %v855
    %v857 = vlaneseq
    %v858 = vshrl.u32 %v857, 7
    %v859 = vsub.s32 %v856, %v858
    %v860 = vrot.slane %v52, %v859
    %v862 = vunpack.c.l.s4 1983009808
    %v863 = vunpack.c.0.s8 %v862
    %v864 = vlaneseq
    %v865 = vshrl.u32 %v864, 7
    %v866 = vsub.s32 %v863, %v865
    %v867 = vrot.slane %v853, %v866
    %v868 = vcombine.high %v860, %v860
    %v869 = vcombine.high %v867, %v867
    %v870 = vcombine.high %v53, %v53
    %v872 = vunpack.c.l.s4 1983009808
    %v873 = vunpack.c.0.s8 %v872
    %v874 = vlaneseq
    %v875 = vshrl.u32 %v874, 7
    %v876 = vsub.s32 %v873, %v875
    %v877 = vrot.slane %v53, %v876
    %v879 = vunpack.c.l.s4 1983009808
    %v880 = vunpack.c.0.s8 %v879
    %v881 = vlaneseq
    %v882 = vshrl.u32 %v881, 7
    %v883 = vsub.s32 %v880, %v882
    %v884 = vrot.slane %v870, %v883
    %v885 = vcombine.high %v877, %v877
    %v886 = vcombine.high %v884, %v884
    %v887 = vcombine.high %v54, %v54
    %v889 = vunpack.c.l.s4 1983009808
    %v890 = vunpack.c.0.s8 %v889
    %v891 = vlaneseq
    %v892 = vshrl.u32 %v891, 7
    %v893 = vsub.s32 %v890, %v892
    %v894 = vrot.slane %v54, %v893
    %v896 = vunpack.c.l.s4 1983009808
    %v897 = vunpack.c.0.s8 %v896
    %v898 = vlaneseq
    %v899 = vshrl.u32 %v898, 7
    %v900 = vsub.s32 %v897, %v899
    %v901 = vrot.slane %v887, %v900
    %v902 = vcombine.high %v894, %v894
    %v903 = vcombine.high %v901, %v901
    %v904 = vcombine.high %v55, %v55
    %v906 = vunpack.c.l.s4 1983009808
    %v907 = vunpack.c.0.s8 %v906
    %v908 = vlaneseq
    %v909 = vshrl.u32 %v908, 7
    %v910 = vsub.s32 %v907, %v909
    %v911 = vrot.slane %v55, %v910
    %v913 = vunpack.c.l.s4 1983009808
    %v914 = vunpack.c.0.s8 %v913
    %v915 = vlaneseq
    %v916 = vshrl.u32 %v915, 7
    %v917 = vsub.s32 %v914, %v916
    %v918 = vrot.slane %v904, %v917
    %v919 = vcombine.high %v911, %v911
    %v920 = vcombine.high %v918, %v918
    %v921 = vcombine.high %v56, %v56
    %v923 = vunpack.c.l.s4 1983009808
    %v924 = vunpack.c.0.s8 %v923
    %v925 = vlaneseq
    %v926 = vshrl.u32 %v925, 7
    %v927 = vsub.s32 %v924, %v926
    %v928 = vrot.slane %v56, %v927
    %v930 = vunpack.c.l.s4 1983009808
    %v931 = vunpack.c.0.s8 %v930
    %v932 = vlaneseq
    %v933 = vshrl.u32 %v932, 7
    %v934 = vsub.s32 %v931, %v933
    %v935 = vrot.slane %v921, %v934
    %v936 = vcombine.high %v928, %v928
    %v937 = vcombine.high %v935, %v935
    %v938 = vcombine.high %v57, %v57
    %v940 = vunpack.c.l.s4 1983009808
    %v941 = vunpack.c.0.s8 %v940
    %v942 = vlaneseq
    %v943 = vshrl.u32 %v942, 7
    %v944 = vsub.s32 %v941, %v943
    %v945 = vrot.slane %v57, %v944
    %v947 = vunpack.c.l.s4 1983009808
    %v948 = vunpack.c.0.s8 %v947
    %v949 = vlaneseq
    %v950 = vshrl.u32 %v949, 7
    %v951 = vsub.s32 %v948, %v950
    %v952 = vrot.slane %v938, %v951
    %v953 = vcombine.high %v945, %v945
    %v954 = vcombine.high %v952, %v952
    %v955 = vcombine.high %v58, %v58
    %v957 = vunpack.c.l.s4 1983009808
    %v958 = vunpack.c.0.s8 %v957
    %v959 = vlaneseq
    %v960 = vshrl.u32 %v959, 7
    %v961 = vsub.s32 %v958, %v960
    %v962 = vrot.slane %v58, %v961
    %v964 = vunpack.c.l.s4 1983009808
    %v965 = vunpack.c.0.s8 %v964
    %v966 = vlaneseq
    %v967 = vshrl.u32 %v966, 7
    %v968 = vsub.s32 %v965, %v967
    %v969 = vrot.slane %v955, %v968
    %v970 = vcombine.high %v962, %v962
    %v971 = vcombine.high %v969, %v969
    %v972 = vcombine.high %v59, %v59
    %v974 = vunpack.c.l.s4 1983009808
    %v975 = vunpack.c.0.s8 %v974
    %v976 = vlaneseq
    %v977 = vshrl.u32 %v976, 7
    %v978 = vsub.s32 %v975, %v977
    %v979 = vrot.slane %v59, %v978
    %v981 = vunpack.c.l.s4 1983009808
    %v982 = vunpack.c.0.s8 %v981
    %v983 = vlaneseq
    %v984 = vshrl.u32 %v983, 7
    %v985 = vsub.s32 %v982, %v984
    %v986 = vrot.slane %v972, %v985
    %v987 = vcombine.high %v979, %v979
    %v988 = vcombine.high %v986, %v986
    %v989 = vcombine.high %v60, %v60
    %v991 = vunpack.c.l.s4 1983009808
    %v992 = vunpack.c.0.s8 %v991
    %v993 = vlaneseq
    %v994 = vshrl.u32 %v993, 7
    %v995 = vsub.s32 %v992, %v994
    %v996 = vrot.slane %v60, %v995
    %v998 = vunpack.c.l.s4 1983009808
    %v999 = vunpack.c.0.s8 %v998
    %v1000 = vlaneseq
    %v1001 = vshrl.u32 %v1000, 7
    %v1002 = vsub.s32 %v999, %v1001
    %v1003 = vrot.slane %v989, %v1002
    %v1004 = vcombine.high %v996, %v996
    %v1005 = vcombine.high %v1003, %v1003
    %v1006 = vcombine.high %v61, %v61
    %v1008 = vunpack.c.l.s4 1983009808
    %v1009 = vunpack.c.0.s8 %v1008
    %v1010 = vlaneseq
    %v1011 = vshrl.u32 %v1010, 7
    %v1012 = vsub.s32 %v1009, %v1011
    %v1013 = vrot.slane %v61, %v1012
    %v1015 = vunpack.c.l.s4 1983009808
    %v1016 = vunpack.c.0.s8 %v1015
    %v1017 = vlaneseq
    %v1018 = vshrl.u32 %v1017, 7
    %v1019 = vsub.s32 %v1016, %v1018
    %v1020 = vrot.slane %v1006, %v1019
    %v1021 = vcombine.high %v1013, %v1013
    %v1022 = vcombine.high %v1020, %v1020
    %v1023 = vcombine.high %v62, %v62
    %v1025 = vunpack.c.l.s4 1983009808
    %v1026 = vunpack.c.0.s8 %v1025
    %v1027 = vlaneseq
    %v1028 = vshrl.u32 %v1027, 7
    %v1029 = vsub.s32 %v1026, %v1028
    %v1030 = vrot.slane %v62, %v1029
    %v1032 = vunpack.c.l.s4 1983009808
    %v1033 = vunpack.c.0.s8 %v1032
    %v1034 = vlaneseq
    %v1035 = vshrl.u32 %v1034, 7
    %v1036 = vsub.s32 %v1033, %v1035
    %v1037 = vrot.slane %v1023, %v1036
    %v1038 = vcombine.high %v1030, %v1030
    %v1039 = vcombine.high %v1037, %v1037
    %v1040 = vcombine.high %v63, %v63
    %v1042 = vunpack.c.l.s4 1983009808
    %v1043 = vunpack.c.0.s8 %v1042
    %v1044 = vlaneseq
    %v1045 = vshrl.u32 %v1044, 7
    %v1046 = vsub.s32 %v1043, %v1045
    %v1047 = vrot.slane %v63, %v1046
    %v1049 = vunpack.c.l.s4 1983009808
    %v1050 = vunpack.c.0.s8 %v1049
    %v1051 = vlaneseq
    %v1052 = vshrl.u32 %v1051, 7
    %v1053 = vsub.s32 %v1050, %v1052
    %v1054 = vrot.slane %v1040, %v1053
    %v1055 = vcombine.high %v1047, %v1047
    %v1056 = vcombine.high %v1054, %v1054
    %v1057 = vcombine.high %v64, %v64
    %v1059 = vunpack.c.l.s4 1983009808
    %v1060 = vunpack.c.0.s8 %v1059
    %v1061 = vlaneseq
    %v1062 = vshrl.u32 %v1061, 7
    %v1063 = vsub.s32 %v1060, %v1062
    %v1064 = vrot.slane %v64, %v1063
    %v1066 = vunpack.c.l.s4 1983009808
    %v1067 = vunpack.c.0.s8 %v1066
    %v1068 = vlaneseq
    %v1069 = vshrl.u32 %v1068, 7
    %v1070 = vsub.s32 %v1067, %v1069
    %v1071 = vrot.slane %v1057, %v1070
    %v1072 = vcombine.high %v1064, %v1064
    %v1073 = vcombine.high %v1071, %v1071
    %v1074 = vcombine.high %v65, %v65
    %v1076 = vunpack.c.l.s4 1983009808
    %v1077 = vunpack.c.0.s8 %v1076
    %v1078 = vlaneseq
    %v1079 = vshrl.u32 %v1078, 7
    %v1080 = vsub.s32 %v1077, %v1079
    %v1081 = vrot.slane %v65, %v1080
    %v1083 = vunpack.c.l.s4 1983009808
    %v1084 = vunpack.c.0.s8 %v1083
    %v1085 = vlaneseq
    %v1086 = vshrl.u32 %v1085, 7
    %v1087 = vsub.s32 %v1084, %v1086
    %v1088 = vrot.slane %v1074, %v1087
    %v1089 = vcombine.high %v1081, %v1081
    %v1090 = vcombine.high %v1088, %v1088
    %v1091 = vcombine.high %v66, %v66
    %v1093 = vunpack.c.l.s4 1983009808
    %v1094 = vunpack.c.0.s8 %v1093
    %v1095 = vlaneseq
    %v1096 = vshrl.u32 %v1095, 7
    %v1097 = vsub.s32 %v1094, %v1096
    %v1098 = vrot.slane %v66, %v1097
    %v1100 = vunpack.c.l.s4 1983009808
    %v1101 = vunpack.c.0.s8 %v1100
    %v1102 = vlaneseq
    %v1103 = vshrl.u32 %v1102, 7
    %v1104 = vsub.s32 %v1101, %v1103
    %v1105 = vrot.slane %v1091, %v1104
    %v1106 = vcombine.high %v1098, %v1098
    %v1107 = vcombine.high %v1105, %v1105
    %v1108 = vcombine.high %v67, %v67
    %v1110 = vunpack.c.l.s4 1983009808
    %v1111 = vunpack.c.0.s8 %v1110
    %v1112 = vlaneseq
    %v1113 = vshrl.u32 %v1112, 7
    %v1114 = vsub.s32 %v1111, %v1113
    %v1115 = vrot.slane %v67, %v1114
    %v1117 = vunpack.c.l.s4 1983009808
    %v1118 = vunpack.c.0.s8 %v1117
    %v1119 = vlaneseq
    %v1120 = vshrl.u32 %v1119, 7
    %v1121 = vsub.s32 %v1118, %v1120
    %v1122 = vrot.slane %v1108, %v1121
    %v1123 = vcombine.high %v1115, %v1115
    %v1124 = vcombine.high %v1122, %v1122
    %v1125 = vcombine.high %v68, %v68
    %v1127 = vunpack.c.l.s4 1983009808
    %v1128 = vunpack.c.0.s8 %v1127
    %v1129 = vlaneseq
    %v1130 = vshrl.u32 %v1129, 7
    %v1131 = vsub.s32 %v1128, %v1130
    %v1132 = vrot.slane %v68, %v1131
    %v1134 = vunpack.c.l.s4 1983009808
    %v1135 = vunpack.c.0.s8 %v1134
    %v1136 = vlaneseq
    %v1137 = vshrl.u32 %v1136, 7
    %v1138 = vsub.s32 %v1135, %v1137
    %v1139 = vrot.slane %v1125, %v1138
    %v1140 = vcombine.high %v1132, %v1132
    %v1141 = vcombine.high %v1139, %v1139
    %v1142 = vcombine.high %v69, %v69
    %v1144 = vunpack.c.l.s4 1983009808
    %v1145 = vunpack.c.0.s8 %v1144
    %v1146 = vlaneseq
    %v1147 = vshrl.u32 %v1146, 7
    %v1148 = vsub.s32 %v1145, %v1147
    %v1149 = vrot.slane %v69, %v1148
    %v1151 = vunpack.c.l.s4 1983009808
    %v1152 = vunpack.c.0.s8 %v1151
    %v1153 = vlaneseq
    %v1154 = vshrl.u32 %v1153, 7
    %v1155 = vsub.s32 %v1152, %v1154
    %v1156 = vrot.slane %v1142, %v1155
    %v1157 = vcombine.high %v1149, %v1149
    %v1158 = vcombine.high %v1156, %v1156
    %v1159 = vcombine.high %v70, %v70
    %v1161 = vunpack.c.l.s4 1983009808
    %v1162 = vunpack.c.0.s8 %v1161
    %v1163 = vlaneseq
    %v1164 = vshrl.u32 %v1163, 7
    %v1165 = vsub.s32 %v1162, %v1164
    %v1166 = vrot.slane %v70, %v1165
    %v1168 = vunpack.c.l.s4 1983009808
    %v1169 = vunpack.c.0.s8 %v1168
    %v1170 = vlaneseq
    %v1171 = vshrl.u32 %v1170, 7
    %v1172 = vsub.s32 %v1169, %v1171
    %v1173 = vrot.slane %v1159, %v1172
    %v1174 = vcombine.high %v1166, %v1166
    %v1175 = vcombine.high %v1173, %v1173
    %v1176 = vcombine.high %v71, %v71
    %v1178 = vunpack.c.l.s4 1983009808
    %v1179 = vunpack.c.0.s8 %v1178
    %v1180 = vlaneseq
    %v1181 = vshrl.u32 %v1180, 7
    %v1182 = vsub.s32 %v1179, %v1181
    %v1183 = vrot.slane %v71, %v1182
    %v1185 = vunpack.c.l.s4 1983009808
    %v1186 = vunpack.c.0.s8 %v1185
    %v1187 = vlaneseq
    %v1188 = vshrl.u32 %v1187, 7
    %v1189 = vsub.s32 %v1186, %v1188
    %v1190 = vrot.slane %v1176, %v1189
    %v1191 = vcombine.high %v1183, %v1183
    %v1192 = vcombine.high %v1190, %v1190
    %v1193 = vcombine.high %v72, %v72
    %v1195 = vunpack.c.l.s4 1983009808
    %v1196 = vunpack.c.0.s8 %v1195
    %v1197 = vlaneseq
    %v1198 = vshrl.u32 %v1197, 7
    %v1199 = vsub.s32 %v1196, %v1198
    %v1200 = vrot.slane %v72, %v1199
    %v1202 = vunpack.c.l.s4 1983009808
    %v1203 = vunpack.c.0.s8 %v1202
    %v1204 = vlaneseq
    %v1205 = vshrl.u32 %v1204, 7
    %v1206 = vsub.s32 %v1203, %v1205
    %v1207 = vrot.slane %v1193, %v1206
    %v1208 = vcombine.high %v1200, %v1200
    %v1209 = vcombine.high %v1207, %v1207
    %v1210 = vcombine.high %v73, %v73
    %v1212 = vunpack.c.l.s4 1983009808
    %v1213 = vunpack.c.0.s8 %v1212
    %v1214 = vlaneseq
    %v1215 = vshrl.u32 %v1214, 7
    %v1216 = vsub.s32 %v1213, %v1215
    %v1217 = vrot.slane %v73, %v1216
    %v1219 = vunpack.c.l.s4 1983009808
    %v1220 = vunpack.c.0.s8 %v1219
    %v1221 = vlaneseq
    %v1222 = vshrl.u32 %v1221, 7
    %v1223 = vsub.s32 %v1220, %v1222
    %v1224 = vrot.slane %v1210, %v1223
    %v1225 = vcombine.high %v1217, %v1217
    %v1226 = vcombine.high %v1224, %v1224
    %v1227 = vcombine.high %v74, %v74
    %v1229 = vunpack.c.l.s4 1983009808
    %v1230 = vunpack.c.0.s8 %v1229
    %v1231 = vlaneseq
    %v1232 = vshrl.u32 %v1231, 7
    %v1233 = vsub.s32 %v1230, %v1232
    %v1234 = vrot.slane %v74, %v1233
    %v1236 = vunpack.c.l.s4 1983009808
    %v1237 = vunpack.c.0.s8 %v1236
    %v1238 = vlaneseq
    %v1239 = vshrl.u32 %v1238, 7
    %v1240 = vsub.s32 %v1237, %v1239
    %v1241 = vrot.slane %v1227, %v1240
    %v1242 = vcombine.high %v1234, %v1234
    %v1243 = vcombine.high %v1241, %v1241
    %v1244 = vcombine.high %v75, %v75
    %v1246 = vunpack.c.l.s4 1983009808
    %v1247 = vunpack.c.0.s8 %v1246
    %v1248 = vlaneseq
    %v1249 = vshrl.u32 %v1248, 7
    %v1250 = vsub.s32 %v1247, %v1249
    %v1251 = vrot.slane %v75, %v1250
    %v1253 = vunpack.c.l.s4 1983009808
    %v1254 = vunpack.c.0.s8 %v1253
    %v1255 = vlaneseq
    %v1256 = vshrl.u32 %v1255, 7
    %v1257 = vsub.s32 %v1254, %v1256
    %v1258 = vrot.slane %v1244, %v1257
    %v1259 = vcombine.high %v1251, %v1251
    %v1260 = vcombine.high %v1258, %v1258
    %v1261 = vcombine.high %v76, %v76
    %v1263 = vunpack.c.l.s4 1983009808
    %v1264 = vunpack.c.0.s8 %v1263
    %v1265 = vlaneseq
    %v1266 = vshrl.u32 %v1265, 7
    %v1267 = vsub.s32 %v1264, %v1266
    %v1268 = vrot.slane %v76, %v1267
    %v1270 = vunpack.c.l.s4 1983009808
    %v1271 = vunpack.c.0.s8 %v1270
    %v1272 = vlaneseq
    %v1273 = vshrl.u32 %v1272, 7
    %v1274 = vsub.s32 %v1271, %v1273
    %v1275 = vrot.slane %v1261, %v1274
    %v1276 = vcombine.high %v1268, %v1268
    %v1277 = vcombine.high %v1275, %v1275
    %v1278 = vcombine.high %v77, %v77
    %v1280 = vunpack.c.l.s4 1983009808
    %v1281 = vunpack.c.0.s8 %v1280
    %v1282 = vlaneseq
    %v1283 = vshrl.u32 %v1282, 7
    %v1284 = vsub.s32 %v1281, %v1283
    %v1285 = vrot.slane %v77, %v1284
    %v1287 = vunpack.c.l.s4 1983009808
    %v1288 = vunpack.c.0.s8 %v1287
    %v1289 = vlaneseq
    %v1290 = vshrl.u32 %v1289, 7
    %v1291 = vsub.s32 %v1288, %v1290
    %v1292 = vrot.slane %v1278, %v1291
    %v1293 = vcombine.high %v1285, %v1285
    %v1294 = vcombine.high %v1292, %v1292
    %v1295 = vcombine.high %v78, %v78
    %v1297 = vunpack.c.l.s4 1983009808
    %v1298 = vunpack.c.0.s8 %v1297
    %v1299 = vlaneseq
    %v1300 = vshrl.u32 %v1299, 7
    %v1301 = vsub.s32 %v1298, %v1300
    %v1302 = vrot.slane %v78, %v1301
    %v1304 = vunpack.c.l.s4 1983009808
    %v1305 = vunpack.c.0.s8 %v1304
    %v1306 = vlaneseq
    %v1307 = vshrl.u32 %v1306, 7
    %v1308 = vsub.s32 %v1305, %v1307
    %v1309 = vrot.slane %v1295, %v1308
    %v1310 = vcombine.high %v1302, %v1302
    %v1311 = vcombine.high %v1309, %v1309
    %v1312 = vcombine.high %v79, %v79
    %v1314 = vunpack.c.l.s4 1983009808
    %v1315 = vunpack.c.0.s8 %v1314
    %v1316 = vlaneseq
    %v1317 = vshrl.u32 %v1316, 7
    %v1318 = vsub.s32 %v1315, %v1317
    %v1319 = vrot.slane %v79, %v1318
    %v1321 = vunpack.c.l.s4 1983009808
    %v1322 = vunpack.c.0.s8 %v1321
    %v1323 = vlaneseq
    %v1324 = vshrl.u32 %v1323, 7
    %v1325 = vsub.s32 %v1322, %v1324
    %v1326 = vrot.slane %v1312, %v1325
    %v1327 = vcombine.high %v1319, %v1319
    %v1328 = vcombine.high %v1326, %v1326
    %v1329 = vcombine.high %v80, %v80
    %v1331 = vunpack.c.l.s4 1983009808
    %v1332 = vunpack.c.0.s8 %v1331
    %v1333 = vlaneseq
    %v1334 = vshrl.u32 %v1333, 7
    %v1335 = vsub.s32 %v1332, %v1334
    %v1336 = vrot.slane %v80, %v1335
    %v1338 = vunpack.c.l.s4 1983009808
    %v1339 = vunpack.c.0.s8 %v1338
    %v1340 = vlaneseq
    %v1341 = vshrl.u32 %v1340, 7
    %v1342 = vsub.s32 %v1339, %v1341
    %v1343 = vrot.slane %v1329, %v1342
    %v1344 = vcombine.high %v1336, %v1336
    %v1345 = vcombine.high %v1343, %v1343
    %v1346 = vcombine.high %v81, %v81
    %v1348 = vunpack.c.l.s4 1983009808
    %v1349 = vunpack.c.0.s8 %v1348
    %v1350 = vlaneseq
    %v1351 = vshrl.u32 %v1350, 7
    %v1352 = vsub.s32 %v1349, %v1351
    %v1353 = vrot.slane %v81, %v1352
    %v1355 = vunpack.c.l.s4 1983009808
    %v1356 = vunpack.c.0.s8 %v1355
    %v1357 = vlaneseq
    %v1358 = vshrl.u32 %v1357, 7
    %v1359 = vsub.s32 %v1356, %v1358
    %v1360 = vrot.slane %v1346, %v1359
    %v1361 = vcombine.high %v1353, %v1353
    %v1362 = vcombine.high %v1360, %v1360
    %v1363 = vcombine.high %v82, %v82
    %v1365 = vunpack.c.l.s4 1983009808
    %v1366 = vunpack.c.0.s8 %v1365
    %v1367 = vlaneseq
    %v1368 = vshrl.u32 %v1367, 7
    %v1369 = vsub.s32 %v1366, %v1368
    %v1370 = vrot.slane %v82, %v1369
    %v1372 = vunpack.c.l.s4 1983009808
    %v1373 = vunpack.c.0.s8 %v1372
    %v1374 = vlaneseq
    %v1375 = vshrl.u32 %v1374, 7
    %v1376 = vsub.s32 %v1373, %v1375
    %v1377 = vrot.slane %v1363, %v1376
    %v1378 = vcombine.high %v1370, %v1370
    %1614 = vmatprep.subr.mxu0 0.0
    %1615 = vmatpush1.xpose.msra.mxu0 0.0
    %1616 = vmatprep.subr.mxu0 0.0
    %1617 = vmatpush1.xpose.msra.mxu0 0.0
    %1618 = vmatprep.subr.mxu0 0.0
    %1619 = vmatpush1.xpose.msra.mxu0 0.0
    %1620 = vmatprep.subr.mxu0 0.0
    %1621 = vmatpush1.xpose.msra.mxu0 0.0
    %1622 = vmatprep.subr.mxu0 0.0
    %1623 = vmatpush1.xpose.msra.mxu0 0.0
    %1624 = vmatprep.subr.mxu0 0.0
    %1625 = vmatpush1.xpose.msra.mxu0 0.0
    %1626 = vmatprep.subr.mxu0 0.0
    %1627 = vmatpush1.xpose.msra.mxu0 0.0
    %1628 = vmatprep.subr.mxu0 0.0
    %1629 = vmatpush1.xpose.msra.mxu0 0.0
    %1630 = vmatprep.subr.mxu0 0.0
    %1631 = vmatpush1.xpose.msra.mxu0 0.0
    %1632 = vmatprep.subr.mxu0 0.0
    %1633 = vmatpush1.xpose.msra.mxu0 0.0
    %1634 = vmatprep.subr.mxu0 0.0
    %1635 = vmatpush1.xpose.msra.mxu0 0.0
    %1636 = vmatprep.subr.mxu0 0.0
    %1637 = vmatpush1.xpose.msra.mxu0 0.0
    %1638 = vmatprep.subr.mxu0 0.0
    %1639 = vmatpush1.xpose.msra.mxu0 0.0
    %1640 = vmatprep.subr.mxu0 0.0
    %1641 = vmatpush1.xpose.msra.mxu0 0.0
    %1642 = vmatprep.subr.mxu0 0.0
    %1643 = vmatpush1.xpose.msra.mxu0 0.0
    %1644 = vmatprep.subr.mxu0 %v84
    %1645 = vmatpush1.xpose.msra.mxu0 %v83
    %1646 = vmatprep.subr.mxu0 0.0
    %1647 = vmatpush2.xpose.msra.mxu0 0.0
    %1648 = vmatprep.subr.mxu0 0.0
    %1649 = vmatpush2.xpose.msra.mxu0 0.0
    %1650 = vmatprep.subr.mxu0 0.0
    %1651 = vmatpush2.xpose.msra.mxu0 0.0
    %1652 = vmatprep.subr.mxu0 0.0
    %1653 = vmatpush2.xpose.msra.mxu0 0.0
    %1654 = vmatprep.subr.mxu0 0.0
    %1655 = vmatpush2.xpose.msra.mxu0 0.0
    %1656 = vmatprep.subr.mxu0 0.0
    %1657 = vmatpush2.xpose.msra.mxu0 0.0
    %1658 = vmatprep.subr.mxu0 0.0
    %1659 = vmatpush2.xpose.msra.mxu0 0.0
    %1660 = vmatprep.subr.mxu0 0.0
    %1661 = vmatpush2.xpose.msra.mxu0 0.0
    %1662 = vmatprep.subr.mxu0 0.0
    %1663 = vmatpush2.xpose.msra.mxu0 0.0
    %1664 = vmatprep.subr.mxu0 0.0
    %1665 = vmatpush2.xpose.msra.mxu0 0.0
    %1666 = vmatprep.subr.mxu0 0.0
    %1667 = vmatpush2.xpose.msra.mxu0 0.0
    %1668 = vmatprep.subr.mxu0 0.0
    %1669 = vmatpush2.xpose.msra.mxu0 0.0
    %1670 = vmatprep.subr.mxu0 0.0
    %1671 = vmatpush2.xpose.msra.mxu0 0.0
    %1672 = vmatprep.subr.mxu0 0.0
    %1673 = vmatpush2.xpose.msra.mxu0 0.0
    %1674 = vmatprep.subr.mxu0 0.0
    %1675 = vmatpush2.xpose.msra.mxu0 0.0
    %1676 = vmatprep.subr.mxu0 0.0
    %1677 = vmatpush2.xpose.msra.mxu0 0.0
    %1678 = vmatprep.mubr.f32.mxu0 %v392
    %1679 = vmatmul.mubr.f32.gmra.mxu0 %v384
    %v1680 = vpop.f32.mrf.mxu0
    %v1681 = vadd.f32 0.0, %v1680
    %v1682 = vpop.f32.mrf.mxu0
    %1683 = vdwg.mxu0
    %1684 = vmatprep.subr.mxu0 0.0
    %1685 = vmatpush1.xpose.msra.mxu0 0.0
    %1686 = vmatprep.subr.mxu0 0.0
    %1687 = vmatpush1.xpose.msra.mxu0 0.0
    %1688 = vmatprep.subr.mxu0 0.0
    %1689 = vmatpush1.xpose.msra.mxu0 0.0
    %1690 = vmatprep.subr.mxu0 0.0
    %1691 = vmatpush1.xpose.msra.mxu0 0.0
    %1692 = vmatprep.subr.mxu0 0.0
    %1693 = vmatpush1.xpose.msra.mxu0 0.0
    %1694 = vmatprep.subr.mxu0 0.0
    %1695 = vmatpush1.xpose.msra.mxu0 0.0
    %1696 = vmatprep.subr.mxu0 0.0
    %1697 = vmatpush1.xpose.msra.mxu0 0.0
    %1698 = vmatprep.subr.mxu0 0.0
    %1699 = vmatpush1.xpose.msra.mxu0 0.0
    %1700 = vmatprep.subr.mxu0 0.0
    %1701 = vmatpush1.xpose.msra.mxu0 0.0
    %1702 = vmatprep.subr.mxu0 0.0
    %1703 = vmatpush1.xpose.msra.mxu0 0.0
    %1704 = vmatprep.subr.mxu0 0.0
    %1705 = vmatpush1.xpose.msra.mxu0 0.0
    %1706 = vmatprep.subr.mxu0 0.0
    %1707 = vmatpush1.xpose.msra.mxu0 0.0
    %1708 = vmatprep.subr.mxu0 0.0
    %1709 = vmatpush1.xpose.msra.mxu0 0.0
    %1710 = vmatprep.subr.mxu0 0.0
    %1711 = vmatpush1.xpose.msra.mxu0 0.0
    %1712 = vmatprep.subr.mxu0 0.0
    %1713 = vmatpush1.xpose.msra.mxu0 0.0
    %1714 = vmatprep.subr.mxu0 %v86
    %1715 = vmatpush1.xpose.msra.mxu0 %v85
    %1716 = vmatprep.subr.mxu0 0.0
    %1717 = vmatpush2.xpose.msra.mxu0 0.0
    %1718 = vmatprep.subr.mxu0 0.0
    %1719 = vmatpush2.xpose.msra.mxu0 0.0
    %1720 = vmatprep.subr.mxu0 0.0
    %1721 = vmatpush2.xpose.msra.mxu0 0.0
    %1722 = vmatprep.subr.mxu0 0.0
    %1723 = vmatpush2.xpose.msra.mxu0 0.0
    %1724 = vmatprep.subr.mxu0 0.0
    %1725 = vmatpush2.xpose.msra.mxu0 0.0
    %1726 = vmatprep.subr.mxu0 0.0
    %1727 = vmatpush2.xpose.msra.mxu0 0.0
    %1728 = vmatprep.subr.mxu0 0.0
    %1729 = vmatpush2.xpose.msra.mxu0 0.0
    %1730 = vmatprep.subr.mxu0 0.0
    %1731 = vmatpush2.xpose.msra.mxu0 0.0
    %1732 = vmatprep.subr.mxu0 0.0
    %1733 = vmatpush2.xpose.msra.mxu0 0.0
    %1734 = vmatprep.subr.mxu0 0.0
    %1735 = vmatpush2.xpose.msra.mxu0 0.0
    %1736 = vmatprep.subr.mxu0 0.0
    %1737 = vmatpush2.xpose.msra.mxu0 0.0
    %1738 = vmatprep.subr.mxu0 0.0
    %1739 = vmatpush2.xpose.msra.mxu0 0.0
    %1740 = vmatprep.subr.mxu0 0.0
    %1741 = vmatpush2.xpose.msra.mxu0 0.0
    %1742 = vmatprep.subr.mxu0 0.0
    %1743 = vmatpush2.xpose.msra.mxu0 0.0
    %1744 = vmatprep.subr.mxu0 0.0
    %1745 = vmatpush2.xpose.msra.mxu0 0.0
    %1746 = vmatprep.subr.mxu0 0.0
    %1747 = vmatpush2.xpose.msra.mxu0 0.0
    %1748 = vmatprep.mubr.f32.mxu0 %v393
    %1749 = vmatmul.mubr.f32.gmra.mxu0 %v391
    %v1750 = vpop.f32.mrf.mxu0
    %v1751 = vadd.f32 %v1681, %v1750
    %v1752 = vpop.f32.mrf.mxu0
    %1753 = vdwg.mxu0
    %1754 = vmatprep.subr.mxu0 0.0
    %1755 = vmatpush1.xpose.msra.mxu0 0.0
    %1756 = vmatprep.subr.mxu0 0.0
    %1757 = vmatpush1.xpose.msra.mxu0 0.0
    %1758 = vmatprep.subr.mxu0 0.0
    %1759 = vmatpush1.xpose.msra.mxu0 0.0
    %1760 = vmatprep.subr.mxu0 0.0
    %1761 = vmatpush1.xpose.msra.mxu0 0.0
    %1762 = vmatprep.subr.mxu0 0.0
    %1763 = vmatpush1.xpose.msra.mxu0 0.0
    %1764 = vmatprep.subr.mxu0 0.0
    %1765 = vmatpush1.xpose.msra.mxu0 0.0
    %1766 = vmatprep.subr.mxu0 0.0
    %1767 = vmatpush1.xpose.msra.mxu0 0.0
    %1768 = vmatprep.subr.mxu0 0.0
    %1769 = vmatpush1.xpose.msra.mxu0 0.0
    %1770 = vmatprep.subr.mxu0 0.0
    %1771 = vmatpush1.xpose.msra.mxu0 0.0
    %1772 = vmatprep.subr.mxu0 0.0
    %1773 = vmatpush1.xpose.msra.mxu0 0.0
    %1774 = vmatprep.subr.mxu0 0.0
    %1775 = vmatpush1.xpose.msra.mxu0 0.0
    %1776 = vmatprep.subr.mxu0 0.0
    %1777 = vmatpush1.xpose.msra.mxu0 0.0
    %1778 = vmatprep.subr.mxu0 0.0
    %1779 = vmatpush1.xpose.msra.mxu0 0.0
    %1780 = vmatprep.subr.mxu0 0.0
    %1781 = vmatpush1.xpose.msra.mxu0 0.0
    %1782 = vmatprep.subr.mxu0 0.0
    %1783 = vmatpush1.xpose.msra.mxu0 0.0
    %1784 = vmatprep.subr.mxu0 %v88
    %1785 = vmatpush1.xpose.msra.mxu0 %v87
    %1786 = vmatprep.subr.mxu0 0.0
    %1787 = vmatpush2.xpose.msra.mxu0 0.0
    %1788 = vmatprep.subr.mxu0 0.0
    %1789 = vmatpush2.xpose.msra.mxu0 0.0
    %1790 = vmatprep.subr.mxu0 0.0
    %1791 = vmatpush2.xpose.msra.mxu0 0.0
    %1792 = vmatprep.subr.mxu0 0.0
    %1793 = vmatpush2.xpose.msra.mxu0 0.0
    %1794 = vmatprep.subr.mxu0 0.0
    %1795 = vmatpush2.xpose.msra.mxu0 0.0
    %1796 = vmatprep.subr.mxu0 0.0
    %1797 = vmatpush2.xpose.msra.mxu0 0.0
    %1798 = vmatprep.subr.mxu0 0.0
    %1799 = vmatpush2.xpose.msra.mxu0 0.0
    %1800 = vmatprep.subr.mxu0 0.0
    %1801 = vmatpush2.xpose.msra.mxu0 0.0
    %1802 = vmatprep.subr.mxu0 0.0
    %1803 = vmatpush2.xpose.msra.mxu0 0.0
    %1804 = vmatprep.subr.mxu0 0.0
    %1805 = vmatpush2.xpose.msra.mxu0 0.0
    %1806 = vmatprep.subr.mxu0 0.0
    %1807 = vmatpush2.xpose.msra.mxu0 0.0
    %1808 = vmatprep.subr.mxu0 0.0
    %1809 = vmatpush2.xpose.msra.mxu0 0.0
    %1810 = vmatprep.subr.mxu0 0.0
    %1811 = vmatpush2.xpose.msra.mxu0 0.0
    %1812 = vmatprep.subr.mxu0 0.0
    %1813 = vmatpush2.xpose.msra.mxu0 0.0
    %1814 = vmatprep.subr.mxu0 0.0
    %1815 = vmatpush2.xpose.msra.mxu0 0.0
    %1816 = vmatprep.subr.mxu0 0.0
    %1817 = vmatpush2.xpose.msra.mxu0 0.0
    %1818 = vmatprep.mubr.f32.mxu0 %v409
    %1819 = vmatmul.mubr.f32.gmra.mxu0 %v401
    %v1820 = vpop.f32.mrf.mxu0
    %v1821 = vadd.f32 %v1751, %v1820
    %v1822 = vpop.f32.mrf.mxu0
    %1823 = vdwg.mxu0
    %1824 = vmatprep.subr.mxu0 0.0
    %1825 = vmatpush1.xpose.msra.mxu0 0.0
    %1826 = vmatprep.subr.mxu0 0.0
    %1827 = vmatpush1.xpose.msra.mxu0 0.0
    %1828 = vmatprep.subr.mxu0 0.0
    %1829 = vmatpush1.xpose.msra.mxu0 0.0
    %1830 = vmatprep.subr.mxu0 0.0
    %1831 = vmatpush1.xpose.msra.mxu0 0.0
    %1832 = vmatprep.subr.mxu0 0.0
    %1833 = vmatpush1.xpose.msra.mxu0 0.0
    %1834 = vmatprep.subr.mxu0 0.0
    %1835 = vmatpush1.xpose.msra.mxu0 0.0
    %1836 = vmatprep.subr.mxu0 0.0
    %1837 = vmatpush1.xpose.msra.mxu0 0.0
    %1838 = vmatprep.subr.mxu0 0.0
    %1839 = vmatpush1.xpose.msra.mxu0 0.0
    %1840 = vmatprep.subr.mxu0 0.0
    %1841 = vmatpush1.xpose.msra.mxu0 0.0
    %1842 = vmatprep.subr.mxu0 0.0
    %1843 = vmatpush1.xpose.msra.mxu0 0.0
    %1844 = vmatprep.subr.mxu0 0.0
    %1845 = vmatpush1.xpose.msra.mxu0 0.0
    %1846 = vmatprep.subr.mxu0 0.0
    %1847 = vmatpush1.xpose.msra.mxu0 0.0
    %1848 = vmatprep.subr.mxu0 0.0
    %1849 = vmatpush1.xpose.msra.mxu0 0.0
    %1850 = vmatprep.subr.mxu0 0.0
    %1851 = vmatpush1.xpose.msra.mxu0 0.0
    %1852 = vmatprep.subr.mxu0 0.0
    %1853 = vmatpush1.xpose.msra.mxu0 0.0
    %1854 = vmatprep.subr.mxu0 %v90
    %1855 = vmatpush1.xpose.msra.mxu0 %v89
    %1856 = vmatprep.subr.mxu0 0.0
    %1857 = vmatpush2.xpose.msra.mxu0 0.0
    %1858 = vmatprep.subr.mxu0 0.0
    %1859 = vmatpush2.xpose.msra.mxu0 0.0
    %1860 = vmatprep.subr.mxu0 0.0
    %1861 = vmatpush2.xpose.msra.mxu0 0.0
    %1862 = vmatprep.subr.mxu0 0.0
    %1863 = vmatpush2.xpose.msra.mxu0 0.0
    %1864 = vmatprep.subr.mxu0 0.0
    %1865 = vmatpush2.xpose.msra.mxu0 0.0
    %1866 = vmatprep.subr.mxu0 0.0
    %1867 = vmatpush2.xpose.msra.mxu0 0.0
    %1868 = vmatprep.subr.mxu0 0.0
    %1869 = vmatpush2.xpose.msra.mxu0 0.0
    %1870 = vmatprep.subr.mxu0 0.0
    %1871 = vmatpush2.xpose.msra.mxu0 0.0
    %1872 = vmatprep.subr.mxu0 0.0
    %1873 = vmatpush2.xpose.msra.mxu0 0.0
    %1874 = vmatprep.subr.mxu0 0.0
    %1875 = vmatpush2.xpose.msra.mxu0 0.0
    %1876 = vmatprep.subr.mxu0 0.0
    %1877 = vmatpush2.xpose.msra.mxu0 0.0
    %1878 = vmatprep.subr.mxu0 0.0
    %1879 = vmatpush2.xpose.msra.mxu0 0.0
    %1880 = vmatprep.subr.mxu0 0.0
    %1881 = vmatpush2.xpose.msra.mxu0 0.0
    %1882 = vmatprep.subr.mxu0 0.0
    %1883 = vmatpush2.xpose.msra.mxu0 0.0
    %1884 = vmatprep.subr.mxu0 0.0
    %1885 = vmatpush2.xpose.msra.mxu0 0.0
    %1886 = vmatprep.subr.mxu0 0.0
    %1887 = vmatpush2.xpose.msra.mxu0 0.0
    %1888 = vmatprep.mubr.f32.mxu0 %v410
    %1889 = vmatmul.mubr.f32.gmra.mxu0 %v408
    %v1890 = vpop.f32.mrf.mxu0
    %v1891 = vadd.f32 %v1821, %v1890
    %v1892 = vpop.f32.mrf.mxu0
    %1893 = vdwg.mxu0
    %1894 = vmatprep.subr.mxu0 0.0
    %1895 = vmatpush1.xpose.msra.mxu0 0.0
    %1896 = vmatprep.subr.mxu0 0.0
    %1897 = vmatpush1.xpose.msra.mxu0 0.0
    %1898 = vmatprep.subr.mxu0 0.0
    %1899 = vmatpush1.xpose.msra.mxu0 0.0
    %1900 = vmatprep.subr.mxu0 0.0
    %1901 = vmatpush1.xpose.msra.mxu0 0.0
    %1902 = vmatprep.subr.mxu0 0.0
    %1903 = vmatpush1.xpose.msra.mxu0 0.0
    %1904 = vmatprep.subr.mxu0 0.0
    %1905 = vmatpush1.xpose.msra.mxu0 0.0
    %1906 = vmatprep.subr.mxu0 0.0
    %1907 = vmatpush1.xpose.msra.mxu0 0.0
    %1908 = vmatprep.subr.mxu0 0.0
    %1909 = vmatpush1.xpose.msra.mxu0 0.0
    %1910 = vmatprep.subr.mxu0 0.0
    %1911 = vmatpush1.xpose.msra.mxu0 0.0
    %1912 = vmatprep.subr.mxu0 0.0
    %1913 = vmatpush1.xpose.msra.mxu0 0.0
    %1914 = vmatprep.subr.mxu0 0.0
    %1915 = vmatpush1.xpose.msra.mxu0 0.0
    %1916 = vmatprep.subr.mxu0 0.0
    %1917 = vmatpush1.xpose.msra.mxu0 0.0
    %1918 = vmatprep.subr.mxu0 0.0
    %1919 = vmatpush1.xpose.msra.mxu0 0.0
    %1920 = vmatprep.subr.mxu0 0.0
    %1921 = vmatpush1.xpose.msra.mxu0 0.0
    %1922 = vmatprep.subr.mxu0 0.0
    %1923 = vmatpush1.xpose.msra.mxu0 0.0
    %1924 = vmatprep.subr.mxu0 %v92
    %1925 = vmatpush1.xpose.msra.mxu0 %v91
    %1926 = vmatprep.subr.mxu0 0.0
    %1927 = vmatpush2.xpose.msra.mxu0 0.0
    %1928 = vmatprep.subr.mxu0 0.0
    %1929 = vmatpush2.xpose.msra.mxu0 0.0
    %1930 = vmatprep.subr.mxu0 0.0
    %1931 = vmatpush2.xpose.msra.mxu0 0.0
    %1932 = vmatprep.subr.mxu0 0.0
    %1933 = vmatpush2.xpose.msra.mxu0 0.0
    %1934 = vmatprep.subr.mxu0 0.0
    %1935 = vmatpush2.xpose.msra.mxu0 0.0
    %1936 = vmatprep.subr.mxu0 0.0
    %1937 = vmatpush2.xpose.msra.mxu0 0.0
    %1938 = vmatprep.subr.mxu0 0.0
    %1939 = vmatpush2.xpose.msra.mxu0 0.0
    %1940 = vmatprep.subr.mxu0 0.0
    %1941 = vmatpush2.xpose.msra.mxu0 0.0
    %1942 = vmatprep.subr.mxu0 0.0
    %1943 = vmatpush2.xpose.msra.mxu0 0.0
    %1944 = vmatprep.subr.mxu0 0.0
    %1945 = vmatpush2.xpose.msra.mxu0 0.0
    %1946 = vmatprep.subr.mxu0 0.0
    %1947 = vmatpush2.xpose.msra.mxu0 0.0
    %1948 = vmatprep.subr.mxu0 0.0
    %1949 = vmatpush2.xpose.msra.mxu0 0.0
    %1950 = vmatprep.subr.mxu0 0.0
    %1951 = vmatpush2.xpose.msra.mxu0 0.0
    %1952 = vmatprep.subr.mxu0 0.0
    %1953 = vmatpush2.xpose.msra.mxu0 0.0
    %1954 = vmatprep.subr.mxu0 0.0
    %1955 = vmatpush2.xpose.msra.mxu0 0.0
    %1956 = vmatprep.subr.mxu0 0.0
    %1957 = vmatpush2.xpose.msra.mxu0 0.0
    %1958 = vmatprep.mubr.f32.mxu0 %v426
    %1959 = vmatmul.mubr.f32.gmra.mxu0 %v418
    %v1960 = vpop.f32.mrf.mxu0
    %v1961 = vadd.f32 %v1891, %v1960
    %v1962 = vpop.f32.mrf.mxu0
    %1963 = vdwg.mxu0
    %1964 = vmatprep.subr.mxu0 0.0
    %1965 = vmatpush1.xpose.msra.mxu0 0.0
    %1966 = vmatprep.subr.mxu0 0.0
    %1967 = vmatpush1.xpose.msra.mxu0 0.0
    %1968 = vmatprep.subr.mxu0 0.0
    %1969 = vmatpush1.xpose.msra.mxu0 0.0
    %1970 = vmatprep.subr.mxu0 0.0
    %1971 = vmatpush1.xpose.msra.mxu0 0.0
    %1972 = vmatprep.subr.mxu0 0.0
    %1973 = vmatpush1.xpose.msra.mxu0 0.0
    %1974 = vmatprep.subr.mxu0 0.0
    %1975 = vmatpush1.xpose.msra.mxu0 0.0
    %1976 = vmatprep.subr.mxu0 0.0
    %1977 = vmatpush1.xpose.msra.mxu0 0.0
    %1978 = vmatprep.subr.mxu0 0.0
    %1979 = vmatpush1.xpose.msra.mxu0 0.0
    %1980 = vmatprep.subr.mxu0 0.0
    %1981 = vmatpush1.xpose.msra.mxu0 0.0
    %1982 = vmatprep.subr.mxu0 0.0
    %1983 = vmatpush1.xpose.msra.mxu0 0.0
    %1984 = vmatprep.subr.mxu0 0.0
    %1985 = vmatpush1.xpose.msra.mxu0 0.0
    %1986 = vmatprep.subr.mxu0 0.0
    %1987 = vmatpush1.xpose.msra.mxu0 0.0
    %1988 = vmatprep.subr.mxu0 0.0
    %1989 = vmatpush1.xpose.msra.mxu0 0.0
    %1990 = vmatprep.subr.mxu0 0.0
    %1991 = vmatpush1.xpose.msra.mxu0 0.0
    %1992 = vmatprep.subr.mxu0 0.0
    %1993 = vmatpush1.xpose.msra.mxu0 0.0
    %1994 = vmatprep.subr.mxu0 %v94
    %1995 = vmatpush1.xpose.msra.mxu0 %v93
    %1996 = vmatprep.subr.mxu0 0.0
    %1997 = vmatpush2.xpose.msra.mxu0 0.0
    %1998 = vmatprep.subr.mxu0 0.0
    %1999 = vmatpush2.xpose.msra.mxu0 0.0
    %2000 = vmatprep.subr.mxu0 0.0
    %2001 = vmatpush2.xpose.msra.mxu0 0.0
    %2002 = vmatprep.subr.mxu0 0.0
    %2003 = vmatpush2.xpose.msra.mxu0 0.0
    %2004 = vmatprep.subr.mxu0 0.0
    %2005 = vmatpush2.xpose.msra.mxu0 0.0
    %2006 = vmatprep.subr.mxu0 0.0
    %2007 = vmatpush2.xpose.msra.mxu0 0.0
    %2008 = vmatprep.subr.mxu0 0.0
    %2009 = vmatpush2.xpose.msra.mxu0 0.0
    %2010 = vmatprep.subr.mxu0 0.0
    %2011 = vmatpush2.xpose.msra.mxu0 0.0
    %2012 = vmatprep.subr.mxu0 0.0
    %2013 = vmatpush2.xpose.msra.mxu0 0.0
    %2014 = vmatprep.subr.mxu0 0.0
    %2015 = vmatpush2.xpose.msra.mxu0 0.0
    %2016 = vmatprep.subr.mxu0 0.0
    %2017 = vmatpush2.xpose.msra.mxu0 0.0
    %2018 = vmatprep.subr.mxu0 0.0
    %2019 = vmatpush2.xpose.msra.mxu0 0.0
    %2020 = vmatprep.subr.mxu0 0.0
    %2021 = vmatpush2.xpose.msra.mxu0 0.0
    %2022 = vmatprep.subr.mxu0 0.0
    %2023 = vmatpush2.xpose.msra.mxu0 0.0
    %2024 = vmatprep.subr.mxu0 0.0
    %2025 = vmatpush2.xpose.msra.mxu0 0.0
    %2026 = vmatprep.subr.mxu0 0.0
    %2027 = vmatpush2.xpose.msra.mxu0 0.0
    %2028 = vmatprep.mubr.f32.mxu0 %v427
    %2029 = vmatmul.mubr.f32.gmra.mxu0 %v425
    %v2030 = vpop.f32.mrf.mxu0
    %v2031 = vadd.f32 %v1961, %v2030
    %v2032 = vpop.f32.mrf.mxu0
    %2033 = vdwg.mxu0
    %2034 = vmatprep.subr.mxu0 0.0
    %2035 = vmatpush1.xpose.msra.mxu0 0.0
    %2036 = vmatprep.subr.mxu0 0.0
    %2037 = vmatpush1.xpose.msra.mxu0 0.0
    %2038 = vmatprep.subr.mxu0 0.0
    %2039 = vmatpush1.xpose.msra.mxu0 0.0
    %2040 = vmatprep.subr.mxu0 0.0
    %2041 = vmatpush1.xpose.msra.mxu0 0.0
    %2042 = vmatprep.subr.mxu0 0.0
    %2043 = vmatpush1.xpose.msra.mxu0 0.0
    %2044 = vmatprep.subr.mxu0 0.0
    %2045 = vmatpush1.xpose.msra.mxu0 0.0
    %2046 = vmatprep.subr.mxu0 0.0
    %2047 = vmatpush1.xpose.msra.mxu0 0.0
    %2048 = vmatprep.subr.mxu0 0.0
    %2049 = vmatpush1.xpose.msra.mxu0 0.0
    %2050 = vmatprep.subr.mxu0 0.0
    %2051 = vmatpush1.xpose.msra.mxu0 0.0
    %2052 = vmatprep.subr.mxu0 0.0
    %2053 = vmatpush1.xpose.msra.mxu0 0.0
    %2054 = vmatprep.subr.mxu0 0.0
    %2055 = vmatpush1.xpose.msra.mxu0 0.0
    %2056 = vmatprep.subr.mxu0 0.0
    %2057 = vmatpush1.xpose.msra.mxu0 0.0
    %2058 = vmatprep.subr.mxu0 0.0
    %2059 = vmatpush1.xpose.msra.mxu0 0.0
    %2060 = vmatprep.subr.mxu0 0.0
    %2061 = vmatpush1.xpose.msra.mxu0 0.0
    %2062 = vmatprep.subr.mxu0 0.0
    %2063 = vmatpush1.xpose.msra.mxu0 0.0
    %2064 = vmatprep.subr.mxu0 %v96
    %2065 = vmatpush1.xpose.msra.mxu0 %v95
    %2066 = vmatprep.subr.mxu0 0.0
    %2067 = vmatpush2.xpose.msra.mxu0 0.0
    %2068 = vmatprep.subr.mxu0 0.0
    %2069 = vmatpush2.xpose.msra.mxu0 0.0
    %2070 = vmatprep.subr.mxu0 0.0
    %2071 = vmatpush2.xpose.msra.mxu0 0.0
    %2072 = vmatprep.subr.mxu0 0.0
    %2073 = vmatpush2.xpose.msra.mxu0 0.0
    %2074 = vmatprep.subr.mxu0 0.0
    %2075 = vmatpush2.xpose.msra.mxu0 0.0
    %2076 = vmatprep.subr.mxu0 0.0
    %2077 = vmatpush2.xpose.msra.mxu0 0.0
    %2078 = vmatprep.subr.mxu0 0.0
    %2079 = vmatpush2.xpose.msra.mxu0 0.0
    %2080 = vmatprep.subr.mxu0 0.0
    %2081 = vmatpush2.xpose.msra.mxu0 0.0
    %2082 = vmatprep.subr.mxu0 0.0
    %2083 = vmatpush2.xpose.msra.mxu0 0.0
    %2084 = vmatprep.subr.mxu0 0.0
    %2085 = vmatpush2.xpose.msra.mxu0 0.0
    %2086 = vmatprep.subr.mxu0 0.0
    %2087 = vmatpush2.xpose.msra.mxu0 0.0
    %2088 = vmatprep.subr.mxu0 0.0
    %2089 = vmatpush2.xpose.msra.mxu0 0.0
    %2090 = vmatprep.subr.mxu0 0.0
    %2091 = vmatpush2.xpose.msra.mxu0 0.0
    %2092 = vmatprep.subr.mxu0 0.0
    %2093 = vmatpush2.xpose.msra.mxu0 0.0
    %2094 = vmatprep.subr.mxu0 0.0
    %2095 = vmatpush2.xpose.msra.mxu0 0.0
    %2096 = vmatprep.subr.mxu0 0.0
    %2097 = vmatpush2.xpose.msra.mxu0 0.0
    %2098 = vmatprep.mubr.f32.mxu0 %v443
    %2099 = vmatmul.mubr.f32.gmra.mxu0 %v435
    %v2100 = vpop.f32.mrf.mxu0
    %v2101 = vadd.f32 %v2031, %v2100
    %v2102 = vpop.f32.mrf.mxu0
    %2103 = vdwg.mxu0
    %2104 = vmatprep.subr.mxu0 0.0
    %2105 = vmatpush1.xpose.msra.mxu0 0.0
    %2106 = vmatprep.subr.mxu0 0.0
    %2107 = vmatpush1.xpose.msra.mxu0 0.0
    %2108 = vmatprep.subr.mxu0 0.0
    %2109 = vmatpush1.xpose.msra.mxu0 0.0
    %2110 = vmatprep.subr.mxu0 0.0
    %2111 = vmatpush1.xpose.msra.mxu0 0.0
    %2112 = vmatprep.subr.mxu0 0.0
    %2113 = vmatpush1.xpose.msra.mxu0 0.0
    %2114 = vmatprep.subr.mxu0 0.0
    %2115 = vmatpush1.xpose.msra.mxu0 0.0
    %2116 = vmatprep.subr.mxu0 0.0
    %2117 = vmatpush1.xpose.msra.mxu0 0.0
    %2118 = vmatprep.subr.mxu0 0.0
    %2119 = vmatpush1.xpose.msra.mxu0 0.0
    %2120 = vmatprep.subr.mxu0 0.0
    %2121 = vmatpush1.xpose.msra.mxu0 0.0
    %2122 = vmatprep.subr.mxu0 0.0
    %2123 = vmatpush1.xpose.msra.mxu0 0.0
    %2124 = vmatprep.subr.mxu0 0.0
    %2125 = vmatpush1.xpose.msra.mxu0 0.0
    %2126 = vmatprep.subr.mxu0 0.0
    %2127 = vmatpush1.xpose.msra.mxu0 0.0
    %2128 = vmatprep.subr.mxu0 0.0
    %2129 = vmatpush1.xpose.msra.mxu0 0.0
    %2130 = vmatprep.subr.mxu0 0.0
    %2131 = vmatpush1.xpose.msra.mxu0 0.0
    %2132 = vmatprep.subr.mxu0 0.0
    %2133 = vmatpush1.xpose.msra.mxu0 0.0
    %2134 = vmatprep.subr.mxu0 %v98
    %2135 = vmatpush1.xpose.msra.mxu0 %v97
    %2136 = vmatprep.subr.mxu0 0.0
    %2137 = vmatpush2.xpose.msra.mxu0 0.0
    %2138 = vmatprep.subr.mxu0 0.0
    %2139 = vmatpush2.xpose.msra.mxu0 0.0
    %2140 = vmatprep.subr.mxu0 0.0
    %2141 = vmatpush2.xpose.msra.mxu0 0.0
    %2142 = vmatprep.subr.mxu0 0.0
    %2143 = vmatpush2.xpose.msra.mxu0 0.0
    %2144 = vmatprep.subr.mxu0 0.0
    %2145 = vmatpush2.xpose.msra.mxu0 0.0
    %2146 = vmatprep.subr.mxu0 0.0
    %2147 = vmatpush2.xpose.msra.mxu0 0.0
    %2148 = vmatprep.subr.mxu0 0.0
    %2149 = vmatpush2.xpose.msra.mxu0 0.0
    %2150 = vmatprep.subr.mxu0 0.0
    %2151 = vmatpush2.xpose.msra.mxu0 0.0
    %2152 = vmatprep.subr.mxu0 0.0
    %2153 = vmatpush2.xpose.msra.mxu0 0.0
    %2154 = vmatprep.subr.mxu0 0.0
    %2155 = vmatpush2.xpose.msra.mxu0 0.0
    %2156 = vmatprep.subr.mxu0 0.0
    %2157 = vmatpush2.xpose.msra.mxu0 0.0
    %2158 = vmatprep.subr.mxu0 0.0
    %2159 = vmatpush2.xpose.msra.mxu0 0.0
    %2160 = vmatprep.subr.mxu0 0.0
    %2161 = vmatpush2.xpose.msra.mxu0 0.0
    %2162 = vmatprep.subr.mxu0 0.0
    %2163 = vmatpush2.xpose.msra.mxu0 0.0
    %2164 = vmatprep.subr.mxu0 0.0
    %2165 = vmatpush2.xpose.msra.mxu0 0.0
    %2166 = vmatprep.subr.mxu0 0.0
    %2167 = vmatpush2.xpose.msra.mxu0 0.0
    %2168 = vmatprep.mubr.f32.mxu0 %v444
    %2169 = vmatmul.mubr.f32.gmra.mxu0 %v442
    %v2170 = vpop.f32.mrf.mxu0
    %v2171 = vadd.f32 %v2101, %v2170
    %v2172 = vpop.f32.mrf.mxu0
    %2173 = vdwg.mxu0
    %2174 = vmatprep.subr.mxu0 0.0
    %2175 = vmatpush1.xpose.msra.mxu0 0.0
    %2176 = vmatprep.subr.mxu0 0.0
    %2177 = vmatpush1.xpose.msra.mxu0 0.0
    %2178 = vmatprep.subr.mxu0 0.0
    %2179 = vmatpush1.xpose.msra.mxu0 0.0
    %2180 = vmatprep.subr.mxu0 0.0
    %2181 = vmatpush1.xpose.msra.mxu0 0.0
    %2182 = vmatprep.subr.mxu0 0.0
    %2183 = vmatpush1.xpose.msra.mxu0 0.0
    %2184 = vmatprep.subr.mxu0 0.0
    %2185 = vmatpush1.xpose.msra.mxu0 0.0
    %2186 = vmatprep.subr.mxu0 0.0
    %2187 = vmatpush1.xpose.msra.mxu0 0.0
    %2188 = vmatprep.subr.mxu0 0.0
    %2189 = vmatpush1.xpose.msra.mxu0 0.0
    %2190 = vmatprep.subr.mxu0 0.0
    %2191 = vmatpush1.xpose.msra.mxu0 0.0
    %2192 = vmatprep.subr.mxu0 0.0
    %2193 = vmatpush1.xpose.msra.mxu0 0.0
    %2194 = vmatprep.subr.mxu0 0.0
    %2195 = vmatpush1.xpose.msra.mxu0 0.0
    %2196 = vmatprep.subr.mxu0 0.0
    %2197 = vmatpush1.xpose.msra.mxu0 0.0
    %2198 = vmatprep.subr.mxu0 0.0
    %2199 = vmatpush1.xpose.msra.mxu0 0.0
    %2200 = vmatprep.subr.mxu0 0.0
    %2201 = vmatpush1.xpose.msra.mxu0 0.0
    %2202 = vmatprep.subr.mxu0 0.0
    %2203 = vmatpush1.xpose.msra.mxu0 0.0
    %2204 = vmatprep.subr.mxu0 %v100
    %2205 = vmatpush1.xpose.msra.mxu0 %v99
    %2206 = vmatprep.subr.mxu0 0.0
    %2207 = vmatpush2.xpose.msra.mxu0 0.0
    %2208 = vmatprep.subr.mxu0 0.0
    %2209 = vmatpush2.xpose.msra.mxu0 0.0
    %2210 = vmatprep.subr.mxu0 0.0
    %2211 = vmatpush2.xpose.msra.mxu0 0.0
    %2212 = vmatprep.subr.mxu0 0.0
    %2213 = vmatpush2.xpose.msra.mxu0 0.0
    %2214 = vmatprep.subr.mxu0 0.0
    %2215 = vmatpush2.xpose.msra.mxu0 0.0
    %2216 = vmatprep.subr.mxu0 0.0
    %2217 = vmatpush2.xpose.msra.mxu0 0.0
    %2218 = vmatprep.subr.mxu0 0.0
    %2219 = vmatpush2.xpose.msra.mxu0 0.0
    %2220 = vmatprep.subr.mxu0 0.0
    %2221 = vmatpush2.xpose.msra.mxu0 0.0
    %2222 = vmatprep.subr.mxu0 0.0
    %2223 = vmatpush2.xpose.msra.mxu0 0.0
    %2224 = vmatprep.subr.mxu0 0.0
    %2225 = vmatpush2.xpose.msra.mxu0 0.0
    %2226 = vmatprep.subr.mxu0 0.0
    %2227 = vmatpush2.xpose.msra.mxu0 0.0
    %2228 = vmatprep.subr.mxu0 0.0
    %2229 = vmatpush2.xpose.msra.mxu0 0.0
    %2230 = vmatprep.subr.mxu0 0.0
    %2231 = vmatpush2.xpose.msra.mxu0 0.0
    %2232 = vmatprep.subr.mxu0 0.0
    %2233 = vmatpush2.xpose.msra.mxu0 0.0
    %2234 = vmatprep.subr.mxu0 0.0
    %2235 = vmatpush2.xpose.msra.mxu0 0.0
    %2236 = vmatprep.subr.mxu0 0.0
    %2237 = vmatpush2.xpose.msra.mxu0 0.0
    %2238 = vmatprep.mubr.f32.mxu0 %v460
    %2239 = vmatmul.mubr.f32.gmra.mxu0 %v452
    %v2240 = vpop.f32.mrf.mxu0
    %v2241 = vadd.f32 %v2171, %v2240
    %v2242 = vpop.f32.mrf.mxu0
    %2243 = vdwg.mxu0
    %2244 = vmatprep.subr.mxu0 0.0
    %2245 = vmatpush1.xpose.msra.mxu0 0.0
    %2246 = vmatprep.subr.mxu0 0.0
    %2247 = vmatpush1.xpose.msra.mxu0 0.0
    %2248 = vmatprep.subr.mxu0 0.0
    %2249 = vmatpush1.xpose.msra.mxu0 0.0
    %2250 = vmatprep.subr.mxu0 0.0
    %2251 = vmatpush1.xpose.msra.mxu0 0.0
    %2252 = vmatprep.subr.mxu0 0.0
    %2253 = vmatpush1.xpose.msra.mxu0 0.0
    %2254 = vmatprep.subr.mxu0 0.0
    %2255 = vmatpush1.xpose.msra.mxu0 0.0
    %2256 = vmatprep.subr.mxu0 0.0
    %2257 = vmatpush1.xpose.msra.mxu0 0.0
    %2258 = vmatprep.subr.mxu0 0.0
    %2259 = vmatpush1.xpose.msra.mxu0 0.0
    %2260 = vmatprep.subr.mxu0 0.0
    %2261 = vmatpush1.xpose.msra.mxu0 0.0
    %2262 = vmatprep.subr.mxu0 0.0
    %2263 = vmatpush1.xpose.msra.mxu0 0.0
    %2264 = vmatprep.subr.mxu0 0.0
    %2265 = vmatpush1.xpose.msra.mxu0 0.0
    %2266 = vmatprep.subr.mxu0 0.0
    %2267 = vmatpush1.xpose.msra.mxu0 0.0
    %2268 = vmatprep.subr.mxu0 0.0
    %2269 = vmatpush1.xpose.msra.mxu0 0.0
    %2270 = vmatprep.subr.mxu0 0.0
    %2271 = vmatpush1.xpose.msra.mxu0 0.0
    %2272 = vmatprep.subr.mxu0 0.0
    %2273 = vmatpush1.xpose.msra.mxu0 0.0
    %2274 = vmatprep.subr.mxu0 %v102
    %2275 = vmatpush1.xpose.msra.mxu0 %v101
    %2276 = vmatprep.subr.mxu0 0.0
    %2277 = vmatpush2.xpose.msra.mxu0 0.0
    %2278 = vmatprep.subr.mxu0 0.0
    %2279 = vmatpush2.xpose.msra.mxu0 0.0
    %2280 = vmatprep.subr.mxu0 0.0
    %2281 = vmatpush2.xpose.msra.mxu0 0.0
    %2282 = vmatprep.subr.mxu0 0.0
    %2283 = vmatpush2.xpose.msra.mxu0 0.0
    %2284 = vmatprep.subr.mxu0 0.0
    %2285 = vmatpush2.xpose.msra.mxu0 0.0
    %2286 = vmatprep.subr.mxu0 0.0
    %2287 = vmatpush2.xpose.msra.mxu0 0.0
    %2288 = vmatprep.subr.mxu0 0.0
    %2289 = vmatpush2.xpose.msra.mxu0 0.0
    %2290 = vmatprep.subr.mxu0 0.0
    %2291 = vmatpush2.xpose.msra.mxu0 0.0
    %2292 = vmatprep.subr.mxu0 0.0
    %2293 = vmatpush2.xpose.msra.mxu0 0.0
    %2294 = vmatprep.subr.mxu0 0.0
    %2295 = vmatpush2.xpose.msra.mxu0 0.0
    %2296 = vmatprep.subr.mxu0 0.0
    %2297 = vmatpush2.xpose.msra.mxu0 0.0
    %2298 = vmatprep.subr.mxu0 0.0
    %2299 = vmatpush2.xpose.msra.mxu0 0.0
    %2300 = vmatprep.subr.mxu0 0.0
    %2301 = vmatpush2.xpose.msra.mxu0 0.0
    %2302 = vmatprep.subr.mxu0 0.0
    %2303 = vmatpush2.xpose.msra.mxu0 0.0
    %2304 = vmatprep.subr.mxu0 0.0
    %2305 = vmatpush2.xpose.msra.mxu0 0.0
    %2306 = vmatprep.subr.mxu0 0.0
    %2307 = vmatpush2.xpose.msra.mxu0 0.0
    %2308 = vmatprep.mubr.f32.mxu0 %v461
    %2309 = vmatmul.mubr.f32.gmra.mxu0 %v459
    %v2310 = vpop.f32.mrf.mxu0
    %v2311 = vadd.f32 %v2241, %v2310
    %v2312 = vpop.f32.mrf.mxu0
    %2313 = vdwg.mxu0
    %2314 = vmatprep.subr.mxu0 0.0
    %2315 = vmatpush1.xpose.msra.mxu0 0.0
    %2316 = vmatprep.subr.mxu0 0.0
    %2317 = vmatpush1.xpose.msra.mxu0 0.0
    %2318 = vmatprep.subr.mxu0 0.0
    %2319 = vmatpush1.xpose.msra.mxu0 0.0
    %2320 = vmatprep.subr.mxu0 0.0
    %2321 = vmatpush1.xpose.msra.mxu0 0.0
    %2322 = vmatprep.subr.mxu0 0.0
    %2323 = vmatpush1.xpose.msra.mxu0 0.0
    %2324 = vmatprep.subr.mxu0 0.0
    %2325 = vmatpush1.xpose.msra.mxu0 0.0
    %2326 = vmatprep.subr.mxu0 0.0
    %2327 = vmatpush1.xpose.msra.mxu0 0.0
    %2328 = vmatprep.subr.mxu0 0.0
    %2329 = vmatpush1.xpose.msra.mxu0 0.0
    %2330 = vmatprep.subr.mxu0 0.0
    %2331 = vmatpush1.xpose.msra.mxu0 0.0
    %2332 = vmatprep.subr.mxu0 0.0
    %2333 = vmatpush1.xpose.msra.mxu0 0.0
    %2334 = vmatprep.subr.mxu0 0.0
    %2335 = vmatpush1.xpose.msra.mxu0 0.0
    %2336 = vmatprep.subr.mxu0 0.0
    %2337 = vmatpush1.xpose.msra.mxu0 0.0
    %2338 = vmatprep.subr.mxu0 0.0
    %2339 = vmatpush1.xpose.msra.mxu0 0.0
    %2340 = vmatprep.subr.mxu0 0.0
    %2341 = vmatpush1.xpose.msra.mxu0 0.0
    %2342 = vmatprep.subr.mxu0 0.0
    %2343 = vmatpush1.xpose.msra.mxu0 0.0
    %2344 = vmatprep.subr.mxu0 %v104
    %2345 = vmatpush1.xpose.msra.mxu0 %v103
    %2346 = vmatprep.subr.mxu0 0.0
    %2347 = vmatpush2.xpose.msra.mxu0 0.0
    %2348 = vmatprep.subr.mxu0 0.0
    %2349 = vmatpush2.xpose.msra.mxu0 0.0
    %2350 = vmatprep.subr.mxu0 0.0
    %2351 = vmatpush2.xpose.msra.mxu0 0.0
    %2352 = vmatprep.subr.mxu0 0.0
    %2353 = vmatpush2.xpose.msra.mxu0 0.0
    %2354 = vmatprep.subr.mxu0 0.0
    %2355 = vmatpush2.xpose.msra.mxu0 0.0
    %2356 = vmatprep.subr.mxu0 0.0
    %2357 = vmatpush2.xpose.msra.mxu0 0.0
    %2358 = vmatprep.subr.mxu0 0.0
    %2359 = vmatpush2.xpose.msra.mxu0 0.0
    %2360 = vmatprep.subr.mxu0 0.0
    %2361 = vmatpush2.xpose.msra.mxu0 0.0
    %2362 = vmatprep.subr.mxu0 0.0
    %2363 = vmatpush2.xpose.msra.mxu0 0.0
    %2364 = vmatprep.subr.mxu0 0.0
    %2365 = vmatpush2.xpose.msra.mxu0 0.0
    %2366 = vmatprep.subr.mxu0 0.0
    %2367 = vmatpush2.xpose.msra.mxu0 0.0
    %2368 = vmatprep.subr.mxu0 0.0
    %2369 = vmatpush2.xpose.msra.mxu0 0.0
    %2370 = vmatprep.subr.mxu0 0.0
    %2371 = vmatpush2.xpose.msra.mxu0 0.0
    %2372 = vmatprep.subr.mxu0 0.0
    %2373 = vmatpush2.xpose.msra.mxu0 0.0
    %2374 = vmatprep.subr.mxu0 0.0
    %2375 = vmatpush2.xpose.msra.mxu0 0.0
    %2376 = vmatprep.subr.mxu0 0.0
    %2377 = vmatpush2.xpose.msra.mxu0 0.0
    %2378 = vmatprep.mubr.f32.mxu0 %v477
    %2379 = vmatmul.mubr.f32.gmra.mxu0 %v469
    %v2380 = vpop.f32.mrf.mxu0
    %v2381 = vadd.f32 %v2311, %v2380
    %v2382 = vpop.f32.mrf.mxu0
    %2383 = vdwg.mxu0
    %2384 = vmatprep.subr.mxu0 0.0
    %2385 = vmatpush1.xpose.msra.mxu0 0.0
    %2386 = vmatprep.subr.mxu0 0.0
    %2387 = vmatpush1.xpose.msra.mxu0 0.0
    %2388 = vmatprep.subr.mxu0 0.0
    %2389 = vmatpush1.xpose.msra.mxu0 0.0
    %2390 = vmatprep.subr.mxu0 0.0
    %2391 = vmatpush1.xpose.msra.mxu0 0.0
    %2392 = vmatprep.subr.mxu0 0.0
    %2393 = vmatpush1.xpose.msra.mxu0 0.0
    %2394 = vmatprep.subr.mxu0 0.0
    %2395 = vmatpush1.xpose.msra.mxu0 0.0
    %2396 = vmatprep.subr.mxu0 0.0
    %2397 = vmatpush1.xpose.msra.mxu0 0.0
    %2398 = vmatprep.subr.mxu0 0.0
    %2399 = vmatpush1.xpose.msra.mxu0 0.0
    %2400 = vmatprep.subr.mxu0 0.0
    %2401 = vmatpush1.xpose.msra.mxu0 0.0
    %2402 = vmatprep.subr.mxu0 0.0
    %2403 = vmatpush1.xpose.msra.mxu0 0.0
    %2404 = vmatprep.subr.mxu0 0.0
    %2405 = vmatpush1.xpose.msra.mxu0 0.0
    %2406 = vmatprep.subr.mxu0 0.0
    %2407 = vmatpush1.xpose.msra.mxu0 0.0
    %2408 = vmatprep.subr.mxu0 0.0
    %2409 = vmatpush1.xpose.msra.mxu0 0.0
    %2410 = vmatprep.subr.mxu0 0.0
    %2411 = vmatpush1.xpose.msra.mxu0 0.0
    %2412 = vmatprep.subr.mxu0 0.0
    %2413 = vmatpush1.xpose.msra.mxu0 0.0
    %2414 = vmatprep.subr.mxu0 %v106
    %2415 = vmatpush1.xpose.msra.mxu0 %v105
    %2416 = vmatprep.subr.mxu0 0.0
    %2417 = vmatpush2.xpose.msra.mxu0 0.0
    %2418 = vmatprep.subr.mxu0 0.0
    %2419 = vmatpush2.xpose.msra.mxu0 0.0
    %2420 = vmatprep.subr.mxu0 0.0
    %2421 = vmatpush2.xpose.msra.mxu0 0.0
    %2422 = vmatprep.subr.mxu0 0.0
    %2423 = vmatpush2.xpose.msra.mxu0 0.0
    %2424 = vmatprep.subr.mxu0 0.0
    %2425 = vmatpush2.xpose.msra.mxu0 0.0
    %2426 = vmatprep.subr.mxu0 0.0
    %2427 = vmatpush2.xpose.msra.mxu0 0.0
    %2428 = vmatprep.subr.mxu0 0.0
    %2429 = vmatpush2.xpose.msra.mxu0 0.0
    %2430 = vmatprep.subr.mxu0 0.0
    %2431 = vmatpush2.xpose.msra.mxu0 0.0
    %2432 = vmatprep.subr.mxu0 0.0
    %2433 = vmatpush2.xpose.msra.mxu0 0.0
    %2434 = vmatprep.subr.mxu0 0.0
    %2435 = vmatpush2.xpose.msra.mxu0 0.0
    %2436 = vmatprep.subr.mxu0 0.0
    %2437 = vmatpush2.xpose.msra.mxu0 0.0
    %2438 = vmatprep.subr.mxu0 0.0
    %2439 = vmatpush2.xpose.msra.mxu0 0.0
    %2440 = vmatprep.subr.mxu0 0.0
    %2441 = vmatpush2.xpose.msra.mxu0 0.0
    %2442 = vmatprep.subr.mxu0 0.0
    %2443 = vmatpush2.xpose.msra.mxu0 0.0
    %2444 = vmatprep.subr.mxu0 0.0
    %2445 = vmatpush2.xpose.msra.mxu0 0.0
    %2446 = vmatprep.subr.mxu0 0.0
    %2447 = vmatpush2.xpose.msra.mxu0 0.0
    %2448 = vmatprep.mubr.f32.mxu0 %v478
    %2449 = vmatmul.mubr.f32.gmra.mxu0 %v476
    %v2450 = vpop.f32.mrf.mxu0
    %v2451 = vadd.f32 %v2381, %v2450
    %v2452 = vpop.f32.mrf.mxu0
    %2453 = vdwg.mxu0
    %2454 = vmatprep.subr.mxu0 0.0
    %2455 = vmatpush1.xpose.msra.mxu0 0.0
    %2456 = vmatprep.subr.mxu0 0.0
    %2457 = vmatpush1.xpose.msra.mxu0 0.0
    %2458 = vmatprep.subr.mxu0 0.0
    %2459 = vmatpush1.xpose.msra.mxu0 0.0
    %2460 = vmatprep.subr.mxu0 0.0
    %2461 = vmatpush1.xpose.msra.mxu0 0.0
    %2462 = vmatprep.subr.mxu0 0.0
    %2463 = vmatpush1.xpose.msra.mxu0 0.0
    %2464 = vmatprep.subr.mxu0 0.0
    %2465 = vmatpush1.xpose.msra.mxu0 0.0
    %2466 = vmatprep.subr.mxu0 0.0
    %2467 = vmatpush1.xpose.msra.mxu0 0.0
    %2468 = vmatprep.subr.mxu0 0.0
    %2469 = vmatpush1.xpose.msra.mxu0 0.0
    %2470 = vmatprep.subr.mxu0 0.0
    %2471 = vmatpush1.xpose.msra.mxu0 0.0
    %2472 = vmatprep.subr.mxu0 0.0
    %2473 = vmatpush1.xpose.msra.mxu0 0.0
    %2474 = vmatprep.subr.mxu0 0.0
    %2475 = vmatpush1.xpose.msra.mxu0 0.0
    %2476 = vmatprep.subr.mxu0 0.0
    %2477 = vmatpush1.xpose.msra.mxu0 0.0
    %2478 = vmatprep.subr.mxu0 0.0
    %2479 = vmatpush1.xpose.msra.mxu0 0.0
    %2480 = vmatprep.subr.mxu0 0.0
    %2481 = vmatpush1.xpose.msra.mxu0 0.0
    %2482 = vmatprep.subr.mxu0 0.0
    %2483 = vmatpush1.xpose.msra.mxu0 0.0
    %2484 = vmatprep.subr.mxu0 %v108
    %2485 = vmatpush1.xpose.msra.mxu0 %v107
    %2486 = vmatprep.subr.mxu0 0.0
    %2487 = vmatpush2.xpose.msra.mxu0 0.0
    %2488 = vmatprep.subr.mxu0 0.0
    %2489 = vmatpush2.xpose.msra.mxu0 0.0
    %2490 = vmatprep.subr.mxu0 0.0
    %2491 = vmatpush2.xpose.msra.mxu0 0.0
    %2492 = vmatprep.subr.mxu0 0.0
    %2493 = vmatpush2.xpose.msra.mxu0 0.0
    %2494 = vmatprep.subr.mxu0 0.0
    %2495 = vmatpush2.xpose.msra.mxu0 0.0
    %2496 = vmatprep.subr.mxu0 0.0
    %2497 = vmatpush2.xpose.msra.mxu0 0.0
    %2498 = vmatprep.subr.mxu0 0.0
    %2499 = vmatpush2.xpose.msra.mxu0 0.0
    %2500 = vmatprep.subr.mxu0 0.0
    %2501 = vmatpush2.xpose.msra.mxu0 0.0
    %2502 = vmatprep.subr.mxu0 0.0
    %2503 = vmatpush2.xpose.msra.mxu0 0.0
    %2504 = vmatprep.subr.mxu0 0.0
    %2505 = vmatpush2.xpose.msra.mxu0 0.0
    %2506 = vmatprep.subr.mxu0 0.0
    %2507 = vmatpush2.xpose.msra.mxu0 0.0
    %2508 = vmatprep.subr.mxu0 0.0
    %2509 = vmatpush2.xpose.msra.mxu0 0.0
    %2510 = vmatprep.subr.mxu0 0.0
    %2511 = vmatpush2.xpose.msra.mxu0 0.0
    %2512 = vmatprep.subr.mxu0 0.0
    %2513 = vmatpush2.xpose.msra.mxu0 0.0
    %2514 = vmatprep.subr.mxu0 0.0
    %2515 = vmatpush2.xpose.msra.mxu0 0.0
    %2516 = vmatprep.subr.mxu0 0.0
    %2517 = vmatpush2.xpose.msra.mxu0 0.0
    %2518 = vmatprep.mubr.f32.mxu0 %v494
    %2519 = vmatmul.mubr.f32.gmra.mxu0 %v486
    %v2520 = vpop.f32.mrf.mxu0
    %v2521 = vadd.f32 %v2451, %v2520
    %v2522 = vpop.f32.mrf.mxu0
    %2523 = vdwg.mxu0
    %2524 = vmatprep.subr.mxu0 0.0
    %2525 = vmatpush1.xpose.msra.mxu0 0.0
    %2526 = vmatprep.subr.mxu0 0.0
    %2527 = vmatpush1.xpose.msra.mxu0 0.0
    %2528 = vmatprep.subr.mxu0 0.0
    %2529 = vmatpush1.xpose.msra.mxu0 0.0
    %2530 = vmatprep.subr.mxu0 0.0
    %2531 = vmatpush1.xpose.msra.mxu0 0.0
    %2532 = vmatprep.subr.mxu0 0.0
    %2533 = vmatpush1.xpose.msra.mxu0 0.0
    %2534 = vmatprep.subr.mxu0 0.0
    %2535 = vmatpush1.xpose.msra.mxu0 0.0
    %2536 = vmatprep.subr.mxu0 0.0
    %2537 = vmatpush1.xpose.msra.mxu0 0.0
    %2538 = vmatprep.subr.mxu0 0.0
    %2539 = vmatpush1.xpose.msra.mxu0 0.0
    %2540 = vmatprep.subr.mxu0 0.0
    %2541 = vmatpush1.xpose.msra.mxu0 0.0
    %2542 = vmatprep.subr.mxu0 0.0
    %2543 = vmatpush1.xpose.msra.mxu0 0.0
    %2544 = vmatprep.subr.mxu0 0.0
    %2545 = vmatpush1.xpose.msra.mxu0 0.0
    %2546 = vmatprep.subr.mxu0 0.0
    %2547 = vmatpush1.xpose.msra.mxu0 0.0
    %2548 = vmatprep.subr.mxu0 0.0
    %2549 = vmatpush1.xpose.msra.mxu0 0.0
    %2550 = vmatprep.subr.mxu0 0.0
    %2551 = vmatpush1.xpose.msra.mxu0 0.0
    %2552 = vmatprep.subr.mxu0 0.0
    %2553 = vmatpush1.xpose.msra.mxu0 0.0
    %2554 = vmatprep.subr.mxu0 %v110
    %2555 = vmatpush1.xpose.msra.mxu0 %v109
    %2556 = vmatprep.subr.mxu0 0.0
    %2557 = vmatpush2.xpose.msra.mxu0 0.0
    %2558 = vmatprep.subr.mxu0 0.0
    %2559 = vmatpush2.xpose.msra.mxu0 0.0
    %2560 = vmatprep.subr.mxu0 0.0
    %2561 = vmatpush2.xpose.msra.mxu0 0.0
    %2562 = vmatprep.subr.mxu0 0.0
    %2563 = vmatpush2.xpose.msra.mxu0 0.0
    %2564 = vmatprep.subr.mxu0 0.0
    %2565 = vmatpush2.xpose.msra.mxu0 0.0
    %2566 = vmatprep.subr.mxu0 0.0
    %2567 = vmatpush2.xpose.msra.mxu0 0.0
    %2568 = vmatprep.subr.mxu0 0.0
    %2569 = vmatpush2.xpose.msra.mxu0 0.0
    %2570 = vmatprep.subr.mxu0 0.0
    %2571 = vmatpush2.xpose.msra.mxu0 0.0
    %2572 = vmatprep.subr.mxu0 0.0
    %2573 = vmatpush2.xpose.msra.mxu0 0.0
    %2574 = vmatprep.subr.mxu0 0.0
    %2575 = vmatpush2.xpose.msra.mxu0 0.0
    %2576 = vmatprep.subr.mxu0 0.0
    %2577 = vmatpush2.xpose.msra.mxu0 0.0
    %2578 = vmatprep.subr.mxu0 0.0
    %2579 = vmatpush2.xpose.msra.mxu0 0.0
    %2580 = vmatprep.subr.mxu0 0.0
    %2581 = vmatpush2.xpose.msra.mxu0 0.0
    %2582 = vmatprep.subr.mxu0 0.0
    %2583 = vmatpush2.xpose.msra.mxu0 0.0
    %2584 = vmatprep.subr.mxu0 0.0
    %2585 = vmatpush2.xpose.msra.mxu0 0.0
    %2586 = vmatprep.subr.mxu0 0.0
    %2587 = vmatpush2.xpose.msra.mxu0 0.0
    %2588 = vmatprep.mubr.f32.mxu0 %v495
    %2589 = vmatmul.mubr.f32.gmra.mxu0 %v493
    %v2590 = vpop.f32.mrf.mxu0
    %v2591 = vadd.f32 %v2521, %v2590
    %v2592 = vpop.f32.mrf.mxu0
    %2593 = vdwg.mxu0
    %2594 = vmatprep.subr.mxu0 0.0
    %2595 = vmatpush1.xpose.msra.mxu0 0.0
    %2596 = vmatprep.subr.mxu0 0.0
    %2597 = vmatpush1.xpose.msra.mxu0 0.0
    %2598 = vmatprep.subr.mxu0 0.0
    %2599 = vmatpush1.xpose.msra.mxu0 0.0
    %2600 = vmatprep.subr.mxu0 0.0
    %2601 = vmatpush1.xpose.msra.mxu0 0.0
    %2602 = vmatprep.subr.mxu0 0.0
    %2603 = vmatpush1.xpose.msra.mxu0 0.0
    %2604 = vmatprep.subr.mxu0 0.0
    %2605 = vmatpush1.xpose.msra.mxu0 0.0
    %2606 = vmatprep.subr.mxu0 0.0
    %2607 = vmatpush1.xpose.msra.mxu0 0.0
    %2608 = vmatprep.subr.mxu0 0.0
    %2609 = vmatpush1.xpose.msra.mxu0 0.0
    %2610 = vmatprep.subr.mxu0 0.0
    %2611 = vmatpush1.xpose.msra.mxu0 0.0
    %2612 = vmatprep.subr.mxu0 0.0
    %2613 = vmatpush1.xpose.msra.mxu0 0.0
    %2614 = vmatprep.subr.mxu0 0.0
    %2615 = vmatpush1.xpose.msra.mxu0 0.0
    %2616 = vmatprep.subr.mxu0 0.0
    %2617 = vmatpush1.xpose.msra.mxu0 0.0
    %2618 = vmatprep.subr.mxu0 0.0
    %2619 = vmatpush1.xpose.msra.mxu0 0.0
    %2620 = vmatprep.subr.mxu0 0.0
    %2621 = vmatpush1.xpose.msra.mxu0 0.0
    %2622 = vmatprep.subr.mxu0 0.0
    %2623 = vmatpush1.xpose.msra.mxu0 0.0
    %2624 = vmatprep.subr.mxu0 %v112
    %2625 = vmatpush1.xpose.msra.mxu0 %v111
    %2626 = vmatprep.subr.mxu0 0.0
    %2627 = vmatpush2.xpose.msra.mxu0 0.0
    %2628 = vmatprep.subr.mxu0 0.0
    %2629 = vmatpush2.xpose.msra.mxu0 0.0
    %2630 = vmatprep.subr.mxu0 0.0
    %2631 = vmatpush2.xpose.msra.mxu0 0.0
    %2632 = vmatprep.subr.mxu0 0.0
    %2633 = vmatpush2.xpose.msra.mxu0 0.0
    %2634 = vmatprep.subr.mxu0 0.0
    %2635 = vmatpush2.xpose.msra.mxu0 0.0
    %2636 = vmatprep.subr.mxu0 0.0
    %2637 = vmatpush2.xpose.msra.mxu0 0.0
    %2638 = vmatprep.subr.mxu0 0.0
    %2639 = vmatpush2.xpose.msra.mxu0 0.0
    %2640 = vmatprep.subr.mxu0 0.0
    %2641 = vmatpush2.xpose.msra.mxu0 0.0
    %2642 = vmatprep.subr.mxu0 0.0
    %2643 = vmatpush2.xpose.msra.mxu0 0.0
    %2644 = vmatprep.subr.mxu0 0.0
    %2645 = vmatpush2.xpose.msra.mxu0 0.0
    %2646 = vmatprep.subr.mxu0 0.0
    %2647 = vmatpush2.xpose.msra.mxu0 0.0
    %2648 = vmatprep.subr.mxu0 0.0
    %2649 = vmatpush2.xpose.msra.mxu0 0.0
    %2650 = vmatprep.subr.mxu0 0.0
    %2651 = vmatpush2.xpose.msra.mxu0 0.0
    %2652 = vmatprep.subr.mxu0 0.0
    %2653 = vmatpush2.xpose.msra.mxu0 0.0
    %2654 = vmatprep.subr.mxu0 0.0
    %2655 = vmatpush2.xpose.msra.mxu0 0.0
    %2656 = vmatprep.subr.mxu0 0.0
    %2657 = vmatpush2.xpose.msra.mxu0 0.0
    %2658 = vmatprep.mubr.f32.mxu0 %v511
    %2659 = vmatmul.mubr.f32.gmra.mxu0 %v503
    %v2660 = vpop.f32.mrf.mxu0
    %v2661 = vadd.f32 %v2591, %v2660
    %v2662 = vpop.f32.mrf.mxu0
    %2663 = vdwg.mxu0
    %2664 = vmatprep.subr.mxu0 0.0
    %2665 = vmatpush1.xpose.msra.mxu0 0.0
    %2666 = vmatprep.subr.mxu0 0.0
    %2667 = vmatpush1.xpose.msra.mxu0 0.0
    %2668 = vmatprep.subr.mxu0 0.0
    %2669 = vmatpush1.xpose.msra.mxu0 0.0
    %2670 = vmatprep.subr.mxu0 0.0
    %2671 = vmatpush1.xpose.msra.mxu0 0.0
    %2672 = vmatprep.subr.mxu0 0.0
    %2673 = vmatpush1.xpose.msra.mxu0 0.0
    %2674 = vmatprep.subr.mxu0 0.0
    %2675 = vmatpush1.xpose.msra.mxu0 0.0
    %2676 = vmatprep.subr.mxu0 0.0
    %2677 = vmatpush1.xpose.msra.mxu0 0.0
    %2678 = vmatprep.subr.mxu0 0.0
    %2679 = vmatpush1.xpose.msra.mxu0 0.0
    %2680 = vmatprep.subr.mxu0 0.0
    %2681 = vmatpush1.xpose.msra.mxu0 0.0
    %2682 = vmatprep.subr.mxu0 0.0
    %2683 = vmatpush1.xpose.msra.mxu0 0.0
    %2684 = vmatprep.subr.mxu0 0.0
    %2685 = vmatpush1.xpose.msra.mxu0 0.0
    %2686 = vmatprep.subr.mxu0 0.0
    %2687 = vmatpush1.xpose.msra.mxu0 0.0
    %2688 = vmatprep.subr.mxu0 0.0
    %2689 = vmatpush1.xpose.msra.mxu0 0.0
    %2690 = vmatprep.subr.mxu0 0.0
    %2691 = vmatpush1.xpose.msra.mxu0 0.0
    %2692 = vmatprep.subr.mxu0 0.0
    %2693 = vmatpush1.xpose.msra.mxu0 0.0
    %2694 = vmatprep.subr.mxu0 %v114
    %2695 = vmatpush1.xpose.msra.mxu0 %v113
    %2696 = vmatprep.subr.mxu0 0.0
    %2697 = vmatpush2.xpose.msra.mxu0 0.0
    %2698 = vmatprep.subr.mxu0 0.0
    %2699 = vmatpush2.xpose.msra.mxu0 0.0
    %2700 = vmatprep.subr.mxu0 0.0
    %2701 = vmatpush2.xpose.msra.mxu0 0.0
    %2702 = vmatprep.subr.mxu0 0.0
    %2703 = vmatpush2.xpose.msra.mxu0 0.0
    %2704 = vmatprep.subr.mxu0 0.0
    %2705 = vmatpush2.xpose.msra.mxu0 0.0
    %2706 = vmatprep.subr.mxu0 0.0
    %2707 = vmatpush2.xpose.msra.mxu0 0.0
    %2708 = vmatprep.subr.mxu0 0.0
    %2709 = vmatpush2.xpose.msra.mxu0 0.0
    %2710 = vmatprep.subr.mxu0 0.0
    %2711 = vmatpush2.xpose.msra.mxu0 0.0
    %2712 = vmatprep.subr.mxu0 0.0
    %2713 = vmatpush2.xpose.msra.mxu0 0.0
    %2714 = vmatprep.subr.mxu0 0.0
    %2715 = vmatpush2.xpose.msra.mxu0 0.0
    %2716 = vmatprep.subr.mxu0 0.0
    %2717 = vmatpush2.xpose.msra.mxu0 0.0
    %2718 = vmatprep.subr.mxu0 0.0
    %2719 = vmatpush2.xpose.msra.mxu0 0.0
    %2720 = vmatprep.subr.mxu0 0.0
    %2721 = vmatpush2.xpose.msra.mxu0 0.0
    %2722 = vmatprep.subr.mxu0 0.0
    %2723 = vmatpush2.xpose.msra.mxu0 0.0
    %2724 = vmatprep.subr.mxu0 0.0
    %2725 = vmatpush2.xpose.msra.mxu0 0.0
    %2726 = vmatprep.subr.mxu0 0.0
    %2727 = vmatpush2.xpose.msra.mxu0 0.0
    %2728 = vmatprep.mubr.f32.mxu0 %v512
    %2729 = vmatmul.mubr.f32.gmra.mxu0 %v510
    %v2730 = vpop.f32.mrf.mxu0
    %v2731 = vadd.f32 %v2661, %v2730
    %v2732 = vpop.f32.mrf.mxu0
    %2733 = vdwg.mxu0
    %2734 = vmatprep.subr.mxu0 0.0
    %2735 = vmatpush1.xpose.msra.mxu0 0.0
    %2736 = vmatprep.subr.mxu0 0.0
    %2737 = vmatpush1.xpose.msra.mxu0 0.0
    %2738 = vmatprep.subr.mxu0 0.0
    %2739 = vmatpush1.xpose.msra.mxu0 0.0
    %2740 = vmatprep.subr.mxu0 0.0
    %2741 = vmatpush1.xpose.msra.mxu0 0.0
    %2742 = vmatprep.subr.mxu0 0.0
    %2743 = vmatpush1.xpose.msra.mxu0 0.0
    %2744 = vmatprep.subr.mxu0 0.0
    %2745 = vmatpush1.xpose.msra.mxu0 0.0
    %2746 = vmatprep.subr.mxu0 0.0
    %2747 = vmatpush1.xpose.msra.mxu0 0.0
    %2748 = vmatprep.subr.mxu0 0.0
    %2749 = vmatpush1.xpose.msra.mxu0 0.0
    %2750 = vmatprep.subr.mxu0 0.0
    %2751 = vmatpush1.xpose.msra.mxu0 0.0
    %2752 = vmatprep.subr.mxu0 0.0
    %2753 = vmatpush1.xpose.msra.mxu0 0.0
    %2754 = vmatprep.subr.mxu0 0.0
    %2755 = vmatpush1.xpose.msra.mxu0 0.0
    %2756 = vmatprep.subr.mxu0 0.0
    %2757 = vmatpush1.xpose.msra.mxu0 0.0
    %2758 = vmatprep.subr.mxu0 0.0
    %2759 = vmatpush1.xpose.msra.mxu0 0.0
    %2760 = vmatprep.subr.mxu0 0.0
    %2761 = vmatpush1.xpose.msra.mxu0 0.0
    %2762 = vmatprep.subr.mxu0 0.0
    %2763 = vmatpush1.xpose.msra.mxu0 0.0
    %2764 = vmatprep.subr.mxu0 %v116
    %2765 = vmatpush1.xpose.msra.mxu0 %v115
    %2766 = vmatprep.subr.mxu0 0.0
    %2767 = vmatpush2.xpose.msra.mxu0 0.0
    %2768 = vmatprep.subr.mxu0 0.0
    %2769 = vmatpush2.xpose.msra.mxu0 0.0
    %2770 = vmatprep.subr.mxu0 0.0
    %2771 = vmatpush2.xpose.msra.mxu0 0.0
    %2772 = vmatprep.subr.mxu0 0.0
    %2773 = vmatpush2.xpose.msra.mxu0 0.0
    %2774 = vmatprep.subr.mxu0 0.0
    %2775 = vmatpush2.xpose.msra.mxu0 0.0
    %2776 = vmatprep.subr.mxu0 0.0
    %2777 = vmatpush2.xpose.msra.mxu0 0.0
    %2778 = vmatprep.subr.mxu0 0.0
    %2779 = vmatpush2.xpose.msra.mxu0 0.0
    %2780 = vmatprep.subr.mxu0 0.0
    %2781 = vmatpush2.xpose.msra.mxu0 0.0
    %2782 = vmatprep.subr.mxu0 0.0
    %2783 = vmatpush2.xpose.msra.mxu0 0.0
    %2784 = vmatprep.subr.mxu0 0.0
    %2785 = vmatpush2.xpose.msra.mxu0 0.0
    %2786 = vmatprep.subr.mxu0 0.0
    %2787 = vmatpush2.xpose.msra.mxu0 0.0
    %2788 = vmatprep.subr.mxu0 0.0
    %2789 = vmatpush2.xpose.msra.mxu0 0.0
    %2790 = vmatprep.subr.mxu0 0.0
    %2791 = vmatpush2.xpose.msra.mxu0 0.0
    %2792 = vmatprep.subr.mxu0 0.0
    %2793 = vmatpush2.xpose.msra.mxu0 0.0
    %2794 = vmatprep.subr.mxu0 0.0
    %2795 = vmatpush2.xpose.msra.mxu0 0.0
    %2796 = vmatprep.subr.mxu0 0.0
    %2797 = vmatpush2.xpose.msra.mxu0 0.0
    %2798 = vmatprep.mubr.f32.mxu0 %v528
    %2799 = vmatmul.mubr.f32.gmra.mxu0 %v520
    %v2800 = vpop.f32.mrf.mxu0
    %v2801 = vadd.f32 %v2731, %v2800
    %v2802 = vpop.f32.mrf.mxu0
    %2803 = vdwg.mxu0
    %2804 = vmatprep.subr.mxu0 0.0
    %2805 = vmatpush1.xpose.msra.mxu0 0.0
    %2806 = vmatprep.subr.mxu0 0.0
    %2807 = vmatpush1.xpose.msra.mxu0 0.0
    %2808 = vmatprep.subr.mxu0 0.0
    %2809 = vmatpush1.xpose.msra.mxu0 0.0
    %2810 = vmatprep.subr.mxu0 0.0
    %2811 = vmatpush1.xpose.msra.mxu0 0.0
    %2812 = vmatprep.subr.mxu0 0.0
    %2813 = vmatpush1.xpose.msra.mxu0 0.0
    %2814 = vmatprep.subr.mxu0 0.0
    %2815 = vmatpush1.xpose.msra.mxu0 0.0
    %2816 = vmatprep.subr.mxu0 0.0
    %2817 = vmatpush1.xpose.msra.mxu0 0.0
    %2818 = vmatprep.subr.mxu0 0.0
    %2819 = vmatpush1.xpose.msra.mxu0 0.0
    %2820 = vmatprep.subr.mxu0 0.0
    %2821 = vmatpush1.xpose.msra.mxu0 0.0
    %2822 = vmatprep.subr.mxu0 0.0
    %2823 = vmatpush1.xpose.msra.mxu0 0.0
    %2824 = vmatprep.subr.mxu0 0.0
    %2825 = vmatpush1.xpose.msra.mxu0 0.0
    %2826 = vmatprep.subr.mxu0 0.0
    %2827 = vmatpush1.xpose.msra.mxu0 0.0
    %2828 = vmatprep.subr.mxu0 0.0
    %2829 = vmatpush1.xpose.msra.mxu0 0.0
    %2830 = vmatprep.subr.mxu0 0.0
    %2831 = vmatpush1.xpose.msra.mxu0 0.0
    %2832 = vmatprep.subr.mxu0 0.0
    %2833 = vmatpush1.xpose.msra.mxu0 0.0
    %2834 = vmatprep.subr.mxu0 %v118
    %2835 = vmatpush1.xpose.msra.mxu0 %v117
    %2836 = vmatprep.subr.mxu0 0.0
    %2837 = vmatpush2.xpose.msra.mxu0 0.0
    %2838 = vmatprep.subr.mxu0 0.0
    %2839 = vmatpush2.xpose.msra.mxu0 0.0
    %2840 = vmatprep.subr.mxu0 0.0
    %2841 = vmatpush2.xpose.msra.mxu0 0.0
    %2842 = vmatprep.subr.mxu0 0.0
    %2843 = vmatpush2.xpose.msra.mxu0 0.0
    %2844 = vmatprep.subr.mxu0 0.0
    %2845 = vmatpush2.xpose.msra.mxu0 0.0
    %2846 = vmatprep.subr.mxu0 0.0
    %2847 = vmatpush2.xpose.msra.mxu0 0.0
    %2848 = vmatprep.subr.mxu0 0.0
    %2849 = vmatpush2.xpose.msra.mxu0 0.0
    %2850 = vmatprep.subr.mxu0 0.0
    %2851 = vmatpush2.xpose.msra.mxu0 0.0
    %2852 = vmatprep.subr.mxu0 0.0
    %2853 = vmatpush2.xpose.msra.mxu0 0.0
    %2854 = vmatprep.subr.mxu0 0.0
    %2855 = vmatpush2.xpose.msra.mxu0 0.0
    %2856 = vmatprep.subr.mxu0 0.0
    %2857 = vmatpush2.xpose.msra.mxu0 0.0
    %2858 = vmatprep.subr.mxu0 0.0
    %2859 = vmatpush2.xpose.msra.mxu0 0.0
    %2860 = vmatprep.subr.mxu0 0.0
    %2861 = vmatpush2.xpose.msra.mxu0 0.0
    %2862 = vmatprep.subr.mxu0 0.0
    %2863 = vmatpush2.xpose.msra.mxu0 0.0
    %2864 = vmatprep.subr.mxu0 0.0
    %2865 = vmatpush2.xpose.msra.mxu0 0.0
    %2866 = vmatprep.subr.mxu0 0.0
    %2867 = vmatpush2.xpose.msra.mxu0 0.0
    %2868 = vmatprep.mubr.f32.mxu0 %v529
    %2869 = vmatmul.mubr.f32.gmra.mxu0 %v527
    %v2870 = vpop.f32.mrf.mxu0
    %v2871 = vadd.f32 %v2801, %v2870
    %v2872 = vpop.f32.mrf.mxu0
    %2873 = vdwg.mxu0
    %2874 = vmatprep.subr.mxu0 0.0
    %2875 = vmatpush1.xpose.msra.mxu0 0.0
    %2876 = vmatprep.subr.mxu0 0.0
    %2877 = vmatpush1.xpose.msra.mxu0 0.0
    %2878 = vmatprep.subr.mxu0 0.0
    %2879 = vmatpush1.xpose.msra.mxu0 0.0
    %2880 = vmatprep.subr.mxu0 0.0
    %2881 = vmatpush1.xpose.msra.mxu0 0.0
    %2882 = vmatprep.subr.mxu0 0.0
    %2883 = vmatpush1.xpose.msra.mxu0 0.0
    %2884 = vmatprep.subr.mxu0 0.0
    %2885 = vmatpush1.xpose.msra.mxu0 0.0
    %2886 = vmatprep.subr.mxu0 0.0
    %2887 = vmatpush1.xpose.msra.mxu0 0.0
    %2888 = vmatprep.subr.mxu0 0.0
    %2889 = vmatpush1.xpose.msra.mxu0 0.0
    %2890 = vmatprep.subr.mxu0 0.0
    %2891 = vmatpush1.xpose.msra.mxu0 0.0
    %2892 = vmatprep.subr.mxu0 0.0
    %2893 = vmatpush1.xpose.msra.mxu0 0.0
    %2894 = vmatprep.subr.mxu0 0.0
    %2895 = vmatpush1.xpose.msra.mxu0 0.0
    %2896 = vmatprep.subr.mxu0 0.0
    %2897 = vmatpush1.xpose.msra.mxu0 0.0
    %2898 = vmatprep.subr.mxu0 0.0
    %2899 = vmatpush1.xpose.msra.mxu0 0.0
    %2900 = vmatprep.subr.mxu0 0.0
    %2901 = vmatpush1.xpose.msra.mxu0 0.0
    %2902 = vmatprep.subr.mxu0 0.0
    %2903 = vmatpush1.xpose.msra.mxu0 0.0
    %2904 = vmatprep.subr.mxu0 %v120
    %2905 = vmatpush1.xpose.msra.mxu0 %v119
    %2906 = vmatprep.subr.mxu0 0.0
    %2907 = vmatpush2.xpose.msra.mxu0 0.0
    %2908 = vmatprep.subr.mxu0 0.0
    %2909 = vmatpush2.xpose.msra.mxu0 0.0
    %2910 = vmatprep.subr.mxu0 0.0
    %2911 = vmatpush2.xpose.msra.mxu0 0.0
    %2912 = vmatprep.subr.mxu0 0.0
    %2913 = vmatpush2.xpose.msra.mxu0 0.0
    %2914 = vmatprep.subr.mxu0 0.0
    %2915 = vmatpush2.xpose.msra.mxu0 0.0
    %2916 = vmatprep.subr.mxu0 0.0
    %2917 = vmatpush2.xpose.msra.mxu0 0.0
    %2918 = vmatprep.subr.mxu0 0.0
    %2919 = vmatpush2.xpose.msra.mxu0 0.0
    %2920 = vmatprep.subr.mxu0 0.0
    %2921 = vmatpush2.xpose.msra.mxu0 0.0
    %2922 = vmatprep.subr.mxu0 0.0
    %2923 = vmatpush2.xpose.msra.mxu0 0.0
    %2924 = vmatprep.subr.mxu0 0.0
    %2925 = vmatpush2.xpose.msra.mxu0 0.0
    %2926 = vmatprep.subr.mxu0 0.0
    %2927 = vmatpush2.xpose.msra.mxu0 0.0
    %2928 = vmatprep.subr.mxu0 0.0
    %2929 = vmatpush2.xpose.msra.mxu0 0.0
    %2930 = vmatprep.subr.mxu0 0.0
    %2931 = vmatpush2.xpose.msra.mxu0 0.0
    %2932 = vmatprep.subr.mxu0 0.0
    %2933 = vmatpush2.xpose.msra.mxu0 0.0
    %2934 = vmatprep.subr.mxu0 0.0
    %2935 = vmatpush2.xpose.msra.mxu0 0.0
    %2936 = vmatprep.subr.mxu0 0.0
    %2937 = vmatpush2.xpose.msra.mxu0 0.0
    %2938 = vmatprep.mubr.f32.mxu0 %v545
    %2939 = vmatmul.mubr.f32.gmra.mxu0 %v537
    %v2940 = vpop.f32.mrf.mxu0
    %v2941 = vadd.f32 %v2871, %v2940
    %v2942 = vpop.f32.mrf.mxu0
    %2943 = vdwg.mxu0
    %2944 = vmatprep.subr.mxu0 0.0
    %2945 = vmatpush1.xpose.msra.mxu0 0.0
    %2946 = vmatprep.subr.mxu0 0.0
    %2947 = vmatpush1.xpose.msra.mxu0 0.0
    %2948 = vmatprep.subr.mxu0 0.0
    %2949 = vmatpush1.xpose.msra.mxu0 0.0
    %2950 = vmatprep.subr.mxu0 0.0
    %2951 = vmatpush1.xpose.msra.mxu0 0.0
    %2952 = vmatprep.subr.mxu0 0.0
    %2953 = vmatpush1.xpose.msra.mxu0 0.0
    %2954 = vmatprep.subr.mxu0 0.0
    %2955 = vmatpush1.xpose.msra.mxu0 0.0
    %2956 = vmatprep.subr.mxu0 0.0
    %2957 = vmatpush1.xpose.msra.mxu0 0.0
    %2958 = vmatprep.subr.mxu0 0.0
    %2959 = vmatpush1.xpose.msra.mxu0 0.0
    %2960 = vmatprep.subr.mxu0 0.0
    %2961 = vmatpush1.xpose.msra.mxu0 0.0
    %2962 = vmatprep.subr.mxu0 0.0
    %2963 = vmatpush1.xpose.msra.mxu0 0.0
    %2964 = vmatprep.subr.mxu0 0.0
    %2965 = vmatpush1.xpose.msra.mxu0 0.0
    %2966 = vmatprep.subr.mxu0 0.0
    %2967 = vmatpush1.xpose.msra.mxu0 0.0
    %2968 = vmatprep.subr.mxu0 0.0
    %2969 = vmatpush1.xpose.msra.mxu0 0.0
    %2970 = vmatprep.subr.mxu0 0.0
    %2971 = vmatpush1.xpose.msra.mxu0 0.0
    %2972 = vmatprep.subr.mxu0 0.0
    %2973 = vmatpush1.xpose.msra.mxu0 0.0
    %2974 = vmatprep.subr.mxu0 %v122
    %2975 = vmatpush1.xpose.msra.mxu0 %v121
    %2976 = vmatprep.subr.mxu0 0.0
    %2977 = vmatpush2.xpose.msra.mxu0 0.0
    %2978 = vmatprep.subr.mxu0 0.0
    %2979 = vmatpush2.xpose.msra.mxu0 0.0
    %2980 = vmatprep.subr.mxu0 0.0
    %2981 = vmatpush2.xpose.msra.mxu0 0.0
    %2982 = vmatprep.subr.mxu0 0.0
    %2983 = vmatpush2.xpose.msra.mxu0 0.0
    %2984 = vmatprep.subr.mxu0 0.0
    %2985 = vmatpush2.xpose.msra.mxu0 0.0
    %2986 = vmatprep.subr.mxu0 0.0
    %2987 = vmatpush2.xpose.msra.mxu0 0.0
    %2988 = vmatprep.subr.mxu0 0.0
    %2989 = vmatpush2.xpose.msra.mxu0 0.0
    %2990 = vmatprep.subr.mxu0 0.0
    %2991 = vmatpush2.xpose.msra.mxu0 0.0
    %2992 = vmatprep.subr.mxu0 0.0
    %2993 = vmatpush2.xpose.msra.mxu0 0.0
    %2994 = vmatprep.subr.mxu0 0.0
    %2995 = vmatpush2.xpose.msra.mxu0 0.0
    %2996 = vmatprep.subr.mxu0 0.0
    %2997 = vmatpush2.xpose.msra.mxu0 0.0
    %2998 = vmatprep.subr.mxu0 0.0
    %2999 = vmatpush2.xpose.msra.mxu0 0.0
    %3000 = vmatprep.subr.mxu0 0.0
    %3001 = vmatpush2.xpose.msra.mxu0 0.0
    %3002 = vmatprep.subr.mxu0 0.0
    %3003 = vmatpush2.xpose.msra.mxu0 0.0
    %3004 = vmatprep.subr.mxu0 0.0
    %3005 = vmatpush2.xpose.msra.mxu0 0.0
    %3006 = vmatprep.subr.mxu0 0.0
    %3007 = vmatpush2.xpose.msra.mxu0 0.0
    %3008 = vmatprep.mubr.f32.mxu0 %v546
    %3009 = vmatmul.mubr.f32.gmra.mxu0 %v544
    %v3010 = vpop.f32.mrf.mxu0
    %v3011 = vadd.f32 %v2941, %v3010
    %v3012 = vpop.f32.mrf.mxu0
    %3013 = vdwg.mxu0
    %3014 = vmatprep.subr.mxu0 0.0
    %3015 = vmatpush1.xpose.msra.mxu0 0.0
    %3016 = vmatprep.subr.mxu0 0.0
    %3017 = vmatpush1.xpose.msra.mxu0 0.0
    %3018 = vmatprep.subr.mxu0 0.0
    %3019 = vmatpush1.xpose.msra.mxu0 0.0
    %3020 = vmatprep.subr.mxu0 0.0
    %3021 = vmatpush1.xpose.msra.mxu0 0.0
    %3022 = vmatprep.subr.mxu0 0.0
    %3023 = vmatpush1.xpose.msra.mxu0 0.0
    %3024 = vmatprep.subr.mxu0 0.0
    %3025 = vmatpush1.xpose.msra.mxu0 0.0
    %3026 = vmatprep.subr.mxu0 0.0
    %3027 = vmatpush1.xpose.msra.mxu0 0.0
    %3028 = vmatprep.subr.mxu0 0.0
    %3029 = vmatpush1.xpose.msra.mxu0 0.0
    %3030 = vmatprep.subr.mxu0 0.0
    %3031 = vmatpush1.xpose.msra.mxu0 0.0
    %3032 = vmatprep.subr.mxu0 0.0
    %3033 = vmatpush1.xpose.msra.mxu0 0.0
    %3034 = vmatprep.subr.mxu0 0.0
    %3035 = vmatpush1.xpose.msra.mxu0 0.0
    %3036 = vmatprep.subr.mxu0 0.0
    %3037 = vmatpush1.xpose.msra.mxu0 0.0
    %3038 = vmatprep.subr.mxu0 0.0
    %3039 = vmatpush1.xpose.msra.mxu0 0.0
    %3040 = vmatprep.subr.mxu0 0.0
    %3041 = vmatpush1.xpose.msra.mxu0 0.0
    %3042 = vmatprep.subr.mxu0 0.0
    %3043 = vmatpush1.xpose.msra.mxu0 0.0
    %3044 = vmatprep.subr.mxu0 %v124
    %3045 = vmatpush1.xpose.msra.mxu0 %v123
    %3046 = vmatprep.subr.mxu0 0.0
    %3047 = vmatpush2.xpose.msra.mxu0 0.0
    %3048 = vmatprep.subr.mxu0 0.0
    %3049 = vmatpush2.xpose.msra.mxu0 0.0
    %3050 = vmatprep.subr.mxu0 0.0
    %3051 = vmatpush2.xpose.msra.mxu0 0.0
    %3052 = vmatprep.subr.mxu0 0.0
    %3053 = vmatpush2.xpose.msra.mxu0 0.0
    %3054 = vmatprep.subr.mxu0 0.0
    %3055 = vmatpush2.xpose.msra.mxu0 0.0
    %3056 = vmatprep.subr.mxu0 0.0
    %3057 = vmatpush2.xpose.msra.mxu0 0.0
    %3058 = vmatprep.subr.mxu0 0.0
    %3059 = vmatpush2.xpose.msra.mxu0 0.0
    %3060 = vmatprep.subr.mxu0 0.0
    %3061 = vmatpush2.xpose.msra.mxu0 0.0
    %3062 = vmatprep.subr.mxu0 0.0
    %3063 = vmatpush2.xpose.msra.mxu0 0.0
    %3064 = vmatprep.subr.mxu0 0.0
    %3065 = vmatpush2.xpose.msra.mxu0 0.0
    %3066 = vmatprep.subr.mxu0 0.0
    %3067 = vmatpush2.xpose.msra.mxu0 0.0
    %3068 = vmatprep.subr.mxu0 0.0
    %3069 = vmatpush2.xpose.msra.mxu0 0.0
    %3070 = vmatprep.subr.mxu0 0.0
    %3071 = vmatpush2.xpose.msra.mxu0 0.0
    %3072 = vmatprep.subr.mxu0 0.0
    %3073 = vmatpush2.xpose.msra.mxu0 0.0
    %3074 = vmatprep.subr.mxu0 0.0
    %3075 = vmatpush2.xpose.msra.mxu0 0.0
    %3076 = vmatprep.subr.mxu0 0.0
    %3077 = vmatpush2.xpose.msra.mxu0 0.0
    %3078 = vmatprep.mubr.f32.mxu0 %v562
    %3079 = vmatmul.mubr.f32.gmra.mxu0 %v554
    %v3080 = vpop.f32.mrf.mxu0
    %v3081 = vadd.f32 %v3011, %v3080
    %v3082 = vpop.f32.mrf.mxu0
    %3083 = vdwg.mxu0
    %3084 = vmatprep.subr.mxu0 0.0
    %3085 = vmatpush1.xpose.msra.mxu0 0.0
    %3086 = vmatprep.subr.mxu0 0.0
    %3087 = vmatpush1.xpose.msra.mxu0 0.0
    %3088 = vmatprep.subr.mxu0 0.0
    %3089 = vmatpush1.xpose.msra.mxu0 0.0
    %3090 = vmatprep.subr.mxu0 0.0
    %3091 = vmatpush1.xpose.msra.mxu0 0.0
    %3092 = vmatprep.subr.mxu0 0.0
    %3093 = vmatpush1.xpose.msra.mxu0 0.0
    %3094 = vmatprep.subr.mxu0 0.0
    %3095 = vmatpush1.xpose.msra.mxu0 0.0
    %3096 = vmatprep.subr.mxu0 0.0
    %3097 = vmatpush1.xpose.msra.mxu0 0.0
    %3098 = vmatprep.subr.mxu0 0.0
    %3099 = vmatpush1.xpose.msra.mxu0 0.0
    %3100 = vmatprep.subr.mxu0 0.0
    %3101 = vmatpush1.xpose.msra.mxu0 0.0
    %3102 = vmatprep.subr.mxu0 0.0
    %3103 = vmatpush1.xpose.msra.mxu0 0.0
    %3104 = vmatprep.subr.mxu0 0.0
    %3105 = vmatpush1.xpose.msra.mxu0 0.0
    %3106 = vmatprep.subr.mxu0 0.0
    %3107 = vmatpush1.xpose.msra.mxu0 0.0
    %3108 = vmatprep.subr.mxu0 0.0
    %3109 = vmatpush1.xpose.msra.mxu0 0.0
    %3110 = vmatprep.subr.mxu0 0.0
    %3111 = vmatpush1.xpose.msra.mxu0 0.0
    %3112 = vmatprep.subr.mxu0 0.0
    %3113 = vmatpush1.xpose.msra.mxu0 0.0
    %3114 = vmatprep.subr.mxu0 %v126
    %3115 = vmatpush1.xpose.msra.mxu0 %v125
    %3116 = vmatprep.subr.mxu0 0.0
    %3117 = vmatpush2.xpose.msra.mxu0 0.0
    %3118 = vmatprep.subr.mxu0 0.0
    %3119 = vmatpush2.xpose.msra.mxu0 0.0
    %3120 = vmatprep.subr.mxu0 0.0
    %3121 = vmatpush2.xpose.msra.mxu0 0.0
    %3122 = vmatprep.subr.mxu0 0.0
    %3123 = vmatpush2.xpose.msra.mxu0 0.0
    %3124 = vmatprep.subr.mxu0 0.0
    %3125 = vmatpush2.xpose.msra.mxu0 0.0
    %3126 = vmatprep.subr.mxu0 0.0
    %3127 = vmatpush2.xpose.msra.mxu0 0.0
    %3128 = vmatprep.subr.mxu0 0.0
    %3129 = vmatpush2.xpose.msra.mxu0 0.0
    %3130 = vmatprep.subr.mxu0 0.0
    %3131 = vmatpush2.xpose.msra.mxu0 0.0
    %3132 = vmatprep.subr.mxu0 0.0
    %3133 = vmatpush2.xpose.msra.mxu0 0.0
    %3134 = vmatprep.subr.mxu0 0.0
    %3135 = vmatpush2.xpose.msra.mxu0 0.0
    %3136 = vmatprep.subr.mxu0 0.0
    %3137 = vmatpush2.xpose.msra.mxu0 0.0
    %3138 = vmatprep.subr.mxu0 0.0
    %3139 = vmatpush2.xpose.msra.mxu0 0.0
    %3140 = vmatprep.subr.mxu0 0.0
    %3141 = vmatpush2.xpose.msra.mxu0 0.0
    %3142 = vmatprep.subr.mxu0 0.0
    %3143 = vmatpush2.xpose.msra.mxu0 0.0
    %3144 = vmatprep.subr.mxu0 0.0
    %3145 = vmatpush2.xpose.msra.mxu0 0.0
    %3146 = vmatprep.subr.mxu0 0.0
    %3147 = vmatpush2.xpose.msra.mxu0 0.0
    %3148 = vmatprep.mubr.f32.mxu0 %v563
    %3149 = vmatmul.mubr.f32.gmra.mxu0 %v561
    %v3150 = vpop.f32.mrf.mxu0
    %v3151 = vadd.f32 %v3081, %v3150
    %v3152 = vpop.f32.mrf.mxu0
    %3153 = vdwg.mxu0
    %3154 = vmatprep.subr.mxu0 0.0
    %3155 = vmatpush1.xpose.msra.mxu0 0.0
    %3156 = vmatprep.subr.mxu0 0.0
    %3157 = vmatpush1.xpose.msra.mxu0 0.0
    %3158 = vmatprep.subr.mxu0 0.0
    %3159 = vmatpush1.xpose.msra.mxu0 0.0
    %3160 = vmatprep.subr.mxu0 0.0
    %3161 = vmatpush1.xpose.msra.mxu0 0.0
    %3162 = vmatprep.subr.mxu0 0.0
    %3163 = vmatpush1.xpose.msra.mxu0 0.0
    %3164 = vmatprep.subr.mxu0 0.0
    %3165 = vmatpush1.xpose.msra.mxu0 0.0
    %3166 = vmatprep.subr.mxu0 0.0
    %3167 = vmatpush1.xpose.msra.mxu0 0.0
    %3168 = vmatprep.subr.mxu0 0.0
    %3169 = vmatpush1.xpose.msra.mxu0 0.0
    %3170 = vmatprep.subr.mxu0 0.0
    %3171 = vmatpush1.xpose.msra.mxu0 0.0
    %3172 = vmatprep.subr.mxu0 0.0
    %3173 = vmatpush1.xpose.msra.mxu0 0.0
    %3174 = vmatprep.subr.mxu0 0.0
    %3175 = vmatpush1.xpose.msra.mxu0 0.0
    %3176 = vmatprep.subr.mxu0 0.0
    %3177 = vmatpush1.xpose.msra.mxu0 0.0
    %3178 = vmatprep.subr.mxu0 0.0
    %3179 = vmatpush1.xpose.msra.mxu0 0.0
    %3180 = vmatprep.subr.mxu0 0.0
    %3181 = vmatpush1.xpose.msra.mxu0 0.0
    %3182 = vmatprep.subr.mxu0 0.0
    %3183 = vmatpush1.xpose.msra.mxu0 0.0
    %3184 = vmatprep.subr.mxu0 %v128
    %3185 = vmatpush1.xpose.msra.mxu0 %v127
    %3186 = vmatprep.subr.mxu0 0.0
    %3187 = vmatpush2.xpose.msra.mxu0 0.0
    %3188 = vmatprep.subr.mxu0 0.0
    %3189 = vmatpush2.xpose.msra.mxu0 0.0
    %3190 = vmatprep.subr.mxu0 0.0
    %3191 = vmatpush2.xpose.msra.mxu0 0.0
    %3192 = vmatprep.subr.mxu0 0.0
    %3193 = vmatpush2.xpose.msra.mxu0 0.0
    %3194 = vmatprep.subr.mxu0 0.0
    %3195 = vmatpush2.xpose.msra.mxu0 0.0
    %3196 = vmatprep.subr.mxu0 0.0
    %3197 = vmatpush2.xpose.msra.mxu0 0.0
    %3198 = vmatprep.subr.mxu0 0.0
    %3199 = vmatpush2.xpose.msra.mxu0 0.0
    %3200 = vmatprep.subr.mxu0 0.0
    %3201 = vmatpush2.xpose.msra.mxu0 0.0
    %3202 = vmatprep.subr.mxu0 0.0
    %3203 = vmatpush2.xpose.msra.mxu0 0.0
    %3204 = vmatprep.subr.mxu0 0.0
    %3205 = vmatpush2.xpose.msra.mxu0 0.0
    %3206 = vmatprep.subr.mxu0 0.0
    %3207 = vmatpush2.xpose.msra.mxu0 0.0
    %3208 = vmatprep.subr.mxu0 0.0
    %3209 = vmatpush2.xpose.msra.mxu0 0.0
    %3210 = vmatprep.subr.mxu0 0.0
    %3211 = vmatpush2.xpose.msra.mxu0 0.0
    %3212 = vmatprep.subr.mxu0 0.0
    %3213 = vmatpush2.xpose.msra.mxu0 0.0
    %3214 = vmatprep.subr.mxu0 0.0
    %3215 = vmatpush2.xpose.msra.mxu0 0.0
    %3216 = vmatprep.subr.mxu0 0.0
    %3217 = vmatpush2.xpose.msra.mxu0 0.0
    %3218 = vmatprep.mubr.f32.mxu0 %v579
    %3219 = vmatmul.mubr.f32.gmra.mxu0 %v571
    %v3220 = vpop.f32.mrf.mxu0
    %v3221 = vadd.f32 %v3151, %v3220
    %v3222 = vpop.f32.mrf.mxu0
    %3223 = vdwg.mxu0
    %3224 = vmatprep.subr.mxu0 0.0
    %3225 = vmatpush1.xpose.msra.mxu0 0.0
    %3226 = vmatprep.subr.mxu0 0.0
    %3227 = vmatpush1.xpose.msra.mxu0 0.0
    %3228 = vmatprep.subr.mxu0 0.0
    %3229 = vmatpush1.xpose.msra.mxu0 0.0
    %3230 = vmatprep.subr.mxu0 0.0
    %3231 = vmatpush1.xpose.msra.mxu0 0.0
    %3232 = vmatprep.subr.mxu0 0.0
    %3233 = vmatpush1.xpose.msra.mxu0 0.0
    %3234 = vmatprep.subr.mxu0 0.0
    %3235 = vmatpush1.xpose.msra.mxu0 0.0
    %3236 = vmatprep.subr.mxu0 0.0
    %3237 = vmatpush1.xpose.msra.mxu0 0.0
    %3238 = vmatprep.subr.mxu0 0.0
    %3239 = vmatpush1.xpose.msra.mxu0 0.0
    %3240 = vmatprep.subr.mxu0 0.0
    %3241 = vmatpush1.xpose.msra.mxu0 0.0
    %3242 = vmatprep.subr.mxu0 0.0
    %3243 = vmatpush1.xpose.msra.mxu0 0.0
    %3244 = vmatprep.subr.mxu0 0.0
    %3245 = vmatpush1.xpose.msra.mxu0 0.0
    %3246 = vmatprep.subr.mxu0 0.0
    %3247 = vmatpush1.xpose.msra.mxu0 0.0
    %3248 = vmatprep.subr.mxu0 0.0
    %3249 = vmatpush1.xpose.msra.mxu0 0.0
    %3250 = vmatprep.subr.mxu0 0.0
    %3251 = vmatpush1.xpose.msra.mxu0 0.0
    %3252 = vmatprep.subr.mxu0 0.0
    %3253 = vmatpush1.xpose.msra.mxu0 0.0
    %3254 = vmatprep.subr.mxu0 %v130
    %3255 = vmatpush1.xpose.msra.mxu0 %v129
    %3256 = vmatprep.subr.mxu0 0.0
    %3257 = vmatpush2.xpose.msra.mxu0 0.0
    %3258 = vmatprep.subr.mxu0 0.0
    %3259 = vmatpush2.xpose.msra.mxu0 0.0
    %3260 = vmatprep.subr.mxu0 0.0
    %3261 = vmatpush2.xpose.msra.mxu0 0.0
    %3262 = vmatprep.subr.mxu0 0.0
    %3263 = vmatpush2.xpose.msra.mxu0 0.0
    %3264 = vmatprep.subr.mxu0 0.0
    %3265 = vmatpush2.xpose.msra.mxu0 0.0
    %3266 = vmatprep.subr.mxu0 0.0
    %3267 = vmatpush2.xpose.msra.mxu0 0.0
    %3268 = vmatprep.subr.mxu0 0.0
    %3269 = vmatpush2.xpose.msra.mxu0 0.0
    %3270 = vmatprep.subr.mxu0 0.0
    %3271 = vmatpush2.xpose.msra.mxu0 0.0
    %3272 = vmatprep.subr.mxu0 0.0
    %3273 = vmatpush2.xpose.msra.mxu0 0.0
    %3274 = vmatprep.subr.mxu0 0.0
    %3275 = vmatpush2.xpose.msra.mxu0 0.0
    %3276 = vmatprep.subr.mxu0 0.0
    %3277 = vmatpush2.xpose.msra.mxu0 0.0
    %3278 = vmatprep.subr.mxu0 0.0
    %3279 = vmatpush2.xpose.msra.mxu0 0.0
    %3280 = vmatprep.subr.mxu0 0.0
    %3281 = vmatpush2.xpose.msra.mxu0 0.0
    %3282 = vmatprep.subr.mxu0 0.0
    %3283 = vmatpush2.xpose.msra.mxu0 0.0
    %3284 = vmatprep.subr.mxu0 0.0
    %3285 = vmatpush2.xpose.msra.mxu0 0.0
    %3286 = vmatprep.subr.mxu0 0.0
    %3287 = vmatpush2.xpose.msra.mxu0 0.0
    %3288 = vmatprep.mubr.f32.mxu0 %v580
    %3289 = vmatmul.mubr.f32.gmra.mxu0 %v578
    %v3290 = vpop.f32.mrf.mxu0
    %v3291 = vadd.f32 %v3221, %v3290
    %v3292 = vpop.f32.mrf.mxu0
    %3293 = vdwg.mxu0
    %3294 = vmatprep.subr.mxu0 0.0
    %3295 = vmatpush1.xpose.msra.mxu0 0.0
    %3296 = vmatprep.subr.mxu0 0.0
    %3297 = vmatpush1.xpose.msra.mxu0 0.0
    %3298 = vmatprep.subr.mxu0 0.0
    %3299 = vmatpush1.xpose.msra.mxu0 0.0
    %3300 = vmatprep.subr.mxu0 0.0
    %3301 = vmatpush1.xpose.msra.mxu0 0.0
    %3302 = vmatprep.subr.mxu0 0.0
    %3303 = vmatpush1.xpose.msra.mxu0 0.0
    %3304 = vmatprep.subr.mxu0 0.0
    %3305 = vmatpush1.xpose.msra.mxu0 0.0
    %3306 = vmatprep.subr.mxu0 0.0
    %3307 = vmatpush1.xpose.msra.mxu0 0.0
    %3308 = vmatprep.subr.mxu0 0.0
    %3309 = vmatpush1.xpose.msra.mxu0 0.0
    %3310 = vmatprep.subr.mxu0 0.0
    %3311 = vmatpush1.xpose.msra.mxu0 0.0
    %3312 = vmatprep.subr.mxu0 0.0
    %3313 = vmatpush1.xpose.msra.mxu0 0.0
    %3314 = vmatprep.subr.mxu0 0.0
    %3315 = vmatpush1.xpose.msra.mxu0 0.0
    %3316 = vmatprep.subr.mxu0 0.0
    %3317 = vmatpush1.xpose.msra.mxu0 0.0
    %3318 = vmatprep.subr.mxu0 0.0
    %3319 = vmatpush1.xpose.msra.mxu0 0.0
    %3320 = vmatprep.subr.mxu0 0.0
    %3321 = vmatpush1.xpose.msra.mxu0 0.0
    %3322 = vmatprep.subr.mxu0 0.0
    %3323 = vmatpush1.xpose.msra.mxu0 0.0
    %3324 = vmatprep.subr.mxu0 %v132
    %3325 = vmatpush1.xpose.msra.mxu0 %v131
    %3326 = vmatprep.subr.mxu0 0.0
    %3327 = vmatpush2.xpose.msra.mxu0 0.0
    %3328 = vmatprep.subr.mxu0 0.0
    %3329 = vmatpush2.xpose.msra.mxu0 0.0
    %3330 = vmatprep.subr.mxu0 0.0
    %3331 = vmatpush2.xpose.msra.mxu0 0.0
    %3332 = vmatprep.subr.mxu0 0.0
    %3333 = vmatpush2.xpose.msra.mxu0 0.0
    %3334 = vmatprep.subr.mxu0 0.0
    %3335 = vmatpush2.xpose.msra.mxu0 0.0
    %3336 = vmatprep.subr.mxu0 0.0
    %3337 = vmatpush2.xpose.msra.mxu0 0.0
    %3338 = vmatprep.subr.mxu0 0.0
    %3339 = vmatpush2.xpose.msra.mxu0 0.0
    %3340 = vmatprep.subr.mxu0 0.0
    %3341 = vmatpush2.xpose.msra.mxu0 0.0
    %3342 = vmatprep.subr.mxu0 0.0
    %3343 = vmatpush2.xpose.msra.mxu0 0.0
    %3344 = vmatprep.subr.mxu0 0.0
    %3345 = vmatpush2.xpose.msra.mxu0 0.0
    %3346 = vmatprep.subr.mxu0 0.0
    %3347 = vmatpush2.xpose.msra.mxu0 0.0
    %3348 = vmatprep.subr.mxu0 0.0
    %3349 = vmatpush2.xpose.msra.mxu0 0.0
    %3350 = vmatprep.subr.mxu0 0.0
    %3351 = vmatpush2.xpose.msra.mxu0 0.0
    %3352 = vmatprep.subr.mxu0 0.0
    %3353 = vmatpush2.xpose.msra.mxu0 0.0
    %3354 = vmatprep.subr.mxu0 0.0
    %3355 = vmatpush2.xpose.msra.mxu0 0.0
    %3356 = vmatprep.subr.mxu0 0.0
    %3357 = vmatpush2.xpose.msra.mxu0 0.0
    %3358 = vmatprep.mubr.f32.mxu0 %v596
    %3359 = vmatmul.mubr.f32.gmra.mxu0 %v588
    %v3360 = vpop.f32.mrf.mxu0
    %v3361 = vadd.f32 %v3291, %v3360
    %v3362 = vpop.f32.mrf.mxu0
    %3363 = vdwg.mxu0
    %3364 = vmatprep.subr.mxu0 0.0
    %3365 = vmatpush1.xpose.msra.mxu0 0.0
    %3366 = vmatprep.subr.mxu0 0.0
    %3367 = vmatpush1.xpose.msra.mxu0 0.0
    %3368 = vmatprep.subr.mxu0 0.0
    %3369 = vmatpush1.xpose.msra.mxu0 0.0
    %3370 = vmatprep.subr.mxu0 0.0
    %3371 = vmatpush1.xpose.msra.mxu0 0.0
    %3372 = vmatprep.subr.mxu0 0.0
    %3373 = vmatpush1.xpose.msra.mxu0 0.0
    %3374 = vmatprep.subr.mxu0 0.0
    %3375 = vmatpush1.xpose.msra.mxu0 0.0
    %3376 = vmatprep.subr.mxu0 0.0
    %3377 = vmatpush1.xpose.msra.mxu0 0.0
    %3378 = vmatprep.subr.mxu0 0.0
    %3379 = vmatpush1.xpose.msra.mxu0 0.0
    %3380 = vmatprep.subr.mxu0 0.0
    %3381 = vmatpush1.xpose.msra.mxu0 0.0
    %3382 = vmatprep.subr.mxu0 0.0
    %3383 = vmatpush1.xpose.msra.mxu0 0.0
    %3384 = vmatprep.subr.mxu0 0.0
    %3385 = vmatpush1.xpose.msra.mxu0 0.0
    %3386 = vmatprep.subr.mxu0 0.0
    %3387 = vmatpush1.xpose.msra.mxu0 0.0
    %3388 = vmatprep.subr.mxu0 0.0
    %3389 = vmatpush1.xpose.msra.mxu0 0.0
    %3390 = vmatprep.subr.mxu0 0.0
    %3391 = vmatpush1.xpose.msra.mxu0 0.0
    %3392 = vmatprep.subr.mxu0 0.0
    %3393 = vmatpush1.xpose.msra.mxu0 0.0
    %3394 = vmatprep.subr.mxu0 %v134
    %3395 = vmatpush1.xpose.msra.mxu0 %v133
    %3396 = vmatprep.subr.mxu0 0.0
    %3397 = vmatpush2.xpose.msra.mxu0 0.0
    %3398 = vmatprep.subr.mxu0 0.0
    %3399 = vmatpush2.xpose.msra.mxu0 0.0
    %3400 = vmatprep.subr.mxu0 0.0
    %3401 = vmatpush2.xpose.msra.mxu0 0.0
    %3402 = vmatprep.subr.mxu0 0.0
    %3403 = vmatpush2.xpose.msra.mxu0 0.0
    %3404 = vmatprep.subr.mxu0 0.0
    %3405 = vmatpush2.xpose.msra.mxu0 0.0
    %3406 = vmatprep.subr.mxu0 0.0
    %3407 = vmatpush2.xpose.msra.mxu0 0.0
    %3408 = vmatprep.subr.mxu0 0.0
    %3409 = vmatpush2.xpose.msra.mxu0 0.0
    %3410 = vmatprep.subr.mxu0 0.0
    %3411 = vmatpush2.xpose.msra.mxu0 0.0
    %3412 = vmatprep.subr.mxu0 0.0
    %3413 = vmatpush2.xpose.msra.mxu0 0.0
    %3414 = vmatprep.subr.mxu0 0.0
    %3415 = vmatpush2.xpose.msra.mxu0 0.0
    %3416 = vmatprep.subr.mxu0 0.0
    %3417 = vmatpush2.xpose.msra.mxu0 0.0
    %3418 = vmatprep.subr.mxu0 0.0
    %3419 = vmatpush2.xpose.msra.mxu0 0.0
    %3420 = vmatprep.subr.mxu0 0.0
    %3421 = vmatpush2.xpose.msra.mxu0 0.0
    %3422 = vmatprep.subr.mxu0 0.0
    %3423 = vmatpush2.xpose.msra.mxu0 0.0
    %3424 = vmatprep.subr.mxu0 0.0
    %3425 = vmatpush2.xpose.msra.mxu0 0.0
    %3426 = vmatprep.subr.mxu0 0.0
    %3427 = vmatpush2.xpose.msra.mxu0 0.0
    %3428 = vmatprep.mubr.f32.mxu0 %v597
    %3429 = vmatmul.mubr.f32.gmra.mxu0 %v595
    %v3430 = vpop.f32.mrf.mxu0
    %v3431 = vadd.f32 %v3361, %v3430
    %v3432 = vpop.f32.mrf.mxu0
    %3433 = vdwg.mxu0
    %3434 = vmatprep.subr.mxu0 0.0
    %3435 = vmatpush1.xpose.msra.mxu0 0.0
    %3436 = vmatprep.subr.mxu0 0.0
    %3437 = vmatpush1.xpose.msra.mxu0 0.0
    %3438 = vmatprep.subr.mxu0 0.0
    %3439 = vmatpush1.xpose.msra.mxu0 0.0
    %3440 = vmatprep.subr.mxu0 0.0
    %3441 = vmatpush1.xpose.msra.mxu0 0.0
    %3442 = vmatprep.subr.mxu0 0.0
    %3443 = vmatpush1.xpose.msra.mxu0 0.0
    %3444 = vmatprep.subr.mxu0 0.0
    %3445 = vmatpush1.xpose.msra.mxu0 0.0
    %3446 = vmatprep.subr.mxu0 0.0
    %3447 = vmatpush1.xpose.msra.mxu0 0.0
    %3448 = vmatprep.subr.mxu0 0.0
    %3449 = vmatpush1.xpose.msra.mxu0 0.0
    %3450 = vmatprep.subr.mxu0 0.0
    %3451 = vmatpush1.xpose.msra.mxu0 0.0
    %3452 = vmatprep.subr.mxu0 0.0
    %3453 = vmatpush1.xpose.msra.mxu0 0.0
    %3454 = vmatprep.subr.mxu0 0.0
    %3455 = vmatpush1.xpose.msra.mxu0 0.0
    %3456 = vmatprep.subr.mxu0 0.0
    %3457 = vmatpush1.xpose.msra.mxu0 0.0
    %3458 = vmatprep.subr.mxu0 0.0
    %3459 = vmatpush1.xpose.msra.mxu0 0.0
    %3460 = vmatprep.subr.mxu0 0.0
    %3461 = vmatpush1.xpose.msra.mxu0 0.0
    %3462 = vmatprep.subr.mxu0 0.0
    %3463 = vmatpush1.xpose.msra.mxu0 0.0
    %3464 = vmatprep.subr.mxu0 %v136
    %3465 = vmatpush1.xpose.msra.mxu0 %v135
    %3466 = vmatprep.subr.mxu0 0.0
    %3467 = vmatpush2.xpose.msra.mxu0 0.0
    %3468 = vmatprep.subr.mxu0 0.0
    %3469 = vmatpush2.xpose.msra.mxu0 0.0
    %3470 = vmatprep.subr.mxu0 0.0
    %3471 = vmatpush2.xpose.msra.mxu0 0.0
    %3472 = vmatprep.subr.mxu0 0.0
    %3473 = vmatpush2.xpose.msra.mxu0 0.0
    %3474 = vmatprep.subr.mxu0 0.0
    %3475 = vmatpush2.xpose.msra.mxu0 0.0
    %3476 = vmatprep.subr.mxu0 0.0
    %3477 = vmatpush2.xpose.msra.mxu0 0.0
    %3478 = vmatprep.subr.mxu0 0.0
    %3479 = vmatpush2.xpose.msra.mxu0 0.0
    %3480 = vmatprep.subr.mxu0 0.0
    %3481 = vmatpush2.xpose.msra.mxu0 0.0
    %3482 = vmatprep.subr.mxu0 0.0
    %3483 = vmatpush2.xpose.msra.mxu0 0.0
    %3484 = vmatprep.subr.mxu0 0.0
    %3485 = vmatpush2.xpose.msra.mxu0 0.0
    %3486 = vmatprep.subr.mxu0 0.0
    %3487 = vmatpush2.xpose.msra.mxu0 0.0
    %3488 = vmatprep.subr.mxu0 0.0
    %3489 = vmatpush2.xpose.msra.mxu0 0.0
    %3490 = vmatprep.subr.mxu0 0.0
    %3491 = vmatpush2.xpose.msra.mxu0 0.0
    %3492 = vmatprep.subr.mxu0 0.0
    %3493 = vmatpush2.xpose.msra.mxu0 0.0
    %3494 = vmatprep.subr.mxu0 0.0
    %3495 = vmatpush2.xpose.msra.mxu0 0.0
    %3496 = vmatprep.subr.mxu0 0.0
    %3497 = vmatpush2.xpose.msra.mxu0 0.0
    %3498 = vmatprep.mubr.f32.mxu0 %v613
    %3499 = vmatmul.mubr.f32.gmra.mxu0 %v605
    %v3500 = vpop.f32.mrf.mxu0
    %v3501 = vadd.f32 %v3431, %v3500
    %v3502 = vpop.f32.mrf.mxu0
    %3503 = vdwg.mxu0
    %3504 = vmatprep.subr.mxu0 0.0
    %3505 = vmatpush1.xpose.msra.mxu0 0.0
    %3506 = vmatprep.subr.mxu0 0.0
    %3507 = vmatpush1.xpose.msra.mxu0 0.0
    %3508 = vmatprep.subr.mxu0 0.0
    %3509 = vmatpush1.xpose.msra.mxu0 0.0
    %3510 = vmatprep.subr.mxu0 0.0
    %3511 = vmatpush1.xpose.msra.mxu0 0.0
    %3512 = vmatprep.subr.mxu0 0.0
    %3513 = vmatpush1.xpose.msra.mxu0 0.0
    %3514 = vmatprep.subr.mxu0 0.0
    %3515 = vmatpush1.xpose.msra.mxu0 0.0
    %3516 = vmatprep.subr.mxu0 0.0
    %3517 = vmatpush1.xpose.msra.mxu0 0.0
    %3518 = vmatprep.subr.mxu0 0.0
    %3519 = vmatpush1.xpose.msra.mxu0 0.0
    %3520 = vmatprep.subr.mxu0 0.0
    %3521 = vmatpush1.xpose.msra.mxu0 0.0
    %3522 = vmatprep.subr.mxu0 0.0
    %3523 = vmatpush1.xpose.msra.mxu0 0.0
    %3524 = vmatprep.subr.mxu0 0.0
    %3525 = vmatpush1.xpose.msra.mxu0 0.0
    %3526 = vmatprep.subr.mxu0 0.0
    %3527 = vmatpush1.xpose.msra.mxu0 0.0
    %3528 = vmatprep.subr.mxu0 0.0
    %3529 = vmatpush1.xpose.msra.mxu0 0.0
    %3530 = vmatprep.subr.mxu0 0.0
    %3531 = vmatpush1.xpose.msra.mxu0 0.0
    %3532 = vmatprep.subr.mxu0 0.0
    %3533 = vmatpush1.xpose.msra.mxu0 0.0
    %3534 = vmatprep.subr.mxu0 %v138
    %3535 = vmatpush1.xpose.msra.mxu0 %v137
    %3536 = vmatprep.subr.mxu0 0.0
    %3537 = vmatpush2.xpose.msra.mxu0 0.0
    %3538 = vmatprep.subr.mxu0 0.0
    %3539 = vmatpush2.xpose.msra.mxu0 0.0
    %3540 = vmatprep.subr.mxu0 0.0
    %3541 = vmatpush2.xpose.msra.mxu0 0.0
    %3542 = vmatprep.subr.mxu0 0.0
    %3543 = vmatpush2.xpose.msra.mxu0 0.0
    %3544 = vmatprep.subr.mxu0 0.0
    %3545 = vmatpush2.xpose.msra.mxu0 0.0
    %3546 = vmatprep.subr.mxu0 0.0
    %3547 = vmatpush2.xpose.msra.mxu0 0.0
    %3548 = vmatprep.subr.mxu0 0.0
    %3549 = vmatpush2.xpose.msra.mxu0 0.0
    %3550 = vmatprep.subr.mxu0 0.0
    %3551 = vmatpush2.xpose.msra.mxu0 0.0
    %3552 = vmatprep.subr.mxu0 0.0
    %3553 = vmatpush2.xpose.msra.mxu0 0.0
    %3554 = vmatprep.subr.mxu0 0.0
    %3555 = vmatpush2.xpose.msra.mxu0 0.0
    %3556 = vmatprep.subr.mxu0 0.0
    %3557 = vmatpush2.xpose.msra.mxu0 0.0
    %3558 = vmatprep.subr.mxu0 0.0
    %3559 = vmatpush2.xpose.msra.mxu0 0.0
    %3560 = vmatprep.subr.mxu0 0.0
    %3561 = vmatpush2.xpose.msra.mxu0 0.0
    %3562 = vmatprep.subr.mxu0 0.0
    %3563 = vmatpush2.xpose.msra.mxu0 0.0
    %3564 = vmatprep.subr.mxu0 0.0
    %3565 = vmatpush2.xpose.msra.mxu0 0.0
    %3566 = vmatprep.subr.mxu0 0.0
    %3567 = vmatpush2.xpose.msra.mxu0 0.0
    %3568 = vmatprep.mubr.f32.mxu0 %v614
    %3569 = vmatmul.mubr.f32.gmra.mxu0 %v612
    %v3570 = vpop.f32.mrf.mxu0
    %v3571 = vadd.f32 %v3501, %v3570
    %v3572 = vpop.f32.mrf.mxu0
    %3573 = vdwg.mxu0
    %3574 = vmatprep.subr.mxu0 0.0
    %3575 = vmatpush1.xpose.msra.mxu0 0.0
    %3576 = vmatprep.subr.mxu0 0.0
    %3577 = vmatpush1.xpose.msra.mxu0 0.0
    %3578 = vmatprep.subr.mxu0 0.0
    %3579 = vmatpush1.xpose.msra.mxu0 0.0
    %3580 = vmatprep.subr.mxu0 0.0
    %3581 = vmatpush1.xpose.msra.mxu0 0.0
    %3582 = vmatprep.subr.mxu0 0.0
    %3583 = vmatpush1.xpose.msra.mxu0 0.0
    %3584 = vmatprep.subr.mxu0 0.0
    %3585 = vmatpush1.xpose.msra.mxu0 0.0
    %3586 = vmatprep.subr.mxu0 0.0
    %3587 = vmatpush1.xpose.msra.mxu0 0.0
    %3588 = vmatprep.subr.mxu0 0.0
    %3589 = vmatpush1.xpose.msra.mxu0 0.0
    %3590 = vmatprep.subr.mxu0 0.0
    %3591 = vmatpush1.xpose.msra.mxu0 0.0
    %3592 = vmatprep.subr.mxu0 0.0
    %3593 = vmatpush1.xpose.msra.mxu0 0.0
    %3594 = vmatprep.subr.mxu0 0.0
    %3595 = vmatpush1.xpose.msra.mxu0 0.0
    %3596 = vmatprep.subr.mxu0 0.0
    %3597 = vmatpush1.xpose.msra.mxu0 0.0
    %3598 = vmatprep.subr.mxu0 0.0
    %3599 = vmatpush1.xpose.msra.mxu0 0.0
    %3600 = vmatprep.subr.mxu0 0.0
    %3601 = vmatpush1.xpose.msra.mxu0 0.0
    %3602 = vmatprep.subr.mxu0 0.0
    %3603 = vmatpush1.xpose.msra.mxu0 0.0
    %3604 = vmatprep.subr.mxu0 %v140
    %3605 = vmatpush1.xpose.msra.mxu0 %v139
    %3606 = vmatprep.subr.mxu0 0.0
    %3607 = vmatpush2.xpose.msra.mxu0 0.0
    %3608 = vmatprep.subr.mxu0 0.0
    %3609 = vmatpush2.xpose.msra.mxu0 0.0
    %3610 = vmatprep.subr.mxu0 0.0
    %3611 = vmatpush2.xpose.msra.mxu0 0.0
    %3612 = vmatprep.subr.mxu0 0.0
    %3613 = vmatpush2.xpose.msra.mxu0 0.0
    %3614 = vmatprep.subr.mxu0 0.0
    %3615 = vmatpush2.xpose.msra.mxu0 0.0
    %3616 = vmatprep.subr.mxu0 0.0
    %3617 = vmatpush2.xpose.msra.mxu0 0.0
    %3618 = vmatprep.subr.mxu0 0.0
    %3619 = vmatpush2.xpose.msra.mxu0 0.0
    %3620 = vmatprep.subr.mxu0 0.0
    %3621 = vmatpush2.xpose.msra.mxu0 0.0
    %3622 = vmatprep.subr.mxu0 0.0
    %3623 = vmatpush2.xpose.msra.mxu0 0.0
    %3624 = vmatprep.subr.mxu0 0.0
    %3625 = vmatpush2.xpose.msra.mxu0 0.0
    %3626 = vmatprep.subr.mxu0 0.0
    %3627 = vmatpush2.xpose.msra.mxu0 0.0
    %3628 = vmatprep.subr.mxu0 0.0
    %3629 = vmatpush2.xpose.msra.mxu0 0.0
    %3630 = vmatprep.subr.mxu0 0.0
    %3631 = vmatpush2.xpose.msra.mxu0 0.0
    %3632 = vmatprep.subr.mxu0 0.0
    %3633 = vmatpush2.xpose.msra.mxu0 0.0
    %3634 = vmatprep.subr.mxu0 0.0
    %3635 = vmatpush2.xpose.msra.mxu0 0.0
    %3636 = vmatprep.subr.mxu0 0.0
    %3637 = vmatpush2.xpose.msra.mxu0 0.0
    %3638 = vmatprep.mubr.f32.mxu0 %v630
    %3639 = vmatmul.mubr.f32.gmra.mxu0 %v622
    %v3640 = vpop.f32.mrf.mxu0
    %v3641 = vadd.f32 %v3571, %v3640
    %v3642 = vpop.f32.mrf.mxu0
    %3643 = vdwg.mxu0
    %3644 = vmatprep.subr.mxu0 0.0
    %3645 = vmatpush1.xpose.msra.mxu0 0.0
    %3646 = vmatprep.subr.mxu0 0.0
    %3647 = vmatpush1.xpose.msra.mxu0 0.0
    %3648 = vmatprep.subr.mxu0 0.0
    %3649 = vmatpush1.xpose.msra.mxu0 0.0
    %3650 = vmatprep.subr.mxu0 0.0
    %3651 = vmatpush1.xpose.msra.mxu0 0.0
    %3652 = vmatprep.subr.mxu0 0.0
    %3653 = vmatpush1.xpose.msra.mxu0 0.0
    %3654 = vmatprep.subr.mxu0 0.0
    %3655 = vmatpush1.xpose.msra.mxu0 0.0
    %3656 = vmatprep.subr.mxu0 0.0
    %3657 = vmatpush1.xpose.msra.mxu0 0.0
    %3658 = vmatprep.subr.mxu0 0.0
    %3659 = vmatpush1.xpose.msra.mxu0 0.0
    %3660 = vmatprep.subr.mxu0 0.0
    %3661 = vmatpush1.xpose.msra.mxu0 0.0
    %3662 = vmatprep.subr.mxu0 0.0
    %3663 = vmatpush1.xpose.msra.mxu0 0.0
    %3664 = vmatprep.subr.mxu0 0.0
    %3665 = vmatpush1.xpose.msra.mxu0 0.0
    %3666 = vmatprep.subr.mxu0 0.0
    %3667 = vmatpush1.xpose.msra.mxu0 0.0
    %3668 = vmatprep.subr.mxu0 0.0
    %3669 = vmatpush1.xpose.msra.mxu0 0.0
    %3670 = vmatprep.subr.mxu0 0.0
    %3671 = vmatpush1.xpose.msra.mxu0 0.0
    %3672 = vmatprep.subr.mxu0 0.0
    %3673 = vmatpush1.xpose.msra.mxu0 0.0
    %3674 = vmatprep.subr.mxu0 %v142
    %3675 = vmatpush1.xpose.msra.mxu0 %v141
    %3676 = vmatprep.subr.mxu0 0.0
    %3677 = vmatpush2.xpose.msra.mxu0 0.0
    %3678 = vmatprep.subr.mxu0 0.0
    %3679 = vmatpush2.xpose.msra.mxu0 0.0
    %3680 = vmatprep.subr.mxu0 0.0
    %3681 = vmatpush2.xpose.msra.mxu0 0.0
    %3682 = vmatprep.subr.mxu0 0.0
    %3683 = vmatpush2.xpose.msra.mxu0 0.0
    %3684 = vmatprep.subr.mxu0 0.0
    %3685 = vmatpush2.xpose.msra.mxu0 0.0
    %3686 = vmatprep.subr.mxu0 0.0
    %3687 = vmatpush2.xpose.msra.mxu0 0.0
    %3688 = vmatprep.subr.mxu0 0.0
    %3689 = vmatpush2.xpose.msra.mxu0 0.0
    %3690 = vmatprep.subr.mxu0 0.0
    %3691 = vmatpush2.xpose.msra.mxu0 0.0
    %3692 = vmatprep.subr.mxu0 0.0
    %3693 = vmatpush2.xpose.msra.mxu0 0.0
    %3694 = vmatprep.subr.mxu0 0.0
    %3695 = vmatpush2.xpose.msra.mxu0 0.0
    %3696 = vmatprep.subr.mxu0 0.0
    %3697 = vmatpush2.xpose.msra.mxu0 0.0
    %3698 = vmatprep.subr.mxu0 0.0
    %3699 = vmatpush2.xpose.msra.mxu0 0.0
    %3700 = vmatprep.subr.mxu0 0.0
    %3701 = vmatpush2.xpose.msra.mxu0 0.0
    %3702 = vmatprep.subr.mxu0 0.0
    %3703 = vmatpush2.xpose.msra.mxu0 0.0
    %3704 = vmatprep.subr.mxu0 0.0
    %3705 = vmatpush2.xpose.msra.mxu0 0.0
    %3706 = vmatprep.subr.mxu0 0.0
    %3707 = vmatpush2.xpose.msra.mxu0 0.0
    %3708 = vmatprep.mubr.f32.mxu0 %v631
    %3709 = vmatmul.mubr.f32.gmra.mxu0 %v629
    %v3710 = vpop.f32.mrf.mxu0
    %v3711 = vadd.f32 %v3641, %v3710
    %v3712 = vpop.f32.mrf.mxu0
    %3713 = vdwg.mxu0
    %3714 = vmatprep.subr.mxu0 0.0
    %3715 = vmatpush1.xpose.msra.mxu0 0.0
    %3716 = vmatprep.subr.mxu0 0.0
    %3717 = vmatpush1.xpose.msra.mxu0 0.0
    %3718 = vmatprep.subr.mxu0 0.0
    %3719 = vmatpush1.xpose.msra.mxu0 0.0
    %3720 = vmatprep.subr.mxu0 0.0
    %3721 = vmatpush1.xpose.msra.mxu0 0.0
    %3722 = vmatprep.subr.mxu0 0.0
    %3723 = vmatpush1.xpose.msra.mxu0 0.0
    %3724 = vmatprep.subr.mxu0 0.0
    %3725 = vmatpush1.xpose.msra.mxu0 0.0
    %3726 = vmatprep.subr.mxu0 0.0
    %3727 = vmatpush1.xpose.msra.mxu0 0.0
    %3728 = vmatprep.subr.mxu0 0.0
    %3729 = vmatpush1.xpose.msra.mxu0 0.0
    %3730 = vmatprep.subr.mxu0 0.0
    %3731 = vmatpush1.xpose.msra.mxu0 0.0
    %3732 = vmatprep.subr.mxu0 0.0
    %3733 = vmatpush1.xpose.msra.mxu0 0.0
    %3734 = vmatprep.subr.mxu0 0.0
    %3735 = vmatpush1.xpose.msra.mxu0 0.0
    %3736 = vmatprep.subr.mxu0 0.0
    %3737 = vmatpush1.xpose.msra.mxu0 0.0
    %3738 = vmatprep.subr.mxu0 0.0
    %3739 = vmatpush1.xpose.msra.mxu0 0.0
    %3740 = vmatprep.subr.mxu0 0.0
    %3741 = vmatpush1.xpose.msra.mxu0 0.0
    %3742 = vmatprep.subr.mxu0 0.0
    %3743 = vmatpush1.xpose.msra.mxu0 0.0
    %3744 = vmatprep.subr.mxu0 %v144
    %3745 = vmatpush1.xpose.msra.mxu0 %v143
    %3746 = vmatprep.subr.mxu0 0.0
    %3747 = vmatpush2.xpose.msra.mxu0 0.0
    %3748 = vmatprep.subr.mxu0 0.0
    %3749 = vmatpush2.xpose.msra.mxu0 0.0
    %3750 = vmatprep.subr.mxu0 0.0
    %3751 = vmatpush2.xpose.msra.mxu0 0.0
    %3752 = vmatprep.subr.mxu0 0.0
    %3753 = vmatpush2.xpose.msra.mxu0 0.0
    %3754 = vmatprep.subr.mxu0 0.0
    %3755 = vmatpush2.xpose.msra.mxu0 0.0
    %3756 = vmatprep.subr.mxu0 0.0
    %3757 = vmatpush2.xpose.msra.mxu0 0.0
    %3758 = vmatprep.subr.mxu0 0.0
    %3759 = vmatpush2.xpose.msra.mxu0 0.0
    %3760 = vmatprep.subr.mxu0 0.0
    %3761 = vmatpush2.xpose.msra.mxu0 0.0
    %3762 = vmatprep.subr.mxu0 0.0
    %3763 = vmatpush2.xpose.msra.mxu0 0.0
    %3764 = vmatprep.subr.mxu0 0.0
    %3765 = vmatpush2.xpose.msra.mxu0 0.0
    %3766 = vmatprep.subr.mxu0 0.0
    %3767 = vmatpush2.xpose.msra.mxu0 0.0
    %3768 = vmatprep.subr.mxu0 0.0
    %3769 = vmatpush2.xpose.msra.mxu0 0.0
    %3770 = vmatprep.subr.mxu0 0.0
    %3771 = vmatpush2.xpose.msra.mxu0 0.0
    %3772 = vmatprep.subr.mxu0 0.0
    %3773 = vmatpush2.xpose.msra.mxu0 0.0
    %3774 = vmatprep.subr.mxu0 0.0
    %3775 = vmatpush2.xpose.msra.mxu0 0.0
    %3776 = vmatprep.subr.mxu0 0.0
    %3777 = vmatpush2.xpose.msra.mxu0 0.0
    %3778 = vmatprep.mubr.f32.mxu0 %v647
    %3779 = vmatmul.mubr.f32.gmra.mxu0 %v639
    %v3780 = vpop.f32.mrf.mxu0
    %v3781 = vadd.f32 %v3711, %v3780
    %v3782 = vpop.f32.mrf.mxu0
    %3783 = vdwg.mxu0
    %3784 = vmatprep.subr.mxu0 0.0
    %3785 = vmatpush1.xpose.msra.mxu0 0.0
    %3786 = vmatprep.subr.mxu0 0.0
    %3787 = vmatpush1.xpose.msra.mxu0 0.0
    %3788 = vmatprep.subr.mxu0 0.0
    %3789 = vmatpush1.xpose.msra.mxu0 0.0
    %3790 = vmatprep.subr.mxu0 0.0
    %3791 = vmatpush1.xpose.msra.mxu0 0.0
    %3792 = vmatprep.subr.mxu0 0.0
    %3793 = vmatpush1.xpose.msra.mxu0 0.0
    %3794 = vmatprep.subr.mxu0 0.0
    %3795 = vmatpush1.xpose.msra.mxu0 0.0
    %3796 = vmatprep.subr.mxu0 0.0
    %3797 = vmatpush1.xpose.msra.mxu0 0.0
    %3798 = vmatprep.subr.mxu0 0.0
    %3799 = vmatpush1.xpose.msra.mxu0 0.0
    %3800 = vmatprep.subr.mxu0 0.0
    %3801 = vmatpush1.xpose.msra.mxu0 0.0
    %3802 = vmatprep.subr.mxu0 0.0
    %3803 = vmatpush1.xpose.msra.mxu0 0.0
    %3804 = vmatprep.subr.mxu0 0.0
    %3805 = vmatpush1.xpose.msra.mxu0 0.0
    %3806 = vmatprep.subr.mxu0 0.0
    %3807 = vmatpush1.xpose.msra.mxu0 0.0
    %3808 = vmatprep.subr.mxu0 0.0
    %3809 = vmatpush1.xpose.msra.mxu0 0.0
    %3810 = vmatprep.subr.mxu0 0.0
    %3811 = vmatpush1.xpose.msra.mxu0 0.0
    %3812 = vmatprep.subr.mxu0 0.0
    %3813 = vmatpush1.xpose.msra.mxu0 0.0
    %3814 = vmatprep.subr.mxu0 %v146
    %3815 = vmatpush1.xpose.msra.mxu0 %v145
    %3816 = vmatprep.subr.mxu0 0.0
    %3817 = vmatpush2.xpose.msra.mxu0 0.0
    %3818 = vmatprep.subr.mxu0 0.0
    %3819 = vmatpush2.xpose.msra.mxu0 0.0
    %3820 = vmatprep.subr.mxu0 0.0
    %3821 = vmatpush2.xpose.msra.mxu0 0.0
    %3822 = vmatprep.subr.mxu0 0.0
    %3823 = vmatpush2.xpose.msra.mxu0 0.0
    %3824 = vmatprep.subr.mxu0 0.0
    %3825 = vmatpush2.xpose.msra.mxu0 0.0
    %3826 = vmatprep.subr.mxu0 0.0
    %3827 = vmatpush2.xpose.msra.mxu0 0.0
    %3828 = vmatprep.subr.mxu0 0.0
    %3829 = vmatpush2.xpose.msra.mxu0 0.0
    %3830 = vmatprep.subr.mxu0 0.0
    %3831 = vmatpush2.xpose.msra.mxu0 0.0
    %3832 = vmatprep.subr.mxu0 0.0
    %3833 = vmatpush2.xpose.msra.mxu0 0.0
    %3834 = vmatprep.subr.mxu0 0.0
    %3835 = vmatpush2.xpose.msra.mxu0 0.0
    %3836 = vmatprep.subr.mxu0 0.0
    %3837 = vmatpush2.xpose.msra.mxu0 0.0
    %3838 = vmatprep.subr.mxu0 0.0
    %3839 = vmatpush2.xpose.msra.mxu0 0.0
    %3840 = vmatprep.subr.mxu0 0.0
    %3841 = vmatpush2.xpose.msra.mxu0 0.0
    %3842 = vmatprep.subr.mxu0 0.0
    %3843 = vmatpush2.xpose.msra.mxu0 0.0
    %3844 = vmatprep.subr.mxu0 0.0
    %3845 = vmatpush2.xpose.msra.mxu0 0.0
    %3846 = vmatprep.subr.mxu0 0.0
    %3847 = vmatpush2.xpose.msra.mxu0 0.0
    %3848 = vmatprep.mubr.f32.mxu0 %v648
    %3849 = vmatmul.mubr.f32.gmra.mxu0 %v646
    %v3850 = vpop.f32.mrf.mxu0
    %v3851 = vadd.f32 %v3781, %v3850
    %v3852 = vpop.f32.mrf.mxu0
    %3853 = vdwg.mxu0
    %3854 = vmatprep.subr.mxu0 0.0
    %3855 = vmatpush1.xpose.msra.mxu0 0.0
    %3856 = vmatprep.subr.mxu0 0.0
    %3857 = vmatpush1.xpose.msra.mxu0 0.0
    %3858 = vmatprep.subr.mxu0 0.0
    %3859 = vmatpush1.xpose.msra.mxu0 0.0
    %3860 = vmatprep.subr.mxu0 0.0
    %3861 = vmatpush1.xpose.msra.mxu0 0.0
    %3862 = vmatprep.subr.mxu0 0.0
    %3863 = vmatpush1.xpose.msra.mxu0 0.0
    %3864 = vmatprep.subr.mxu0 0.0
    %3865 = vmatpush1.xpose.msra.mxu0 0.0
    %3866 = vmatprep.subr.mxu0 0.0
    %3867 = vmatpush1.xpose.msra.mxu0 0.0
    %3868 = vmatprep.subr.mxu0 0.0
    %3869 = vmatpush1.xpose.msra.mxu0 0.0
    %3870 = vmatprep.subr.mxu0 0.0
    %3871 = vmatpush1.xpose.msra.mxu0 0.0
    %3872 = vmatprep.subr.mxu0 0.0
    %3873 = vmatpush1.xpose.msra.mxu0 0.0
    %3874 = vmatprep.subr.mxu0 0.0
    %3875 = vmatpush1.xpose.msra.mxu0 0.0
    %3876 = vmatprep.subr.mxu0 0.0
    %3877 = vmatpush1.xpose.msra.mxu0 0.0
    %3878 = vmatprep.subr.mxu0 0.0
    %3879 = vmatpush1.xpose.msra.mxu0 0.0
    %3880 = vmatprep.subr.mxu0 0.0
    %3881 = vmatpush1.xpose.msra.mxu0 0.0
    %3882 = vmatprep.subr.mxu0 0.0
    %3883 = vmatpush1.xpose.msra.mxu0 0.0
    %3884 = vmatprep.subr.mxu0 %v148
    %3885 = vmatpush1.xpose.msra.mxu0 %v147
    %3886 = vmatprep.subr.mxu0 0.0
    %3887 = vmatpush2.xpose.msra.mxu0 0.0
    %3888 = vmatprep.subr.mxu0 0.0
    %3889 = vmatpush2.xpose.msra.mxu0 0.0
    %3890 = vmatprep.subr.mxu0 0.0
    %3891 = vmatpush2.xpose.msra.mxu0 0.0
    %3892 = vmatprep.subr.mxu0 0.0
    %3893 = vmatpush2.xpose.msra.mxu0 0.0
    %3894 = vmatprep.subr.mxu0 0.0
    %3895 = vmatpush2.xpose.msra.mxu0 0.0
    %3896 = vmatprep.subr.mxu0 0.0
    %3897 = vmatpush2.xpose.msra.mxu0 0.0
    %3898 = vmatprep.subr.mxu0 0.0
    %3899 = vmatpush2.xpose.msra.mxu0 0.0
    %3900 = vmatprep.subr.mxu0 0.0
    %3901 = vmatpush2.xpose.msra.mxu0 0.0
    %3902 = vmatprep.subr.mxu0 0.0
    %3903 = vmatpush2.xpose.msra.mxu0 0.0
    %3904 = vmatprep.subr.mxu0 0.0
    %3905 = vmatpush2.xpose.msra.mxu0 0.0
    %3906 = vmatprep.subr.mxu0 0.0
    %3907 = vmatpush2.xpose.msra.mxu0 0.0
    %3908 = vmatprep.subr.mxu0 0.0
    %3909 = vmatpush2.xpose.msra.mxu0 0.0
    %3910 = vmatprep.subr.mxu0 0.0
    %3911 = vmatpush2.xpose.msra.mxu0 0.0
    %3912 = vmatprep.subr.mxu0 0.0
    %3913 = vmatpush2.xpose.msra.mxu0 0.0
    %3914 = vmatprep.subr.mxu0 0.0
    %3915 = vmatpush2.xpose.msra.mxu0 0.0
    %3916 = vmatprep.subr.mxu0 0.0
    %3917 = vmatpush2.xpose.msra.mxu0 0.0
    %3918 = vmatprep.mubr.f32.mxu0 %v664
    %3919 = vmatmul.mubr.f32.gmra.mxu0 %v656
    %v3920 = vpop.f32.mrf.mxu0
    %v3921 = vadd.f32 %v3851, %v3920
    %v3922 = vpop.f32.mrf.mxu0
    %3923 = vdwg.mxu0
    %3924 = vmatprep.subr.mxu0 0.0
    %3925 = vmatpush1.xpose.msra.mxu0 0.0
    %3926 = vmatprep.subr.mxu0 0.0
    %3927 = vmatpush1.xpose.msra.mxu0 0.0
    %3928 = vmatprep.subr.mxu0 0.0
    %3929 = vmatpush1.xpose.msra.mxu0 0.0
    %3930 = vmatprep.subr.mxu0 0.0
    %3931 = vmatpush1.xpose.msra.mxu0 0.0
    %3932 = vmatprep.subr.mxu0 0.0
    %3933 = vmatpush1.xpose.msra.mxu0 0.0
    %3934 = vmatprep.subr.mxu0 0.0
    %3935 = vmatpush1.xpose.msra.mxu0 0.0
    %3936 = vmatprep.subr.mxu0 0.0
    %3937 = vmatpush1.xpose.msra.mxu0 0.0
    %3938 = vmatprep.subr.mxu0 0.0
    %3939 = vmatpush1.xpose.msra.mxu0 0.0
    %3940 = vmatprep.subr.mxu0 0.0
    %3941 = vmatpush1.xpose.msra.mxu0 0.0
    %3942 = vmatprep.subr.mxu0 0.0
    %3943 = vmatpush1.xpose.msra.mxu0 0.0
    %3944 = vmatprep.subr.mxu0 0.0
    %3945 = vmatpush1.xpose.msra.mxu0 0.0
    %3946 = vmatprep.subr.mxu0 0.0
    %3947 = vmatpush1.xpose.msra.mxu0 0.0
    %3948 = vmatprep.subr.mxu0 0.0
    %3949 = vmatpush1.xpose.msra.mxu0 0.0
    %3950 = vmatprep.subr.mxu0 0.0
    %3951 = vmatpush1.xpose.msra.mxu0 0.0
    %3952 = vmatprep.subr.mxu0 0.0
    %3953 = vmatpush1.xpose.msra.mxu0 0.0
    %3954 = vmatprep.subr.mxu0 %v150
    %3955 = vmatpush1.xpose.msra.mxu0 %v149
    %3956 = vmatprep.subr.mxu0 0.0
    %3957 = vmatpush2.xpose.msra.mxu0 0.0
    %3958 = vmatprep.subr.mxu0 0.0
    %3959 = vmatpush2.xpose.msra.mxu0 0.0
    %3960 = vmatprep.subr.mxu0 0.0
    %3961 = vmatpush2.xpose.msra.mxu0 0.0
    %3962 = vmatprep.subr.mxu0 0.0
    %3963 = vmatpush2.xpose.msra.mxu0 0.0
    %3964 = vmatprep.subr.mxu0 0.0
    %3965 = vmatpush2.xpose.msra.mxu0 0.0
    %3966 = vmatprep.subr.mxu0 0.0
    %3967 = vmatpush2.xpose.msra.mxu0 0.0
    %3968 = vmatprep.subr.mxu0 0.0
    %3969 = vmatpush2.xpose.msra.mxu0 0.0
    %3970 = vmatprep.subr.mxu0 0.0
    %3971 = vmatpush2.xpose.msra.mxu0 0.0
    %3972 = vmatprep.subr.mxu0 0.0
    %3973 = vmatpush2.xpose.msra.mxu0 0.0
    %3974 = vmatprep.subr.mxu0 0.0
    %3975 = vmatpush2.xpose.msra.mxu0 0.0
    %3976 = vmatprep.subr.mxu0 0.0
    %3977 = vmatpush2.xpose.msra.mxu0 0.0
    %3978 = vmatprep.subr.mxu0 0.0
    %3979 = vmatpush2.xpose.msra.mxu0 0.0
    %3980 = vmatprep.subr.mxu0 0.0
    %3981 = vmatpush2.xpose.msra.mxu0 0.0
    %3982 = vmatprep.subr.mxu0 0.0
    %3983 = vmatpush2.xpose.msra.mxu0 0.0
    %3984 = vmatprep.subr.mxu0 0.0
    %3985 = vmatpush2.xpose.msra.mxu0 0.0
    %3986 = vmatprep.subr.mxu0 0.0
    %3987 = vmatpush2.xpose.msra.mxu0 0.0
    %3988 = vmatprep.mubr.f32.mxu0 %v665
    %3989 = vmatmul.mubr.f32.gmra.mxu0 %v663
    %v3990 = vpop.f32.mrf.mxu0
    %v3991 = vadd.f32 %v3921, %v3990
    %v3992 = vpop.f32.mrf.mxu0
    %3993 = vdwg.mxu0
    %3994 = vmatprep.subr.mxu0 0.0
    %3995 = vmatpush1.xpose.msra.mxu0 0.0
    %3996 = vmatprep.subr.mxu0 0.0
    %3997 = vmatpush1.xpose.msra.mxu0 0.0
    %3998 = vmatprep.subr.mxu0 0.0
    %3999 = vmatpush1.xpose.msra.mxu0 0.0
    %4000 = vmatprep.subr.mxu0 0.0
    %4001 = vmatpush1.xpose.msra.mxu0 0.0
    %4002 = vmatprep.subr.mxu0 0.0
    %4003 = vmatpush1.xpose.msra.mxu0 0.0
    %4004 = vmatprep.subr.mxu0 0.0
    %4005 = vmatpush1.xpose.msra.mxu0 0.0
    %4006 = vmatprep.subr.mxu0 0.0
    %4007 = vmatpush1.xpose.msra.mxu0 0.0
    %4008 = vmatprep.subr.mxu0 0.0
    %4009 = vmatpush1.xpose.msra.mxu0 0.0
    %4010 = vmatprep.subr.mxu0 0.0
    %4011 = vmatpush1.xpose.msra.mxu0 0.0
    %4012 = vmatprep.subr.mxu0 0.0
    %4013 = vmatpush1.xpose.msra.mxu0 0.0
    %4014 = vmatprep.subr.mxu0 0.0
    %4015 = vmatpush1.xpose.msra.mxu0 0.0
    %4016 = vmatprep.subr.mxu0 0.0
    %4017 = vmatpush1.xpose.msra.mxu0 0.0
    %4018 = vmatprep.subr.mxu0 0.0
    %4019 = vmatpush1.xpose.msra.mxu0 0.0
    %4020 = vmatprep.subr.mxu0 0.0
    %4021 = vmatpush1.xpose.msra.mxu0 0.0
    %4022 = vmatprep.subr.mxu0 0.0
    %4023 = vmatpush1.xpose.msra.mxu0 0.0
    %4024 = vmatprep.subr.mxu0 %v152
    %4025 = vmatpush1.xpose.msra.mxu0 %v151
    %4026 = vmatprep.subr.mxu0 0.0
    %4027 = vmatpush2.xpose.msra.mxu0 0.0
    %4028 = vmatprep.subr.mxu0 0.0
    %4029 = vmatpush2.xpose.msra.mxu0 0.0
    %4030 = vmatprep.subr.mxu0 0.0
    %4031 = vmatpush2.xpose.msra.mxu0 0.0
    %4032 = vmatprep.subr.mxu0 0.0
    %4033 = vmatpush2.xpose.msra.mxu0 0.0
    %4034 = vmatprep.subr.mxu0 0.0
    %4035 = vmatpush2.xpose.msra.mxu0 0.0
    %4036 = vmatprep.subr.mxu0 0.0
    %4037 = vmatpush2.xpose.msra.mxu0 0.0
    %4038 = vmatprep.subr.mxu0 0.0
    %4039 = vmatpush2.xpose.msra.mxu0 0.0
    %4040 = vmatprep.subr.mxu0 0.0
    %4041 = vmatpush2.xpose.msra.mxu0 0.0
    %4042 = vmatprep.subr.mxu0 0.0
    %4043 = vmatpush2.xpose.msra.mxu0 0.0
    %4044 = vmatprep.subr.mxu0 0.0
    %4045 = vmatpush2.xpose.msra.mxu0 0.0
    %4046 = vmatprep.subr.mxu0 0.0
    %4047 = vmatpush2.xpose.msra.mxu0 0.0
    %4048 = vmatprep.subr.mxu0 0.0
    %4049 = vmatpush2.xpose.msra.mxu0 0.0
    %4050 = vmatprep.subr.mxu0 0.0
    %4051 = vmatpush2.xpose.msra.mxu0 0.0
    %4052 = vmatprep.subr.mxu0 0.0
    %4053 = vmatpush2.xpose.msra.mxu0 0.0
    %4054 = vmatprep.subr.mxu0 0.0
    %4055 = vmatpush2.xpose.msra.mxu0 0.0
    %4056 = vmatprep.subr.mxu0 0.0
    %4057 = vmatpush2.xpose.msra.mxu0 0.0
    %4058 = vmatprep.mubr.f32.mxu0 %v681
    %4059 = vmatmul.mubr.f32.gmra.mxu0 %v673
    %v4060 = vpop.f32.mrf.mxu0
    %v4061 = vadd.f32 %v3991, %v4060
    %v4062 = vpop.f32.mrf.mxu0
    %4063 = vdwg.mxu0
    %4064 = vmatprep.subr.mxu0 0.0
    %4065 = vmatpush1.xpose.msra.mxu0 0.0
    %4066 = vmatprep.subr.mxu0 0.0
    %4067 = vmatpush1.xpose.msra.mxu0 0.0
    %4068 = vmatprep.subr.mxu0 0.0
    %4069 = vmatpush1.xpose.msra.mxu0 0.0
    %4070 = vmatprep.subr.mxu0 0.0
    %4071 = vmatpush1.xpose.msra.mxu0 0.0
    %4072 = vmatprep.subr.mxu0 0.0
    %4073 = vmatpush1.xpose.msra.mxu0 0.0
    %4074 = vmatprep.subr.mxu0 0.0
    %4075 = vmatpush1.xpose.msra.mxu0 0.0
    %4076 = vmatprep.subr.mxu0 0.0
    %4077 = vmatpush1.xpose.msra.mxu0 0.0
    %4078 = vmatprep.subr.mxu0 0.0
    %4079 = vmatpush1.xpose.msra.mxu0 0.0
    %4080 = vmatprep.subr.mxu0 0.0
    %4081 = vmatpush1.xpose.msra.mxu0 0.0
    %4082 = vmatprep.subr.mxu0 0.0
    %4083 = vmatpush1.xpose.msra.mxu0 0.0
    %4084 = vmatprep.subr.mxu0 0.0
    %4085 = vmatpush1.xpose.msra.mxu0 0.0
    %4086 = vmatprep.subr.mxu0 0.0
    %4087 = vmatpush1.xpose.msra.mxu0 0.0
    %4088 = vmatprep.subr.mxu0 0.0
    %4089 = vmatpush1.xpose.msra.mxu0 0.0
    %4090 = vmatprep.subr.mxu0 0.0
    %4091 = vmatpush1.xpose.msra.mxu0 0.0
    %4092 = vmatprep.subr.mxu0 0.0
    %4093 = vmatpush1.xpose.msra.mxu0 0.0
    %4094 = vmatprep.subr.mxu0 %v154
    %4095 = vmatpush1.xpose.msra.mxu0 %v153
    %4096 = vmatprep.subr.mxu0 0.0
    %4097 = vmatpush2.xpose.msra.mxu0 0.0
    %4098 = vmatprep.subr.mxu0 0.0
    %4099 = vmatpush2.xpose.msra.mxu0 0.0
    %4100 = vmatprep.subr.mxu0 0.0
    %4101 = vmatpush2.xpose.msra.mxu0 0.0
    %4102 = vmatprep.subr.mxu0 0.0
    %4103 = vmatpush2.xpose.msra.mxu0 0.0
    %4104 = vmatprep.subr.mxu0 0.0
    %4105 = vmatpush2.xpose.msra.mxu0 0.0
    %4106 = vmatprep.subr.mxu0 0.0
    %4107 = vmatpush2.xpose.msra.mxu0 0.0
    %4108 = vmatprep.subr.mxu0 0.0
    %4109 = vmatpush2.xpose.msra.mxu0 0.0
    %4110 = vmatprep.subr.mxu0 0.0
    %4111 = vmatpush2.xpose.msra.mxu0 0.0
    %4112 = vmatprep.subr.mxu0 0.0
    %4113 = vmatpush2.xpose.msra.mxu0 0.0
    %4114 = vmatprep.subr.mxu0 0.0
    %4115 = vmatpush2.xpose.msra.mxu0 0.0
    %4116 = vmatprep.subr.mxu0 0.0
    %4117 = vmatpush2.xpose.msra.mxu0 0.0
    %4118 = vmatprep.subr.mxu0 0.0
    %4119 = vmatpush2.xpose.msra.mxu0 0.0
    %4120 = vmatprep.subr.mxu0 0.0
    %4121 = vmatpush2.xpose.msra.mxu0 0.0
    %4122 = vmatprep.subr.mxu0 0.0
    %4123 = vmatpush2.xpose.msra.mxu0 0.0
    %4124 = vmatprep.subr.mxu0 0.0
    %4125 = vmatpush2.xpose.msra.mxu0 0.0
    %4126 = vmatprep.subr.mxu0 0.0
    %4127 = vmatpush2.xpose.msra.mxu0 0.0
    %4128 = vmatprep.mubr.f32.mxu0 %v682
    %4129 = vmatmul.mubr.f32.gmra.mxu0 %v680
    %v4130 = vpop.f32.mrf.mxu0
    %v4131 = vadd.f32 %v4061, %v4130
    %v4132 = vpop.f32.mrf.mxu0
    %4133 = vdwg.mxu0
    %4134 = vmatprep.subr.mxu0 0.0
    %4135 = vmatpush1.xpose.msra.mxu0 0.0
    %4136 = vmatprep.subr.mxu0 0.0
    %4137 = vmatpush1.xpose.msra.mxu0 0.0
    %4138 = vmatprep.subr.mxu0 0.0
    %4139 = vmatpush1.xpose.msra.mxu0 0.0
    %4140 = vmatprep.subr.mxu0 0.0
    %4141 = vmatpush1.xpose.msra.mxu0 0.0
    %4142 = vmatprep.subr.mxu0 0.0
    %4143 = vmatpush1.xpose.msra.mxu0 0.0
    %4144 = vmatprep.subr.mxu0 0.0
    %4145 = vmatpush1.xpose.msra.mxu0 0.0
    %4146 = vmatprep.subr.mxu0 0.0
    %4147 = vmatpush1.xpose.msra.mxu0 0.0
    %4148 = vmatprep.subr.mxu0 0.0
    %4149 = vmatpush1.xpose.msra.mxu0 0.0
    %4150 = vmatprep.subr.mxu0 0.0
    %4151 = vmatpush1.xpose.msra.mxu0 0.0
    %4152 = vmatprep.subr.mxu0 0.0
    %4153 = vmatpush1.xpose.msra.mxu0 0.0
    %4154 = vmatprep.subr.mxu0 0.0
    %4155 = vmatpush1.xpose.msra.mxu0 0.0
    %4156 = vmatprep.subr.mxu0 0.0
    %4157 = vmatpush1.xpose.msra.mxu0 0.0
    %4158 = vmatprep.subr.mxu0 0.0
    %4159 = vmatpush1.xpose.msra.mxu0 0.0
    %4160 = vmatprep.subr.mxu0 0.0
    %4161 = vmatpush1.xpose.msra.mxu0 0.0
    %4162 = vmatprep.subr.mxu0 0.0
    %4163 = vmatpush1.xpose.msra.mxu0 0.0
    %4164 = vmatprep.subr.mxu0 %v156
    %4165 = vmatpush1.xpose.msra.mxu0 %v155
    %4166 = vmatprep.subr.mxu0 0.0
    %4167 = vmatpush2.xpose.msra.mxu0 0.0
    %4168 = vmatprep.subr.mxu0 0.0
    %4169 = vmatpush2.xpose.msra.mxu0 0.0
    %4170 = vmatprep.subr.mxu0 0.0
    %4171 = vmatpush2.xpose.msra.mxu0 0.0
    %4172 = vmatprep.subr.mxu0 0.0
    %4173 = vmatpush2.xpose.msra.mxu0 0.0
    %4174 = vmatprep.subr.mxu0 0.0
    %4175 = vmatpush2.xpose.msra.mxu0 0.0
    %4176 = vmatprep.subr.mxu0 0.0
    %4177 = vmatpush2.xpose.msra.mxu0 0.0
    %4178 = vmatprep.subr.mxu0 0.0
    %4179 = vmatpush2.xpose.msra.mxu0 0.0
    %4180 = vmatprep.subr.mxu0 0.0
    %4181 = vmatpush2.xpose.msra.mxu0 0.0
    %4182 = vmatprep.subr.mxu0 0.0
    %4183 = vmatpush2.xpose.msra.mxu0 0.0
    %4184 = vmatprep.subr.mxu0 0.0
    %4185 = vmatpush2.xpose.msra.mxu0 0.0
    %4186 = vmatprep.subr.mxu0 0.0
    %4187 = vmatpush2.xpose.msra.mxu0 0.0
    %4188 = vmatprep.subr.mxu0 0.0
    %4189 = vmatpush2.xpose.msra.mxu0 0.0
    %4190 = vmatprep.subr.mxu0 0.0
    %4191 = vmatpush2.xpose.msra.mxu0 0.0
    %4192 = vmatprep.subr.mxu0 0.0
    %4193 = vmatpush2.xpose.msra.mxu0 0.0
    %4194 = vmatprep.subr.mxu0 0.0
    %4195 = vmatpush2.xpose.msra.mxu0 0.0
    %4196 = vmatprep.subr.mxu0 0.0
    %4197 = vmatpush2.xpose.msra.mxu0 0.0
    %4198 = vmatprep.mubr.f32.mxu0 %v698
    %4199 = vmatmul.mubr.f32.gmra.mxu0 %v690
    %v4200 = vpop.f32.mrf.mxu0
    %v4201 = vadd.f32 %v4131, %v4200
    %v4202 = vpop.f32.mrf.mxu0
    %4203 = vdwg.mxu0
    %4204 = vmatprep.subr.mxu0 0.0
    %4205 = vmatpush1.xpose.msra.mxu0 0.0
    %4206 = vmatprep.subr.mxu0 0.0
    %4207 = vmatpush1.xpose.msra.mxu0 0.0
    %4208 = vmatprep.subr.mxu0 0.0
    %4209 = vmatpush1.xpose.msra.mxu0 0.0
    %4210 = vmatprep.subr.mxu0 0.0
    %4211 = vmatpush1.xpose.msra.mxu0 0.0
    %4212 = vmatprep.subr.mxu0 0.0
    %4213 = vmatpush1.xpose.msra.mxu0 0.0
    %4214 = vmatprep.subr.mxu0 0.0
    %4215 = vmatpush1.xpose.msra.mxu0 0.0
    %4216 = vmatprep.subr.mxu0 0.0
    %4217 = vmatpush1.xpose.msra.mxu0 0.0
    %4218 = vmatprep.subr.mxu0 0.0
    %4219 = vmatpush1.xpose.msra.mxu0 0.0
    %4220 = vmatprep.subr.mxu0 0.0
    %4221 = vmatpush1.xpose.msra.mxu0 0.0
    %4222 = vmatprep.subr.mxu0 0.0
    %4223 = vmatpush1.xpose.msra.mxu0 0.0
    %4224 = vmatprep.subr.mxu0 0.0
    %4225 = vmatpush1.xpose.msra.mxu0 0.0
    %4226 = vmatprep.subr.mxu0 0.0
    %4227 = vmatpush1.xpose.msra.mxu0 0.0
    %4228 = vmatprep.subr.mxu0 0.0
    %4229 = vmatpush1.xpose.msra.mxu0 0.0
    %4230 = vmatprep.subr.mxu0 0.0
    %4231 = vmatpush1.xpose.msra.mxu0 0.0
    %4232 = vmatprep.subr.mxu0 0.0
    %4233 = vmatpush1.xpose.msra.mxu0 0.0
    %4234 = vmatprep.subr.mxu0 %v158
    %4235 = vmatpush1.xpose.msra.mxu0 %v157
    %4236 = vmatprep.subr.mxu0 0.0
    %4237 = vmatpush2.xpose.msra.mxu0 0.0
    %4238 = vmatprep.subr.mxu0 0.0
    %4239 = vmatpush2.xpose.msra.mxu0 0.0
    %4240 = vmatprep.subr.mxu0 0.0
    %4241 = vmatpush2.xpose.msra.mxu0 0.0
    %4242 = vmatprep.subr.mxu0 0.0
    %4243 = vmatpush2.xpose.msra.mxu0 0.0
    %4244 = vmatprep.subr.mxu0 0.0
    %4245 = vmatpush2.xpose.msra.mxu0 0.0
    %4246 = vmatprep.subr.mxu0 0.0
    %4247 = vmatpush2.xpose.msra.mxu0 0.0
    %4248 = vmatprep.subr.mxu0 0.0
    %4249 = vmatpush2.xpose.msra.mxu0 0.0
    %4250 = vmatprep.subr.mxu0 0.0
    %4251 = vmatpush2.xpose.msra.mxu0 0.0
    %4252 = vmatprep.subr.mxu0 0.0
    %4253 = vmatpush2.xpose.msra.mxu0 0.0
    %4254 = vmatprep.subr.mxu0 0.0
    %4255 = vmatpush2.xpose.msra.mxu0 0.0
    %4256 = vmatprep.subr.mxu0 0.0
    %4257 = vmatpush2.xpose.msra.mxu0 0.0
    %4258 = vmatprep.subr.mxu0 0.0
    %4259 = vmatpush2.xpose.msra.mxu0 0.0
    %4260 = vmatprep.subr.mxu0 0.0
    %4261 = vmatpush2.xpose.msra.mxu0 0.0
    %4262 = vmatprep.subr.mxu0 0.0
    %4263 = vmatpush2.xpose.msra.mxu0 0.0
    %4264 = vmatprep.subr.mxu0 0.0
    %4265 = vmatpush2.xpose.msra.mxu0 0.0
    %4266 = vmatprep.subr.mxu0 0.0
    %4267 = vmatpush2.xpose.msra.mxu0 0.0
    %4268 = vmatprep.mubr.f32.mxu0 %v699
    %4269 = vmatmul.mubr.f32.gmra.mxu0 %v697
    %v4270 = vpop.f32.mrf.mxu0
    %v4271 = vadd.f32 %v4201, %v4270
    %v4272 = vpop.f32.mrf.mxu0
    %4273 = vdwg.mxu0
    %4274 = vmatprep.subr.mxu0 0.0
    %4275 = vmatpush1.xpose.msra.mxu0 0.0
    %4276 = vmatprep.subr.mxu0 0.0
    %4277 = vmatpush1.xpose.msra.mxu0 0.0
    %4278 = vmatprep.subr.mxu0 0.0
    %4279 = vmatpush1.xpose.msra.mxu0 0.0
    %4280 = vmatprep.subr.mxu0 0.0
    %4281 = vmatpush1.xpose.msra.mxu0 0.0
    %4282 = vmatprep.subr.mxu0 0.0
    %4283 = vmatpush1.xpose.msra.mxu0 0.0
    %4284 = vmatprep.subr.mxu0 0.0
    %4285 = vmatpush1.xpose.msra.mxu0 0.0
    %4286 = vmatprep.subr.mxu0 0.0
    %4287 = vmatpush1.xpose.msra.mxu0 0.0
    %4288 = vmatprep.subr.mxu0 0.0
    %4289 = vmatpush1.xpose.msra.mxu0 0.0
    %4290 = vmatprep.subr.mxu0 0.0
    %4291 = vmatpush1.xpose.msra.mxu0 0.0
    %4292 = vmatprep.subr.mxu0 0.0
    %4293 = vmatpush1.xpose.msra.mxu0 0.0
    %4294 = vmatprep.subr.mxu0 0.0
    %4295 = vmatpush1.xpose.msra.mxu0 0.0
    %4296 = vmatprep.subr.mxu0 0.0
    %4297 = vmatpush1.xpose.msra.mxu0 0.0
    %4298 = vmatprep.subr.mxu0 0.0
    %4299 = vmatpush1.xpose.msra.mxu0 0.0
    %4300 = vmatprep.subr.mxu0 0.0
    %4301 = vmatpush1.xpose.msra.mxu0 0.0
    %4302 = vmatprep.subr.mxu0 0.0
    %4303 = vmatpush1.xpose.msra.mxu0 0.0
    %4304 = vmatprep.subr.mxu0 %v160
    %4305 = vmatpush1.xpose.msra.mxu0 %v159
    %4306 = vmatprep.subr.mxu0 0.0
    %4307 = vmatpush2.xpose.msra.mxu0 0.0
    %4308 = vmatprep.subr.mxu0 0.0
    %4309 = vmatpush2.xpose.msra.mxu0 0.0
    %4310 = vmatprep.subr.mxu0 0.0
    %4311 = vmatpush2.xpose.msra.mxu0 0.0
    %4312 = vmatprep.subr.mxu0 0.0
    %4313 = vmatpush2.xpose.msra.mxu0 0.0
    %4314 = vmatprep.subr.mxu0 0.0
    %4315 = vmatpush2.xpose.msra.mxu0 0.0
    %4316 = vmatprep.subr.mxu0 0.0
    %4317 = vmatpush2.xpose.msra.mxu0 0.0
    %4318 = vmatprep.subr.mxu0 0.0
    %4319 = vmatpush2.xpose.msra.mxu0 0.0
    %4320 = vmatprep.subr.mxu0 0.0
    %4321 = vmatpush2.xpose.msra.mxu0 0.0
    %4322 = vmatprep.subr.mxu0 0.0
    %4323 = vmatpush2.xpose.msra.mxu0 0.0
    %4324 = vmatprep.subr.mxu0 0.0
    %4325 = vmatpush2.xpose.msra.mxu0 0.0
    %4326 = vmatprep.subr.mxu0 0.0
    %4327 = vmatpush2.xpose.msra.mxu0 0.0
    %4328 = vmatprep.subr.mxu0 0.0
    %4329 = vmatpush2.xpose.msra.mxu0 0.0
    %4330 = vmatprep.subr.mxu0 0.0
    %4331 = vmatpush2.xpose.msra.mxu0 0.0
    %4332 = vmatprep.subr.mxu0 0.0
    %4333 = vmatpush2.xpose.msra.mxu0 0.0
    %4334 = vmatprep.subr.mxu0 0.0
    %4335 = vmatpush2.xpose.msra.mxu0 0.0
    %4336 = vmatprep.subr.mxu0 0.0
    %4337 = vmatpush2.xpose.msra.mxu0 0.0
    %4338 = vmatprep.mubr.f32.mxu0 %v715
    %4339 = vmatmul.mubr.f32.gmra.mxu0 %v707
    %v4340 = vpop.f32.mrf.mxu0
    %v4341 = vadd.f32 %v4271, %v4340
    %v4342 = vpop.f32.mrf.mxu0
    %4343 = vdwg.mxu0
    %4344 = vmatprep.subr.mxu0 0.0
    %4345 = vmatpush1.xpose.msra.mxu0 0.0
    %4346 = vmatprep.subr.mxu0 0.0
    %4347 = vmatpush1.xpose.msra.mxu0 0.0
    %4348 = vmatprep.subr.mxu0 0.0
    %4349 = vmatpush1.xpose.msra.mxu0 0.0
    %4350 = vmatprep.subr.mxu0 0.0
    %4351 = vmatpush1.xpose.msra.mxu0 0.0
    %4352 = vmatprep.subr.mxu0 0.0
    %4353 = vmatpush1.xpose.msra.mxu0 0.0
    %4354 = vmatprep.subr.mxu0 0.0
    %4355 = vmatpush1.xpose.msra.mxu0 0.0
    %4356 = vmatprep.subr.mxu0 0.0
    %4357 = vmatpush1.xpose.msra.mxu0 0.0
    %4358 = vmatprep.subr.mxu0 0.0
    %4359 = vmatpush1.xpose.msra.mxu0 0.0
    %4360 = vmatprep.subr.mxu0 0.0
    %4361 = vmatpush1.xpose.msra.mxu0 0.0
    %4362 = vmatprep.subr.mxu0 0.0
    %4363 = vmatpush1.xpose.msra.mxu0 0.0
    %4364 = vmatprep.subr.mxu0 0.0
    %4365 = vmatpush1.xpose.msra.mxu0 0.0
    %4366 = vmatprep.subr.mxu0 0.0
    %4367 = vmatpush1.xpose.msra.mxu0 0.0
    %4368 = vmatprep.subr.mxu0 0.0
    %4369 = vmatpush1.xpose.msra.mxu0 0.0
    %4370 = vmatprep.subr.mxu0 0.0
    %4371 = vmatpush1.xpose.msra.mxu0 0.0
    %4372 = vmatprep.subr.mxu0 0.0
    %4373 = vmatpush1.xpose.msra.mxu0 0.0
    %4374 = vmatprep.subr.mxu0 %v162
    %4375 = vmatpush1.xpose.msra.mxu0 %v161
    %4376 = vmatprep.subr.mxu0 0.0
    %4377 = vmatpush2.xpose.msra.mxu0 0.0
    %4378 = vmatprep.subr.mxu0 0.0
    %4379 = vmatpush2.xpose.msra.mxu0 0.0
    %4380 = vmatprep.subr.mxu0 0.0
    %4381 = vmatpush2.xpose.msra.mxu0 0.0
    %4382 = vmatprep.subr.mxu0 0.0
    %4383 = vmatpush2.xpose.msra.mxu0 0.0
    %4384 = vmatprep.subr.mxu0 0.0
    %4385 = vmatpush2.xpose.msra.mxu0 0.0
    %4386 = vmatprep.subr.mxu0 0.0
    %4387 = vmatpush2.xpose.msra.mxu0 0.0
    %4388 = vmatprep.subr.mxu0 0.0
    %4389 = vmatpush2.xpose.msra.mxu0 0.0
    %4390 = vmatprep.subr.mxu0 0.0
    %4391 = vmatpush2.xpose.msra.mxu0 0.0
    %4392 = vmatprep.subr.mxu0 0.0
    %4393 = vmatpush2.xpose.msra.mxu0 0.0
    %4394 = vmatprep.subr.mxu0 0.0
    %4395 = vmatpush2.xpose.msra.mxu0 0.0
    %4396 = vmatprep.subr.mxu0 0.0
    %4397 = vmatpush2.xpose.msra.mxu0 0.0
    %4398 = vmatprep.subr.mxu0 0.0
    %4399 = vmatpush2.xpose.msra.mxu0 0.0
    %4400 = vmatprep.subr.mxu0 0.0
    %4401 = vmatpush2.xpose.msra.mxu0 0.0
    %4402 = vmatprep.subr.mxu0 0.0
    %4403 = vmatpush2.xpose.msra.mxu0 0.0
    %4404 = vmatprep.subr.mxu0 0.0
    %4405 = vmatpush2.xpose.msra.mxu0 0.0
    %4406 = vmatprep.subr.mxu0 0.0
    %4407 = vmatpush2.xpose.msra.mxu0 0.0
    %4408 = vmatprep.mubr.f32.mxu0 %v716
    %4409 = vmatmul.mubr.f32.gmra.mxu0 %v714
    %v4410 = vpop.f32.mrf.mxu0
    %v4411 = vadd.f32 %v4341, %v4410
    %v4412 = vpop.f32.mrf.mxu0
    %4413 = vdwg.mxu0
    %4414 = vmatprep.subr.mxu0 0.0
    %4415 = vmatpush1.xpose.msra.mxu0 0.0
    %4416 = vmatprep.subr.mxu0 0.0
    %4417 = vmatpush1.xpose.msra.mxu0 0.0
    %4418 = vmatprep.subr.mxu0 0.0
    %4419 = vmatpush1.xpose.msra.mxu0 0.0
    %4420 = vmatprep.subr.mxu0 0.0
    %4421 = vmatpush1.xpose.msra.mxu0 0.0
    %4422 = vmatprep.subr.mxu0 0.0
    %4423 = vmatpush1.xpose.msra.mxu0 0.0
    %4424 = vmatprep.subr.mxu0 0.0
    %4425 = vmatpush1.xpose.msra.mxu0 0.0
    %4426 = vmatprep.subr.mxu0 0.0
    %4427 = vmatpush1.xpose.msra.mxu0 0.0
    %4428 = vmatprep.subr.mxu0 0.0
    %4429 = vmatpush1.xpose.msra.mxu0 0.0
    %4430 = vmatprep.subr.mxu0 0.0
    %4431 = vmatpush1.xpose.msra.mxu0 0.0
    %4432 = vmatprep.subr.mxu0 0.0
    %4433 = vmatpush1.xpose.msra.mxu0 0.0
    %4434 = vmatprep.subr.mxu0 0.0
    %4435 = vmatpush1.xpose.msra.mxu0 0.0
    %4436 = vmatprep.subr.mxu0 0.0
    %4437 = vmatpush1.xpose.msra.mxu0 0.0
    %4438 = vmatprep.subr.mxu0 0.0
    %4439 = vmatpush1.xpose.msra.mxu0 0.0
    %4440 = vmatprep.subr.mxu0 0.0
    %4441 = vmatpush1.xpose.msra.mxu0 0.0
    %4442 = vmatprep.subr.mxu0 0.0
    %4443 = vmatpush1.xpose.msra.mxu0 0.0
    %4444 = vmatprep.subr.mxu0 %v164
    %4445 = vmatpush1.xpose.msra.mxu0 %v163
    %4446 = vmatprep.subr.mxu0 0.0
    %4447 = vmatpush2.xpose.msra.mxu0 0.0
    %4448 = vmatprep.subr.mxu0 0.0
    %4449 = vmatpush2.xpose.msra.mxu0 0.0
    %4450 = vmatprep.subr.mxu0 0.0
    %4451 = vmatpush2.xpose.msra.mxu0 0.0
    %4452 = vmatprep.subr.mxu0 0.0
    %4453 = vmatpush2.xpose.msra.mxu0 0.0
    %4454 = vmatprep.subr.mxu0 0.0
    %4455 = vmatpush2.xpose.msra.mxu0 0.0
    %4456 = vmatprep.subr.mxu0 0.0
    %4457 = vmatpush2.xpose.msra.mxu0 0.0
    %4458 = vmatprep.subr.mxu0 0.0
    %4459 = vmatpush2.xpose.msra.mxu0 0.0
    %4460 = vmatprep.subr.mxu0 0.0
    %4461 = vmatpush2.xpose.msra.mxu0 0.0
    %4462 = vmatprep.subr.mxu0 0.0
    %4463 = vmatpush2.xpose.msra.mxu0 0.0
    %4464 = vmatprep.subr.mxu0 0.0
    %4465 = vmatpush2.xpose.msra.mxu0 0.0
    %4466 = vmatprep.subr.mxu0 0.0
    %4467 = vmatpush2.xpose.msra.mxu0 0.0
    %4468 = vmatprep.subr.mxu0 0.0
    %4469 = vmatpush2.xpose.msra.mxu0 0.0
    %4470 = vmatprep.subr.mxu0 0.0
    %4471 = vmatpush2.xpose.msra.mxu0 0.0
    %4472 = vmatprep.subr.mxu0 0.0
    %4473 = vmatpush2.xpose.msra.mxu0 0.0
    %4474 = vmatprep.subr.mxu0 0.0
    %4475 = vmatpush2.xpose.msra.mxu0 0.0
    %4476 = vmatprep.subr.mxu0 0.0
    %4477 = vmatpush2.xpose.msra.mxu0 0.0
    %4478 = vmatprep.mubr.f32.mxu0 %v732
    %4479 = vmatmul.mubr.f32.gmra.mxu0 %v724
    %v4480 = vpop.f32.mrf.mxu0
    %v4481 = vadd.f32 %v4411, %v4480
    %v4482 = vpop.f32.mrf.mxu0
    %4483 = vdwg.mxu0
    %4484 = vmatprep.subr.mxu0 0.0
    %4485 = vmatpush1.xpose.msra.mxu0 0.0
    %4486 = vmatprep.subr.mxu0 0.0
    %4487 = vmatpush1.xpose.msra.mxu0 0.0
    %4488 = vmatprep.subr.mxu0 0.0
    %4489 = vmatpush1.xpose.msra.mxu0 0.0
    %4490 = vmatprep.subr.mxu0 0.0
    %4491 = vmatpush1.xpose.msra.mxu0 0.0
    %4492 = vmatprep.subr.mxu0 0.0
    %4493 = vmatpush1.xpose.msra.mxu0 0.0
    %4494 = vmatprep.subr.mxu0 0.0
    %4495 = vmatpush1.xpose.msra.mxu0 0.0
    %4496 = vmatprep.subr.mxu0 0.0
    %4497 = vmatpush1.xpose.msra.mxu0 0.0
    %4498 = vmatprep.subr.mxu0 0.0
    %4499 = vmatpush1.xpose.msra.mxu0 0.0
    %4500 = vmatprep.subr.mxu0 0.0
    %4501 = vmatpush1.xpose.msra.mxu0 0.0
    %4502 = vmatprep.subr.mxu0 0.0
    %4503 = vmatpush1.xpose.msra.mxu0 0.0
    %4504 = vmatprep.subr.mxu0 0.0
    %4505 = vmatpush1.xpose.msra.mxu0 0.0
    %4506 = vmatprep.subr.mxu0 0.0
    %4507 = vmatpush1.xpose.msra.mxu0 0.0
    %4508 = vmatprep.subr.mxu0 0.0
    %4509 = vmatpush1.xpose.msra.mxu0 0.0
    %4510 = vmatprep.subr.mxu0 0.0
    %4511 = vmatpush1.xpose.msra.mxu0 0.0
    %4512 = vmatprep.subr.mxu0 0.0
    %4513 = vmatpush1.xpose.msra.mxu0 0.0
    %4514 = vmatprep.subr.mxu0 %v166
    %4515 = vmatpush1.xpose.msra.mxu0 %v165
    %4516 = vmatprep.subr.mxu0 0.0
    %4517 = vmatpush2.xpose.msra.mxu0 0.0
    %4518 = vmatprep.subr.mxu0 0.0
    %4519 = vmatpush2.xpose.msra.mxu0 0.0
    %4520 = vmatprep.subr.mxu0 0.0
    %4521 = vmatpush2.xpose.msra.mxu0 0.0
    %4522 = vmatprep.subr.mxu0 0.0
    %4523 = vmatpush2.xpose.msra.mxu0 0.0
    %4524 = vmatprep.subr.mxu0 0.0
    %4525 = vmatpush2.xpose.msra.mxu0 0.0
    %4526 = vmatprep.subr.mxu0 0.0
    %4527 = vmatpush2.xpose.msra.mxu0 0.0
    %4528 = vmatprep.subr.mxu0 0.0
    %4529 = vmatpush2.xpose.msra.mxu0 0.0
    %4530 = vmatprep.subr.mxu0 0.0
    %4531 = vmatpush2.xpose.msra.mxu0 0.0
    %4532 = vmatprep.subr.mxu0 0.0
    %4533 = vmatpush2.xpose.msra.mxu0 0.0
    %4534 = vmatprep.subr.mxu0 0.0
    %4535 = vmatpush2.xpose.msra.mxu0 0.0
    %4536 = vmatprep.subr.mxu0 0.0
    %4537 = vmatpush2.xpose.msra.mxu0 0.0
    %4538 = vmatprep.subr.mxu0 0.0
    %4539 = vmatpush2.xpose.msra.mxu0 0.0
    %4540 = vmatprep.subr.mxu0 0.0
    %4541 = vmatpush2.xpose.msra.mxu0 0.0
    %4542 = vmatprep.subr.mxu0 0.0
    %4543 = vmatpush2.xpose.msra.mxu0 0.0
    %4544 = vmatprep.subr.mxu0 0.0
    %4545 = vmatpush2.xpose.msra.mxu0 0.0
    %4546 = vmatprep.subr.mxu0 0.0
    %4547 = vmatpush2.xpose.msra.mxu0 0.0
    %4548 = vmatprep.mubr.f32.mxu0 %v733
    %4549 = vmatmul.mubr.f32.gmra.mxu0 %v731
    %v4550 = vpop.f32.mrf.mxu0
    %v4551 = vadd.f32 %v4481, %v4550
    %v4552 = vpop.f32.mrf.mxu0
    %4553 = vdwg.mxu0
    %4554 = vmatprep.subr.mxu0 0.0
    %4555 = vmatpush1.xpose.msra.mxu0 0.0
    %4556 = vmatprep.subr.mxu0 0.0
    %4557 = vmatpush1.xpose.msra.mxu0 0.0
    %4558 = vmatprep.subr.mxu0 0.0
    %4559 = vmatpush1.xpose.msra.mxu0 0.0
    %4560 = vmatprep.subr.mxu0 0.0
    %4561 = vmatpush1.xpose.msra.mxu0 0.0
    %4562 = vmatprep.subr.mxu0 0.0
    %4563 = vmatpush1.xpose.msra.mxu0 0.0
    %4564 = vmatprep.subr.mxu0 0.0
    %4565 = vmatpush1.xpose.msra.mxu0 0.0
    %4566 = vmatprep.subr.mxu0 0.0
    %4567 = vmatpush1.xpose.msra.mxu0 0.0
    %4568 = vmatprep.subr.mxu0 0.0
    %4569 = vmatpush1.xpose.msra.mxu0 0.0
    %4570 = vmatprep.subr.mxu0 0.0
    %4571 = vmatpush1.xpose.msra.mxu0 0.0
    %4572 = vmatprep.subr.mxu0 0.0
    %4573 = vmatpush1.xpose.msra.mxu0 0.0
    %4574 = vmatprep.subr.mxu0 0.0
    %4575 = vmatpush1.xpose.msra.mxu0 0.0
    %4576 = vmatprep.subr.mxu0 0.0
    %4577 = vmatpush1.xpose.msra.mxu0 0.0
    %4578 = vmatprep.subr.mxu0 0.0
    %4579 = vmatpush1.xpose.msra.mxu0 0.0
    %4580 = vmatprep.subr.mxu0 0.0
    %4581 = vmatpush1.xpose.msra.mxu0 0.0
    %4582 = vmatprep.subr.mxu0 0.0
    %4583 = vmatpush1.xpose.msra.mxu0 0.0
    %4584 = vmatprep.subr.mxu0 %v168
    %4585 = vmatpush1.xpose.msra.mxu0 %v167
    %4586 = vmatprep.subr.mxu0 0.0
    %4587 = vmatpush2.xpose.msra.mxu0 0.0
    %4588 = vmatprep.subr.mxu0 0.0
    %4589 = vmatpush2.xpose.msra.mxu0 0.0
    %4590 = vmatprep.subr.mxu0 0.0
    %4591 = vmatpush2.xpose.msra.mxu0 0.0
    %4592 = vmatprep.subr.mxu0 0.0
    %4593 = vmatpush2.xpose.msra.mxu0 0.0
    %4594 = vmatprep.subr.mxu0 0.0
    %4595 = vmatpush2.xpose.msra.mxu0 0.0
    %4596 = vmatprep.subr.mxu0 0.0
    %4597 = vmatpush2.xpose.msra.mxu0 0.0
    %4598 = vmatprep.subr.mxu0 0.0
    %4599 = vmatpush2.xpose.msra.mxu0 0.0
    %4600 = vmatprep.subr.mxu0 0.0
    %4601 = vmatpush2.xpose.msra.mxu0 0.0
    %4602 = vmatprep.subr.mxu0 0.0
    %4603 = vmatpush2.xpose.msra.mxu0 0.0
    %4604 = vmatprep.subr.mxu0 0.0
    %4605 = vmatpush2.xpose.msra.mxu0 0.0
    %4606 = vmatprep.subr.mxu0 0.0
    %4607 = vmatpush2.xpose.msra.mxu0 0.0
    %4608 = vmatprep.subr.mxu0 0.0
    %4609 = vmatpush2.xpose.msra.mxu0 0.0
    %4610 = vmatprep.subr.mxu0 0.0
    %4611 = vmatpush2.xpose.msra.mxu0 0.0
    %4612 = vmatprep.subr.mxu0 0.0
    %4613 = vmatpush2.xpose.msra.mxu0 0.0
    %4614 = vmatprep.subr.mxu0 0.0
    %4615 = vmatpush2.xpose.msra.mxu0 0.0
    %4616 = vmatprep.subr.mxu0 0.0
    %4617 = vmatpush2.xpose.msra.mxu0 0.0
    %4618 = vmatprep.mubr.f32.mxu0 %v749
    %4619 = vmatmul.mubr.f32.gmra.mxu0 %v741
    %v4620 = vpop.f32.mrf.mxu0
    %v4621 = vadd.f32 %v4551, %v4620
    %v4622 = vpop.f32.mrf.mxu0
    %4623 = vdwg.mxu0
    %4624 = vmatprep.subr.mxu0 0.0
    %4625 = vmatpush1.xpose.msra.mxu0 0.0
    %4626 = vmatprep.subr.mxu0 0.0
    %4627 = vmatpush1.xpose.msra.mxu0 0.0
    %4628 = vmatprep.subr.mxu0 0.0
    %4629 = vmatpush1.xpose.msra.mxu0 0.0
    %4630 = vmatprep.subr.mxu0 0.0
    %4631 = vmatpush1.xpose.msra.mxu0 0.0
    %4632 = vmatprep.subr.mxu0 0.0
    %4633 = vmatpush1.xpose.msra.mxu0 0.0
    %4634 = vmatprep.subr.mxu0 0.0
    %4635 = vmatpush1.xpose.msra.mxu0 0.0
    %4636 = vmatprep.subr.mxu0 0.0
    %4637 = vmatpush1.xpose.msra.mxu0 0.0
    %4638 = vmatprep.subr.mxu0 0.0
    %4639 = vmatpush1.xpose.msra.mxu0 0.0
    %4640 = vmatprep.subr.mxu0 0.0
    %4641 = vmatpush1.xpose.msra.mxu0 0.0
    %4642 = vmatprep.subr.mxu0 0.0
    %4643 = vmatpush1.xpose.msra.mxu0 0.0
    %4644 = vmatprep.subr.mxu0 0.0
    %4645 = vmatpush1.xpose.msra.mxu0 0.0
    %4646 = vmatprep.subr.mxu0 0.0
    %4647 = vmatpush1.xpose.msra.mxu0 0.0
    %4648 = vmatprep.subr.mxu0 0.0
    %4649 = vmatpush1.xpose.msra.mxu0 0.0
    %4650 = vmatprep.subr.mxu0 0.0
    %4651 = vmatpush1.xpose.msra.mxu0 0.0
    %4652 = vmatprep.subr.mxu0 0.0
    %4653 = vmatpush1.xpose.msra.mxu0 0.0
    %4654 = vmatprep.subr.mxu0 %v170
    %4655 = vmatpush1.xpose.msra.mxu0 %v169
    %4656 = vmatprep.subr.mxu0 0.0
    %4657 = vmatpush2.xpose.msra.mxu0 0.0
    %4658 = vmatprep.subr.mxu0 0.0
    %4659 = vmatpush2.xpose.msra.mxu0 0.0
    %4660 = vmatprep.subr.mxu0 0.0
    %4661 = vmatpush2.xpose.msra.mxu0 0.0
    %4662 = vmatprep.subr.mxu0 0.0
    %4663 = vmatpush2.xpose.msra.mxu0 0.0
    %4664 = vmatprep.subr.mxu0 0.0
    %4665 = vmatpush2.xpose.msra.mxu0 0.0
    %4666 = vmatprep.subr.mxu0 0.0
    %4667 = vmatpush2.xpose.msra.mxu0 0.0
    %4668 = vmatprep.subr.mxu0 0.0
    %4669 = vmatpush2.xpose.msra.mxu0 0.0
    %4670 = vmatprep.subr.mxu0 0.0
    %4671 = vmatpush2.xpose.msra.mxu0 0.0
    %4672 = vmatprep.subr.mxu0 0.0
    %4673 = vmatpush2.xpose.msra.mxu0 0.0
    %4674 = vmatprep.subr.mxu0 0.0
    %4675 = vmatpush2.xpose.msra.mxu0 0.0
    %4676 = vmatprep.subr.mxu0 0.0
    %4677 = vmatpush2.xpose.msra.mxu0 0.0
    %4678 = vmatprep.subr.mxu0 0.0
    %4679 = vmatpush2.xpose.msra.mxu0 0.0
    %4680 = vmatprep.subr.mxu0 0.0
    %4681 = vmatpush2.xpose.msra.mxu0 0.0
    %4682 = vmatprep.subr.mxu0 0.0
    %4683 = vmatpush2.xpose.msra.mxu0 0.0
    %4684 = vmatprep.subr.mxu0 0.0
    %4685 = vmatpush2.xpose.msra.mxu0 0.0
    %4686 = vmatprep.subr.mxu0 0.0
    %4687 = vmatpush2.xpose.msra.mxu0 0.0
    %4688 = vmatprep.mubr.f32.mxu0 %v750
    %4689 = vmatmul.mubr.f32.gmra.mxu0 %v748
    %v4690 = vpop.f32.mrf.mxu0
    %v4691 = vadd.f32 %v4621, %v4690
    %v4692 = vpop.f32.mrf.mxu0
    %4693 = vdwg.mxu0
    %4694 = vmatprep.subr.mxu0 0.0
    %4695 = vmatpush1.xpose.msra.mxu0 0.0
    %4696 = vmatprep.subr.mxu0 0.0
    %4697 = vmatpush1.xpose.msra.mxu0 0.0
    %4698 = vmatprep.subr.mxu0 0.0
    %4699 = vmatpush1.xpose.msra.mxu0 0.0
    %4700 = vmatprep.subr.mxu0 0.0
    %4701 = vmatpush1.xpose.msra.mxu0 0.0
    %4702 = vmatprep.subr.mxu0 0.0
    %4703 = vmatpush1.xpose.msra.mxu0 0.0
    %4704 = vmatprep.subr.mxu0 0.0
    %4705 = vmatpush1.xpose.msra.mxu0 0.0
    %4706 = vmatprep.subr.mxu0 0.0
    %4707 = vmatpush1.xpose.msra.mxu0 0.0
    %4708 = vmatprep.subr.mxu0 0.0
    %4709 = vmatpush1.xpose.msra.mxu0 0.0
    %4710 = vmatprep.subr.mxu0 0.0
    %4711 = vmatpush1.xpose.msra.mxu0 0.0
    %4712 = vmatprep.subr.mxu0 0.0
    %4713 = vmatpush1.xpose.msra.mxu0 0.0
    %4714 = vmatprep.subr.mxu0 0.0
    %4715 = vmatpush1.xpose.msra.mxu0 0.0
    %4716 = vmatprep.subr.mxu0 0.0
    %4717 = vmatpush1.xpose.msra.mxu0 0.0
    %4718 = vmatprep.subr.mxu0 0.0
    %4719 = vmatpush1.xpose.msra.mxu0 0.0
    %4720 = vmatprep.subr.mxu0 0.0
    %4721 = vmatpush1.xpose.msra.mxu0 0.0
    %4722 = vmatprep.subr.mxu0 0.0
    %4723 = vmatpush1.xpose.msra.mxu0 0.0
    %4724 = vmatprep.subr.mxu0 %v172
    %4725 = vmatpush1.xpose.msra.mxu0 %v171
    %4726 = vmatprep.subr.mxu0 0.0
    %4727 = vmatpush2.xpose.msra.mxu0 0.0
    %4728 = vmatprep.subr.mxu0 0.0
    %4729 = vmatpush2.xpose.msra.mxu0 0.0
    %4730 = vmatprep.subr.mxu0 0.0
    %4731 = vmatpush2.xpose.msra.mxu0 0.0
    %4732 = vmatprep.subr.mxu0 0.0
    %4733 = vmatpush2.xpose.msra.mxu0 0.0
    %4734 = vmatprep.subr.mxu0 0.0
    %4735 = vmatpush2.xpose.msra.mxu0 0.0
    %4736 = vmatprep.subr.mxu0 0.0
    %4737 = vmatpush2.xpose.msra.mxu0 0.0
    %4738 = vmatprep.subr.mxu0 0.0
    %4739 = vmatpush2.xpose.msra.mxu0 0.0
    %4740 = vmatprep.subr.mxu0 0.0
    %4741 = vmatpush2.xpose.msra.mxu0 0.0
    %4742 = vmatprep.subr.mxu0 0.0
    %4743 = vmatpush2.xpose.msra.mxu0 0.0
    %4744 = vmatprep.subr.mxu0 0.0
    %4745 = vmatpush2.xpose.msra.mxu0 0.0
    %4746 = vmatprep.subr.mxu0 0.0
    %4747 = vmatpush2.xpose.msra.mxu0 0.0
    %4748 = vmatprep.subr.mxu0 0.0
    %4749 = vmatpush2.xpose.msra.mxu0 0.0
    %4750 = vmatprep.subr.mxu0 0.0
    %4751 = vmatpush2.xpose.msra.mxu0 0.0
    %4752 = vmatprep.subr.mxu0 0.0
    %4753 = vmatpush2.xpose.msra.mxu0 0.0
    %4754 = vmatprep.subr.mxu0 0.0
    %4755 = vmatpush2.xpose.msra.mxu0 0.0
    %4756 = vmatprep.subr.mxu0 0.0
    %4757 = vmatpush2.xpose.msra.mxu0 0.0
    %4758 = vmatprep.mubr.f32.mxu0 %v766
    %4759 = vmatmul.mubr.f32.gmra.mxu0 %v758
    %v4760 = vpop.f32.mrf.mxu0
    %v4761 = vadd.f32 %v4691, %v4760
    %v4762 = vpop.f32.mrf.mxu0
    %4763 = vdwg.mxu0
    %4764 = vmatprep.subr.mxu0 0.0
    %4765 = vmatpush1.xpose.msra.mxu0 0.0
    %4766 = vmatprep.subr.mxu0 0.0
    %4767 = vmatpush1.xpose.msra.mxu0 0.0
    %4768 = vmatprep.subr.mxu0 0.0
    %4769 = vmatpush1.xpose.msra.mxu0 0.0
    %4770 = vmatprep.subr.mxu0 0.0
    %4771 = vmatpush1.xpose.msra.mxu0 0.0
    %4772 = vmatprep.subr.mxu0 0.0
    %4773 = vmatpush1.xpose.msra.mxu0 0.0
    %4774 = vmatprep.subr.mxu0 0.0
    %4775 = vmatpush1.xpose.msra.mxu0 0.0
    %4776 = vmatprep.subr.mxu0 0.0
    %4777 = vmatpush1.xpose.msra.mxu0 0.0
    %4778 = vmatprep.subr.mxu0 0.0
    %4779 = vmatpush1.xpose.msra.mxu0 0.0
    %4780 = vmatprep.subr.mxu0 0.0
    %4781 = vmatpush1.xpose.msra.mxu0 0.0
    %4782 = vmatprep.subr.mxu0 0.0
    %4783 = vmatpush1.xpose.msra.mxu0 0.0
    %4784 = vmatprep.subr.mxu0 0.0
    %4785 = vmatpush1.xpose.msra.mxu0 0.0
    %4786 = vmatprep.subr.mxu0 0.0
    %4787 = vmatpush1.xpose.msra.mxu0 0.0
    %4788 = vmatprep.subr.mxu0 0.0
    %4789 = vmatpush1.xpose.msra.mxu0 0.0
    %4790 = vmatprep.subr.mxu0 0.0
    %4791 = vmatpush1.xpose.msra.mxu0 0.0
    %4792 = vmatprep.subr.mxu0 0.0
    %4793 = vmatpush1.xpose.msra.mxu0 0.0
    %4794 = vmatprep.subr.mxu0 %v174
    %4795 = vmatpush1.xpose.msra.mxu0 %v173
    %4796 = vmatprep.subr.mxu0 0.0
    %4797 = vmatpush2.xpose.msra.mxu0 0.0
    %4798 = vmatprep.subr.mxu0 0.0
    %4799 = vmatpush2.xpose.msra.mxu0 0.0
    %4800 = vmatprep.subr.mxu0 0.0
    %4801 = vmatpush2.xpose.msra.mxu0 0.0
    %4802 = vmatprep.subr.mxu0 0.0
    %4803 = vmatpush2.xpose.msra.mxu0 0.0
    %4804 = vmatprep.subr.mxu0 0.0
    %4805 = vmatpush2.xpose.msra.mxu0 0.0
    %4806 = vmatprep.subr.mxu0 0.0
    %4807 = vmatpush2.xpose.msra.mxu0 0.0
    %4808 = vmatprep.subr.mxu0 0.0
    %4809 = vmatpush2.xpose.msra.mxu0 0.0
    %4810 = vmatprep.subr.mxu0 0.0
    %4811 = vmatpush2.xpose.msra.mxu0 0.0
    %4812 = vmatprep.subr.mxu0 0.0
    %4813 = vmatpush2.xpose.msra.mxu0 0.0
    %4814 = vmatprep.subr.mxu0 0.0
    %4815 = vmatpush2.xpose.msra.mxu0 0.0
    %4816 = vmatprep.subr.mxu0 0.0
    %4817 = vmatpush2.xpose.msra.mxu0 0.0
    %4818 = vmatprep.subr.mxu0 0.0
    %4819 = vmatpush2.xpose.msra.mxu0 0.0
    %4820 = vmatprep.subr.mxu0 0.0
    %4821 = vmatpush2.xpose.msra.mxu0 0.0
    %4822 = vmatprep.subr.mxu0 0.0
    %4823 = vmatpush2.xpose.msra.mxu0 0.0
    %4824 = vmatprep.subr.mxu0 0.0
    %4825 = vmatpush2.xpose.msra.mxu0 0.0
    %4826 = vmatprep.subr.mxu0 0.0
    %4827 = vmatpush2.xpose.msra.mxu0 0.0
    %4828 = vmatprep.mubr.f32.mxu0 %v767
    %4829 = vmatmul.mubr.f32.gmra.mxu0 %v765
    %v4830 = vpop.f32.mrf.mxu0
    %v4831 = vadd.f32 %v4761, %v4830
    %v4832 = vpop.f32.mrf.mxu0
    %4833 = vdwg.mxu0
    %4834 = vmatprep.subr.mxu0 0.0
    %4835 = vmatpush1.xpose.msra.mxu0 0.0
    %4836 = vmatprep.subr.mxu0 0.0
    %4837 = vmatpush1.xpose.msra.mxu0 0.0
    %4838 = vmatprep.subr.mxu0 0.0
    %4839 = vmatpush1.xpose.msra.mxu0 0.0
    %4840 = vmatprep.subr.mxu0 0.0
    %4841 = vmatpush1.xpose.msra.mxu0 0.0
    %4842 = vmatprep.subr.mxu0 0.0
    %4843 = vmatpush1.xpose.msra.mxu0 0.0
    %4844 = vmatprep.subr.mxu0 0.0
    %4845 = vmatpush1.xpose.msra.mxu0 0.0
    %4846 = vmatprep.subr.mxu0 0.0
    %4847 = vmatpush1.xpose.msra.mxu0 0.0
    %4848 = vmatprep.subr.mxu0 0.0
    %4849 = vmatpush1.xpose.msra.mxu0 0.0
    %4850 = vmatprep.subr.mxu0 0.0
    %4851 = vmatpush1.xpose.msra.mxu0 0.0
    %4852 = vmatprep.subr.mxu0 0.0
    %4853 = vmatpush1.xpose.msra.mxu0 0.0
    %4854 = vmatprep.subr.mxu0 0.0
    %4855 = vmatpush1.xpose.msra.mxu0 0.0
    %4856 = vmatprep.subr.mxu0 0.0
    %4857 = vmatpush1.xpose.msra.mxu0 0.0
    %4858 = vmatprep.subr.mxu0 0.0
    %4859 = vmatpush1.xpose.msra.mxu0 0.0
    %4860 = vmatprep.subr.mxu0 0.0
    %4861 = vmatpush1.xpose.msra.mxu0 0.0
    %4862 = vmatprep.subr.mxu0 0.0
    %4863 = vmatpush1.xpose.msra.mxu0 0.0
    %4864 = vmatprep.subr.mxu0 %v176
    %4865 = vmatpush1.xpose.msra.mxu0 %v175
    %4866 = vmatprep.subr.mxu0 0.0
    %4867 = vmatpush2.xpose.msra.mxu0 0.0
    %4868 = vmatprep.subr.mxu0 0.0
    %4869 = vmatpush2.xpose.msra.mxu0 0.0
    %4870 = vmatprep.subr.mxu0 0.0
    %4871 = vmatpush2.xpose.msra.mxu0 0.0
    %4872 = vmatprep.subr.mxu0 0.0
    %4873 = vmatpush2.xpose.msra.mxu0 0.0
    %4874 = vmatprep.subr.mxu0 0.0
    %4875 = vmatpush2.xpose.msra.mxu0 0.0
    %4876 = vmatprep.subr.mxu0 0.0
    %4877 = vmatpush2.xpose.msra.mxu0 0.0
    %4878 = vmatprep.subr.mxu0 0.0
    %4879 = vmatpush2.xpose.msra.mxu0 0.0
    %4880 = vmatprep.subr.mxu0 0.0
    %4881 = vmatpush2.xpose.msra.mxu0 0.0
    %4882 = vmatprep.subr.mxu0 0.0
    %4883 = vmatpush2.xpose.msra.mxu0 0.0
    %4884 = vmatprep.subr.mxu0 0.0
    %4885 = vmatpush2.xpose.msra.mxu0 0.0
    %4886 = vmatprep.subr.mxu0 0.0
    %4887 = vmatpush2.xpose.msra.mxu0 0.0
    %4888 = vmatprep.subr.mxu0 0.0
    %4889 = vmatpush2.xpose.msra.mxu0 0.0
    %4890 = vmatprep.subr.mxu0 0.0
    %4891 = vmatpush2.xpose.msra.mxu0 0.0
    %4892 = vmatprep.subr.mxu0 0.0
    %4893 = vmatpush2.xpose.msra.mxu0 0.0
    %4894 = vmatprep.subr.mxu0 0.0
    %4895 = vmatpush2.xpose.msra.mxu0 0.0
    %4896 = vmatprep.subr.mxu0 0.0
    %4897 = vmatpush2.xpose.msra.mxu0 0.0
    %4898 = vmatprep.mubr.f32.mxu0 %v783
    %4899 = vmatmul.mubr.f32.gmra.mxu0 %v775
    %v4900 = vpop.f32.mrf.mxu0
    %v4901 = vadd.f32 %v4831, %v4900
    %v4902 = vpop.f32.mrf.mxu0
    %4903 = vdwg.mxu0
    %4904 = vmatprep.subr.mxu0 0.0
    %4905 = vmatpush1.xpose.msra.mxu0 0.0
    %4906 = vmatprep.subr.mxu0 0.0
    %4907 = vmatpush1.xpose.msra.mxu0 0.0
    %4908 = vmatprep.subr.mxu0 0.0
    %4909 = vmatpush1.xpose.msra.mxu0 0.0
    %4910 = vmatprep.subr.mxu0 0.0
    %4911 = vmatpush1.xpose.msra.mxu0 0.0
    %4912 = vmatprep.subr.mxu0 0.0
    %4913 = vmatpush1.xpose.msra.mxu0 0.0
    %4914 = vmatprep.subr.mxu0 0.0
    %4915 = vmatpush1.xpose.msra.mxu0 0.0
    %4916 = vmatprep.subr.mxu0 0.0
    %4917 = vmatpush1.xpose.msra.mxu0 0.0
    %4918 = vmatprep.subr.mxu0 0.0
    %4919 = vmatpush1.xpose.msra.mxu0 0.0
    %4920 = vmatprep.subr.mxu0 0.0
    %4921 = vmatpush1.xpose.msra.mxu0 0.0
    %4922 = vmatprep.subr.mxu0 0.0
    %4923 = vmatpush1.xpose.msra.mxu0 0.0
    %4924 = vmatprep.subr.mxu0 0.0
    %4925 = vmatpush1.xpose.msra.mxu0 0.0
    %4926 = vmatprep.subr.mxu0 0.0
    %4927 = vmatpush1.xpose.msra.mxu0 0.0
    %4928 = vmatprep.subr.mxu0 0.0
    %4929 = vmatpush1.xpose.msra.mxu0 0.0
    %4930 = vmatprep.subr.mxu0 0.0
    %4931 = vmatpush1.xpose.msra.mxu0 0.0
    %4932 = vmatprep.subr.mxu0 0.0
    %4933 = vmatpush1.xpose.msra.mxu0 0.0
    %4934 = vmatprep.subr.mxu0 %v178
    %4935 = vmatpush1.xpose.msra.mxu0 %v177
    %4936 = vmatprep.subr.mxu0 0.0
    %4937 = vmatpush2.xpose.msra.mxu0 0.0
    %4938 = vmatprep.subr.mxu0 0.0
    %4939 = vmatpush2.xpose.msra.mxu0 0.0
    %4940 = vmatprep.subr.mxu0 0.0
    %4941 = vmatpush2.xpose.msra.mxu0 0.0
    %4942 = vmatprep.subr.mxu0 0.0
    %4943 = vmatpush2.xpose.msra.mxu0 0.0
    %4944 = vmatprep.subr.mxu0 0.0
    %4945 = vmatpush2.xpose.msra.mxu0 0.0
    %4946 = vmatprep.subr.mxu0 0.0
    %4947 = vmatpush2.xpose.msra.mxu0 0.0
    %4948 = vmatprep.subr.mxu0 0.0
    %4949 = vmatpush2.xpose.msra.mxu0 0.0
    %4950 = vmatprep.subr.mxu0 0.0
    %4951 = vmatpush2.xpose.msra.mxu0 0.0
    %4952 = vmatprep.subr.mxu0 0.0
    %4953 = vmatpush2.xpose.msra.mxu0 0.0
    %4954 = vmatprep.subr.mxu0 0.0
    %4955 = vmatpush2.xpose.msra.mxu0 0.0
    %4956 = vmatprep.subr.mxu0 0.0
    %4957 = vmatpush2.xpose.msra.mxu0 0.0
    %4958 = vmatprep.subr.mxu0 0.0
    %4959 = vmatpush2.xpose.msra.mxu0 0.0
    %4960 = vmatprep.subr.mxu0 0.0
    %4961 = vmatpush2.xpose.msra.mxu0 0.0
    %4962 = vmatprep.subr.mxu0 0.0
    %4963 = vmatpush2.xpose.msra.mxu0 0.0
    %4964 = vmatprep.subr.mxu0 0.0
    %4965 = vmatpush2.xpose.msra.mxu0 0.0
    %4966 = vmatprep.subr.mxu0 0.0
    %4967 = vmatpush2.xpose.msra.mxu0 0.0
    %4968 = vmatprep.mubr.f32.mxu0 %v784
    %4969 = vmatmul.mubr.f32.gmra.mxu0 %v782
    %v4970 = vpop.f32.mrf.mxu0
    %v4971 = vadd.f32 %v4901, %v4970
    %v4972 = vpop.f32.mrf.mxu0
    %4973 = vdwg.mxu0
    %4974 = vmatprep.subr.mxu0 0.0
    %4975 = vmatpush1.xpose.msra.mxu0 0.0
    %4976 = vmatprep.subr.mxu0 0.0
    %4977 = vmatpush1.xpose.msra.mxu0 0.0
    %4978 = vmatprep.subr.mxu0 0.0
    %4979 = vmatpush1.xpose.msra.mxu0 0.0
    %4980 = vmatprep.subr.mxu0 0.0
    %4981 = vmatpush1.xpose.msra.mxu0 0.0
    %4982 = vmatprep.subr.mxu0 0.0
    %4983 = vmatpush1.xpose.msra.mxu0 0.0
    %4984 = vmatprep.subr.mxu0 0.0
    %4985 = vmatpush1.xpose.msra.mxu0 0.0
    %4986 = vmatprep.subr.mxu0 0.0
    %4987 = vmatpush1.xpose.msra.mxu0 0.0
    %4988 = vmatprep.subr.mxu0 0.0
    %4989 = vmatpush1.xpose.msra.mxu0 0.0
    %4990 = vmatprep.subr.mxu0 0.0
    %4991 = vmatpush1.xpose.msra.mxu0 0.0
    %4992 = vmatprep.subr.mxu0 0.0
    %4993 = vmatpush1.xpose.msra.mxu0 0.0
    %4994 = vmatprep.subr.mxu0 0.0
    %4995 = vmatpush1.xpose.msra.mxu0 0.0
    %4996 = vmatprep.subr.mxu0 0.0
    %4997 = vmatpush1.xpose.msra.mxu0 0.0
    %4998 = vmatprep.subr.mxu0 0.0
    %4999 = vmatpush1.xpose.msra.mxu0 0.0
    %5000 = vmatprep.subr.mxu0 0.0
    %5001 = vmatpush1.xpose.msra.mxu0 0.0
    %5002 = vmatprep.subr.mxu0 0.0
    %5003 = vmatpush1.xpose.msra.mxu0 0.0
    %5004 = vmatprep.subr.mxu0 %v180
    %5005 = vmatpush1.xpose.msra.mxu0 %v179
    %5006 = vmatprep.subr.mxu0 0.0
    %5007 = vmatpush2.xpose.msra.mxu0 0.0
    %5008 = vmatprep.subr.mxu0 0.0
    %5009 = vmatpush2.xpose.msra.mxu0 0.0
    %5010 = vmatprep.subr.mxu0 0.0
    %5011 = vmatpush2.xpose.msra.mxu0 0.0
    %5012 = vmatprep.subr.mxu0 0.0
    %5013 = vmatpush2.xpose.msra.mxu0 0.0
    %5014 = vmatprep.subr.mxu0 0.0
    %5015 = vmatpush2.xpose.msra.mxu0 0.0
    %5016 = vmatprep.subr.mxu0 0.0
    %5017 = vmatpush2.xpose.msra.mxu0 0.0
    %5018 = vmatprep.subr.mxu0 0.0
    %5019 = vmatpush2.xpose.msra.mxu0 0.0
    %5020 = vmatprep.subr.mxu0 0.0
    %5021 = vmatpush2.xpose.msra.mxu0 0.0
    %5022 = vmatprep.subr.mxu0 0.0
    %5023 = vmatpush2.xpose.msra.mxu0 0.0
    %5024 = vmatprep.subr.mxu0 0.0
    %5025 = vmatpush2.xpose.msra.mxu0 0.0
    %5026 = vmatprep.subr.mxu0 0.0
    %5027 = vmatpush2.xpose.msra.mxu0 0.0
    %5028 = vmatprep.subr.mxu0 0.0
    %5029 = vmatpush2.xpose.msra.mxu0 0.0
    %5030 = vmatprep.subr.mxu0 0.0
    %5031 = vmatpush2.xpose.msra.mxu0 0.0
    %5032 = vmatprep.subr.mxu0 0.0
    %5033 = vmatpush2.xpose.msra.mxu0 0.0
    %5034 = vmatprep.subr.mxu0 0.0
    %5035 = vmatpush2.xpose.msra.mxu0 0.0
    %5036 = vmatprep.subr.mxu0 0.0
    %5037 = vmatpush2.xpose.msra.mxu0 0.0
    %5038 = vmatprep.mubr.f32.mxu0 %v800
    %5039 = vmatmul.mubr.f32.gmra.mxu0 %v792
    %v5040 = vpop.f32.mrf.mxu0
    %v5041 = vadd.f32 %v4971, %v5040
    %v5042 = vpop.f32.mrf.mxu0
    %5043 = vdwg.mxu0
    %5044 = vmatprep.subr.mxu0 0.0
    %5045 = vmatpush1.xpose.msra.mxu0 0.0
    %5046 = vmatprep.subr.mxu0 0.0
    %5047 = vmatpush1.xpose.msra.mxu0 0.0
    %5048 = vmatprep.subr.mxu0 0.0
    %5049 = vmatpush1.xpose.msra.mxu0 0.0
    %5050 = vmatprep.subr.mxu0 0.0
    %5051 = vmatpush1.xpose.msra.mxu0 0.0
    %5052 = vmatprep.subr.mxu0 0.0
    %5053 = vmatpush1.xpose.msra.mxu0 0.0
    %5054 = vmatprep.subr.mxu0 0.0
    %5055 = vmatpush1.xpose.msra.mxu0 0.0
    %5056 = vmatprep.subr.mxu0 0.0
    %5057 = vmatpush1.xpose.msra.mxu0 0.0
    %5058 = vmatprep.subr.mxu0 0.0
    %5059 = vmatpush1.xpose.msra.mxu0 0.0
    %5060 = vmatprep.subr.mxu0 0.0
    %5061 = vmatpush1.xpose.msra.mxu0 0.0
    %5062 = vmatprep.subr.mxu0 0.0
    %5063 = vmatpush1.xpose.msra.mxu0 0.0
    %5064 = vmatprep.subr.mxu0 0.0
    %5065 = vmatpush1.xpose.msra.mxu0 0.0
    %5066 = vmatprep.subr.mxu0 0.0
    %5067 = vmatpush1.xpose.msra.mxu0 0.0
    %5068 = vmatprep.subr.mxu0 0.0
    %5069 = vmatpush1.xpose.msra.mxu0 0.0
    %5070 = vmatprep.subr.mxu0 0.0
    %5071 = vmatpush1.xpose.msra.mxu0 0.0
    %5072 = vmatprep.subr.mxu0 0.0
    %5073 = vmatpush1.xpose.msra.mxu0 0.0
    %5074 = vmatprep.subr.mxu0 %v182
    %5075 = vmatpush1.xpose.msra.mxu0 %v181
    %5076 = vmatprep.subr.mxu0 0.0
    %5077 = vmatpush2.xpose.msra.mxu0 0.0
    %5078 = vmatprep.subr.mxu0 0.0
    %5079 = vmatpush2.xpose.msra.mxu0 0.0
    %5080 = vmatprep.subr.mxu0 0.0
    %5081 = vmatpush2.xpose.msra.mxu0 0.0
    %5082 = vmatprep.subr.mxu0 0.0
    %5083 = vmatpush2.xpose.msra.mxu0 0.0
    %5084 = vmatprep.subr.mxu0 0.0
    %5085 = vmatpush2.xpose.msra.mxu0 0.0
    %5086 = vmatprep.subr.mxu0 0.0
    %5087 = vmatpush2.xpose.msra.mxu0 0.0
    %5088 = vmatprep.subr.mxu0 0.0
    %5089 = vmatpush2.xpose.msra.mxu0 0.0
    %5090 = vmatprep.subr.mxu0 0.0
    %5091 = vmatpush2.xpose.msra.mxu0 0.0
    %5092 = vmatprep.subr.mxu0 0.0
    %5093 = vmatpush2.xpose.msra.mxu0 0.0
    %5094 = vmatprep.subr.mxu0 0.0
    %5095 = vmatpush2.xpose.msra.mxu0 0.0
    %5096 = vmatprep.subr.mxu0 0.0
    %5097 = vmatpush2.xpose.msra.mxu0 0.0
    %5098 = vmatprep.subr.mxu0 0.0
    %5099 = vmatpush2.xpose.msra.mxu0 0.0
    %5100 = vmatprep.subr.mxu0 0.0
    %5101 = vmatpush2.xpose.msra.mxu0 0.0
    %5102 = vmatprep.subr.mxu0 0.0
    %5103 = vmatpush2.xpose.msra.mxu0 0.0
    %5104 = vmatprep.subr.mxu0 0.0
    %5105 = vmatpush2.xpose.msra.mxu0 0.0
    %5106 = vmatprep.subr.mxu0 0.0
    %5107 = vmatpush2.xpose.msra.mxu0 0.0
    %5108 = vmatprep.mubr.f32.mxu0 %v801
    %5109 = vmatmul.mubr.f32.gmra.mxu0 %v799
    %v5110 = vpop.f32.mrf.mxu0
    %v5111 = vadd.f32 %v5041, %v5110
    %v5112 = vpop.f32.mrf.mxu0
    %5113 = vdwg.mxu0
    %5114 = vmatprep.subr.mxu0 0.0
    %5115 = vmatpush1.xpose.msra.mxu0 0.0
    %5116 = vmatprep.subr.mxu0 0.0
    %5117 = vmatpush1.xpose.msra.mxu0 0.0
    %5118 = vmatprep.subr.mxu0 0.0
    %5119 = vmatpush1.xpose.msra.mxu0 0.0
    %5120 = vmatprep.subr.mxu0 0.0
    %5121 = vmatpush1.xpose.msra.mxu0 0.0
    %5122 = vmatprep.subr.mxu0 0.0
    %5123 = vmatpush1.xpose.msra.mxu0 0.0
    %5124 = vmatprep.subr.mxu0 0.0
    %5125 = vmatpush1.xpose.msra.mxu0 0.0
    %5126 = vmatprep.subr.mxu0 0.0
    %5127 = vmatpush1.xpose.msra.mxu0 0.0
    %5128 = vmatprep.subr.mxu0 0.0
    %5129 = vmatpush1.xpose.msra.mxu0 0.0
    %5130 = vmatprep.subr.mxu0 0.0
    %5131 = vmatpush1.xpose.msra.mxu0 0.0
    %5132 = vmatprep.subr.mxu0 0.0
    %5133 = vmatpush1.xpose.msra.mxu0 0.0
    %5134 = vmatprep.subr.mxu0 0.0
    %5135 = vmatpush1.xpose.msra.mxu0 0.0
    %5136 = vmatprep.subr.mxu0 0.0
    %5137 = vmatpush1.xpose.msra.mxu0 0.0
    %5138 = vmatprep.subr.mxu0 0.0
    %5139 = vmatpush1.xpose.msra.mxu0 0.0
    %5140 = vmatprep.subr.mxu0 0.0
    %5141 = vmatpush1.xpose.msra.mxu0 0.0
    %5142 = vmatprep.subr.mxu0 0.0
    %5143 = vmatpush1.xpose.msra.mxu0 0.0
    %5144 = vmatprep.subr.mxu0 %v184
    %5145 = vmatpush1.xpose.msra.mxu0 %v183
    %5146 = vmatprep.subr.mxu0 0.0
    %5147 = vmatpush2.xpose.msra.mxu0 0.0
    %5148 = vmatprep.subr.mxu0 0.0
    %5149 = vmatpush2.xpose.msra.mxu0 0.0
    %5150 = vmatprep.subr.mxu0 0.0
    %5151 = vmatpush2.xpose.msra.mxu0 0.0
    %5152 = vmatprep.subr.mxu0 0.0
    %5153 = vmatpush2.xpose.msra.mxu0 0.0
    %5154 = vmatprep.subr.mxu0 0.0
    %5155 = vmatpush2.xpose.msra.mxu0 0.0
    %5156 = vmatprep.subr.mxu0 0.0
    %5157 = vmatpush2.xpose.msra.mxu0 0.0
    %5158 = vmatprep.subr.mxu0 0.0
    %5159 = vmatpush2.xpose.msra.mxu0 0.0
    %5160 = vmatprep.subr.mxu0 0.0
    %5161 = vmatpush2.xpose.msra.mxu0 0.0
    %5162 = vmatprep.subr.mxu0 0.0
    %5163 = vmatpush2.xpose.msra.mxu0 0.0
    %5164 = vmatprep.subr.mxu0 0.0
    %5165 = vmatpush2.xpose.msra.mxu0 0.0
    %5166 = vmatprep.subr.mxu0 0.0
    %5167 = vmatpush2.xpose.msra.mxu0 0.0
    %5168 = vmatprep.subr.mxu0 0.0
    %5169 = vmatpush2.xpose.msra.mxu0 0.0
    %5170 = vmatprep.subr.mxu0 0.0
    %5171 = vmatpush2.xpose.msra.mxu0 0.0
    %5172 = vmatprep.subr.mxu0 0.0
    %5173 = vmatpush2.xpose.msra.mxu0 0.0
    %5174 = vmatprep.subr.mxu0 0.0
    %5175 = vmatpush2.xpose.msra.mxu0 0.0
    %5176 = vmatprep.subr.mxu0 0.0
    %5177 = vmatpush2.xpose.msra.mxu0 0.0
    %5178 = vmatprep.mubr.f32.mxu0 %v817
    %5179 = vmatmul.mubr.f32.gmra.mxu0 %v809
    %v5180 = vpop.f32.mrf.mxu0
    %v5181 = vadd.f32 %v5111, %v5180
    %v5182 = vpop.f32.mrf.mxu0
    %5183 = vdwg.mxu0
    %5184 = vmatprep.subr.mxu0 0.0
    %5185 = vmatpush1.xpose.msra.mxu0 0.0
    %5186 = vmatprep.subr.mxu0 0.0
    %5187 = vmatpush1.xpose.msra.mxu0 0.0
    %5188 = vmatprep.subr.mxu0 0.0
    %5189 = vmatpush1.xpose.msra.mxu0 0.0
    %5190 = vmatprep.subr.mxu0 0.0
    %5191 = vmatpush1.xpose.msra.mxu0 0.0
    %5192 = vmatprep.subr.mxu0 0.0
    %5193 = vmatpush1.xpose.msra.mxu0 0.0
    %5194 = vmatprep.subr.mxu0 0.0
    %5195 = vmatpush1.xpose.msra.mxu0 0.0
    %5196 = vmatprep.subr.mxu0 0.0
    %5197 = vmatpush1.xpose.msra.mxu0 0.0
    %5198 = vmatprep.subr.mxu0 0.0
    %5199 = vmatpush1.xpose.msra.mxu0 0.0
    %5200 = vmatprep.subr.mxu0 0.0
    %5201 = vmatpush1.xpose.msra.mxu0 0.0
    %5202 = vmatprep.subr.mxu0 0.0
    %5203 = vmatpush1.xpose.msra.mxu0 0.0
    %5204 = vmatprep.subr.mxu0 0.0
    %5205 = vmatpush1.xpose.msra.mxu0 0.0
    %5206 = vmatprep.subr.mxu0 0.0
    %5207 = vmatpush1.xpose.msra.mxu0 0.0
    %5208 = vmatprep.subr.mxu0 0.0
    %5209 = vmatpush1.xpose.msra.mxu0 0.0
    %5210 = vmatprep.subr.mxu0 0.0
    %5211 = vmatpush1.xpose.msra.mxu0 0.0
    %5212 = vmatprep.subr.mxu0 0.0
    %5213 = vmatpush1.xpose.msra.mxu0 0.0
    %5214 = vmatprep.subr.mxu0 %v186
    %5215 = vmatpush1.xpose.msra.mxu0 %v185
    %5216 = vmatprep.subr.mxu0 0.0
    %5217 = vmatpush2.xpose.msra.mxu0 0.0
    %5218 = vmatprep.subr.mxu0 0.0
    %5219 = vmatpush2.xpose.msra.mxu0 0.0
    %5220 = vmatprep.subr.mxu0 0.0
    %5221 = vmatpush2.xpose.msra.mxu0 0.0
    %5222 = vmatprep.subr.mxu0 0.0
    %5223 = vmatpush2.xpose.msra.mxu0 0.0
    %5224 = vmatprep.subr.mxu0 0.0
    %5225 = vmatpush2.xpose.msra.mxu0 0.0
    %5226 = vmatprep.subr.mxu0 0.0
    %5227 = vmatpush2.xpose.msra.mxu0 0.0
    %5228 = vmatprep.subr.mxu0 0.0
    %5229 = vmatpush2.xpose.msra.mxu0 0.0
    %5230 = vmatprep.subr.mxu0 0.0
    %5231 = vmatpush2.xpose.msra.mxu0 0.0
    %5232 = vmatprep.subr.mxu0 0.0
    %5233 = vmatpush2.xpose.msra.mxu0 0.0
    %5234 = vmatprep.subr.mxu0 0.0
    %5235 = vmatpush2.xpose.msra.mxu0 0.0
    %5236 = vmatprep.subr.mxu0 0.0
    %5237 = vmatpush2.xpose.msra.mxu0 0.0
    %5238 = vmatprep.subr.mxu0 0.0
    %5239 = vmatpush2.xpose.msra.mxu0 0.0
    %5240 = vmatprep.subr.mxu0 0.0
    %5241 = vmatpush2.xpose.msra.mxu0 0.0
    %5242 = vmatprep.subr.mxu0 0.0
    %5243 = vmatpush2.xpose.msra.mxu0 0.0
    %5244 = vmatprep.subr.mxu0 0.0
    %5245 = vmatpush2.xpose.msra.mxu0 0.0
    %5246 = vmatprep.subr.mxu0 0.0
    %5247 = vmatpush2.xpose.msra.mxu0 0.0
    %5248 = vmatprep.mubr.f32.mxu0 %v818
    %5249 = vmatmul.mubr.f32.gmra.mxu0 %v816
    %v5250 = vpop.f32.mrf.mxu0
    %v5251 = vadd.f32 %v5181, %v5250
    %v5252 = vpop.f32.mrf.mxu0
    %5253 = vdwg.mxu0
    %5254 = vmatprep.subr.mxu0 0.0
    %5255 = vmatpush1.xpose.msra.mxu0 0.0
    %5256 = vmatprep.subr.mxu0 0.0
    %5257 = vmatpush1.xpose.msra.mxu0 0.0
    %5258 = vmatprep.subr.mxu0 0.0
    %5259 = vmatpush1.xpose.msra.mxu0 0.0
    %5260 = vmatprep.subr.mxu0 0.0
    %5261 = vmatpush1.xpose.msra.mxu0 0.0
    %5262 = vmatprep.subr.mxu0 0.0
    %5263 = vmatpush1.xpose.msra.mxu0 0.0
    %5264 = vmatprep.subr.mxu0 0.0
    %5265 = vmatpush1.xpose.msra.mxu0 0.0
    %5266 = vmatprep.subr.mxu0 0.0
    %5267 = vmatpush1.xpose.msra.mxu0 0.0
    %5268 = vmatprep.subr.mxu0 0.0
    %5269 = vmatpush1.xpose.msra.mxu0 0.0
    %5270 = vmatprep.subr.mxu0 0.0
    %5271 = vmatpush1.xpose.msra.mxu0 0.0
    %5272 = vmatprep.subr.mxu0 0.0
    %5273 = vmatpush1.xpose.msra.mxu0 0.0
    %5274 = vmatprep.subr.mxu0 0.0
    %5275 = vmatpush1.xpose.msra.mxu0 0.0
    %5276 = vmatprep.subr.mxu0 0.0
    %5277 = vmatpush1.xpose.msra.mxu0 0.0
    %5278 = vmatprep.subr.mxu0 0.0
    %5279 = vmatpush1.xpose.msra.mxu0 0.0
    %5280 = vmatprep.subr.mxu0 0.0
    %5281 = vmatpush1.xpose.msra.mxu0 0.0
    %5282 = vmatprep.subr.mxu0 0.0
    %5283 = vmatpush1.xpose.msra.mxu0 0.0
    %5284 = vmatprep.subr.mxu0 %v188
    %5285 = vmatpush1.xpose.msra.mxu0 %v187
    %5286 = vmatprep.subr.mxu0 0.0
    %5287 = vmatpush2.xpose.msra.mxu0 0.0
    %5288 = vmatprep.subr.mxu0 0.0
    %5289 = vmatpush2.xpose.msra.mxu0 0.0
    %5290 = vmatprep.subr.mxu0 0.0
    %5291 = vmatpush2.xpose.msra.mxu0 0.0
    %5292 = vmatprep.subr.mxu0 0.0
    %5293 = vmatpush2.xpose.msra.mxu0 0.0
    %5294 = vmatprep.subr.mxu0 0.0
    %5295 = vmatpush2.xpose.msra.mxu0 0.0
    %5296 = vmatprep.subr.mxu0 0.0
    %5297 = vmatpush2.xpose.msra.mxu0 0.0
    %5298 = vmatprep.subr.mxu0 0.0
    %5299 = vmatpush2.xpose.msra.mxu0 0.0
    %5300 = vmatprep.subr.mxu0 0.0
    %5301 = vmatpush2.xpose.msra.mxu0 0.0
    %5302 = vmatprep.subr.mxu0 0.0
    %5303 = vmatpush2.xpose.msra.mxu0 0.0
    %5304 = vmatprep.subr.mxu0 0.0
    %5305 = vmatpush2.xpose.msra.mxu0 0.0
    %5306 = vmatprep.subr.mxu0 0.0
    %5307 = vmatpush2.xpose.msra.mxu0 0.0
    %5308 = vmatprep.subr.mxu0 0.0
    %5309 = vmatpush2.xpose.msra.mxu0 0.0
    %5310 = vmatprep.subr.mxu0 0.0
    %5311 = vmatpush2.xpose.msra.mxu0 0.0
    %5312 = vmatprep.subr.mxu0 0.0
    %5313 = vmatpush2.xpose.msra.mxu0 0.0
    %5314 = vmatprep.subr.mxu0 0.0
    %5315 = vmatpush2.xpose.msra.mxu0 0.0
    %5316 = vmatprep.subr.mxu0 0.0
    %5317 = vmatpush2.xpose.msra.mxu0 0.0
    %5318 = vmatprep.mubr.f32.mxu0 %v834
    %5319 = vmatmul.mubr.f32.gmra.mxu0 %v826
    %v5320 = vpop.f32.mrf.mxu0
    %v5321 = vadd.f32 %v5251, %v5320
    %v5322 = vpop.f32.mrf.mxu0
    %5323 = vdwg.mxu0
    %5324 = vmatprep.subr.mxu0 0.0
    %5325 = vmatpush1.xpose.msra.mxu0 0.0
    %5326 = vmatprep.subr.mxu0 0.0
    %5327 = vmatpush1.xpose.msra.mxu0 0.0
    %5328 = vmatprep.subr.mxu0 0.0
    %5329 = vmatpush1.xpose.msra.mxu0 0.0
    %5330 = vmatprep.subr.mxu0 0.0
    %5331 = vmatpush1.xpose.msra.mxu0 0.0
    %5332 = vmatprep.subr.mxu0 0.0
    %5333 = vmatpush1.xpose.msra.mxu0 0.0
    %5334 = vmatprep.subr.mxu0 0.0
    %5335 = vmatpush1.xpose.msra.mxu0 0.0
    %5336 = vmatprep.subr.mxu0 0.0
    %5337 = vmatpush1.xpose.msra.mxu0 0.0
    %5338 = vmatprep.subr.mxu0 0.0
    %5339 = vmatpush1.xpose.msra.mxu0 0.0
    %5340 = vmatprep.subr.mxu0 0.0
    %5341 = vmatpush1.xpose.msra.mxu0 0.0
    %5342 = vmatprep.subr.mxu0 0.0
    %5343 = vmatpush1.xpose.msra.mxu0 0.0
    %5344 = vmatprep.subr.mxu0 0.0
    %5345 = vmatpush1.xpose.msra.mxu0 0.0
    %5346 = vmatprep.subr.mxu0 0.0
    %5347 = vmatpush1.xpose.msra.mxu0 0.0
    %5348 = vmatprep.subr.mxu0 0.0
    %5349 = vmatpush1.xpose.msra.mxu0 0.0
    %5350 = vmatprep.subr.mxu0 0.0
    %5351 = vmatpush1.xpose.msra.mxu0 0.0
    %5352 = vmatprep.subr.mxu0 0.0
    %5353 = vmatpush1.xpose.msra.mxu0 0.0
    %5354 = vmatprep.subr.mxu0 %v190
    %5355 = vmatpush1.xpose.msra.mxu0 %v189
    %5356 = vmatprep.subr.mxu0 0.0
    %5357 = vmatpush2.xpose.msra.mxu0 0.0
    %5358 = vmatprep.subr.mxu0 0.0
    %5359 = vmatpush2.xpose.msra.mxu0 0.0
    %5360 = vmatprep.subr.mxu0 0.0
    %5361 = vmatpush2.xpose.msra.mxu0 0.0
    %5362 = vmatprep.subr.mxu0 0.0
    %5363 = vmatpush2.xpose.msra.mxu0 0.0
    %5364 = vmatprep.subr.mxu0 0.0
    %5365 = vmatpush2.xpose.msra.mxu0 0.0
    %5366 = vmatprep.subr.mxu0 0.0
    %5367 = vmatpush2.xpose.msra.mxu0 0.0
    %5368 = vmatprep.subr.mxu0 0.0
    %5369 = vmatpush2.xpose.msra.mxu0 0.0
    %5370 = vmatprep.subr.mxu0 0.0
    %5371 = vmatpush2.xpose.msra.mxu0 0.0
    %5372 = vmatprep.subr.mxu0 0.0
    %5373 = vmatpush2.xpose.msra.mxu0 0.0
    %5374 = vmatprep.subr.mxu0 0.0
    %5375 = vmatpush2.xpose.msra.mxu0 0.0
    %5376 = vmatprep.subr.mxu0 0.0
    %5377 = vmatpush2.xpose.msra.mxu0 0.0
    %5378 = vmatprep.subr.mxu0 0.0
    %5379 = vmatpush2.xpose.msra.mxu0 0.0
    %5380 = vmatprep.subr.mxu0 0.0
    %5381 = vmatpush2.xpose.msra.mxu0 0.0
    %5382 = vmatprep.subr.mxu0 0.0
    %5383 = vmatpush2.xpose.msra.mxu0 0.0
    %5384 = vmatprep.subr.mxu0 0.0
    %5385 = vmatpush2.xpose.msra.mxu0 0.0
    %5386 = vmatprep.subr.mxu0 0.0
    %5387 = vmatpush2.xpose.msra.mxu0 0.0
    %5388 = vmatprep.mubr.f32.mxu0 %v835
    %5389 = vmatmul.mubr.f32.gmra.mxu0 %v833
    %v5390 = vpop.f32.mrf.mxu0
    %v5391 = vadd.f32 %v5321, %v5390
    %v5392 = vpop.f32.mrf.mxu0
    %5393 = vdwg.mxu0
    %5394 = vmatprep.subr.mxu0 0.0
    %5395 = vmatpush1.xpose.msra.mxu0 0.0
    %5396 = vmatprep.subr.mxu0 0.0
    %5397 = vmatpush1.xpose.msra.mxu0 0.0
    %5398 = vmatprep.subr.mxu0 0.0
    %5399 = vmatpush1.xpose.msra.mxu0 0.0
    %5400 = vmatprep.subr.mxu0 0.0
    %5401 = vmatpush1.xpose.msra.mxu0 0.0
    %5402 = vmatprep.subr.mxu0 0.0
    %5403 = vmatpush1.xpose.msra.mxu0 0.0
    %5404 = vmatprep.subr.mxu0 0.0
    %5405 = vmatpush1.xpose.msra.mxu0 0.0
    %5406 = vmatprep.subr.mxu0 0.0
    %5407 = vmatpush1.xpose.msra.mxu0 0.0
    %5408 = vmatprep.subr.mxu0 0.0
    %5409 = vmatpush1.xpose.msra.mxu0 0.0
    %5410 = vmatprep.subr.mxu0 0.0
    %5411 = vmatpush1.xpose.msra.mxu0 0.0
    %5412 = vmatprep.subr.mxu0 0.0
    %5413 = vmatpush1.xpose.msra.mxu0 0.0
    %5414 = vmatprep.subr.mxu0 0.0
    %5415 = vmatpush1.xpose.msra.mxu0 0.0
    %5416 = vmatprep.subr.mxu0 0.0
    %5417 = vmatpush1.xpose.msra.mxu0 0.0
    %5418 = vmatprep.subr.mxu0 0.0
    %5419 = vmatpush1.xpose.msra.mxu0 0.0
    %5420 = vmatprep.subr.mxu0 0.0
    %5421 = vmatpush1.xpose.msra.mxu0 0.0
    %5422 = vmatprep.subr.mxu0 0.0
    %5423 = vmatpush1.xpose.msra.mxu0 0.0
    %5424 = vmatprep.subr.mxu0 %v192
    %5425 = vmatpush1.xpose.msra.mxu0 %v191
    %5426 = vmatprep.subr.mxu0 0.0
    %5427 = vmatpush2.xpose.msra.mxu0 0.0
    %5428 = vmatprep.subr.mxu0 0.0
    %5429 = vmatpush2.xpose.msra.mxu0 0.0
    %5430 = vmatprep.subr.mxu0 0.0
    %5431 = vmatpush2.xpose.msra.mxu0 0.0
    %5432 = vmatprep.subr.mxu0 0.0
    %5433 = vmatpush2.xpose.msra.mxu0 0.0
    %5434 = vmatprep.subr.mxu0 0.0
    %5435 = vmatpush2.xpose.msra.mxu0 0.0
    %5436 = vmatprep.subr.mxu0 0.0
    %5437 = vmatpush2.xpose.msra.mxu0 0.0
    %5438 = vmatprep.subr.mxu0 0.0
    %5439 = vmatpush2.xpose.msra.mxu0 0.0
    %5440 = vmatprep.subr.mxu0 0.0
    %5441 = vmatpush2.xpose.msra.mxu0 0.0
    %5442 = vmatprep.subr.mxu0 0.0
    %5443 = vmatpush2.xpose.msra.mxu0 0.0
    %5444 = vmatprep.subr.mxu0 0.0
    %5445 = vmatpush2.xpose.msra.mxu0 0.0
    %5446 = vmatprep.subr.mxu0 0.0
    %5447 = vmatpush2.xpose.msra.mxu0 0.0
    %5448 = vmatprep.subr.mxu0 0.0
    %5449 = vmatpush2.xpose.msra.mxu0 0.0
    %5450 = vmatprep.subr.mxu0 0.0
    %5451 = vmatpush2.xpose.msra.mxu0 0.0
    %5452 = vmatprep.subr.mxu0 0.0
    %5453 = vmatpush2.xpose.msra.mxu0 0.0
    %5454 = vmatprep.subr.mxu0 0.0
    %5455 = vmatpush2.xpose.msra.mxu0 0.0
    %5456 = vmatprep.subr.mxu0 0.0
    %5457 = vmatpush2.xpose.msra.mxu0 0.0
    %5458 = vmatprep.mubr.f32.mxu0 %v851
    %5459 = vmatmul.mubr.f32.gmra.mxu0 %v843
    %v5460 = vpop.f32.mrf.mxu0
    %v5461 = vadd.f32 %v5391, %v5460
    %v5462 = vpop.f32.mrf.mxu0
    %5463 = vdwg.mxu0
    %5464 = vmatprep.subr.mxu0 0.0
    %5465 = vmatpush1.xpose.msra.mxu0 0.0
    %5466 = vmatprep.subr.mxu0 0.0
    %5467 = vmatpush1.xpose.msra.mxu0 0.0
    %5468 = vmatprep.subr.mxu0 0.0
    %5469 = vmatpush1.xpose.msra.mxu0 0.0
    %5470 = vmatprep.subr.mxu0 0.0
    %5471 = vmatpush1.xpose.msra.mxu0 0.0
    %5472 = vmatprep.subr.mxu0 0.0
    %5473 = vmatpush1.xpose.msra.mxu0 0.0
    %5474 = vmatprep.subr.mxu0 0.0
    %5475 = vmatpush1.xpose.msra.mxu0 0.0
    %5476 = vmatprep.subr.mxu0 0.0
    %5477 = vmatpush1.xpose.msra.mxu0 0.0
    %5478 = vmatprep.subr.mxu0 0.0
    %5479 = vmatpush1.xpose.msra.mxu0 0.0
    %5480 = vmatprep.subr.mxu0 0.0
    %5481 = vmatpush1.xpose.msra.mxu0 0.0
    %5482 = vmatprep.subr.mxu0 0.0
    %5483 = vmatpush1.xpose.msra.mxu0 0.0
    %5484 = vmatprep.subr.mxu0 0.0
    %5485 = vmatpush1.xpose.msra.mxu0 0.0
    %5486 = vmatprep.subr.mxu0 0.0
    %5487 = vmatpush1.xpose.msra.mxu0 0.0
    %5488 = vmatprep.subr.mxu0 0.0
    %5489 = vmatpush1.xpose.msra.mxu0 0.0
    %5490 = vmatprep.subr.mxu0 0.0
    %5491 = vmatpush1.xpose.msra.mxu0 0.0
    %5492 = vmatprep.subr.mxu0 0.0
    %5493 = vmatpush1.xpose.msra.mxu0 0.0
    %5494 = vmatprep.subr.mxu0 %v194
    %5495 = vmatpush1.xpose.msra.mxu0 %v193
    %5496 = vmatprep.subr.mxu0 0.0
    %5497 = vmatpush2.xpose.msra.mxu0 0.0
    %5498 = vmatprep.subr.mxu0 0.0
    %5499 = vmatpush2.xpose.msra.mxu0 0.0
    %5500 = vmatprep.subr.mxu0 0.0
    %5501 = vmatpush2.xpose.msra.mxu0 0.0
    %5502 = vmatprep.subr.mxu0 0.0
    %5503 = vmatpush2.xpose.msra.mxu0 0.0
    %5504 = vmatprep.subr.mxu0 0.0
    %5505 = vmatpush2.xpose.msra.mxu0 0.0
    %5506 = vmatprep.subr.mxu0 0.0
    %5507 = vmatpush2.xpose.msra.mxu0 0.0
    %5508 = vmatprep.subr.mxu0 0.0
    %5509 = vmatpush2.xpose.msra.mxu0 0.0
    %5510 = vmatprep.subr.mxu0 0.0
    %5511 = vmatpush2.xpose.msra.mxu0 0.0
    %5512 = vmatprep.subr.mxu0 0.0
    %5513 = vmatpush2.xpose.msra.mxu0 0.0
    %5514 = vmatprep.subr.mxu0 0.0
    %5515 = vmatpush2.xpose.msra.mxu0 0.0
    %5516 = vmatprep.subr.mxu0 0.0
    %5517 = vmatpush2.xpose.msra.mxu0 0.0
    %5518 = vmatprep.subr.mxu0 0.0
    %5519 = vmatpush2.xpose.msra.mxu0 0.0
    %5520 = vmatprep.subr.mxu0 0.0
    %5521 = vmatpush2.xpose.msra.mxu0 0.0
    %5522 = vmatprep.subr.mxu0 0.0
    %5523 = vmatpush2.xpose.msra.mxu0 0.0
    %5524 = vmatprep.subr.mxu0 0.0
    %5525 = vmatpush2.xpose.msra.mxu0 0.0
    %5526 = vmatprep.subr.mxu0 0.0
    %5527 = vmatpush2.xpose.msra.mxu0 0.0
    %5528 = vmatprep.mubr.f32.mxu0 %v852
    %5529 = vmatmul.mubr.f32.gmra.mxu0 %v850
    %v5530 = vpop.f32.mrf.mxu0
    %v5531 = vadd.f32 %v5461, %v5530
    %v5532 = vpop.f32.mrf.mxu0
    %5533 = vdwg.mxu0
    %5534 = vmatprep.subr.mxu0 0.0
    %5535 = vmatpush1.xpose.msra.mxu0 0.0
    %5536 = vmatprep.subr.mxu0 0.0
    %5537 = vmatpush1.xpose.msra.mxu0 0.0
    %5538 = vmatprep.subr.mxu0 0.0
    %5539 = vmatpush1.xpose.msra.mxu0 0.0
    %5540 = vmatprep.subr.mxu0 0.0
    %5541 = vmatpush1.xpose.msra.mxu0 0.0
    %5542 = vmatprep.subr.mxu0 0.0
    %5543 = vmatpush1.xpose.msra.mxu0 0.0
    %5544 = vmatprep.subr.mxu0 0.0
    %5545 = vmatpush1.xpose.msra.mxu0 0.0
    %5546 = vmatprep.subr.mxu0 0.0
    %5547 = vmatpush1.xpose.msra.mxu0 0.0
    %5548 = vmatprep.subr.mxu0 0.0
    %5549 = vmatpush1.xpose.msra.mxu0 0.0
    %5550 = vmatprep.subr.mxu0 0.0
    %5551 = vmatpush1.xpose.msra.mxu0 0.0
    %5552 = vmatprep.subr.mxu0 0.0
    %5553 = vmatpush1.xpose.msra.mxu0 0.0
    %5554 = vmatprep.subr.mxu0 0.0
    %5555 = vmatpush1.xpose.msra.mxu0 0.0
    %5556 = vmatprep.subr.mxu0 0.0
    %5557 = vmatpush1.xpose.msra.mxu0 0.0
    %5558 = vmatprep.subr.mxu0 0.0
    %5559 = vmatpush1.xpose.msra.mxu0 0.0
    %5560 = vmatprep.subr.mxu0 0.0
    %5561 = vmatpush1.xpose.msra.mxu0 0.0
    %5562 = vmatprep.subr.mxu0 0.0
    %5563 = vmatpush1.xpose.msra.mxu0 0.0
    %5564 = vmatprep.subr.mxu0 %v196
    %5565 = vmatpush1.xpose.msra.mxu0 %v195
    %5566 = vmatprep.subr.mxu0 0.0
    %5567 = vmatpush2.xpose.msra.mxu0 0.0
    %5568 = vmatprep.subr.mxu0 0.0
    %5569 = vmatpush2.xpose.msra.mxu0 0.0
    %5570 = vmatprep.subr.mxu0 0.0
    %5571 = vmatpush2.xpose.msra.mxu0 0.0
    %5572 = vmatprep.subr.mxu0 0.0
    %5573 = vmatpush2.xpose.msra.mxu0 0.0
    %5574 = vmatprep.subr.mxu0 0.0
    %5575 = vmatpush2.xpose.msra.mxu0 0.0
    %5576 = vmatprep.subr.mxu0 0.0
    %5577 = vmatpush2.xpose.msra.mxu0 0.0
    %5578 = vmatprep.subr.mxu0 0.0
    %5579 = vmatpush2.xpose.msra.mxu0 0.0
    %5580 = vmatprep.subr.mxu0 0.0
    %5581 = vmatpush2.xpose.msra.mxu0 0.0
    %5582 = vmatprep.subr.mxu0 0.0
    %5583 = vmatpush2.xpose.msra.mxu0 0.0
    %5584 = vmatprep.subr.mxu0 0.0
    %5585 = vmatpush2.xpose.msra.mxu0 0.0
    %5586 = vmatprep.subr.mxu0 0.0
    %5587 = vmatpush2.xpose.msra.mxu0 0.0
    %5588 = vmatprep.subr.mxu0 0.0
    %5589 = vmatpush2.xpose.msra.mxu0 0.0
    %5590 = vmatprep.subr.mxu0 0.0
    %5591 = vmatpush2.xpose.msra.mxu0 0.0
    %5592 = vmatprep.subr.mxu0 0.0
    %5593 = vmatpush2.xpose.msra.mxu0 0.0
    %5594 = vmatprep.subr.mxu0 0.0
    %5595 = vmatpush2.xpose.msra.mxu0 0.0
    %5596 = vmatprep.subr.mxu0 0.0
    %5597 = vmatpush2.xpose.msra.mxu0 0.0
    %5598 = vmatprep.mubr.f32.mxu0 %v868
    %5599 = vmatmul.mubr.f32.gmra.mxu0 %v860
    %v5600 = vpop.f32.mrf.mxu0
    %v5601 = vadd.f32 %v5531, %v5600
    %v5602 = vpop.f32.mrf.mxu0
    %5603 = vdwg.mxu0
    %5604 = vmatprep.subr.mxu0 0.0
    %5605 = vmatpush1.xpose.msra.mxu0 0.0
    %5606 = vmatprep.subr.mxu0 0.0
    %5607 = vmatpush1.xpose.msra.mxu0 0.0
    %5608 = vmatprep.subr.mxu0 0.0
    %5609 = vmatpush1.xpose.msra.mxu0 0.0
    %5610 = vmatprep.subr.mxu0 0.0
    %5611 = vmatpush1.xpose.msra.mxu0 0.0
    %5612 = vmatprep.subr.mxu0 0.0
    %5613 = vmatpush1.xpose.msra.mxu0 0.0
    %5614 = vmatprep.subr.mxu0 0.0
    %5615 = vmatpush1.xpose.msra.mxu0 0.0
    %5616 = vmatprep.subr.mxu0 0.0
    %5617 = vmatpush1.xpose.msra.mxu0 0.0
    %5618 = vmatprep.subr.mxu0 0.0
    %5619 = vmatpush1.xpose.msra.mxu0 0.0
    %5620 = vmatprep.subr.mxu0 0.0
    %5621 = vmatpush1.xpose.msra.mxu0 0.0
    %5622 = vmatprep.subr.mxu0 0.0
    %5623 = vmatpush1.xpose.msra.mxu0 0.0
    %5624 = vmatprep.subr.mxu0 0.0
    %5625 = vmatpush1.xpose.msra.mxu0 0.0
    %5626 = vmatprep.subr.mxu0 0.0
    %5627 = vmatpush1.xpose.msra.mxu0 0.0
    %5628 = vmatprep.subr.mxu0 0.0
    %5629 = vmatpush1.xpose.msra.mxu0 0.0
    %5630 = vmatprep.subr.mxu0 0.0
    %5631 = vmatpush1.xpose.msra.mxu0 0.0
    %5632 = vmatprep.subr.mxu0 0.0
    %5633 = vmatpush1.xpose.msra.mxu0 0.0
    %5634 = vmatprep.subr.mxu0 %v198
    %5635 = vmatpush1.xpose.msra.mxu0 %v197
    %5636 = vmatprep.subr.mxu0 0.0
    %5637 = vmatpush2.xpose.msra.mxu0 0.0
    %5638 = vmatprep.subr.mxu0 0.0
    %5639 = vmatpush2.xpose.msra.mxu0 0.0
    %5640 = vmatprep.subr.mxu0 0.0
    %5641 = vmatpush2.xpose.msra.mxu0 0.0
    %5642 = vmatprep.subr.mxu0 0.0
    %5643 = vmatpush2.xpose.msra.mxu0 0.0
    %5644 = vmatprep.subr.mxu0 0.0
    %5645 = vmatpush2.xpose.msra.mxu0 0.0
    %5646 = vmatprep.subr.mxu0 0.0
    %5647 = vmatpush2.xpose.msra.mxu0 0.0
    %5648 = vmatprep.subr.mxu0 0.0
    %5649 = vmatpush2.xpose.msra.mxu0 0.0
    %5650 = vmatprep.subr.mxu0 0.0
    %5651 = vmatpush2.xpose.msra.mxu0 0.0
    %5652 = vmatprep.subr.mxu0 0.0
    %5653 = vmatpush2.xpose.msra.mxu0 0.0
    %5654 = vmatprep.subr.mxu0 0.0
    %5655 = vmatpush2.xpose.msra.mxu0 0.0
    %5656 = vmatprep.subr.mxu0 0.0
    %5657 = vmatpush2.xpose.msra.mxu0 0.0
    %5658 = vmatprep.subr.mxu0 0.0
    %5659 = vmatpush2.xpose.msra.mxu0 0.0
    %5660 = vmatprep.subr.mxu0 0.0
    %5661 = vmatpush2.xpose.msra.mxu0 0.0
    %5662 = vmatprep.subr.mxu0 0.0
    %5663 = vmatpush2.xpose.msra.mxu0 0.0
    %5664 = vmatprep.subr.mxu0 0.0
    %5665 = vmatpush2.xpose.msra.mxu0 0.0
    %5666 = vmatprep.subr.mxu0 0.0
    %5667 = vmatpush2.xpose.msra.mxu0 0.0
    %5668 = vmatprep.mubr.f32.mxu0 %v869
    %5669 = vmatmul.mubr.f32.gmra.mxu0 %v867
    %v5670 = vpop.f32.mrf.mxu0
    %v5671 = vadd.f32 %v5601, %v5670
    %v5672 = vpop.f32.mrf.mxu0
    %5673 = vdwg.mxu0
    %5674 = vmatprep.subr.mxu0 0.0
    %5675 = vmatpush1.xpose.msra.mxu0 0.0
    %5676 = vmatprep.subr.mxu0 0.0
    %5677 = vmatpush1.xpose.msra.mxu0 0.0
    %5678 = vmatprep.subr.mxu0 0.0
    %5679 = vmatpush1.xpose.msra.mxu0 0.0
    %5680 = vmatprep.subr.mxu0 0.0
    %5681 = vmatpush1.xpose.msra.mxu0 0.0
    %5682 = vmatprep.subr.mxu0 0.0
    %5683 = vmatpush1.xpose.msra.mxu0 0.0
    %5684 = vmatprep.subr.mxu0 0.0
    %5685 = vmatpush1.xpose.msra.mxu0 0.0
    %5686 = vmatprep.subr.mxu0 0.0
    %5687 = vmatpush1.xpose.msra.mxu0 0.0
    %5688 = vmatprep.subr.mxu0 0.0
    %5689 = vmatpush1.xpose.msra.mxu0 0.0
    %5690 = vmatprep.subr.mxu0 0.0
    %5691 = vmatpush1.xpose.msra.mxu0 0.0
    %5692 = vmatprep.subr.mxu0 0.0
    %5693 = vmatpush1.xpose.msra.mxu0 0.0
    %5694 = vmatprep.subr.mxu0 0.0
    %5695 = vmatpush1.xpose.msra.mxu0 0.0
    %5696 = vmatprep.subr.mxu0 0.0
    %5697 = vmatpush1.xpose.msra.mxu0 0.0
    %5698 = vmatprep.subr.mxu0 0.0
    %5699 = vmatpush1.xpose.msra.mxu0 0.0
    %5700 = vmatprep.subr.mxu0 0.0
    %5701 = vmatpush1.xpose.msra.mxu0 0.0
    %5702 = vmatprep.subr.mxu0 0.0
    %5703 = vmatpush1.xpose.msra.mxu0 0.0
    %5704 = vmatprep.subr.mxu0 %v200
    %5705 = vmatpush1.xpose.msra.mxu0 %v199
    %5706 = vmatprep.subr.mxu0 0.0
    %5707 = vmatpush2.xpose.msra.mxu0 0.0
    %5708 = vmatprep.subr.mxu0 0.0
    %5709 = vmatpush2.xpose.msra.mxu0 0.0
    %5710 = vmatprep.subr.mxu0 0.0
    %5711 = vmatpush2.xpose.msra.mxu0 0.0
    %5712 = vmatprep.subr.mxu0 0.0
    %5713 = vmatpush2.xpose.msra.mxu0 0.0
    %5714 = vmatprep.subr.mxu0 0.0
    %5715 = vmatpush2.xpose.msra.mxu0 0.0
    %5716 = vmatprep.subr.mxu0 0.0
    %5717 = vmatpush2.xpose.msra.mxu0 0.0
    %5718 = vmatprep.subr.mxu0 0.0
    %5719 = vmatpush2.xpose.msra.mxu0 0.0
    %5720 = vmatprep.subr.mxu0 0.0
    %5721 = vmatpush2.xpose.msra.mxu0 0.0
    %5722 = vmatprep.subr.mxu0 0.0
    %5723 = vmatpush2.xpose.msra.mxu0 0.0
    %5724 = vmatprep.subr.mxu0 0.0
    %5725 = vmatpush2.xpose.msra.mxu0 0.0
    %5726 = vmatprep.subr.mxu0 0.0
    %5727 = vmatpush2.xpose.msra.mxu0 0.0
    %5728 = vmatprep.subr.mxu0 0.0
    %5729 = vmatpush2.xpose.msra.mxu0 0.0
    %5730 = vmatprep.subr.mxu0 0.0
    %5731 = vmatpush2.xpose.msra.mxu0 0.0
    %5732 = vmatprep.subr.mxu0 0.0
    %5733 = vmatpush2.xpose.msra.mxu0 0.0
    %5734 = vmatprep.subr.mxu0 0.0
    %5735 = vmatpush2.xpose.msra.mxu0 0.0
    %5736 = vmatprep.subr.mxu0 0.0
    %5737 = vmatpush2.xpose.msra.mxu0 0.0
    %5738 = vmatprep.mubr.f32.mxu0 %v885
    %5739 = vmatmul.mubr.f32.gmra.mxu0 %v877
    %v5740 = vpop.f32.mrf.mxu0
    %v5741 = vadd.f32 %v5671, %v5740
    %v5742 = vpop.f32.mrf.mxu0
    %5743 = vdwg.mxu0
    %5744 = vmatprep.subr.mxu0 0.0
    %5745 = vmatpush1.xpose.msra.mxu0 0.0
    %5746 = vmatprep.subr.mxu0 0.0
    %5747 = vmatpush1.xpose.msra.mxu0 0.0
    %5748 = vmatprep.subr.mxu0 0.0
    %5749 = vmatpush1.xpose.msra.mxu0 0.0
    %5750 = vmatprep.subr.mxu0 0.0
    %5751 = vmatpush1.xpose.msra.mxu0 0.0
    %5752 = vmatprep.subr.mxu0 0.0
    %5753 = vmatpush1.xpose.msra.mxu0 0.0
    %5754 = vmatprep.subr.mxu0 0.0
    %5755 = vmatpush1.xpose.msra.mxu0 0.0
    %5756 = vmatprep.subr.mxu0 0.0
    %5757 = vmatpush1.xpose.msra.mxu0 0.0
    %5758 = vmatprep.subr.mxu0 0.0
    %5759 = vmatpush1.xpose.msra.mxu0 0.0
    %5760 = vmatprep.subr.mxu0 0.0
    %5761 = vmatpush1.xpose.msra.mxu0 0.0
    %5762 = vmatprep.subr.mxu0 0.0
    %5763 = vmatpush1.xpose.msra.mxu0 0.0
    %5764 = vmatprep.subr.mxu0 0.0
    %5765 = vmatpush1.xpose.msra.mxu0 0.0
    %5766 = vmatprep.subr.mxu0 0.0
    %5767 = vmatpush1.xpose.msra.mxu0 0.0
    %5768 = vmatprep.subr.mxu0 0.0
    %5769 = vmatpush1.xpose.msra.mxu0 0.0
    %5770 = vmatprep.subr.mxu0 0.0
    %5771 = vmatpush1.xpose.msra.mxu0 0.0
    %5772 = vmatprep.subr.mxu0 0.0
    %5773 = vmatpush1.xpose.msra.mxu0 0.0
    %5774 = vmatprep.subr.mxu0 %v202
    %5775 = vmatpush1.xpose.msra.mxu0 %v201
    %5776 = vmatprep.subr.mxu0 0.0
    %5777 = vmatpush2.xpose.msra.mxu0 0.0
    %5778 = vmatprep.subr.mxu0 0.0
    %5779 = vmatpush2.xpose.msra.mxu0 0.0
    %5780 = vmatprep.subr.mxu0 0.0
    %5781 = vmatpush2.xpose.msra.mxu0 0.0
    %5782 = vmatprep.subr.mxu0 0.0
    %5783 = vmatpush2.xpose.msra.mxu0 0.0
    %5784 = vmatprep.subr.mxu0 0.0
    %5785 = vmatpush2.xpose.msra.mxu0 0.0
    %5786 = vmatprep.subr.mxu0 0.0
    %5787 = vmatpush2.xpose.msra.mxu0 0.0
    %5788 = vmatprep.subr.mxu0 0.0
    %5789 = vmatpush2.xpose.msra.mxu0 0.0
    %5790 = vmatprep.subr.mxu0 0.0
    %5791 = vmatpush2.xpose.msra.mxu0 0.0
    %5792 = vmatprep.subr.mxu0 0.0
    %5793 = vmatpush2.xpose.msra.mxu0 0.0
    %5794 = vmatprep.subr.mxu0 0.0
    %5795 = vmatpush2.xpose.msra.mxu0 0.0
    %5796 = vmatprep.subr.mxu0 0.0
    %5797 = vmatpush2.xpose.msra.mxu0 0.0
    %5798 = vmatprep.subr.mxu0 0.0
    %5799 = vmatpush2.xpose.msra.mxu0 0.0
    %5800 = vmatprep.subr.mxu0 0.0
    %5801 = vmatpush2.xpose.msra.mxu0 0.0
    %5802 = vmatprep.subr.mxu0 0.0
    %5803 = vmatpush2.xpose.msra.mxu0 0.0
    %5804 = vmatprep.subr.mxu0 0.0
    %5805 = vmatpush2.xpose.msra.mxu0 0.0
    %5806 = vmatprep.subr.mxu0 0.0
    %5807 = vmatpush2.xpose.msra.mxu0 0.0
    %5808 = vmatprep.mubr.f32.mxu0 %v886
    %5809 = vmatmul.mubr.f32.gmra.mxu0 %v884
    %v5810 = vpop.f32.mrf.mxu0
    %v5811 = vadd.f32 %v5741, %v5810
    %v5812 = vpop.f32.mrf.mxu0
    %5813 = vdwg.mxu0
    %5814 = vmatprep.subr.mxu0 0.0
    %5815 = vmatpush1.xpose.msra.mxu0 0.0
    %5816 = vmatprep.subr.mxu0 0.0
    %5817 = vmatpush1.xpose.msra.mxu0 0.0
    %5818 = vmatprep.subr.mxu0 0.0
    %5819 = vmatpush1.xpose.msra.mxu0 0.0
    %5820 = vmatprep.subr.mxu0 0.0
    %5821 = vmatpush1.xpose.msra.mxu0 0.0
    %5822 = vmatprep.subr.mxu0 0.0
    %5823 = vmatpush1.xpose.msra.mxu0 0.0
    %5824 = vmatprep.subr.mxu0 0.0
    %5825 = vmatpush1.xpose.msra.mxu0 0.0
    %5826 = vmatprep.subr.mxu0 0.0
    %5827 = vmatpush1.xpose.msra.mxu0 0.0
    %5828 = vmatprep.subr.mxu0 0.0
    %5829 = vmatpush1.xpose.msra.mxu0 0.0
    %5830 = vmatprep.subr.mxu0 0.0
    %5831 = vmatpush1.xpose.msra.mxu0 0.0
    %5832 = vmatprep.subr.mxu0 0.0
    %5833 = vmatpush1.xpose.msra.mxu0 0.0
    %5834 = vmatprep.subr.mxu0 0.0
    %5835 = vmatpush1.xpose.msra.mxu0 0.0
    %5836 = vmatprep.subr.mxu0 0.0
    %5837 = vmatpush1.xpose.msra.mxu0 0.0
    %5838 = vmatprep.subr.mxu0 0.0
    %5839 = vmatpush1.xpose.msra.mxu0 0.0
    %5840 = vmatprep.subr.mxu0 0.0
    %5841 = vmatpush1.xpose.msra.mxu0 0.0
    %5842 = vmatprep.subr.mxu0 0.0
    %5843 = vmatpush1.xpose.msra.mxu0 0.0
    %5844 = vmatprep.subr.mxu0 %v204
    %5845 = vmatpush1.xpose.msra.mxu0 %v203
    %5846 = vmatprep.subr.mxu0 0.0
    %5847 = vmatpush2.xpose.msra.mxu0 0.0
    %5848 = vmatprep.subr.mxu0 0.0
    %5849 = vmatpush2.xpose.msra.mxu0 0.0
    %5850 = vmatprep.subr.mxu0 0.0
    %5851 = vmatpush2.xpose.msra.mxu0 0.0
    %5852 = vmatprep.subr.mxu0 0.0
    %5853 = vmatpush2.xpose.msra.mxu0 0.0
    %5854 = vmatprep.subr.mxu0 0.0
    %5855 = vmatpush2.xpose.msra.mxu0 0.0
    %5856 = vmatprep.subr.mxu0 0.0
    %5857 = vmatpush2.xpose.msra.mxu0 0.0
    %5858 = vmatprep.subr.mxu0 0.0
    %5859 = vmatpush2.xpose.msra.mxu0 0.0
    %5860 = vmatprep.subr.mxu0 0.0
    %5861 = vmatpush2.xpose.msra.mxu0 0.0
    %5862 = vmatprep.subr.mxu0 0.0
    %5863 = vmatpush2.xpose.msra.mxu0 0.0
    %5864 = vmatprep.subr.mxu0 0.0
    %5865 = vmatpush2.xpose.msra.mxu0 0.0
    %5866 = vmatprep.subr.mxu0 0.0
    %5867 = vmatpush2.xpose.msra.mxu0 0.0
    %5868 = vmatprep.subr.mxu0 0.0
    %5869 = vmatpush2.xpose.msra.mxu0 0.0
    %5870 = vmatprep.subr.mxu0 0.0
    %5871 = vmatpush2.xpose.msra.mxu0 0.0
    %5872 = vmatprep.subr.mxu0 0.0
    %5873 = vmatpush2.xpose.msra.mxu0 0.0
    %5874 = vmatprep.subr.mxu0 0.0
    %5875 = vmatpush2.xpose.msra.mxu0 0.0
    %5876 = vmatprep.subr.mxu0 0.0
    %5877 = vmatpush2.xpose.msra.mxu0 0.0
    %5878 = vmatprep.mubr.f32.mxu0 %v902
    %5879 = vmatmul.mubr.f32.gmra.mxu0 %v894
    %v5880 = vpop.f32.mrf.mxu0
    %v5881 = vadd.f32 %v5811, %v5880
    %v5882 = vpop.f32.mrf.mxu0
    %5883 = vdwg.mxu0
    %5884 = vmatprep.subr.mxu0 0.0
    %5885 = vmatpush1.xpose.msra.mxu0 0.0
    %5886 = vmatprep.subr.mxu0 0.0
    %5887 = vmatpush1.xpose.msra.mxu0 0.0
    %5888 = vmatprep.subr.mxu0 0.0
    %5889 = vmatpush1.xpose.msra.mxu0 0.0
    %5890 = vmatprep.subr.mxu0 0.0
    %5891 = vmatpush1.xpose.msra.mxu0 0.0
    %5892 = vmatprep.subr.mxu0 0.0
    %5893 = vmatpush1.xpose.msra.mxu0 0.0
    %5894 = vmatprep.subr.mxu0 0.0
    %5895 = vmatpush1.xpose.msra.mxu0 0.0
    %5896 = vmatprep.subr.mxu0 0.0
    %5897 = vmatpush1.xpose.msra.mxu0 0.0
    %5898 = vmatprep.subr.mxu0 0.0
    %5899 = vmatpush1.xpose.msra.mxu0 0.0
    %5900 = vmatprep.subr.mxu0 0.0
    %5901 = vmatpush1.xpose.msra.mxu0 0.0
    %5902 = vmatprep.subr.mxu0 0.0
    %5903 = vmatpush1.xpose.msra.mxu0 0.0
    %5904 = vmatprep.subr.mxu0 0.0
    %5905 = vmatpush1.xpose.msra.mxu0 0.0
    %5906 = vmatprep.subr.mxu0 0.0
    %5907 = vmatpush1.xpose.msra.mxu0 0.0
    %5908 = vmatprep.subr.mxu0 0.0
    %5909 = vmatpush1.xpose.msra.mxu0 0.0
    %5910 = vmatprep.subr.mxu0 0.0
    %5911 = vmatpush1.xpose.msra.mxu0 0.0
    %5912 = vmatprep.subr.mxu0 0.0
    %5913 = vmatpush1.xpose.msra.mxu0 0.0
    %5914 = vmatprep.subr.mxu0 %v206
    %5915 = vmatpush1.xpose.msra.mxu0 %v205
    %5916 = vmatprep.subr.mxu0 0.0
    %5917 = vmatpush2.xpose.msra.mxu0 0.0
    %5918 = vmatprep.subr.mxu0 0.0
    %5919 = vmatpush2.xpose.msra.mxu0 0.0
    %5920 = vmatprep.subr.mxu0 0.0
    %5921 = vmatpush2.xpose.msra.mxu0 0.0
    %5922 = vmatprep.subr.mxu0 0.0
    %5923 = vmatpush2.xpose.msra.mxu0 0.0
    %5924 = vmatprep.subr.mxu0 0.0
    %5925 = vmatpush2.xpose.msra.mxu0 0.0
    %5926 = vmatprep.subr.mxu0 0.0
    %5927 = vmatpush2.xpose.msra.mxu0 0.0
    %5928 = vmatprep.subr.mxu0 0.0
    %5929 = vmatpush2.xpose.msra.mxu0 0.0
    %5930 = vmatprep.subr.mxu0 0.0
    %5931 = vmatpush2.xpose.msra.mxu0 0.0
    %5932 = vmatprep.subr.mxu0 0.0
    %5933 = vmatpush2.xpose.msra.mxu0 0.0
    %5934 = vmatprep.subr.mxu0 0.0
    %5935 = vmatpush2.xpose.msra.mxu0 0.0
    %5936 = vmatprep.subr.mxu0 0.0
    %5937 = vmatpush2.xpose.msra.mxu0 0.0
    %5938 = vmatprep.subr.mxu0 0.0
    %5939 = vmatpush2.xpose.msra.mxu0 0.0
    %5940 = vmatprep.subr.mxu0 0.0
    %5941 = vmatpush2.xpose.msra.mxu0 0.0
    %5942 = vmatprep.subr.mxu0 0.0
    %5943 = vmatpush2.xpose.msra.mxu0 0.0
    %5944 = vmatprep.subr.mxu0 0.0
    %5945 = vmatpush2.xpose.msra.mxu0 0.0
    %5946 = vmatprep.subr.mxu0 0.0
    %5947 = vmatpush2.xpose.msra.mxu0 0.0
    %5948 = vmatprep.mubr.f32.mxu0 %v903
    %5949 = vmatmul.mubr.f32.gmra.mxu0 %v901
    %v5950 = vpop.f32.mrf.mxu0
    %v5951 = vadd.f32 %v5881, %v5950
    %v5952 = vpop.f32.mrf.mxu0
    %5953 = vdwg.mxu0
    %5954 = vmatprep.subr.mxu0 0.0
    %5955 = vmatpush1.xpose.msra.mxu0 0.0
    %5956 = vmatprep.subr.mxu0 0.0
    %5957 = vmatpush1.xpose.msra.mxu0 0.0
    %5958 = vmatprep.subr.mxu0 0.0
    %5959 = vmatpush1.xpose.msra.mxu0 0.0
    %5960 = vmatprep.subr.mxu0 0.0
    %5961 = vmatpush1.xpose.msra.mxu0 0.0
    %5962 = vmatprep.subr.mxu0 0.0
    %5963 = vmatpush1.xpose.msra.mxu0 0.0
    %5964 = vmatprep.subr.mxu0 0.0
    %5965 = vmatpush1.xpose.msra.mxu0 0.0
    %5966 = vmatprep.subr.mxu0 0.0
    %5967 = vmatpush1.xpose.msra.mxu0 0.0
    %5968 = vmatprep.subr.mxu0 0.0
    %5969 = vmatpush1.xpose.msra.mxu0 0.0
    %5970 = vmatprep.subr.mxu0 0.0
    %5971 = vmatpush1.xpose.msra.mxu0 0.0
    %5972 = vmatprep.subr.mxu0 0.0
    %5973 = vmatpush1.xpose.msra.mxu0 0.0
    %5974 = vmatprep.subr.mxu0 0.0
    %5975 = vmatpush1.xpose.msra.mxu0 0.0
    %5976 = vmatprep.subr.mxu0 0.0
    %5977 = vmatpush1.xpose.msra.mxu0 0.0
    %5978 = vmatprep.subr.mxu0 0.0
    %5979 = vmatpush1.xpose.msra.mxu0 0.0
    %5980 = vmatprep.subr.mxu0 0.0
    %5981 = vmatpush1.xpose.msra.mxu0 0.0
    %5982 = vmatprep.subr.mxu0 0.0
    %5983 = vmatpush1.xpose.msra.mxu0 0.0
    %5984 = vmatprep.subr.mxu0 %v208
    %5985 = vmatpush1.xpose.msra.mxu0 %v207
    %5986 = vmatprep.subr.mxu0 0.0
    %5987 = vmatpush2.xpose.msra.mxu0 0.0
    %5988 = vmatprep.subr.mxu0 0.0
    %5989 = vmatpush2.xpose.msra.mxu0 0.0
    %5990 = vmatprep.subr.mxu0 0.0
    %5991 = vmatpush2.xpose.msra.mxu0 0.0
    %5992 = vmatprep.subr.mxu0 0.0
    %5993 = vmatpush2.xpose.msra.mxu0 0.0
    %5994 = vmatprep.subr.mxu0 0.0
    %5995 = vmatpush2.xpose.msra.mxu0 0.0
    %5996 = vmatprep.subr.mxu0 0.0
    %5997 = vmatpush2.xpose.msra.mxu0 0.0
    %5998 = vmatprep.subr.mxu0 0.0
    %5999 = vmatpush2.xpose.msra.mxu0 0.0
    %6000 = vmatprep.subr.mxu0 0.0
    %6001 = vmatpush2.xpose.msra.mxu0 0.0
    %6002 = vmatprep.subr.mxu0 0.0
    %6003 = vmatpush2.xpose.msra.mxu0 0.0
    %6004 = vmatprep.subr.mxu0 0.0
    %6005 = vmatpush2.xpose.msra.mxu0 0.0
    %6006 = vmatprep.subr.mxu0 0.0
    %6007 = vmatpush2.xpose.msra.mxu0 0.0
    %6008 = vmatprep.subr.mxu0 0.0
    %6009 = vmatpush2.xpose.msra.mxu0 0.0
    %6010 = vmatprep.subr.mxu0 0.0
    %6011 = vmatpush2.xpose.msra.mxu0 0.0
    %6012 = vmatprep.subr.mxu0 0.0
    %6013 = vmatpush2.xpose.msra.mxu0 0.0
    %6014 = vmatprep.subr.mxu0 0.0
    %6015 = vmatpush2.xpose.msra.mxu0 0.0
    %6016 = vmatprep.subr.mxu0 0.0
    %6017 = vmatpush2.xpose.msra.mxu0 0.0
    %6018 = vmatprep.mubr.f32.mxu0 %v919
    %6019 = vmatmul.mubr.f32.gmra.mxu0 %v911
    %v6020 = vpop.f32.mrf.mxu0
    %v6021 = vadd.f32 %v5951, %v6020
    %v6022 = vpop.f32.mrf.mxu0
    %6023 = vdwg.mxu0
    %6024 = vmatprep.subr.mxu0 0.0
    %6025 = vmatpush1.xpose.msra.mxu0 0.0
    %6026 = vmatprep.subr.mxu0 0.0
    %6027 = vmatpush1.xpose.msra.mxu0 0.0
    %6028 = vmatprep.subr.mxu0 0.0
    %6029 = vmatpush1.xpose.msra.mxu0 0.0
    %6030 = vmatprep.subr.mxu0 0.0
    %6031 = vmatpush1.xpose.msra.mxu0 0.0
    %6032 = vmatprep.subr.mxu0 0.0
    %6033 = vmatpush1.xpose.msra.mxu0 0.0
    %6034 = vmatprep.subr.mxu0 0.0
    %6035 = vmatpush1.xpose.msra.mxu0 0.0
    %6036 = vmatprep.subr.mxu0 0.0
    %6037 = vmatpush1.xpose.msra.mxu0 0.0
    %6038 = vmatprep.subr.mxu0 0.0
    %6039 = vmatpush1.xpose.msra.mxu0 0.0
    %6040 = vmatprep.subr.mxu0 0.0
    %6041 = vmatpush1.xpose.msra.mxu0 0.0
    %6042 = vmatprep.subr.mxu0 0.0
    %6043 = vmatpush1.xpose.msra.mxu0 0.0
    %6044 = vmatprep.subr.mxu0 0.0
    %6045 = vmatpush1.xpose.msra.mxu0 0.0
    %6046 = vmatprep.subr.mxu0 0.0
    %6047 = vmatpush1.xpose.msra.mxu0 0.0
    %6048 = vmatprep.subr.mxu0 0.0
    %6049 = vmatpush1.xpose.msra.mxu0 0.0
    %6050 = vmatprep.subr.mxu0 0.0
    %6051 = vmatpush1.xpose.msra.mxu0 0.0
    %6052 = vmatprep.subr.mxu0 0.0
    %6053 = vmatpush1.xpose.msra.mxu0 0.0
    %6054 = vmatprep.subr.mxu0 %v210
    %6055 = vmatpush1.xpose.msra.mxu0 %v209
    %6056 = vmatprep.subr.mxu0 0.0
    %6057 = vmatpush2.xpose.msra.mxu0 0.0
    %6058 = vmatprep.subr.mxu0 0.0
    %6059 = vmatpush2.xpose.msra.mxu0 0.0
    %6060 = vmatprep.subr.mxu0 0.0
    %6061 = vmatpush2.xpose.msra.mxu0 0.0
    %6062 = vmatprep.subr.mxu0 0.0
    %6063 = vmatpush2.xpose.msra.mxu0 0.0
    %6064 = vmatprep.subr.mxu0 0.0
    %6065 = vmatpush2.xpose.msra.mxu0 0.0
    %6066 = vmatprep.subr.mxu0 0.0
    %6067 = vmatpush2.xpose.msra.mxu0 0.0
    %6068 = vmatprep.subr.mxu0 0.0
    %6069 = vmatpush2.xpose.msra.mxu0 0.0
    %6070 = vmatprep.subr.mxu0 0.0
    %6071 = vmatpush2.xpose.msra.mxu0 0.0
    %6072 = vmatprep.subr.mxu0 0.0
    %6073 = vmatpush2.xpose.msra.mxu0 0.0
    %6074 = vmatprep.subr.mxu0 0.0
    %6075 = vmatpush2.xpose.msra.mxu0 0.0
    %6076 = vmatprep.subr.mxu0 0.0
    %6077 = vmatpush2.xpose.msra.mxu0 0.0
    %6078 = vmatprep.subr.mxu0 0.0
    %6079 = vmatpush2.xpose.msra.mxu0 0.0
    %6080 = vmatprep.subr.mxu0 0.0
    %6081 = vmatpush2.xpose.msra.mxu0 0.0
    %6082 = vmatprep.subr.mxu0 0.0
    %6083 = vmatpush2.xpose.msra.mxu0 0.0
    %6084 = vmatprep.subr.mxu0 0.0
    %6085 = vmatpush2.xpose.msra.mxu0 0.0
    %6086 = vmatprep.subr.mxu0 0.0
    %6087 = vmatpush2.xpose.msra.mxu0 0.0
    %6088 = vmatprep.mubr.f32.mxu0 %v920
    %6089 = vmatmul.mubr.f32.gmra.mxu0 %v918
    %v6090 = vpop.f32.mrf.mxu0
    %v6091 = vadd.f32 %v6021, %v6090
    %v6092 = vpop.f32.mrf.mxu0
    %6093 = vdwg.mxu0
    %6094 = vmatprep.subr.mxu0 0.0
    %6095 = vmatpush1.xpose.msra.mxu0 0.0
    %6096 = vmatprep.subr.mxu0 0.0
    %6097 = vmatpush1.xpose.msra.mxu0 0.0
    %6098 = vmatprep.subr.mxu0 0.0
    %6099 = vmatpush1.xpose.msra.mxu0 0.0
    %6100 = vmatprep.subr.mxu0 0.0
    %6101 = vmatpush1.xpose.msra.mxu0 0.0
    %6102 = vmatprep.subr.mxu0 0.0
    %6103 = vmatpush1.xpose.msra.mxu0 0.0
    %6104 = vmatprep.subr.mxu0 0.0
    %6105 = vmatpush1.xpose.msra.mxu0 0.0
    %6106 = vmatprep.subr.mxu0 0.0
    %6107 = vmatpush1.xpose.msra.mxu0 0.0
    %6108 = vmatprep.subr.mxu0 0.0
    %6109 = vmatpush1.xpose.msra.mxu0 0.0
    %6110 = vmatprep.subr.mxu0 0.0
    %6111 = vmatpush1.xpose.msra.mxu0 0.0
    %6112 = vmatprep.subr.mxu0 0.0
    %6113 = vmatpush1.xpose.msra.mxu0 0.0
    %6114 = vmatprep.subr.mxu0 0.0
    %6115 = vmatpush1.xpose.msra.mxu0 0.0
    %6116 = vmatprep.subr.mxu0 0.0
    %6117 = vmatpush1.xpose.msra.mxu0 0.0
    %6118 = vmatprep.subr.mxu0 0.0
    %6119 = vmatpush1.xpose.msra.mxu0 0.0
    %6120 = vmatprep.subr.mxu0 0.0
    %6121 = vmatpush1.xpose.msra.mxu0 0.0
    %6122 = vmatprep.subr.mxu0 0.0
    %6123 = vmatpush1.xpose.msra.mxu0 0.0
    %6124 = vmatprep.subr.mxu0 %v212
    %6125 = vmatpush1.xpose.msra.mxu0 %v211
    %6126 = vmatprep.subr.mxu0 0.0
    %6127 = vmatpush2.xpose.msra.mxu0 0.0
    %6128 = vmatprep.subr.mxu0 0.0
    %6129 = vmatpush2.xpose.msra.mxu0 0.0
    %6130 = vmatprep.subr.mxu0 0.0
    %6131 = vmatpush2.xpose.msra.mxu0 0.0
    %6132 = vmatprep.subr.mxu0 0.0
    %6133 = vmatpush2.xpose.msra.mxu0 0.0
    %6134 = vmatprep.subr.mxu0 0.0
    %6135 = vmatpush2.xpose.msra.mxu0 0.0
    %6136 = vmatprep.subr.mxu0 0.0
    %6137 = vmatpush2.xpose.msra.mxu0 0.0
    %6138 = vmatprep.subr.mxu0 0.0
    %6139 = vmatpush2.xpose.msra.mxu0 0.0
    %6140 = vmatprep.subr.mxu0 0.0
    %6141 = vmatpush2.xpose.msra.mxu0 0.0
    %6142 = vmatprep.subr.mxu0 0.0
    %6143 = vmatpush2.xpose.msra.mxu0 0.0
    %6144 = vmatprep.subr.mxu0 0.0
    %6145 = vmatpush2.xpose.msra.mxu0 0.0
    %6146 = vmatprep.subr.mxu0 0.0
    %6147 = vmatpush2.xpose.msra.mxu0 0.0
    %6148 = vmatprep.subr.mxu0 0.0
    %6149 = vmatpush2.xpose.msra.mxu0 0.0
    %6150 = vmatprep.subr.mxu0 0.0
    %6151 = vmatpush2.xpose.msra.mxu0 0.0
    %6152 = vmatprep.subr.mxu0 0.0
    %6153 = vmatpush2.xpose.msra.mxu0 0.0
    %6154 = vmatprep.subr.mxu0 0.0
    %6155 = vmatpush2.xpose.msra.mxu0 0.0
    %6156 = vmatprep.subr.mxu0 0.0
    %6157 = vmatpush2.xpose.msra.mxu0 0.0
    %6158 = vmatprep.mubr.f32.mxu0 %v936
    %6159 = vmatmul.mubr.f32.gmra.mxu0 %v928
    %v6160 = vpop.f32.mrf.mxu0
    %v6161 = vadd.f32 %v6091, %v6160
    %v6162 = vpop.f32.mrf.mxu0
    %6163 = vdwg.mxu0
    %6164 = vmatprep.subr.mxu0 0.0
    %6165 = vmatpush1.xpose.msra.mxu0 0.0
    %6166 = vmatprep.subr.mxu0 0.0
    %6167 = vmatpush1.xpose.msra.mxu0 0.0
    %6168 = vmatprep.subr.mxu0 0.0
    %6169 = vmatpush1.xpose.msra.mxu0 0.0
    %6170 = vmatprep.subr.mxu0 0.0
    %6171 = vmatpush1.xpose.msra.mxu0 0.0
    %6172 = vmatprep.subr.mxu0 0.0
    %6173 = vmatpush1.xpose.msra.mxu0 0.0
    %6174 = vmatprep.subr.mxu0 0.0
    %6175 = vmatpush1.xpose.msra.mxu0 0.0
    %6176 = vmatprep.subr.mxu0 0.0
    %6177 = vmatpush1.xpose.msra.mxu0 0.0
    %6178 = vmatprep.subr.mxu0 0.0
    %6179 = vmatpush1.xpose.msra.mxu0 0.0
    %6180 = vmatprep.subr.mxu0 0.0
    %6181 = vmatpush1.xpose.msra.mxu0 0.0
    %6182 = vmatprep.subr.mxu0 0.0
    %6183 = vmatpush1.xpose.msra.mxu0 0.0
    %6184 = vmatprep.subr.mxu0 0.0
    %6185 = vmatpush1.xpose.msra.mxu0 0.0
    %6186 = vmatprep.subr.mxu0 0.0
    %6187 = vmatpush1.xpose.msra.mxu0 0.0
    %6188 = vmatprep.subr.mxu0 0.0
    %6189 = vmatpush1.xpose.msra.mxu0 0.0
    %6190 = vmatprep.subr.mxu0 0.0
    %6191 = vmatpush1.xpose.msra.mxu0 0.0
    %6192 = vmatprep.subr.mxu0 0.0
    %6193 = vmatpush1.xpose.msra.mxu0 0.0
    %6194 = vmatprep.subr.mxu0 %v214
    %6195 = vmatpush1.xpose.msra.mxu0 %v213
    %6196 = vmatprep.subr.mxu0 0.0
    %6197 = vmatpush2.xpose.msra.mxu0 0.0
    %6198 = vmatprep.subr.mxu0 0.0
    %6199 = vmatpush2.xpose.msra.mxu0 0.0
    %6200 = vmatprep.subr.mxu0 0.0
    %6201 = vmatpush2.xpose.msra.mxu0 0.0
    %6202 = vmatprep.subr.mxu0 0.0
    %6203 = vmatpush2.xpose.msra.mxu0 0.0
    %6204 = vmatprep.subr.mxu0 0.0
    %6205 = vmatpush2.xpose.msra.mxu0 0.0
    %6206 = vmatprep.subr.mxu0 0.0
    %6207 = vmatpush2.xpose.msra.mxu0 0.0
    %6208 = vmatprep.subr.mxu0 0.0
    %6209 = vmatpush2.xpose.msra.mxu0 0.0
    %6210 = vmatprep.subr.mxu0 0.0
    %6211 = vmatpush2.xpose.msra.mxu0 0.0
    %6212 = vmatprep.subr.mxu0 0.0
    %6213 = vmatpush2.xpose.msra.mxu0 0.0
    %6214 = vmatprep.subr.mxu0 0.0
    %6215 = vmatpush2.xpose.msra.mxu0 0.0
    %6216 = vmatprep.subr.mxu0 0.0
    %6217 = vmatpush2.xpose.msra.mxu0 0.0
    %6218 = vmatprep.subr.mxu0 0.0
    %6219 = vmatpush2.xpose.msra.mxu0 0.0
    %6220 = vmatprep.subr.mxu0 0.0
    %6221 = vmatpush2.xpose.msra.mxu0 0.0
    %6222 = vmatprep.subr.mxu0 0.0
    %6223 = vmatpush2.xpose.msra.mxu0 0.0
    %6224 = vmatprep.subr.mxu0 0.0
    %6225 = vmatpush2.xpose.msra.mxu0 0.0
    %6226 = vmatprep.subr.mxu0 0.0
    %6227 = vmatpush2.xpose.msra.mxu0 0.0
    %6228 = vmatprep.mubr.f32.mxu0 %v937
    %6229 = vmatmul.mubr.f32.gmra.mxu0 %v935
    %v6230 = vpop.f32.mrf.mxu0
    %v6231 = vadd.f32 %v6161, %v6230
    %v6232 = vpop.f32.mrf.mxu0
    %6233 = vdwg.mxu0
    %6234 = vmatprep.subr.mxu0 0.0
    %6235 = vmatpush1.xpose.msra.mxu0 0.0
    %6236 = vmatprep.subr.mxu0 0.0
    %6237 = vmatpush1.xpose.msra.mxu0 0.0
    %6238 = vmatprep.subr.mxu0 0.0
    %6239 = vmatpush1.xpose.msra.mxu0 0.0
    %6240 = vmatprep.subr.mxu0 0.0
    %6241 = vmatpush1.xpose.msra.mxu0 0.0
    %6242 = vmatprep.subr.mxu0 0.0
    %6243 = vmatpush1.xpose.msra.mxu0 0.0
    %6244 = vmatprep.subr.mxu0 0.0
    %6245 = vmatpush1.xpose.msra.mxu0 0.0
    %6246 = vmatprep.subr.mxu0 0.0
    %6247 = vmatpush1.xpose.msra.mxu0 0.0
    %6248 = vmatprep.subr.mxu0 0.0
    %6249 = vmatpush1.xpose.msra.mxu0 0.0
    %6250 = vmatprep.subr.mxu0 0.0
    %6251 = vmatpush1.xpose.msra.mxu0 0.0
    %6252 = vmatprep.subr.mxu0 0.0
    %6253 = vmatpush1.xpose.msra.mxu0 0.0
    %6254 = vmatprep.subr.mxu0 0.0
    %6255 = vmatpush1.xpose.msra.mxu0 0.0
    %6256 = vmatprep.subr.mxu0 0.0
    %6257 = vmatpush1.xpose.msra.mxu0 0.0
    %6258 = vmatprep.subr.mxu0 0.0
    %6259 = vmatpush1.xpose.msra.mxu0 0.0
    %6260 = vmatprep.subr.mxu0 0.0
    %6261 = vmatpush1.xpose.msra.mxu0 0.0
    %6262 = vmatprep.subr.mxu0 0.0
    %6263 = vmatpush1.xpose.msra.mxu0 0.0
    %6264 = vmatprep.subr.mxu0 %v216
    %6265 = vmatpush1.xpose.msra.mxu0 %v215
    %6266 = vmatprep.subr.mxu0 0.0
    %6267 = vmatpush2.xpose.msra.mxu0 0.0
    %6268 = vmatprep.subr.mxu0 0.0
    %6269 = vmatpush2.xpose.msra.mxu0 0.0
    %6270 = vmatprep.subr.mxu0 0.0
    %6271 = vmatpush2.xpose.msra.mxu0 0.0
    %6272 = vmatprep.subr.mxu0 0.0
    %6273 = vmatpush2.xpose.msra.mxu0 0.0
    %6274 = vmatprep.subr.mxu0 0.0
    %6275 = vmatpush2.xpose.msra.mxu0 0.0
    %6276 = vmatprep.subr.mxu0 0.0
    %6277 = vmatpush2.xpose.msra.mxu0 0.0
    %6278 = vmatprep.subr.mxu0 0.0
    %6279 = vmatpush2.xpose.msra.mxu0 0.0
    %6280 = vmatprep.subr.mxu0 0.0
    %6281 = vmatpush2.xpose.msra.mxu0 0.0
    %6282 = vmatprep.subr.mxu0 0.0
    %6283 = vmatpush2.xpose.msra.mxu0 0.0
    %6284 = vmatprep.subr.mxu0 0.0
    %6285 = vmatpush2.xpose.msra.mxu0 0.0
    %6286 = vmatprep.subr.mxu0 0.0
    %6287 = vmatpush2.xpose.msra.mxu0 0.0
    %6288 = vmatprep.subr.mxu0 0.0
    %6289 = vmatpush2.xpose.msra.mxu0 0.0
    %6290 = vmatprep.subr.mxu0 0.0
    %6291 = vmatpush2.xpose.msra.mxu0 0.0
    %6292 = vmatprep.subr.mxu0 0.0
    %6293 = vmatpush2.xpose.msra.mxu0 0.0
    %6294 = vmatprep.subr.mxu0 0.0
    %6295 = vmatpush2.xpose.msra.mxu0 0.0
    %6296 = vmatprep.subr.mxu0 0.0
    %6297 = vmatpush2.xpose.msra.mxu0 0.0
    %6298 = vmatprep.mubr.f32.mxu0 %v953
    %6299 = vmatmul.mubr.f32.gmra.mxu0 %v945
    %v6300 = vpop.f32.mrf.mxu0
    %v6301 = vadd.f32 %v6231, %v6300
    %v6302 = vpop.f32.mrf.mxu0
    %6303 = vdwg.mxu0
    %6304 = vmatprep.subr.mxu0 0.0
    %6305 = vmatpush1.xpose.msra.mxu0 0.0
    %6306 = vmatprep.subr.mxu0 0.0
    %6307 = vmatpush1.xpose.msra.mxu0 0.0
    %6308 = vmatprep.subr.mxu0 0.0
    %6309 = vmatpush1.xpose.msra.mxu0 0.0
    %6310 = vmatprep.subr.mxu0 0.0
    %6311 = vmatpush1.xpose.msra.mxu0 0.0
    %6312 = vmatprep.subr.mxu0 0.0
    %6313 = vmatpush1.xpose.msra.mxu0 0.0
    %6314 = vmatprep.subr.mxu0 0.0
    %6315 = vmatpush1.xpose.msra.mxu0 0.0
    %6316 = vmatprep.subr.mxu0 0.0
    %6317 = vmatpush1.xpose.msra.mxu0 0.0
    %6318 = vmatprep.subr.mxu0 0.0
    %6319 = vmatpush1.xpose.msra.mxu0 0.0
    %6320 = vmatprep.subr.mxu0 0.0
    %6321 = vmatpush1.xpose.msra.mxu0 0.0
    %6322 = vmatprep.subr.mxu0 0.0
    %6323 = vmatpush1.xpose.msra.mxu0 0.0
    %6324 = vmatprep.subr.mxu0 0.0
    %6325 = vmatpush1.xpose.msra.mxu0 0.0
    %6326 = vmatprep.subr.mxu0 0.0
    %6327 = vmatpush1.xpose.msra.mxu0 0.0
    %6328 = vmatprep.subr.mxu0 0.0
    %6329 = vmatpush1.xpose.msra.mxu0 0.0
    %6330 = vmatprep.subr.mxu0 0.0
    %6331 = vmatpush1.xpose.msra.mxu0 0.0
    %6332 = vmatprep.subr.mxu0 0.0
    %6333 = vmatpush1.xpose.msra.mxu0 0.0
    %6334 = vmatprep.subr.mxu0 %v218
    %6335 = vmatpush1.xpose.msra.mxu0 %v217
    %6336 = vmatprep.subr.mxu0 0.0
    %6337 = vmatpush2.xpose.msra.mxu0 0.0
    %6338 = vmatprep.subr.mxu0 0.0
    %6339 = vmatpush2.xpose.msra.mxu0 0.0
    %6340 = vmatprep.subr.mxu0 0.0
    %6341 = vmatpush2.xpose.msra.mxu0 0.0
    %6342 = vmatprep.subr.mxu0 0.0
    %6343 = vmatpush2.xpose.msra.mxu0 0.0
    %6344 = vmatprep.subr.mxu0 0.0
    %6345 = vmatpush2.xpose.msra.mxu0 0.0
    %6346 = vmatprep.subr.mxu0 0.0
    %6347 = vmatpush2.xpose.msra.mxu0 0.0
    %6348 = vmatprep.subr.mxu0 0.0
    %6349 = vmatpush2.xpose.msra.mxu0 0.0
    %6350 = vmatprep.subr.mxu0 0.0
    %6351 = vmatpush2.xpose.msra.mxu0 0.0
    %6352 = vmatprep.subr.mxu0 0.0
    %6353 = vmatpush2.xpose.msra.mxu0 0.0
    %6354 = vmatprep.subr.mxu0 0.0
    %6355 = vmatpush2.xpose.msra.mxu0 0.0
    %6356 = vmatprep.subr.mxu0 0.0
    %6357 = vmatpush2.xpose.msra.mxu0 0.0
    %6358 = vmatprep.subr.mxu0 0.0
    %6359 = vmatpush2.xpose.msra.mxu0 0.0
    %6360 = vmatprep.subr.mxu0 0.0
    %6361 = vmatpush2.xpose.msra.mxu0 0.0
    %6362 = vmatprep.subr.mxu0 0.0
    %6363 = vmatpush2.xpose.msra.mxu0 0.0
    %6364 = vmatprep.subr.mxu0 0.0
    %6365 = vmatpush2.xpose.msra.mxu0 0.0
    %6366 = vmatprep.subr.mxu0 0.0
    %6367 = vmatpush2.xpose.msra.mxu0 0.0
    %6368 = vmatprep.mubr.f32.mxu0 %v954
    %6369 = vmatmul.mubr.f32.gmra.mxu0 %v952
    %v6370 = vpop.f32.mrf.mxu0
    %v6371 = vadd.f32 %v6301, %v6370
    %v6372 = vpop.f32.mrf.mxu0
    %6373 = vdwg.mxu0
    %6374 = vmatprep.subr.mxu0 0.0
    %6375 = vmatpush1.xpose.msra.mxu0 0.0
    %6376 = vmatprep.subr.mxu0 0.0
    %6377 = vmatpush1.xpose.msra.mxu0 0.0
    %6378 = vmatprep.subr.mxu0 0.0
    %6379 = vmatpush1.xpose.msra.mxu0 0.0
    %6380 = vmatprep.subr.mxu0 0.0
    %6381 = vmatpush1.xpose.msra.mxu0 0.0
    %6382 = vmatprep.subr.mxu0 0.0
    %6383 = vmatpush1.xpose.msra.mxu0 0.0
    %6384 = vmatprep.subr.mxu0 0.0
    %6385 = vmatpush1.xpose.msra.mxu0 0.0
    %6386 = vmatprep.subr.mxu0 0.0
    %6387 = vmatpush1.xpose.msra.mxu0 0.0
    %6388 = vmatprep.subr.mxu0 0.0
    %6389 = vmatpush1.xpose.msra.mxu0 0.0
    %6390 = vmatprep.subr.mxu0 0.0
    %6391 = vmatpush1.xpose.msra.mxu0 0.0
    %6392 = vmatprep.subr.mxu0 0.0
    %6393 = vmatpush1.xpose.msra.mxu0 0.0
    %6394 = vmatprep.subr.mxu0 0.0
    %6395 = vmatpush1.xpose.msra.mxu0 0.0
    %6396 = vmatprep.subr.mxu0 0.0
    %6397 = vmatpush1.xpose.msra.mxu0 0.0
    %6398 = vmatprep.subr.mxu0 0.0
    %6399 = vmatpush1.xpose.msra.mxu0 0.0
    %6400 = vmatprep.subr.mxu0 0.0
    %6401 = vmatpush1.xpose.msra.mxu0 0.0
    %6402 = vmatprep.subr.mxu0 0.0
    %6403 = vmatpush1.xpose.msra.mxu0 0.0
    %6404 = vmatprep.subr.mxu0 %v220
    %6405 = vmatpush1.xpose.msra.mxu0 %v219
    %6406 = vmatprep.subr.mxu0 0.0
    %6407 = vmatpush2.xpose.msra.mxu0 0.0
    %6408 = vmatprep.subr.mxu0 0.0
    %6409 = vmatpush2.xpose.msra.mxu0 0.0
    %6410 = vmatprep.subr.mxu0 0.0
    %6411 = vmatpush2.xpose.msra.mxu0 0.0
    %6412 = vmatprep.subr.mxu0 0.0
    %6413 = vmatpush2.xpose.msra.mxu0 0.0
    %6414 = vmatprep.subr.mxu0 0.0
    %6415 = vmatpush2.xpose.msra.mxu0 0.0
    %6416 = vmatprep.subr.mxu0 0.0
    %6417 = vmatpush2.xpose.msra.mxu0 0.0
    %6418 = vmatprep.subr.mxu0 0.0
    %6419 = vmatpush2.xpose.msra.mxu0 0.0
    %6420 = vmatprep.subr.mxu0 0.0
    %6421 = vmatpush2.xpose.msra.mxu0 0.0
    %6422 = vmatprep.subr.mxu0 0.0
    %6423 = vmatpush2.xpose.msra.mxu0 0.0
    %6424 = vmatprep.subr.mxu0 0.0
    %6425 = vmatpush2.xpose.msra.mxu0 0.0
    %6426 = vmatprep.subr.mxu0 0.0
    %6427 = vmatpush2.xpose.msra.mxu0 0.0
    %6428 = vmatprep.subr.mxu0 0.0
    %6429 = vmatpush2.xpose.msra.mxu0 0.0
    %6430 = vmatprep.subr.mxu0 0.0
    %6431 = vmatpush2.xpose.msra.mxu0 0.0
    %6432 = vmatprep.subr.mxu0 0.0
    %6433 = vmatpush2.xpose.msra.mxu0 0.0
    %6434 = vmatprep.subr.mxu0 0.0
    %6435 = vmatpush2.xpose.msra.mxu0 0.0
    %6436 = vmatprep.subr.mxu0 0.0
    %6437 = vmatpush2.xpose.msra.mxu0 0.0
    %6438 = vmatprep.mubr.f32.mxu0 %v970
    %6439 = vmatmul.mubr.f32.gmra.mxu0 %v962
    %v6440 = vpop.f32.mrf.mxu0
    %v6441 = vadd.f32 %v6371, %v6440
    %v6442 = vpop.f32.mrf.mxu0
    %6443 = vdwg.mxu0
    %6444 = vmatprep.subr.mxu0 0.0
    %6445 = vmatpush1.xpose.msra.mxu0 0.0
    %6446 = vmatprep.subr.mxu0 0.0
    %6447 = vmatpush1.xpose.msra.mxu0 0.0
    %6448 = vmatprep.subr.mxu0 0.0
    %6449 = vmatpush1.xpose.msra.mxu0 0.0
    %6450 = vmatprep.subr.mxu0 0.0
    %6451 = vmatpush1.xpose.msra.mxu0 0.0
    %6452 = vmatprep.subr.mxu0 0.0
    %6453 = vmatpush1.xpose.msra.mxu0 0.0
    %6454 = vmatprep.subr.mxu0 0.0
    %6455 = vmatpush1.xpose.msra.mxu0 0.0
    %6456 = vmatprep.subr.mxu0 0.0
    %6457 = vmatpush1.xpose.msra.mxu0 0.0
    %6458 = vmatprep.subr.mxu0 0.0
    %6459 = vmatpush1.xpose.msra.mxu0 0.0
    %6460 = vmatprep.subr.mxu0 0.0
    %6461 = vmatpush1.xpose.msra.mxu0 0.0
    %6462 = vmatprep.subr.mxu0 0.0
    %6463 = vmatpush1.xpose.msra.mxu0 0.0
    %6464 = vmatprep.subr.mxu0 0.0
    %6465 = vmatpush1.xpose.msra.mxu0 0.0
    %6466 = vmatprep.subr.mxu0 0.0
    %6467 = vmatpush1.xpose.msra.mxu0 0.0
    %6468 = vmatprep.subr.mxu0 0.0
    %6469 = vmatpush1.xpose.msra.mxu0 0.0
    %6470 = vmatprep.subr.mxu0 0.0
    %6471 = vmatpush1.xpose.msra.mxu0 0.0
    %6472 = vmatprep.subr.mxu0 0.0
    %6473 = vmatpush1.xpose.msra.mxu0 0.0
    %6474 = vmatprep.subr.mxu0 %v222
    %6475 = vmatpush1.xpose.msra.mxu0 %v221
    %6476 = vmatprep.subr.mxu0 0.0
    %6477 = vmatpush2.xpose.msra.mxu0 0.0
    %6478 = vmatprep.subr.mxu0 0.0
    %6479 = vmatpush2.xpose.msra.mxu0 0.0
    %6480 = vmatprep.subr.mxu0 0.0
    %6481 = vmatpush2.xpose.msra.mxu0 0.0
    %6482 = vmatprep.subr.mxu0 0.0
    %6483 = vmatpush2.xpose.msra.mxu0 0.0
    %6484 = vmatprep.subr.mxu0 0.0
    %6485 = vmatpush2.xpose.msra.mxu0 0.0
    %6486 = vmatprep.subr.mxu0 0.0
    %6487 = vmatpush2.xpose.msra.mxu0 0.0
    %6488 = vmatprep.subr.mxu0 0.0
    %6489 = vmatpush2.xpose.msra.mxu0 0.0
    %6490 = vmatprep.subr.mxu0 0.0
    %6491 = vmatpush2.xpose.msra.mxu0 0.0
    %6492 = vmatprep.subr.mxu0 0.0
    %6493 = vmatpush2.xpose.msra.mxu0 0.0
    %6494 = vmatprep.subr.mxu0 0.0
    %6495 = vmatpush2.xpose.msra.mxu0 0.0
    %6496 = vmatprep.subr.mxu0 0.0
    %6497 = vmatpush2.xpose.msra.mxu0 0.0
    %6498 = vmatprep.subr.mxu0 0.0
    %6499 = vmatpush2.xpose.msra.mxu0 0.0
    %6500 = vmatprep.subr.mxu0 0.0
    %6501 = vmatpush2.xpose.msra.mxu0 0.0
    %6502 = vmatprep.subr.mxu0 0.0
    %6503 = vmatpush2.xpose.msra.mxu0 0.0
    %6504 = vmatprep.subr.mxu0 0.0
    %6505 = vmatpush2.xpose.msra.mxu0 0.0
    %6506 = vmatprep.subr.mxu0 0.0
    %6507 = vmatpush2.xpose.msra.mxu0 0.0
    %6508 = vmatprep.mubr.f32.mxu0 %v971
    %6509 = vmatmul.mubr.f32.gmra.mxu0 %v969
    %v6510 = vpop.f32.mrf.mxu0
    %v6511 = vadd.f32 %v6441, %v6510
    %v6512 = vpop.f32.mrf.mxu0
    %6513 = vdwg.mxu0
    %6514 = vmatprep.subr.mxu0 0.0
    %6515 = vmatpush1.xpose.msra.mxu0 0.0
    %6516 = vmatprep.subr.mxu0 0.0
    %6517 = vmatpush1.xpose.msra.mxu0 0.0
    %6518 = vmatprep.subr.mxu0 0.0
    %6519 = vmatpush1.xpose.msra.mxu0 0.0
    %6520 = vmatprep.subr.mxu0 0.0
    %6521 = vmatpush1.xpose.msra.mxu0 0.0
    %6522 = vmatprep.subr.mxu0 0.0
    %6523 = vmatpush1.xpose.msra.mxu0 0.0
    %6524 = vmatprep.subr.mxu0 0.0
    %6525 = vmatpush1.xpose.msra.mxu0 0.0
    %6526 = vmatprep.subr.mxu0 0.0
    %6527 = vmatpush1.xpose.msra.mxu0 0.0
    %6528 = vmatprep.subr.mxu0 0.0
    %6529 = vmatpush1.xpose.msra.mxu0 0.0
    %6530 = vmatprep.subr.mxu0 0.0
    %6531 = vmatpush1.xpose.msra.mxu0 0.0
    %6532 = vmatprep.subr.mxu0 0.0
    %6533 = vmatpush1.xpose.msra.mxu0 0.0
    %6534 = vmatprep.subr.mxu0 0.0
    %6535 = vmatpush1.xpose.msra.mxu0 0.0
    %6536 = vmatprep.subr.mxu0 0.0
    %6537 = vmatpush1.xpose.msra.mxu0 0.0
    %6538 = vmatprep.subr.mxu0 0.0
    %6539 = vmatpush1.xpose.msra.mxu0 0.0
    %6540 = vmatprep.subr.mxu0 0.0
    %6541 = vmatpush1.xpose.msra.mxu0 0.0
    %6542 = vmatprep.subr.mxu0 0.0
    %6543 = vmatpush1.xpose.msra.mxu0 0.0
    %6544 = vmatprep.subr.mxu0 %v224
    %6545 = vmatpush1.xpose.msra.mxu0 %v223
    %6546 = vmatprep.subr.mxu0 0.0
    %6547 = vmatpush2.xpose.msra.mxu0 0.0
    %6548 = vmatprep.subr.mxu0 0.0
    %6549 = vmatpush2.xpose.msra.mxu0 0.0
    %6550 = vmatprep.subr.mxu0 0.0
    %6551 = vmatpush2.xpose.msra.mxu0 0.0
    %6552 = vmatprep.subr.mxu0 0.0
    %6553 = vmatpush2.xpose.msra.mxu0 0.0
    %6554 = vmatprep.subr.mxu0 0.0
    %6555 = vmatpush2.xpose.msra.mxu0 0.0
    %6556 = vmatprep.subr.mxu0 0.0
    %6557 = vmatpush2.xpose.msra.mxu0 0.0
    %6558 = vmatprep.subr.mxu0 0.0
    %6559 = vmatpush2.xpose.msra.mxu0 0.0
    %6560 = vmatprep.subr.mxu0 0.0
    %6561 = vmatpush2.xpose.msra.mxu0 0.0
    %6562 = vmatprep.subr.mxu0 0.0
    %6563 = vmatpush2.xpose.msra.mxu0 0.0
    %6564 = vmatprep.subr.mxu0 0.0
    %6565 = vmatpush2.xpose.msra.mxu0 0.0
    %6566 = vmatprep.subr.mxu0 0.0
    %6567 = vmatpush2.xpose.msra.mxu0 0.0
    %6568 = vmatprep.subr.mxu0 0.0
    %6569 = vmatpush2.xpose.msra.mxu0 0.0
    %6570 = vmatprep.subr.mxu0 0.0
    %6571 = vmatpush2.xpose.msra.mxu0 0.0
    %6572 = vmatprep.subr.mxu0 0.0
    %6573 = vmatpush2.xpose.msra.mxu0 0.0
    %6574 = vmatprep.subr.mxu0 0.0
    %6575 = vmatpush2.xpose.msra.mxu0 0.0
    %6576 = vmatprep.subr.mxu0 0.0
    %6577 = vmatpush2.xpose.msra.mxu0 0.0
    %6578 = vmatprep.mubr.f32.mxu0 %v987
    %6579 = vmatmul.mubr.f32.gmra.mxu0 %v979
    %v6580 = vpop.f32.mrf.mxu0
    %v6581 = vadd.f32 %v6511, %v6580
    %v6582 = vpop.f32.mrf.mxu0
    %6583 = vdwg.mxu0
    %6584 = vmatprep.subr.mxu0 0.0
    %6585 = vmatpush1.xpose.msra.mxu0 0.0
    %6586 = vmatprep.subr.mxu0 0.0
    %6587 = vmatpush1.xpose.msra.mxu0 0.0
    %6588 = vmatprep.subr.mxu0 0.0
    %6589 = vmatpush1.xpose.msra.mxu0 0.0
    %6590 = vmatprep.subr.mxu0 0.0
    %6591 = vmatpush1.xpose.msra.mxu0 0.0
    %6592 = vmatprep.subr.mxu0 0.0
    %6593 = vmatpush1.xpose.msra.mxu0 0.0
    %6594 = vmatprep.subr.mxu0 0.0
    %6595 = vmatpush1.xpose.msra.mxu0 0.0
    %6596 = vmatprep.subr.mxu0 0.0
    %6597 = vmatpush1.xpose.msra.mxu0 0.0
    %6598 = vmatprep.subr.mxu0 0.0
    %6599 = vmatpush1.xpose.msra.mxu0 0.0
    %6600 = vmatprep.subr.mxu0 0.0
    %6601 = vmatpush1.xpose.msra.mxu0 0.0
    %6602 = vmatprep.subr.mxu0 0.0
    %6603 = vmatpush1.xpose.msra.mxu0 0.0
    %6604 = vmatprep.subr.mxu0 0.0
    %6605 = vmatpush1.xpose.msra.mxu0 0.0
    %6606 = vmatprep.subr.mxu0 0.0
    %6607 = vmatpush1.xpose.msra.mxu0 0.0
    %6608 = vmatprep.subr.mxu0 0.0
    %6609 = vmatpush1.xpose.msra.mxu0 0.0
    %6610 = vmatprep.subr.mxu0 0.0
    %6611 = vmatpush1.xpose.msra.mxu0 0.0
    %6612 = vmatprep.subr.mxu0 0.0
    %6613 = vmatpush1.xpose.msra.mxu0 0.0
    %6614 = vmatprep.subr.mxu0 %v226
    %6615 = vmatpush1.xpose.msra.mxu0 %v225
    %6616 = vmatprep.subr.mxu0 0.0
    %6617 = vmatpush2.xpose.msra.mxu0 0.0
    %6618 = vmatprep.subr.mxu0 0.0
    %6619 = vmatpush2.xpose.msra.mxu0 0.0
    %6620 = vmatprep.subr.mxu0 0.0
    %6621 = vmatpush2.xpose.msra.mxu0 0.0
    %6622 = vmatprep.subr.mxu0 0.0
    %6623 = vmatpush2.xpose.msra.mxu0 0.0
    %6624 = vmatprep.subr.mxu0 0.0
    %6625 = vmatpush2.xpose.msra.mxu0 0.0
    %6626 = vmatprep.subr.mxu0 0.0
    %6627 = vmatpush2.xpose.msra.mxu0 0.0
    %6628 = vmatprep.subr.mxu0 0.0
    %6629 = vmatpush2.xpose.msra.mxu0 0.0
    %6630 = vmatprep.subr.mxu0 0.0
    %6631 = vmatpush2.xpose.msra.mxu0 0.0
    %6632 = vmatprep.subr.mxu0 0.0
    %6633 = vmatpush2.xpose.msra.mxu0 0.0
    %6634 = vmatprep.subr.mxu0 0.0
    %6635 = vmatpush2.xpose.msra.mxu0 0.0
    %6636 = vmatprep.subr.mxu0 0.0
    %6637 = vmatpush2.xpose.msra.mxu0 0.0
    %6638 = vmatprep.subr.mxu0 0.0
    %6639 = vmatpush2.xpose.msra.mxu0 0.0
    %6640 = vmatprep.subr.mxu0 0.0
    %6641 = vmatpush2.xpose.msra.mxu0 0.0
    %6642 = vmatprep.subr.mxu0 0.0
    %6643 = vmatpush2.xpose.msra.mxu0 0.0
    %6644 = vmatprep.subr.mxu0 0.0
    %6645 = vmatpush2.xpose.msra.mxu0 0.0
    %6646 = vmatprep.subr.mxu0 0.0
    %6647 = vmatpush2.xpose.msra.mxu0 0.0
    %6648 = vmatprep.mubr.f32.mxu0 %v988
    %6649 = vmatmul.mubr.f32.gmra.mxu0 %v986
    %v6650 = vpop.f32.mrf.mxu0
    %v6651 = vadd.f32 %v6581, %v6650
    %v6652 = vpop.f32.mrf.mxu0
    %6653 = vdwg.mxu0
    %6654 = vmatprep.subr.mxu0 0.0
    %6655 = vmatpush1.xpose.msra.mxu0 0.0
    %6656 = vmatprep.subr.mxu0 0.0
    %6657 = vmatpush1.xpose.msra.mxu0 0.0
    %6658 = vmatprep.subr.mxu0 0.0
    %6659 = vmatpush1.xpose.msra.mxu0 0.0
    %6660 = vmatprep.subr.mxu0 0.0
    %6661 = vmatpush1.xpose.msra.mxu0 0.0
    %6662 = vmatprep.subr.mxu0 0.0
    %6663 = vmatpush1.xpose.msra.mxu0 0.0
    %6664 = vmatprep.subr.mxu0 0.0
    %6665 = vmatpush1.xpose.msra.mxu0 0.0
    %6666 = vmatprep.subr.mxu0 0.0
    %6667 = vmatpush1.xpose.msra.mxu0 0.0
    %6668 = vmatprep.subr.mxu0 0.0
    %6669 = vmatpush1.xpose.msra.mxu0 0.0
    %6670 = vmatprep.subr.mxu0 0.0
    %6671 = vmatpush1.xpose.msra.mxu0 0.0
    %6672 = vmatprep.subr.mxu0 0.0
    %6673 = vmatpush1.xpose.msra.mxu0 0.0
    %6674 = vmatprep.subr.mxu0 0.0
    %6675 = vmatpush1.xpose.msra.mxu0 0.0
    %6676 = vmatprep.subr.mxu0 0.0
    %6677 = vmatpush1.xpose.msra.mxu0 0.0
    %6678 = vmatprep.subr.mxu0 0.0
    %6679 = vmatpush1.xpose.msra.mxu0 0.0
    %6680 = vmatprep.subr.mxu0 0.0
    %6681 = vmatpush1.xpose.msra.mxu0 0.0
    %6682 = vmatprep.subr.mxu0 0.0
    %6683 = vmatpush1.xpose.msra.mxu0 0.0
    %6684 = vmatprep.subr.mxu0 %v228
    %6685 = vmatpush1.xpose.msra.mxu0 %v227
    %6686 = vmatprep.subr.mxu0 0.0
    %6687 = vmatpush2.xpose.msra.mxu0 0.0
    %6688 = vmatprep.subr.mxu0 0.0
    %6689 = vmatpush2.xpose.msra.mxu0 0.0
    %6690 = vmatprep.subr.mxu0 0.0
    %6691 = vmatpush2.xpose.msra.mxu0 0.0
    %6692 = vmatprep.subr.mxu0 0.0
    %6693 = vmatpush2.xpose.msra.mxu0 0.0
    %6694 = vmatprep.subr.mxu0 0.0
    %6695 = vmatpush2.xpose.msra.mxu0 0.0
    %6696 = vmatprep.subr.mxu0 0.0
    %6697 = vmatpush2.xpose.msra.mxu0 0.0
    %6698 = vmatprep.subr.mxu0 0.0
    %6699 = vmatpush2.xpose.msra.mxu0 0.0
    %6700 = vmatprep.subr.mxu0 0.0
    %6701 = vmatpush2.xpose.msra.mxu0 0.0
    %6702 = vmatprep.subr.mxu0 0.0
    %6703 = vmatpush2.xpose.msra.mxu0 0.0
    %6704 = vmatprep.subr.mxu0 0.0
    %6705 = vmatpush2.xpose.msra.mxu0 0.0
    %6706 = vmatprep.subr.mxu0 0.0
    %6707 = vmatpush2.xpose.msra.mxu0 0.0
    %6708 = vmatprep.subr.mxu0 0.0
    %6709 = vmatpush2.xpose.msra.mxu0 0.0
    %6710 = vmatprep.subr.mxu0 0.0
    %6711 = vmatpush2.xpose.msra.mxu0 0.0
    %6712 = vmatprep.subr.mxu0 0.0
    %6713 = vmatpush2.xpose.msra.mxu0 0.0
    %6714 = vmatprep.subr.mxu0 0.0
    %6715 = vmatpush2.xpose.msra.mxu0 0.0
    %6716 = vmatprep.subr.mxu0 0.0
    %6717 = vmatpush2.xpose.msra.mxu0 0.0
    %6718 = vmatprep.mubr.f32.mxu0 %v1004
    %6719 = vmatmul.mubr.f32.gmra.mxu0 %v996
    %v6720 = vpop.f32.mrf.mxu0
    %v6721 = vadd.f32 %v6651, %v6720
    %v6722 = vpop.f32.mrf.mxu0
    %6723 = vdwg.mxu0
    %6724 = vmatprep.subr.mxu0 0.0
    %6725 = vmatpush1.xpose.msra.mxu0 0.0
    %6726 = vmatprep.subr.mxu0 0.0
    %6727 = vmatpush1.xpose.msra.mxu0 0.0
    %6728 = vmatprep.subr.mxu0 0.0
    %6729 = vmatpush1.xpose.msra.mxu0 0.0
    %6730 = vmatprep.subr.mxu0 0.0
    %6731 = vmatpush1.xpose.msra.mxu0 0.0
    %6732 = vmatprep.subr.mxu0 0.0
    %6733 = vmatpush1.xpose.msra.mxu0 0.0
    %6734 = vmatprep.subr.mxu0 0.0
    %6735 = vmatpush1.xpose.msra.mxu0 0.0
    %6736 = vmatprep.subr.mxu0 0.0
    %6737 = vmatpush1.xpose.msra.mxu0 0.0
    %6738 = vmatprep.subr.mxu0 0.0
    %6739 = vmatpush1.xpose.msra.mxu0 0.0
    %6740 = vmatprep.subr.mxu0 0.0
    %6741 = vmatpush1.xpose.msra.mxu0 0.0
    %6742 = vmatprep.subr.mxu0 0.0
    %6743 = vmatpush1.xpose.msra.mxu0 0.0
    %6744 = vmatprep.subr.mxu0 0.0
    %6745 = vmatpush1.xpose.msra.mxu0 0.0
    %6746 = vmatprep.subr.mxu0 0.0
    %6747 = vmatpush1.xpose.msra.mxu0 0.0
    %6748 = vmatprep.subr.mxu0 0.0
    %6749 = vmatpush1.xpose.msra.mxu0 0.0
    %6750 = vmatprep.subr.mxu0 0.0
    %6751 = vmatpush1.xpose.msra.mxu0 0.0
    %6752 = vmatprep.subr.mxu0 0.0
    %6753 = vmatpush1.xpose.msra.mxu0 0.0
    %6754 = vmatprep.subr.mxu0 %v230
    %6755 = vmatpush1.xpose.msra.mxu0 %v229
    %6756 = vmatprep.subr.mxu0 0.0
    %6757 = vmatpush2.xpose.msra.mxu0 0.0
    %6758 = vmatprep.subr.mxu0 0.0
    %6759 = vmatpush2.xpose.msra.mxu0 0.0
    %6760 = vmatprep.subr.mxu0 0.0
    %6761 = vmatpush2.xpose.msra.mxu0 0.0
    %6762 = vmatprep.subr.mxu0 0.0
    %6763 = vmatpush2.xpose.msra.mxu0 0.0
    %6764 = vmatprep.subr.mxu0 0.0
    %6765 = vmatpush2.xpose.msra.mxu0 0.0
    %6766 = vmatprep.subr.mxu0 0.0
    %6767 = vmatpush2.xpose.msra.mxu0 0.0
    %6768 = vmatprep.subr.mxu0 0.0
    %6769 = vmatpush2.xpose.msra.mxu0 0.0
    %6770 = vmatprep.subr.mxu0 0.0
    %6771 = vmatpush2.xpose.msra.mxu0 0.0
    %6772 = vmatprep.subr.mxu0 0.0
    %6773 = vmatpush2.xpose.msra.mxu0 0.0
    %6774 = vmatprep.subr.mxu0 0.0
    %6775 = vmatpush2.xpose.msra.mxu0 0.0
    %6776 = vmatprep.subr.mxu0 0.0
    %6777 = vmatpush2.xpose.msra.mxu0 0.0
    %6778 = vmatprep.subr.mxu0 0.0
    %6779 = vmatpush2.xpose.msra.mxu0 0.0
    %6780 = vmatprep.subr.mxu0 0.0
    %6781 = vmatpush2.xpose.msra.mxu0 0.0
    %6782 = vmatprep.subr.mxu0 0.0
    %6783 = vmatpush2.xpose.msra.mxu0 0.0
    %6784 = vmatprep.subr.mxu0 0.0
    %6785 = vmatpush2.xpose.msra.mxu0 0.0
    %6786 = vmatprep.subr.mxu0 0.0
    %6787 = vmatpush2.xpose.msra.mxu0 0.0
    %6788 = vmatprep.mubr.f32.mxu0 %v1005
    %6789 = vmatmul.mubr.f32.gmra.mxu0 %v1003
    %v6790 = vpop.f32.mrf.mxu0
    %v6791 = vadd.f32 %v6721, %v6790
    %v6792 = vpop.f32.mrf.mxu0
    %6793 = vdwg.mxu0
    %6794 = vmatprep.subr.mxu0 0.0
    %6795 = vmatpush1.xpose.msra.mxu0 0.0
    %6796 = vmatprep.subr.mxu0 0.0
    %6797 = vmatpush1.xpose.msra.mxu0 0.0
    %6798 = vmatprep.subr.mxu0 0.0
    %6799 = vmatpush1.xpose.msra.mxu0 0.0
    %6800 = vmatprep.subr.mxu0 0.0
    %6801 = vmatpush1.xpose.msra.mxu0 0.0
    %6802 = vmatprep.subr.mxu0 0.0
    %6803 = vmatpush1.xpose.msra.mxu0 0.0
    %6804 = vmatprep.subr.mxu0 0.0
    %6805 = vmatpush1.xpose.msra.mxu0 0.0
    %6806 = vmatprep.subr.mxu0 0.0
    %6807 = vmatpush1.xpose.msra.mxu0 0.0
    %6808 = vmatprep.subr.mxu0 0.0
    %6809 = vmatpush1.xpose.msra.mxu0 0.0
    %6810 = vmatprep.subr.mxu0 0.0
    %6811 = vmatpush1.xpose.msra.mxu0 0.0
    %6812 = vmatprep.subr.mxu0 0.0
    %6813 = vmatpush1.xpose.msra.mxu0 0.0
    %6814 = vmatprep.subr.mxu0 0.0
    %6815 = vmatpush1.xpose.msra.mxu0 0.0
    %6816 = vmatprep.subr.mxu0 0.0
    %6817 = vmatpush1.xpose.msra.mxu0 0.0
    %6818 = vmatprep.subr.mxu0 0.0
    %6819 = vmatpush1.xpose.msra.mxu0 0.0
    %6820 = vmatprep.subr.mxu0 0.0
    %6821 = vmatpush1.xpose.msra.mxu0 0.0
    %6822 = vmatprep.subr.mxu0 0.0
    %6823 = vmatpush1.xpose.msra.mxu0 0.0
    %6824 = vmatprep.subr.mxu0 %v232
    %6825 = vmatpush1.xpose.msra.mxu0 %v231
    %6826 = vmatprep.subr.mxu0 0.0
    %6827 = vmatpush2.xpose.msra.mxu0 0.0
    %6828 = vmatprep.subr.mxu0 0.0
    %6829 = vmatpush2.xpose.msra.mxu0 0.0
    %6830 = vmatprep.subr.mxu0 0.0
    %6831 = vmatpush2.xpose.msra.mxu0 0.0
    %6832 = vmatprep.subr.mxu0 0.0
    %6833 = vmatpush2.xpose.msra.mxu0 0.0
    %6834 = vmatprep.subr.mxu0 0.0
    %6835 = vmatpush2.xpose.msra.mxu0 0.0
    %6836 = vmatprep.subr.mxu0 0.0
    %6837 = vmatpush2.xpose.msra.mxu0 0.0
    %6838 = vmatprep.subr.mxu0 0.0
    %6839 = vmatpush2.xpose.msra.mxu0 0.0
    %6840 = vmatprep.subr.mxu0 0.0
    %6841 = vmatpush2.xpose.msra.mxu0 0.0
    %6842 = vmatprep.subr.mxu0 0.0
    %6843 = vmatpush2.xpose.msra.mxu0 0.0
    %6844 = vmatprep.subr.mxu0 0.0
    %6845 = vmatpush2.xpose.msra.mxu0 0.0
    %6846 = vmatprep.subr.mxu0 0.0
    %6847 = vmatpush2.xpose.msra.mxu0 0.0
    %6848 = vmatprep.subr.mxu0 0.0
    %6849 = vmatpush2.xpose.msra.mxu0 0.0
    %6850 = vmatprep.subr.mxu0 0.0
    %6851 = vmatpush2.xpose.msra.mxu0 0.0
    %6852 = vmatprep.subr.mxu0 0.0
    %6853 = vmatpush2.xpose.msra.mxu0 0.0
    %6854 = vmatprep.subr.mxu0 0.0
    %6855 = vmatpush2.xpose.msra.mxu0 0.0
    %6856 = vmatprep.subr.mxu0 0.0
    %6857 = vmatpush2.xpose.msra.mxu0 0.0
    %6858 = vmatprep.mubr.f32.mxu0 %v1021
    %6859 = vmatmul.mubr.f32.gmra.mxu0 %v1013
    %v6860 = vpop.f32.mrf.mxu0
    %v6861 = vadd.f32 %v6791, %v6860
    %v6862 = vpop.f32.mrf.mxu0
    %6863 = vdwg.mxu0
    %6864 = vmatprep.subr.mxu0 0.0
    %6865 = vmatpush1.xpose.msra.mxu0 0.0
    %6866 = vmatprep.subr.mxu0 0.0
    %6867 = vmatpush1.xpose.msra.mxu0 0.0
    %6868 = vmatprep.subr.mxu0 0.0
    %6869 = vmatpush1.xpose.msra.mxu0 0.0
    %6870 = vmatprep.subr.mxu0 0.0
    %6871 = vmatpush1.xpose.msra.mxu0 0.0
    %6872 = vmatprep.subr.mxu0 0.0
    %6873 = vmatpush1.xpose.msra.mxu0 0.0
    %6874 = vmatprep.subr.mxu0 0.0
    %6875 = vmatpush1.xpose.msra.mxu0 0.0
    %6876 = vmatprep.subr.mxu0 0.0
    %6877 = vmatpush1.xpose.msra.mxu0 0.0
    %6878 = vmatprep.subr.mxu0 0.0
    %6879 = vmatpush1.xpose.msra.mxu0 0.0
    %6880 = vmatprep.subr.mxu0 0.0
    %6881 = vmatpush1.xpose.msra.mxu0 0.0
    %6882 = vmatprep.subr.mxu0 0.0
    %6883 = vmatpush1.xpose.msra.mxu0 0.0
    %6884 = vmatprep.subr.mxu0 0.0
    %6885 = vmatpush1.xpose.msra.mxu0 0.0
    %6886 = vmatprep.subr.mxu0 0.0
    %6887 = vmatpush1.xpose.msra.mxu0 0.0
    %6888 = vmatprep.subr.mxu0 0.0
    %6889 = vmatpush1.xpose.msra.mxu0 0.0
    %6890 = vmatprep.subr.mxu0 0.0
    %6891 = vmatpush1.xpose.msra.mxu0 0.0
    %6892 = vmatprep.subr.mxu0 0.0
    %6893 = vmatpush1.xpose.msra.mxu0 0.0
    %6894 = vmatprep.subr.mxu0 %v234
    %6895 = vmatpush1.xpose.msra.mxu0 %v233
    %6896 = vmatprep.subr.mxu0 0.0
    %6897 = vmatpush2.xpose.msra.mxu0 0.0
    %6898 = vmatprep.subr.mxu0 0.0
    %6899 = vmatpush2.xpose.msra.mxu0 0.0
    %6900 = vmatprep.subr.mxu0 0.0
    %6901 = vmatpush2.xpose.msra.mxu0 0.0
    %6902 = vmatprep.subr.mxu0 0.0
    %6903 = vmatpush2.xpose.msra.mxu0 0.0
    %6904 = vmatprep.subr.mxu0 0.0
    %6905 = vmatpush2.xpose.msra.mxu0 0.0
    %6906 = vmatprep.subr.mxu0 0.0
    %6907 = vmatpush2.xpose.msra.mxu0 0.0
    %6908 = vmatprep.subr.mxu0 0.0
    %6909 = vmatpush2.xpose.msra.mxu0 0.0
    %6910 = vmatprep.subr.mxu0 0.0
    %6911 = vmatpush2.xpose.msra.mxu0 0.0
    %6912 = vmatprep.subr.mxu0 0.0
    %6913 = vmatpush2.xpose.msra.mxu0 0.0
    %6914 = vmatprep.subr.mxu0 0.0
    %6915 = vmatpush2.xpose.msra.mxu0 0.0
    %6916 = vmatprep.subr.mxu0 0.0
    %6917 = vmatpush2.xpose.msra.mxu0 0.0
    %6918 = vmatprep.subr.mxu0 0.0
    %6919 = vmatpush2.xpose.msra.mxu0 0.0
    %6920 = vmatprep.subr.mxu0 0.0
    %6921 = vmatpush2.xpose.msra.mxu0 0.0
    %6922 = vmatprep.subr.mxu0 0.0
    %6923 = vmatpush2.xpose.msra.mxu0 0.0
    %6924 = vmatprep.subr.mxu0 0.0
    %6925 = vmatpush2.xpose.msra.mxu0 0.0
    %6926 = vmatprep.subr.mxu0 0.0
    %6927 = vmatpush2.xpose.msra.mxu0 0.0
    %6928 = vmatprep.mubr.f32.mxu0 %v1022
    %6929 = vmatmul.mubr.f32.gmra.mxu0 %v1020
    %v6930 = vpop.f32.mrf.mxu0
    %v6931 = vadd.f32 %v6861, %v6930
    %v6932 = vpop.f32.mrf.mxu0
    %6933 = vdwg.mxu0
    %6934 = vmatprep.subr.mxu0 0.0
    %6935 = vmatpush1.xpose.msra.mxu0 0.0
    %6936 = vmatprep.subr.mxu0 0.0
    %6937 = vmatpush1.xpose.msra.mxu0 0.0
    %6938 = vmatprep.subr.mxu0 0.0
    %6939 = vmatpush1.xpose.msra.mxu0 0.0
    %6940 = vmatprep.subr.mxu0 0.0
    %6941 = vmatpush1.xpose.msra.mxu0 0.0
    %6942 = vmatprep.subr.mxu0 0.0
    %6943 = vmatpush1.xpose.msra.mxu0 0.0
    %6944 = vmatprep.subr.mxu0 0.0
    %6945 = vmatpush1.xpose.msra.mxu0 0.0
    %6946 = vmatprep.subr.mxu0 0.0
    %6947 = vmatpush1.xpose.msra.mxu0 0.0
    %6948 = vmatprep.subr.mxu0 0.0
    %6949 = vmatpush1.xpose.msra.mxu0 0.0
    %6950 = vmatprep.subr.mxu0 0.0
    %6951 = vmatpush1.xpose.msra.mxu0 0.0
    %6952 = vmatprep.subr.mxu0 0.0
    %6953 = vmatpush1.xpose.msra.mxu0 0.0
    %6954 = vmatprep.subr.mxu0 0.0
    %6955 = vmatpush1.xpose.msra.mxu0 0.0
    %6956 = vmatprep.subr.mxu0 0.0
    %6957 = vmatpush1.xpose.msra.mxu0 0.0
    %6958 = vmatprep.subr.mxu0 0.0
    %6959 = vmatpush1.xpose.msra.mxu0 0.0
    %6960 = vmatprep.subr.mxu0 0.0
    %6961 = vmatpush1.xpose.msra.mxu0 0.0
    %6962 = vmatprep.subr.mxu0 0.0
    %6963 = vmatpush1.xpose.msra.mxu0 0.0
    %6964 = vmatprep.subr.mxu0 %v236
    %6965 = vmatpush1.xpose.msra.mxu0 %v235
    %6966 = vmatprep.subr.mxu0 0.0
    %6967 = vmatpush2.xpose.msra.mxu0 0.0
    %6968 = vmatprep.subr.mxu0 0.0
    %6969 = vmatpush2.xpose.msra.mxu0 0.0
    %6970 = vmatprep.subr.mxu0 0.0
    %6971 = vmatpush2.xpose.msra.mxu0 0.0
    %6972 = vmatprep.subr.mxu0 0.0
    %6973 = vmatpush2.xpose.msra.mxu0 0.0
    %6974 = vmatprep.subr.mxu0 0.0
    %6975 = vmatpush2.xpose.msra.mxu0 0.0
    %6976 = vmatprep.subr.mxu0 0.0
    %6977 = vmatpush2.xpose.msra.mxu0 0.0
    %6978 = vmatprep.subr.mxu0 0.0
    %6979 = vmatpush2.xpose.msra.mxu0 0.0
    %6980 = vmatprep.subr.mxu0 0.0
    %6981 = vmatpush2.xpose.msra.mxu0 0.0
    %6982 = vmatprep.subr.mxu0 0.0
    %6983 = vmatpush2.xpose.msra.mxu0 0.0
    %6984 = vmatprep.subr.mxu0 0.0
    %6985 = vmatpush2.xpose.msra.mxu0 0.0
    %6986 = vmatprep.subr.mxu0 0.0
    %6987 = vmatpush2.xpose.msra.mxu0 0.0
    %6988 = vmatprep.subr.mxu0 0.0
    %6989 = vmatpush2.xpose.msra.mxu0 0.0
    %6990 = vmatprep.subr.mxu0 0.0
    %6991 = vmatpush2.xpose.msra.mxu0 0.0
    %6992 = vmatprep.subr.mxu0 0.0
    %6993 = vmatpush2.xpose.msra.mxu0 0.0
    %6994 = vmatprep.subr.mxu0 0.0
    %6995 = vmatpush2.xpose.msra.mxu0 0.0
    %6996 = vmatprep.subr.mxu0 0.0
    %6997 = vmatpush2.xpose.msra.mxu0 0.0
    %6998 = vmatprep.mubr.f32.mxu0 %v1038
    %6999 = vmatmul.mubr.f32.gmra.mxu0 %v1030
    %v7000 = vpop.f32.mrf.mxu0
    %v7001 = vadd.f32 %v6931, %v7000
    %v7002 = vpop.f32.mrf.mxu0
    %7003 = vdwg.mxu0
    %7004 = vmatprep.subr.mxu0 0.0
    %7005 = vmatpush1.xpose.msra.mxu0 0.0
    %7006 = vmatprep.subr.mxu0 0.0
    %7007 = vmatpush1.xpose.msra.mxu0 0.0
    %7008 = vmatprep.subr.mxu0 0.0
    %7009 = vmatpush1.xpose.msra.mxu0 0.0
    %7010 = vmatprep.subr.mxu0 0.0
    %7011 = vmatpush1.xpose.msra.mxu0 0.0
    %7012 = vmatprep.subr.mxu0 0.0
    %7013 = vmatpush1.xpose.msra.mxu0 0.0
    %7014 = vmatprep.subr.mxu0 0.0
    %7015 = vmatpush1.xpose.msra.mxu0 0.0
    %7016 = vmatprep.subr.mxu0 0.0
    %7017 = vmatpush1.xpose.msra.mxu0 0.0
    %7018 = vmatprep.subr.mxu0 0.0
    %7019 = vmatpush1.xpose.msra.mxu0 0.0
    %7020 = vmatprep.subr.mxu0 0.0
    %7021 = vmatpush1.xpose.msra.mxu0 0.0
    %7022 = vmatprep.subr.mxu0 0.0
    %7023 = vmatpush1.xpose.msra.mxu0 0.0
    %7024 = vmatprep.subr.mxu0 0.0
    %7025 = vmatpush1.xpose.msra.mxu0 0.0
    %7026 = vmatprep.subr.mxu0 0.0
    %7027 = vmatpush1.xpose.msra.mxu0 0.0
    %7028 = vmatprep.subr.mxu0 0.0
    %7029 = vmatpush1.xpose.msra.mxu0 0.0
    %7030 = vmatprep.subr.mxu0 0.0
    %7031 = vmatpush1.xpose.msra.mxu0 0.0
    %7032 = vmatprep.subr.mxu0 0.0
    %7033 = vmatpush1.xpose.msra.mxu0 0.0
    %7034 = vmatprep.subr.mxu0 %v238
    %7035 = vmatpush1.xpose.msra.mxu0 %v237
    %7036 = vmatprep.subr.mxu0 0.0
    %7037 = vmatpush2.xpose.msra.mxu0 0.0
    %7038 = vmatprep.subr.mxu0 0.0
    %7039 = vmatpush2.xpose.msra.mxu0 0.0
    %7040 = vmatprep.subr.mxu0 0.0
    %7041 = vmatpush2.xpose.msra.mxu0 0.0
    %7042 = vmatprep.subr.mxu0 0.0
    %7043 = vmatpush2.xpose.msra.mxu0 0.0
    %7044 = vmatprep.subr.mxu0 0.0
    %7045 = vmatpush2.xpose.msra.mxu0 0.0
    %7046 = vmatprep.subr.mxu0 0.0
    %7047 = vmatpush2.xpose.msra.mxu0 0.0
    %7048 = vmatprep.subr.mxu0 0.0
    %7049 = vmatpush2.xpose.msra.mxu0 0.0
    %7050 = vmatprep.subr.mxu0 0.0
    %7051 = vmatpush2.xpose.msra.mxu0 0.0
    %7052 = vmatprep.subr.mxu0 0.0
    %7053 = vmatpush2.xpose.msra.mxu0 0.0
    %7054 = vmatprep.subr.mxu0 0.0
    %7055 = vmatpush2.xpose.msra.mxu0 0.0
    %7056 = vmatprep.subr.mxu0 0.0
    %7057 = vmatpush2.xpose.msra.mxu0 0.0
    %7058 = vmatprep.subr.mxu0 0.0
    %7059 = vmatpush2.xpose.msra.mxu0 0.0
    %7060 = vmatprep.subr.mxu0 0.0
    %7061 = vmatpush2.xpose.msra.mxu0 0.0
    %7062 = vmatprep.subr.mxu0 0.0
    %7063 = vmatpush2.xpose.msra.mxu0 0.0
    %7064 = vmatprep.subr.mxu0 0.0
    %7065 = vmatpush2.xpose.msra.mxu0 0.0
    %7066 = vmatprep.subr.mxu0 0.0
    %7067 = vmatpush2.xpose.msra.mxu0 0.0
    %7068 = vmatprep.mubr.f32.mxu0 %v1039
    %7069 = vmatmul.mubr.f32.gmra.mxu0 %v1037
    %v7070 = vpop.f32.mrf.mxu0
    %v7071 = vadd.f32 %v7001, %v7070
    %v7072 = vpop.f32.mrf.mxu0
    %7073 = vdwg.mxu0
    %7074 = vmatprep.subr.mxu0 0.0
    %7075 = vmatpush1.xpose.msra.mxu0 0.0
    %7076 = vmatprep.subr.mxu0 0.0
    %7077 = vmatpush1.xpose.msra.mxu0 0.0
    %7078 = vmatprep.subr.mxu0 0.0
    %7079 = vmatpush1.xpose.msra.mxu0 0.0
    %7080 = vmatprep.subr.mxu0 0.0
    %7081 = vmatpush1.xpose.msra.mxu0 0.0
    %7082 = vmatprep.subr.mxu0 0.0
    %7083 = vmatpush1.xpose.msra.mxu0 0.0
    %7084 = vmatprep.subr.mxu0 0.0
    %7085 = vmatpush1.xpose.msra.mxu0 0.0
    %7086 = vmatprep.subr.mxu0 0.0
    %7087 = vmatpush1.xpose.msra.mxu0 0.0
    %7088 = vmatprep.subr.mxu0 0.0
    %7089 = vmatpush1.xpose.msra.mxu0 0.0
    %7090 = vmatprep.subr.mxu0 0.0
    %7091 = vmatpush1.xpose.msra.mxu0 0.0
    %7092 = vmatprep.subr.mxu0 0.0
    %7093 = vmatpush1.xpose.msra.mxu0 0.0
    %7094 = vmatprep.subr.mxu0 0.0
    %7095 = vmatpush1.xpose.msra.mxu0 0.0
    %7096 = vmatprep.subr.mxu0 0.0
    %7097 = vmatpush1.xpose.msra.mxu0 0.0
    %7098 = vmatprep.subr.mxu0 0.0
    %7099 = vmatpush1.xpose.msra.mxu0 0.0
    %7100 = vmatprep.subr.mxu0 0.0
    %7101 = vmatpush1.xpose.msra.mxu0 0.0
    %7102 = vmatprep.subr.mxu0 0.0
    %7103 = vmatpush1.xpose.msra.mxu0 0.0
    %7104 = vmatprep.subr.mxu0 %v240
    %7105 = vmatpush1.xpose.msra.mxu0 %v239
    %7106 = vmatprep.subr.mxu0 0.0
    %7107 = vmatpush2.xpose.msra.mxu0 0.0
    %7108 = vmatprep.subr.mxu0 0.0
    %7109 = vmatpush2.xpose.msra.mxu0 0.0
    %7110 = vmatprep.subr.mxu0 0.0
    %7111 = vmatpush2.xpose.msra.mxu0 0.0
    %7112 = vmatprep.subr.mxu0 0.0
    %7113 = vmatpush2.xpose.msra.mxu0 0.0
    %7114 = vmatprep.subr.mxu0 0.0
    %7115 = vmatpush2.xpose.msra.mxu0 0.0
    %7116 = vmatprep.subr.mxu0 0.0
    %7117 = vmatpush2.xpose.msra.mxu0 0.0
    %7118 = vmatprep.subr.mxu0 0.0
    %7119 = vmatpush2.xpose.msra.mxu0 0.0
    %7120 = vmatprep.subr.mxu0 0.0
    %7121 = vmatpush2.xpose.msra.mxu0 0.0
    %7122 = vmatprep.subr.mxu0 0.0
    %7123 = vmatpush2.xpose.msra.mxu0 0.0
    %7124 = vmatprep.subr.mxu0 0.0
    %7125 = vmatpush2.xpose.msra.mxu0 0.0
    %7126 = vmatprep.subr.mxu0 0.0
    %7127 = vmatpush2.xpose.msra.mxu0 0.0
    %7128 = vmatprep.subr.mxu0 0.0
    %7129 = vmatpush2.xpose.msra.mxu0 0.0
    %7130 = vmatprep.subr.mxu0 0.0
    %7131 = vmatpush2.xpose.msra.mxu0 0.0
    %7132 = vmatprep.subr.mxu0 0.0
    %7133 = vmatpush2.xpose.msra.mxu0 0.0
    %7134 = vmatprep.subr.mxu0 0.0
    %7135 = vmatpush2.xpose.msra.mxu0 0.0
    %7136 = vmatprep.subr.mxu0 0.0
    %7137 = vmatpush2.xpose.msra.mxu0 0.0
    %7138 = vmatprep.mubr.f32.mxu0 %v1055
    %7139 = vmatmul.mubr.f32.gmra.mxu0 %v1047
    %v7140 = vpop.f32.mrf.mxu0
    %v7141 = vadd.f32 %v7071, %v7140
    %v7142 = vpop.f32.mrf.mxu0
    %7143 = vdwg.mxu0
    %7144 = vmatprep.subr.mxu0 0.0
    %7145 = vmatpush1.xpose.msra.mxu0 0.0
    %7146 = vmatprep.subr.mxu0 0.0
    %7147 = vmatpush1.xpose.msra.mxu0 0.0
    %7148 = vmatprep.subr.mxu0 0.0
    %7149 = vmatpush1.xpose.msra.mxu0 0.0
    %7150 = vmatprep.subr.mxu0 0.0
    %7151 = vmatpush1.xpose.msra.mxu0 0.0
    %7152 = vmatprep.subr.mxu0 0.0
    %7153 = vmatpush1.xpose.msra.mxu0 0.0
    %7154 = vmatprep.subr.mxu0 0.0
    %7155 = vmatpush1.xpose.msra.mxu0 0.0
    %7156 = vmatprep.subr.mxu0 0.0
    %7157 = vmatpush1.xpose.msra.mxu0 0.0
    %7158 = vmatprep.subr.mxu0 0.0
    %7159 = vmatpush1.xpose.msra.mxu0 0.0
    %7160 = vmatprep.subr.mxu0 0.0
    %7161 = vmatpush1.xpose.msra.mxu0 0.0
    %7162 = vmatprep.subr.mxu0 0.0
    %7163 = vmatpush1.xpose.msra.mxu0 0.0
    %7164 = vmatprep.subr.mxu0 0.0
    %7165 = vmatpush1.xpose.msra.mxu0 0.0
    %7166 = vmatprep.subr.mxu0 0.0
    %7167 = vmatpush1.xpose.msra.mxu0 0.0
    %7168 = vmatprep.subr.mxu0 0.0
    %7169 = vmatpush1.xpose.msra.mxu0 0.0
    %7170 = vmatprep.subr.mxu0 0.0
    %7171 = vmatpush1.xpose.msra.mxu0 0.0
    %7172 = vmatprep.subr.mxu0 0.0
    %7173 = vmatpush1.xpose.msra.mxu0 0.0
    %7174 = vmatprep.subr.mxu0 %v242
    %7175 = vmatpush1.xpose.msra.mxu0 %v241
    %7176 = vmatprep.subr.mxu0 0.0
    %7177 = vmatpush2.xpose.msra.mxu0 0.0
    %7178 = vmatprep.subr.mxu0 0.0
    %7179 = vmatpush2.xpose.msra.mxu0 0.0
    %7180 = vmatprep.subr.mxu0 0.0
    %7181 = vmatpush2.xpose.msra.mxu0 0.0
    %7182 = vmatprep.subr.mxu0 0.0
    %7183 = vmatpush2.xpose.msra.mxu0 0.0
    %7184 = vmatprep.subr.mxu0 0.0
    %7185 = vmatpush2.xpose.msra.mxu0 0.0
    %7186 = vmatprep.subr.mxu0 0.0
    %7187 = vmatpush2.xpose.msra.mxu0 0.0
    %7188 = vmatprep.subr.mxu0 0.0
    %7189 = vmatpush2.xpose.msra.mxu0 0.0
    %7190 = vmatprep.subr.mxu0 0.0
    %7191 = vmatpush2.xpose.msra.mxu0 0.0
    %7192 = vmatprep.subr.mxu0 0.0
    %7193 = vmatpush2.xpose.msra.mxu0 0.0
    %7194 = vmatprep.subr.mxu0 0.0
    %7195 = vmatpush2.xpose.msra.mxu0 0.0
    %7196 = vmatprep.subr.mxu0 0.0
    %7197 = vmatpush2.xpose.msra.mxu0 0.0
    %7198 = vmatprep.subr.mxu0 0.0
    %7199 = vmatpush2.xpose.msra.mxu0 0.0
    %7200 = vmatprep.subr.mxu0 0.0
    %7201 = vmatpush2.xpose.msra.mxu0 0.0
    %7202 = vmatprep.subr.mxu0 0.0
    %7203 = vmatpush2.xpose.msra.mxu0 0.0
    %7204 = vmatprep.subr.mxu0 0.0
    %7205 = vmatpush2.xpose.msra.mxu0 0.0
    %7206 = vmatprep.subr.mxu0 0.0
    %7207 = vmatpush2.xpose.msra.mxu0 0.0
    %7208 = vmatprep.mubr.f32.mxu0 %v1056
    %7209 = vmatmul.mubr.f32.gmra.mxu0 %v1054
    %v7210 = vpop.f32.mrf.mxu0
    %v7211 = vadd.f32 %v7141, %v7210
    %v7212 = vpop.f32.mrf.mxu0
    %7213 = vdwg.mxu0
    %7214 = vmatprep.subr.mxu0 0.0
    %7215 = vmatpush1.xpose.msra.mxu0 0.0
    %7216 = vmatprep.subr.mxu0 0.0
    %7217 = vmatpush1.xpose.msra.mxu0 0.0
    %7218 = vmatprep.subr.mxu0 0.0
    %7219 = vmatpush1.xpose.msra.mxu0 0.0
    %7220 = vmatprep.subr.mxu0 0.0
    %7221 = vmatpush1.xpose.msra.mxu0 0.0
    %7222 = vmatprep.subr.mxu0 0.0
    %7223 = vmatpush1.xpose.msra.mxu0 0.0
    %7224 = vmatprep.subr.mxu0 0.0
    %7225 = vmatpush1.xpose.msra.mxu0 0.0
    %7226 = vmatprep.subr.mxu0 0.0
    %7227 = vmatpush1.xpose.msra.mxu0 0.0
    %7228 = vmatprep.subr.mxu0 0.0
    %7229 = vmatpush1.xpose.msra.mxu0 0.0
    %7230 = vmatprep.subr.mxu0 0.0
    %7231 = vmatpush1.xpose.msra.mxu0 0.0
    %7232 = vmatprep.subr.mxu0 0.0
    %7233 = vmatpush1.xpose.msra.mxu0 0.0
    %7234 = vmatprep.subr.mxu0 0.0
    %7235 = vmatpush1.xpose.msra.mxu0 0.0
    %7236 = vmatprep.subr.mxu0 0.0
    %7237 = vmatpush1.xpose.msra.mxu0 0.0
    %7238 = vmatprep.subr.mxu0 0.0
    %7239 = vmatpush1.xpose.msra.mxu0 0.0
    %7240 = vmatprep.subr.mxu0 0.0
    %7241 = vmatpush1.xpose.msra.mxu0 0.0
    %7242 = vmatprep.subr.mxu0 0.0
    %7243 = vmatpush1.xpose.msra.mxu0 0.0
    %7244 = vmatprep.subr.mxu0 %v244
    %7245 = vmatpush1.xpose.msra.mxu0 %v243
    %7246 = vmatprep.subr.mxu0 0.0
    %7247 = vmatpush2.xpose.msra.mxu0 0.0
    %7248 = vmatprep.subr.mxu0 0.0
    %7249 = vmatpush2.xpose.msra.mxu0 0.0
    %7250 = vmatprep.subr.mxu0 0.0
    %7251 = vmatpush2.xpose.msra.mxu0 0.0
    %7252 = vmatprep.subr.mxu0 0.0
    %7253 = vmatpush2.xpose.msra.mxu0 0.0
    %7254 = vmatprep.subr.mxu0 0.0
    %7255 = vmatpush2.xpose.msra.mxu0 0.0
    %7256 = vmatprep.subr.mxu0 0.0
    %7257 = vmatpush2.xpose.msra.mxu0 0.0
    %7258 = vmatprep.subr.mxu0 0.0
    %7259 = vmatpush2.xpose.msra.mxu0 0.0
    %7260 = vmatprep.subr.mxu0 0.0
    %7261 = vmatpush2.xpose.msra.mxu0 0.0
    %7262 = vmatprep.subr.mxu0 0.0
    %7263 = vmatpush2.xpose.msra.mxu0 0.0
    %7264 = vmatprep.subr.mxu0 0.0
    %7265 = vmatpush2.xpose.msra.mxu0 0.0
    %7266 = vmatprep.subr.mxu0 0.0
    %7267 = vmatpush2.xpose.msra.mxu0 0.0
    %7268 = vmatprep.subr.mxu0 0.0
    %7269 = vmatpush2.xpose.msra.mxu0 0.0
    %7270 = vmatprep.subr.mxu0 0.0
    %7271 = vmatpush2.xpose.msra.mxu0 0.0
    %7272 = vmatprep.subr.mxu0 0.0
    %7273 = vmatpush2.xpose.msra.mxu0 0.0
    %7274 = vmatprep.subr.mxu0 0.0
    %7275 = vmatpush2.xpose.msra.mxu0 0.0
    %7276 = vmatprep.subr.mxu0 0.0
    %7277 = vmatpush2.xpose.msra.mxu0 0.0
    %7278 = vmatprep.mubr.f32.mxu0 %v1072
    %7279 = vmatmul.mubr.f32.gmra.mxu0 %v1064
    %v7280 = vpop.f32.mrf.mxu0
    %v7281 = vadd.f32 %v7211, %v7280
    %v7282 = vpop.f32.mrf.mxu0
    %7283 = vdwg.mxu0
    %7284 = vmatprep.subr.mxu0 0.0
    %7285 = vmatpush1.xpose.msra.mxu0 0.0
    %7286 = vmatprep.subr.mxu0 0.0
    %7287 = vmatpush1.xpose.msra.mxu0 0.0
    %7288 = vmatprep.subr.mxu0 0.0
    %7289 = vmatpush1.xpose.msra.mxu0 0.0
    %7290 = vmatprep.subr.mxu0 0.0
    %7291 = vmatpush1.xpose.msra.mxu0 0.0
    %7292 = vmatprep.subr.mxu0 0.0
    %7293 = vmatpush1.xpose.msra.mxu0 0.0
    %7294 = vmatprep.subr.mxu0 0.0
    %7295 = vmatpush1.xpose.msra.mxu0 0.0
    %7296 = vmatprep.subr.mxu0 0.0
    %7297 = vmatpush1.xpose.msra.mxu0 0.0
    %7298 = vmatprep.subr.mxu0 0.0
    %7299 = vmatpush1.xpose.msra.mxu0 0.0
    %7300 = vmatprep.subr.mxu0 0.0
    %7301 = vmatpush1.xpose.msra.mxu0 0.0
    %7302 = vmatprep.subr.mxu0 0.0
    %7303 = vmatpush1.xpose.msra.mxu0 0.0
    %7304 = vmatprep.subr.mxu0 0.0
    %7305 = vmatpush1.xpose.msra.mxu0 0.0
    %7306 = vmatprep.subr.mxu0 0.0
    %7307 = vmatpush1.xpose.msra.mxu0 0.0
    %7308 = vmatprep.subr.mxu0 0.0
    %7309 = vmatpush1.xpose.msra.mxu0 0.0
    %7310 = vmatprep.subr.mxu0 0.0
    %7311 = vmatpush1.xpose.msra.mxu0 0.0
    %7312 = vmatprep.subr.mxu0 0.0
    %7313 = vmatpush1.xpose.msra.mxu0 0.0
    %7314 = vmatprep.subr.mxu0 %v246
    %7315 = vmatpush1.xpose.msra.mxu0 %v245
    %7316 = vmatprep.subr.mxu0 0.0
    %7317 = vmatpush2.xpose.msra.mxu0 0.0
    %7318 = vmatprep.subr.mxu0 0.0
    %7319 = vmatpush2.xpose.msra.mxu0 0.0
    %7320 = vmatprep.subr.mxu0 0.0
    %7321 = vmatpush2.xpose.msra.mxu0 0.0
    %7322 = vmatprep.subr.mxu0 0.0
    %7323 = vmatpush2.xpose.msra.mxu0 0.0
    %7324 = vmatprep.subr.mxu0 0.0
    %7325 = vmatpush2.xpose.msra.mxu0 0.0
    %7326 = vmatprep.subr.mxu0 0.0
    %7327 = vmatpush2.xpose.msra.mxu0 0.0
    %7328 = vmatprep.subr.mxu0 0.0
    %7329 = vmatpush2.xpose.msra.mxu0 0.0
    %7330 = vmatprep.subr.mxu0 0.0
    %7331 = vmatpush2.xpose.msra.mxu0 0.0
    %7332 = vmatprep.subr.mxu0 0.0
    %7333 = vmatpush2.xpose.msra.mxu0 0.0
    %7334 = vmatprep.subr.mxu0 0.0
    %7335 = vmatpush2.xpose.msra.mxu0 0.0
    %7336 = vmatprep.subr.mxu0 0.0
    %7337 = vmatpush2.xpose.msra.mxu0 0.0
    %7338 = vmatprep.subr.mxu0 0.0
    %7339 = vmatpush2.xpose.msra.mxu0 0.0
    %7340 = vmatprep.subr.mxu0 0.0
    %7341 = vmatpush2.xpose.msra.mxu0 0.0
    %7342 = vmatprep.subr.mxu0 0.0
    %7343 = vmatpush2.xpose.msra.mxu0 0.0
    %7344 = vmatprep.subr.mxu0 0.0
    %7345 = vmatpush2.xpose.msra.mxu0 0.0
    %7346 = vmatprep.subr.mxu0 0.0
    %7347 = vmatpush2.xpose.msra.mxu0 0.0
    %7348 = vmatprep.mubr.f32.mxu0 %v1073
    %7349 = vmatmul.mubr.f32.gmra.mxu0 %v1071
    %v7350 = vpop.f32.mrf.mxu0
    %v7351 = vadd.f32 %v7281, %v7350
    %v7352 = vpop.f32.mrf.mxu0
    %7353 = vdwg.mxu0
    %7354 = vmatprep.subr.mxu0 0.0
    %7355 = vmatpush1.xpose.msra.mxu0 0.0
    %7356 = vmatprep.subr.mxu0 0.0
    %7357 = vmatpush1.xpose.msra.mxu0 0.0
    %7358 = vmatprep.subr.mxu0 0.0
    %7359 = vmatpush1.xpose.msra.mxu0 0.0
    %7360 = vmatprep.subr.mxu0 0.0
    %7361 = vmatpush1.xpose.msra.mxu0 0.0
    %7362 = vmatprep.subr.mxu0 0.0
    %7363 = vmatpush1.xpose.msra.mxu0 0.0
    %7364 = vmatprep.subr.mxu0 0.0
    %7365 = vmatpush1.xpose.msra.mxu0 0.0
    %7366 = vmatprep.subr.mxu0 0.0
    %7367 = vmatpush1.xpose.msra.mxu0 0.0
    %7368 = vmatprep.subr.mxu0 0.0
    %7369 = vmatpush1.xpose.msra.mxu0 0.0
    %7370 = vmatprep.subr.mxu0 0.0
    %7371 = vmatpush1.xpose.msra.mxu0 0.0
    %7372 = vmatprep.subr.mxu0 0.0
    %7373 = vmatpush1.xpose.msra.mxu0 0.0
    %7374 = vmatprep.subr.mxu0 0.0
    %7375 = vmatpush1.xpose.msra.mxu0 0.0
    %7376 = vmatprep.subr.mxu0 0.0
    %7377 = vmatpush1.xpose.msra.mxu0 0.0
    %7378 = vmatprep.subr.mxu0 0.0
    %7379 = vmatpush1.xpose.msra.mxu0 0.0
    %7380 = vmatprep.subr.mxu0 0.0
    %7381 = vmatpush1.xpose.msra.mxu0 0.0
    %7382 = vmatprep.subr.mxu0 0.0
    %7383 = vmatpush1.xpose.msra.mxu0 0.0
    %7384 = vmatprep.subr.mxu0 %v248
    %7385 = vmatpush1.xpose.msra.mxu0 %v247
    %7386 = vmatprep.subr.mxu0 0.0
    %7387 = vmatpush2.xpose.msra.mxu0 0.0
    %7388 = vmatprep.subr.mxu0 0.0
    %7389 = vmatpush2.xpose.msra.mxu0 0.0
    %7390 = vmatprep.subr.mxu0 0.0
    %7391 = vmatpush2.xpose.msra.mxu0 0.0
    %7392 = vmatprep.subr.mxu0 0.0
    %7393 = vmatpush2.xpose.msra.mxu0 0.0
    %7394 = vmatprep.subr.mxu0 0.0
    %7395 = vmatpush2.xpose.msra.mxu0 0.0
    %7396 = vmatprep.subr.mxu0 0.0
    %7397 = vmatpush2.xpose.msra.mxu0 0.0
    %7398 = vmatprep.subr.mxu0 0.0
    %7399 = vmatpush2.xpose.msra.mxu0 0.0
    %7400 = vmatprep.subr.mxu0 0.0
    %7401 = vmatpush2.xpose.msra.mxu0 0.0
    %7402 = vmatprep.subr.mxu0 0.0
    %7403 = vmatpush2.xpose.msra.mxu0 0.0
    %7404 = vmatprep.subr.mxu0 0.0
    %7405 = vmatpush2.xpose.msra.mxu0 0.0
    %7406 = vmatprep.subr.mxu0 0.0
    %7407 = vmatpush2.xpose.msra.mxu0 0.0
    %7408 = vmatprep.subr.mxu0 0.0
    %7409 = vmatpush2.xpose.msra.mxu0 0.0
    %7410 = vmatprep.subr.mxu0 0.0
    %7411 = vmatpush2.xpose.msra.mxu0 0.0
    %7412 = vmatprep.subr.mxu0 0.0
    %7413 = vmatpush2.xpose.msra.mxu0 0.0
    %7414 = vmatprep.subr.mxu0 0.0
    %7415 = vmatpush2.xpose.msra.mxu0 0.0
    %7416 = vmatprep.subr.mxu0 0.0
    %7417 = vmatpush2.xpose.msra.mxu0 0.0
    %7418 = vmatprep.mubr.f32.mxu0 %v1089
    %7419 = vmatmul.mubr.f32.gmra.mxu0 %v1081
    %v7420 = vpop.f32.mrf.mxu0
    %v7421 = vadd.f32 %v7351, %v7420
    %v7422 = vpop.f32.mrf.mxu0
    %7423 = vdwg.mxu0
    %7424 = vmatprep.subr.mxu0 0.0
    %7425 = vmatpush1.xpose.msra.mxu0 0.0
    %7426 = vmatprep.subr.mxu0 0.0
    %7427 = vmatpush1.xpose.msra.mxu0 0.0
    %7428 = vmatprep.subr.mxu0 0.0
    %7429 = vmatpush1.xpose.msra.mxu0 0.0
    %7430 = vmatprep.subr.mxu0 0.0
    %7431 = vmatpush1.xpose.msra.mxu0 0.0
    %7432 = vmatprep.subr.mxu0 0.0
    %7433 = vmatpush1.xpose.msra.mxu0 0.0
    %7434 = vmatprep.subr.mxu0 0.0
    %7435 = vmatpush1.xpose.msra.mxu0 0.0
    %7436 = vmatprep.subr.mxu0 0.0
    %7437 = vmatpush1.xpose.msra.mxu0 0.0
    %7438 = vmatprep.subr.mxu0 0.0
    %7439 = vmatpush1.xpose.msra.mxu0 0.0
    %7440 = vmatprep.subr.mxu0 0.0
    %7441 = vmatpush1.xpose.msra.mxu0 0.0
    %7442 = vmatprep.subr.mxu0 0.0
    %7443 = vmatpush1.xpose.msra.mxu0 0.0
    %7444 = vmatprep.subr.mxu0 0.0
    %7445 = vmatpush1.xpose.msra.mxu0 0.0
    %7446 = vmatprep.subr.mxu0 0.0
    %7447 = vmatpush1.xpose.msra.mxu0 0.0
    %7448 = vmatprep.subr.mxu0 0.0
    %7449 = vmatpush1.xpose.msra.mxu0 0.0
    %7450 = vmatprep.subr.mxu0 0.0
    %7451 = vmatpush1.xpose.msra.mxu0 0.0
    %7452 = vmatprep.subr.mxu0 0.0
    %7453 = vmatpush1.xpose.msra.mxu0 0.0
    %7454 = vmatprep.subr.mxu0 %v250
    %7455 = vmatpush1.xpose.msra.mxu0 %v249
    %7456 = vmatprep.subr.mxu0 0.0
    %7457 = vmatpush2.xpose.msra.mxu0 0.0
    %7458 = vmatprep.subr.mxu0 0.0
    %7459 = vmatpush2.xpose.msra.mxu0 0.0
    %7460 = vmatprep.subr.mxu0 0.0
    %7461 = vmatpush2.xpose.msra.mxu0 0.0
    %7462 = vmatprep.subr.mxu0 0.0
    %7463 = vmatpush2.xpose.msra.mxu0 0.0
    %7464 = vmatprep.subr.mxu0 0.0
    %7465 = vmatpush2.xpose.msra.mxu0 0.0
    %7466 = vmatprep.subr.mxu0 0.0
    %7467 = vmatpush2.xpose.msra.mxu0 0.0
    %7468 = vmatprep.subr.mxu0 0.0
    %7469 = vmatpush2.xpose.msra.mxu0 0.0
    %7470 = vmatprep.subr.mxu0 0.0
    %7471 = vmatpush2.xpose.msra.mxu0 0.0
    %7472 = vmatprep.subr.mxu0 0.0
    %7473 = vmatpush2.xpose.msra.mxu0 0.0
    %7474 = vmatprep.subr.mxu0 0.0
    %7475 = vmatpush2.xpose.msra.mxu0 0.0
    %7476 = vmatprep.subr.mxu0 0.0
    %7477 = vmatpush2.xpose.msra.mxu0 0.0
    %7478 = vmatprep.subr.mxu0 0.0
    %7479 = vmatpush2.xpose.msra.mxu0 0.0
    %7480 = vmatprep.subr.mxu0 0.0
    %7481 = vmatpush2.xpose.msra.mxu0 0.0
    %7482 = vmatprep.subr.mxu0 0.0
    %7483 = vmatpush2.xpose.msra.mxu0 0.0
    %7484 = vmatprep.subr.mxu0 0.0
    %7485 = vmatpush2.xpose.msra.mxu0 0.0
    %7486 = vmatprep.subr.mxu0 0.0
    %7487 = vmatpush2.xpose.msra.mxu0 0.0
    %7488 = vmatprep.mubr.f32.mxu0 %v1090
    %7489 = vmatmul.mubr.f32.gmra.mxu0 %v1088
    %v7490 = vpop.f32.mrf.mxu0
    %v7491 = vadd.f32 %v7421, %v7490
    %v7492 = vpop.f32.mrf.mxu0
    %7493 = vdwg.mxu0
    %7494 = vmatprep.subr.mxu0 0.0
    %7495 = vmatpush1.xpose.msra.mxu0 0.0
    %7496 = vmatprep.subr.mxu0 0.0
    %7497 = vmatpush1.xpose.msra.mxu0 0.0
    %7498 = vmatprep.subr.mxu0 0.0
    %7499 = vmatpush1.xpose.msra.mxu0 0.0
    %7500 = vmatprep.subr.mxu0 0.0
    %7501 = vmatpush1.xpose.msra.mxu0 0.0
    %7502 = vmatprep.subr.mxu0 0.0
    %7503 = vmatpush1.xpose.msra.mxu0 0.0
    %7504 = vmatprep.subr.mxu0 0.0
    %7505 = vmatpush1.xpose.msra.mxu0 0.0
    %7506 = vmatprep.subr.mxu0 0.0
    %7507 = vmatpush1.xpose.msra.mxu0 0.0
    %7508 = vmatprep.subr.mxu0 0.0
    %7509 = vmatpush1.xpose.msra.mxu0 0.0
    %7510 = vmatprep.subr.mxu0 0.0
    %7511 = vmatpush1.xpose.msra.mxu0 0.0
    %7512 = vmatprep.subr.mxu0 0.0
    %7513 = vmatpush1.xpose.msra.mxu0 0.0
    %7514 = vmatprep.subr.mxu0 0.0
    %7515 = vmatpush1.xpose.msra.mxu0 0.0
    %7516 = vmatprep.subr.mxu0 0.0
    %7517 = vmatpush1.xpose.msra.mxu0 0.0
    %7518 = vmatprep.subr.mxu0 0.0
    %7519 = vmatpush1.xpose.msra.mxu0 0.0
    %7520 = vmatprep.subr.mxu0 0.0
    %7521 = vmatpush1.xpose.msra.mxu0 0.0
    %7522 = vmatprep.subr.mxu0 0.0
    %7523 = vmatpush1.xpose.msra.mxu0 0.0
    %7524 = vmatprep.subr.mxu0 %v252
    %7525 = vmatpush1.xpose.msra.mxu0 %v251
    %7526 = vmatprep.subr.mxu0 0.0
    %7527 = vmatpush2.xpose.msra.mxu0 0.0
    %7528 = vmatprep.subr.mxu0 0.0
    %7529 = vmatpush2.xpose.msra.mxu0 0.0
    %7530 = vmatprep.subr.mxu0 0.0
    %7531 = vmatpush2.xpose.msra.mxu0 0.0
    %7532 = vmatprep.subr.mxu0 0.0
    %7533 = vmatpush2.xpose.msra.mxu0 0.0
    %7534 = vmatprep.subr.mxu0 0.0
    %7535 = vmatpush2.xpose.msra.mxu0 0.0
    %7536 = vmatprep.subr.mxu0 0.0
    %7537 = vmatpush2.xpose.msra.mxu0 0.0
    %7538 = vmatprep.subr.mxu0 0.0
    %7539 = vmatpush2.xpose.msra.mxu0 0.0
    %7540 = vmatprep.subr.mxu0 0.0
    %7541 = vmatpush2.xpose.msra.mxu0 0.0
    %7542 = vmatprep.subr.mxu0 0.0
    %7543 = vmatpush2.xpose.msra.mxu0 0.0
    %7544 = vmatprep.subr.mxu0 0.0
    %7545 = vmatpush2.xpose.msra.mxu0 0.0
    %7546 = vmatprep.subr.mxu0 0.0
    %7547 = vmatpush2.xpose.msra.mxu0 0.0
    %7548 = vmatprep.subr.mxu0 0.0
    %7549 = vmatpush2.xpose.msra.mxu0 0.0
    %7550 = vmatprep.subr.mxu0 0.0
    %7551 = vmatpush2.xpose.msra.mxu0 0.0
    %7552 = vmatprep.subr.mxu0 0.0
    %7553 = vmatpush2.xpose.msra.mxu0 0.0
    %7554 = vmatprep.subr.mxu0 0.0
    %7555 = vmatpush2.xpose.msra.mxu0 0.0
    %7556 = vmatprep.subr.mxu0 0.0
    %7557 = vmatpush2.xpose.msra.mxu0 0.0
    %7558 = vmatprep.mubr.f32.mxu0 %v1106
    %7559 = vmatmul.mubr.f32.gmra.mxu0 %v1098
    %v7560 = vpop.f32.mrf.mxu0
    %v7561 = vadd.f32 %v7491, %v7560
    %v7562 = vpop.f32.mrf.mxu0
    %7563 = vdwg.mxu0
    %7564 = vmatprep.subr.mxu0 0.0
    %7565 = vmatpush1.xpose.msra.mxu0 0.0
    %7566 = vmatprep.subr.mxu0 0.0
    %7567 = vmatpush1.xpose.msra.mxu0 0.0
    %7568 = vmatprep.subr.mxu0 0.0
    %7569 = vmatpush1.xpose.msra.mxu0 0.0
    %7570 = vmatprep.subr.mxu0 0.0
    %7571 = vmatpush1.xpose.msra.mxu0 0.0
    %7572 = vmatprep.subr.mxu0 0.0
    %7573 = vmatpush1.xpose.msra.mxu0 0.0
    %7574 = vmatprep.subr.mxu0 0.0
    %7575 = vmatpush1.xpose.msra.mxu0 0.0
    %7576 = vmatprep.subr.mxu0 0.0
    %7577 = vmatpush1.xpose.msra.mxu0 0.0
    %7578 = vmatprep.subr.mxu0 0.0
    %7579 = vmatpush1.xpose.msra.mxu0 0.0
    %7580 = vmatprep.subr.mxu0 0.0
    %7581 = vmatpush1.xpose.msra.mxu0 0.0
    %7582 = vmatprep.subr.mxu0 0.0
    %7583 = vmatpush1.xpose.msra.mxu0 0.0
    %7584 = vmatprep.subr.mxu0 0.0
    %7585 = vmatpush1.xpose.msra.mxu0 0.0
    %7586 = vmatprep.subr.mxu0 0.0
    %7587 = vmatpush1.xpose.msra.mxu0 0.0
    %7588 = vmatprep.subr.mxu0 0.0
    %7589 = vmatpush1.xpose.msra.mxu0 0.0
    %7590 = vmatprep.subr.mxu0 0.0
    %7591 = vmatpush1.xpose.msra.mxu0 0.0
    %7592 = vmatprep.subr.mxu0 0.0
    %7593 = vmatpush1.xpose.msra.mxu0 0.0
    %7594 = vmatprep.subr.mxu0 %v254
    %7595 = vmatpush1.xpose.msra.mxu0 %v253
    %7596 = vmatprep.subr.mxu0 0.0
    %7597 = vmatpush2.xpose.msra.mxu0 0.0
    %7598 = vmatprep.subr.mxu0 0.0
    %7599 = vmatpush2.xpose.msra.mxu0 0.0
    %7600 = vmatprep.subr.mxu0 0.0
    %7601 = vmatpush2.xpose.msra.mxu0 0.0
    %7602 = vmatprep.subr.mxu0 0.0
    %7603 = vmatpush2.xpose.msra.mxu0 0.0
    %7604 = vmatprep.subr.mxu0 0.0
    %7605 = vmatpush2.xpose.msra.mxu0 0.0
    %7606 = vmatprep.subr.mxu0 0.0
    %7607 = vmatpush2.xpose.msra.mxu0 0.0
    %7608 = vmatprep.subr.mxu0 0.0
    %7609 = vmatpush2.xpose.msra.mxu0 0.0
    %7610 = vmatprep.subr.mxu0 0.0
    %7611 = vmatpush2.xpose.msra.mxu0 0.0
    %7612 = vmatprep.subr.mxu0 0.0
    %7613 = vmatpush2.xpose.msra.mxu0 0.0
    %7614 = vmatprep.subr.mxu0 0.0
    %7615 = vmatpush2.xpose.msra.mxu0 0.0
    %7616 = vmatprep.subr.mxu0 0.0
    %7617 = vmatpush2.xpose.msra.mxu0 0.0
    %7618 = vmatprep.subr.mxu0 0.0
    %7619 = vmatpush2.xpose.msra.mxu0 0.0
    %7620 = vmatprep.subr.mxu0 0.0
    %7621 = vmatpush2.xpose.msra.mxu0 0.0
    %7622 = vmatprep.subr.mxu0 0.0
    %7623 = vmatpush2.xpose.msra.mxu0 0.0
    %7624 = vmatprep.subr.mxu0 0.0
    %7625 = vmatpush2.xpose.msra.mxu0 0.0
    %7626 = vmatprep.subr.mxu0 0.0
    %7627 = vmatpush2.xpose.msra.mxu0 0.0
    %7628 = vmatprep.mubr.f32.mxu0 %v1107
    %7629 = vmatmul.mubr.f32.gmra.mxu0 %v1105
    %v7630 = vpop.f32.mrf.mxu0
    %v7631 = vadd.f32 %v7561, %v7630
    %v7632 = vpop.f32.mrf.mxu0
    %7633 = vdwg.mxu0
    %7634 = vmatprep.subr.mxu0 0.0
    %7635 = vmatpush1.xpose.msra.mxu0 0.0
    %7636 = vmatprep.subr.mxu0 0.0
    %7637 = vmatpush1.xpose.msra.mxu0 0.0
    %7638 = vmatprep.subr.mxu0 0.0
    %7639 = vmatpush1.xpose.msra.mxu0 0.0
    %7640 = vmatprep.subr.mxu0 0.0
    %7641 = vmatpush1.xpose.msra.mxu0 0.0
    %7642 = vmatprep.subr.mxu0 0.0
    %7643 = vmatpush1.xpose.msra.mxu0 0.0
    %7644 = vmatprep.subr.mxu0 0.0
    %7645 = vmatpush1.xpose.msra.mxu0 0.0
    %7646 = vmatprep.subr.mxu0 0.0
    %7647 = vmatpush1.xpose.msra.mxu0 0.0
    %7648 = vmatprep.subr.mxu0 0.0
    %7649 = vmatpush1.xpose.msra.mxu0 0.0
    %7650 = vmatprep.subr.mxu0 0.0
    %7651 = vmatpush1.xpose.msra.mxu0 0.0
    %7652 = vmatprep.subr.mxu0 0.0
    %7653 = vmatpush1.xpose.msra.mxu0 0.0
    %7654 = vmatprep.subr.mxu0 0.0
    %7655 = vmatpush1.xpose.msra.mxu0 0.0
    %7656 = vmatprep.subr.mxu0 0.0
    %7657 = vmatpush1.xpose.msra.mxu0 0.0
    %7658 = vmatprep.subr.mxu0 0.0
    %7659 = vmatpush1.xpose.msra.mxu0 0.0
    %7660 = vmatprep.subr.mxu0 0.0
    %7661 = vmatpush1.xpose.msra.mxu0 0.0
    %7662 = vmatprep.subr.mxu0 0.0
    %7663 = vmatpush1.xpose.msra.mxu0 0.0
    %7664 = vmatprep.subr.mxu0 %v256
    %7665 = vmatpush1.xpose.msra.mxu0 %v255
    %7666 = vmatprep.subr.mxu0 0.0
    %7667 = vmatpush2.xpose.msra.mxu0 0.0
    %7668 = vmatprep.subr.mxu0 0.0
    %7669 = vmatpush2.xpose.msra.mxu0 0.0
    %7670 = vmatprep.subr.mxu0 0.0
    %7671 = vmatpush2.xpose.msra.mxu0 0.0
    %7672 = vmatprep.subr.mxu0 0.0
    %7673 = vmatpush2.xpose.msra.mxu0 0.0
    %7674 = vmatprep.subr.mxu0 0.0
    %7675 = vmatpush2.xpose.msra.mxu0 0.0
    %7676 = vmatprep.subr.mxu0 0.0
    %7677 = vmatpush2.xpose.msra.mxu0 0.0
    %7678 = vmatprep.subr.mxu0 0.0
    %7679 = vmatpush2.xpose.msra.mxu0 0.0
    %7680 = vmatprep.subr.mxu0 0.0
    %7681 = vmatpush2.xpose.msra.mxu0 0.0
    %7682 = vmatprep.subr.mxu0 0.0
    %7683 = vmatpush2.xpose.msra.mxu0 0.0
    %7684 = vmatprep.subr.mxu0 0.0
    %7685 = vmatpush2.xpose.msra.mxu0 0.0
    %7686 = vmatprep.subr.mxu0 0.0
    %7687 = vmatpush2.xpose.msra.mxu0 0.0
    %7688 = vmatprep.subr.mxu0 0.0
    %7689 = vmatpush2.xpose.msra.mxu0 0.0
    %7690 = vmatprep.subr.mxu0 0.0
    %7691 = vmatpush2.xpose.msra.mxu0 0.0
    %7692 = vmatprep.subr.mxu0 0.0
    %7693 = vmatpush2.xpose.msra.mxu0 0.0
    %7694 = vmatprep.subr.mxu0 0.0
    %7695 = vmatpush2.xpose.msra.mxu0 0.0
    %7696 = vmatprep.subr.mxu0 0.0
    %7697 = vmatpush2.xpose.msra.mxu0 0.0
    %7698 = vmatprep.mubr.f32.mxu0 %v1123
    %7699 = vmatmul.mubr.f32.gmra.mxu0 %v1115
    %v7700 = vpop.f32.mrf.mxu0
    %v7701 = vadd.f32 %v7631, %v7700
    %v7702 = vpop.f32.mrf.mxu0
    %7703 = vdwg.mxu0
    %7704 = vmatprep.subr.mxu0 0.0
    %7705 = vmatpush1.xpose.msra.mxu0 0.0
    %7706 = vmatprep.subr.mxu0 0.0
    %7707 = vmatpush1.xpose.msra.mxu0 0.0
    %7708 = vmatprep.subr.mxu0 0.0
    %7709 = vmatpush1.xpose.msra.mxu0 0.0
    %7710 = vmatprep.subr.mxu0 0.0
    %7711 = vmatpush1.xpose.msra.mxu0 0.0
    %7712 = vmatprep.subr.mxu0 0.0
    %7713 = vmatpush1.xpose.msra.mxu0 0.0
    %7714 = vmatprep.subr.mxu0 0.0
    %7715 = vmatpush1.xpose.msra.mxu0 0.0
    %7716 = vmatprep.subr.mxu0 0.0
    %7717 = vmatpush1.xpose.msra.mxu0 0.0
    %7718 = vmatprep.subr.mxu0 0.0
    %7719 = vmatpush1.xpose.msra.mxu0 0.0
    %7720 = vmatprep.subr.mxu0 0.0
    %7721 = vmatpush1.xpose.msra.mxu0 0.0
    %7722 = vmatprep.subr.mxu0 0.0
    %7723 = vmatpush1.xpose.msra.mxu0 0.0
    %7724 = vmatprep.subr.mxu0 0.0
    %7725 = vmatpush1.xpose.msra.mxu0 0.0
    %7726 = vmatprep.subr.mxu0 0.0
    %7727 = vmatpush1.xpose.msra.mxu0 0.0
    %7728 = vmatprep.subr.mxu0 0.0
    %7729 = vmatpush1.xpose.msra.mxu0 0.0
    %7730 = vmatprep.subr.mxu0 0.0
    %7731 = vmatpush1.xpose.msra.mxu0 0.0
    %7732 = vmatprep.subr.mxu0 0.0
    %7733 = vmatpush1.xpose.msra.mxu0 0.0
    %7734 = vmatprep.subr.mxu0 %v258
    %7735 = vmatpush1.xpose.msra.mxu0 %v257
    %7736 = vmatprep.subr.mxu0 0.0
    %7737 = vmatpush2.xpose.msra.mxu0 0.0
    %7738 = vmatprep.subr.mxu0 0.0
    %7739 = vmatpush2.xpose.msra.mxu0 0.0
    %7740 = vmatprep.subr.mxu0 0.0
    %7741 = vmatpush2.xpose.msra.mxu0 0.0
    %7742 = vmatprep.subr.mxu0 0.0
    %7743 = vmatpush2.xpose.msra.mxu0 0.0
    %7744 = vmatprep.subr.mxu0 0.0
    %7745 = vmatpush2.xpose.msra.mxu0 0.0
    %7746 = vmatprep.subr.mxu0 0.0
    %7747 = vmatpush2.xpose.msra.mxu0 0.0
    %7748 = vmatprep.subr.mxu0 0.0
    %7749 = vmatpush2.xpose.msra.mxu0 0.0
    %7750 = vmatprep.subr.mxu0 0.0
    %7751 = vmatpush2.xpose.msra.mxu0 0.0
    %7752 = vmatprep.subr.mxu0 0.0
    %7753 = vmatpush2.xpose.msra.mxu0 0.0
    %7754 = vmatprep.subr.mxu0 0.0
    %7755 = vmatpush2.xpose.msra.mxu0 0.0
    %7756 = vmatprep.subr.mxu0 0.0
    %7757 = vmatpush2.xpose.msra.mxu0 0.0
    %7758 = vmatprep.subr.mxu0 0.0
    %7759 = vmatpush2.xpose.msra.mxu0 0.0
    %7760 = vmatprep.subr.mxu0 0.0
    %7761 = vmatpush2.xpose.msra.mxu0 0.0
    %7762 = vmatprep.subr.mxu0 0.0
    %7763 = vmatpush2.xpose.msra.mxu0 0.0
    %7764 = vmatprep.subr.mxu0 0.0
    %7765 = vmatpush2.xpose.msra.mxu0 0.0
    %7766 = vmatprep.subr.mxu0 0.0
    %7767 = vmatpush2.xpose.msra.mxu0 0.0
    %7768 = vmatprep.mubr.f32.mxu0 %v1124
    %7769 = vmatmul.mubr.f32.gmra.mxu0 %v1122
    %v7770 = vpop.f32.mrf.mxu0
    %v7771 = vadd.f32 %v7701, %v7770
    %v7772 = vpop.f32.mrf.mxu0
    %7773 = vdwg.mxu0
    %7774 = vmatprep.subr.mxu0 0.0
    %7775 = vmatpush1.xpose.msra.mxu0 0.0
    %7776 = vmatprep.subr.mxu0 0.0
    %7777 = vmatpush1.xpose.msra.mxu0 0.0
    %7778 = vmatprep.subr.mxu0 0.0
    %7779 = vmatpush1.xpose.msra.mxu0 0.0
    %7780 = vmatprep.subr.mxu0 0.0
    %7781 = vmatpush1.xpose.msra.mxu0 0.0
    %7782 = vmatprep.subr.mxu0 0.0
    %7783 = vmatpush1.xpose.msra.mxu0 0.0
    %7784 = vmatprep.subr.mxu0 0.0
    %7785 = vmatpush1.xpose.msra.mxu0 0.0
    %7786 = vmatprep.subr.mxu0 0.0
    %7787 = vmatpush1.xpose.msra.mxu0 0.0
    %7788 = vmatprep.subr.mxu0 0.0
    %7789 = vmatpush1.xpose.msra.mxu0 0.0
    %7790 = vmatprep.subr.mxu0 0.0
    %7791 = vmatpush1.xpose.msra.mxu0 0.0
    %7792 = vmatprep.subr.mxu0 0.0
    %7793 = vmatpush1.xpose.msra.mxu0 0.0
    %7794 = vmatprep.subr.mxu0 0.0
    %7795 = vmatpush1.xpose.msra.mxu0 0.0
    %7796 = vmatprep.subr.mxu0 0.0
    %7797 = vmatpush1.xpose.msra.mxu0 0.0
    %7798 = vmatprep.subr.mxu0 0.0
    %7799 = vmatpush1.xpose.msra.mxu0 0.0
    %7800 = vmatprep.subr.mxu0 0.0
    %7801 = vmatpush1.xpose.msra.mxu0 0.0
    %7802 = vmatprep.subr.mxu0 0.0
    %7803 = vmatpush1.xpose.msra.mxu0 0.0
    %7804 = vmatprep.subr.mxu0 %v260
    %7805 = vmatpush1.xpose.msra.mxu0 %v259
    %7806 = vmatprep.subr.mxu0 0.0
    %7807 = vmatpush2.xpose.msra.mxu0 0.0
    %7808 = vmatprep.subr.mxu0 0.0
    %7809 = vmatpush2.xpose.msra.mxu0 0.0
    %7810 = vmatprep.subr.mxu0 0.0
    %7811 = vmatpush2.xpose.msra.mxu0 0.0
    %7812 = vmatprep.subr.mxu0 0.0
    %7813 = vmatpush2.xpose.msra.mxu0 0.0
    %7814 = vmatprep.subr.mxu0 0.0
    %7815 = vmatpush2.xpose.msra.mxu0 0.0
    %7816 = vmatprep.subr.mxu0 0.0
    %7817 = vmatpush2.xpose.msra.mxu0 0.0
    %7818 = vmatprep.subr.mxu0 0.0
    %7819 = vmatpush2.xpose.msra.mxu0 0.0
    %7820 = vmatprep.subr.mxu0 0.0
    %7821 = vmatpush2.xpose.msra.mxu0 0.0
    %7822 = vmatprep.subr.mxu0 0.0
    %7823 = vmatpush2.xpose.msra.mxu0 0.0
    %7824 = vmatprep.subr.mxu0 0.0
    %7825 = vmatpush2.xpose.msra.mxu0 0.0
    %7826 = vmatprep.subr.mxu0 0.0
    %7827 = vmatpush2.xpose.msra.mxu0 0.0
    %7828 = vmatprep.subr.mxu0 0.0
    %7829 = vmatpush2.xpose.msra.mxu0 0.0
    %7830 = vmatprep.subr.mxu0 0.0
    %7831 = vmatpush2.xpose.msra.mxu0 0.0
    %7832 = vmatprep.subr.mxu0 0.0
    %7833 = vmatpush2.xpose.msra.mxu0 0.0
    %7834 = vmatprep.subr.mxu0 0.0
    %7835 = vmatpush2.xpose.msra.mxu0 0.0
    %7836 = vmatprep.subr.mxu0 0.0
    %7837 = vmatpush2.xpose.msra.mxu0 0.0
    %7838 = vmatprep.mubr.f32.mxu0 %v1140
    %7839 = vmatmul.mubr.f32.gmra.mxu0 %v1132
    %v7840 = vpop.f32.mrf.mxu0
    %v7841 = vadd.f32 %v7771, %v7840
    %v7842 = vpop.f32.mrf.mxu0
    %7843 = vdwg.mxu0
    %7844 = vmatprep.subr.mxu0 0.0
    %7845 = vmatpush1.xpose.msra.mxu0 0.0
    %7846 = vmatprep.subr.mxu0 0.0
    %7847 = vmatpush1.xpose.msra.mxu0 0.0
    %7848 = vmatprep.subr.mxu0 0.0
    %7849 = vmatpush1.xpose.msra.mxu0 0.0
    %7850 = vmatprep.subr.mxu0 0.0
    %7851 = vmatpush1.xpose.msra.mxu0 0.0
    %7852 = vmatprep.subr.mxu0 0.0
    %7853 = vmatpush1.xpose.msra.mxu0 0.0
    %7854 = vmatprep.subr.mxu0 0.0
    %7855 = vmatpush1.xpose.msra.mxu0 0.0
    %7856 = vmatprep.subr.mxu0 0.0
    %7857 = vmatpush1.xpose.msra.mxu0 0.0
    %7858 = vmatprep.subr.mxu0 0.0
    %7859 = vmatpush1.xpose.msra.mxu0 0.0
    %7860 = vmatprep.subr.mxu0 0.0
    %7861 = vmatpush1.xpose.msra.mxu0 0.0
    %7862 = vmatprep.subr.mxu0 0.0
    %7863 = vmatpush1.xpose.msra.mxu0 0.0
    %7864 = vmatprep.subr.mxu0 0.0
    %7865 = vmatpush1.xpose.msra.mxu0 0.0
    %7866 = vmatprep.subr.mxu0 0.0
    %7867 = vmatpush1.xpose.msra.mxu0 0.0
    %7868 = vmatprep.subr.mxu0 0.0
    %7869 = vmatpush1.xpose.msra.mxu0 0.0
    %7870 = vmatprep.subr.mxu0 0.0
    %7871 = vmatpush1.xpose.msra.mxu0 0.0
    %7872 = vmatprep.subr.mxu0 0.0
    %7873 = vmatpush1.xpose.msra.mxu0 0.0
    %7874 = vmatprep.subr.mxu0 %v262
    %7875 = vmatpush1.xpose.msra.mxu0 %v261
    %7876 = vmatprep.subr.mxu0 0.0
    %7877 = vmatpush2.xpose.msra.mxu0 0.0
    %7878 = vmatprep.subr.mxu0 0.0
    %7879 = vmatpush2.xpose.msra.mxu0 0.0
    %7880 = vmatprep.subr.mxu0 0.0
    %7881 = vmatpush2.xpose.msra.mxu0 0.0
    %7882 = vmatprep.subr.mxu0 0.0
    %7883 = vmatpush2.xpose.msra.mxu0 0.0
    %7884 = vmatprep.subr.mxu0 0.0
    %7885 = vmatpush2.xpose.msra.mxu0 0.0
    %7886 = vmatprep.subr.mxu0 0.0
    %7887 = vmatpush2.xpose.msra.mxu0 0.0
    %7888 = vmatprep.subr.mxu0 0.0
    %7889 = vmatpush2.xpose.msra.mxu0 0.0
    %7890 = vmatprep.subr.mxu0 0.0
    %7891 = vmatpush2.xpose.msra.mxu0 0.0
    %7892 = vmatprep.subr.mxu0 0.0
    %7893 = vmatpush2.xpose.msra.mxu0 0.0
    %7894 = vmatprep.subr.mxu0 0.0
    %7895 = vmatpush2.xpose.msra.mxu0 0.0
    %7896 = vmatprep.subr.mxu0 0.0
    %7897 = vmatpush2.xpose.msra.mxu0 0.0
    %7898 = vmatprep.subr.mxu0 0.0
    %7899 = vmatpush2.xpose.msra.mxu0 0.0
    %7900 = vmatprep.subr.mxu0 0.0
    %7901 = vmatpush2.xpose.msra.mxu0 0.0
    %7902 = vmatprep.subr.mxu0 0.0
    %7903 = vmatpush2.xpose.msra.mxu0 0.0
    %7904 = vmatprep.subr.mxu0 0.0
    %7905 = vmatpush2.xpose.msra.mxu0 0.0
    %7906 = vmatprep.subr.mxu0 0.0
    %7907 = vmatpush2.xpose.msra.mxu0 0.0
    %7908 = vmatprep.mubr.f32.mxu0 %v1141
    %7909 = vmatmul.mubr.f32.gmra.mxu0 %v1139
    %v7910 = vpop.f32.mrf.mxu0
    %v7911 = vadd.f32 %v7841, %v7910
    %v7912 = vpop.f32.mrf.mxu0
    %7913 = vdwg.mxu0
    %7914 = vmatprep.subr.mxu0 0.0
    %7915 = vmatpush1.xpose.msra.mxu0 0.0
    %7916 = vmatprep.subr.mxu0 0.0
    %7917 = vmatpush1.xpose.msra.mxu0 0.0
    %7918 = vmatprep.subr.mxu0 0.0
    %7919 = vmatpush1.xpose.msra.mxu0 0.0
    %7920 = vmatprep.subr.mxu0 0.0
    %7921 = vmatpush1.xpose.msra.mxu0 0.0
    %7922 = vmatprep.subr.mxu0 0.0
    %7923 = vmatpush1.xpose.msra.mxu0 0.0
    %7924 = vmatprep.subr.mxu0 0.0
    %7925 = vmatpush1.xpose.msra.mxu0 0.0
    %7926 = vmatprep.subr.mxu0 0.0
    %7927 = vmatpush1.xpose.msra.mxu0 0.0
    %7928 = vmatprep.subr.mxu0 0.0
    %7929 = vmatpush1.xpose.msra.mxu0 0.0
    %7930 = vmatprep.subr.mxu0 0.0
    %7931 = vmatpush1.xpose.msra.mxu0 0.0
    %7932 = vmatprep.subr.mxu0 0.0
    %7933 = vmatpush1.xpose.msra.mxu0 0.0
    %7934 = vmatprep.subr.mxu0 0.0
    %7935 = vmatpush1.xpose.msra.mxu0 0.0
    %7936 = vmatprep.subr.mxu0 0.0
    %7937 = vmatpush1.xpose.msra.mxu0 0.0
    %7938 = vmatprep.subr.mxu0 0.0
    %7939 = vmatpush1.xpose.msra.mxu0 0.0
    %7940 = vmatprep.subr.mxu0 0.0
    %7941 = vmatpush1.xpose.msra.mxu0 0.0
    %7942 = vmatprep.subr.mxu0 0.0
    %7943 = vmatpush1.xpose.msra.mxu0 0.0
    %7944 = vmatprep.subr.mxu0 %v264
    %7945 = vmatpush1.xpose.msra.mxu0 %v263
    %7946 = vmatprep.subr.mxu0 0.0
    %7947 = vmatpush2.xpose.msra.mxu0 0.0
    %7948 = vmatprep.subr.mxu0 0.0
    %7949 = vmatpush2.xpose.msra.mxu0 0.0
    %7950 = vmatprep.subr.mxu0 0.0
    %7951 = vmatpush2.xpose.msra.mxu0 0.0
    %7952 = vmatprep.subr.mxu0 0.0
    %7953 = vmatpush2.xpose.msra.mxu0 0.0
    %7954 = vmatprep.subr.mxu0 0.0
    %7955 = vmatpush2.xpose.msra.mxu0 0.0
    %7956 = vmatprep.subr.mxu0 0.0
    %7957 = vmatpush2.xpose.msra.mxu0 0.0
    %7958 = vmatprep.subr.mxu0 0.0
    %7959 = vmatpush2.xpose.msra.mxu0 0.0
    %7960 = vmatprep.subr.mxu0 0.0
    %7961 = vmatpush2.xpose.msra.mxu0 0.0
    %7962 = vmatprep.subr.mxu0 0.0
    %7963 = vmatpush2.xpose.msra.mxu0 0.0
    %7964 = vmatprep.subr.mxu0 0.0
    %7965 = vmatpush2.xpose.msra.mxu0 0.0
    %7966 = vmatprep.subr.mxu0 0.0
    %7967 = vmatpush2.xpose.msra.mxu0 0.0
    %7968 = vmatprep.subr.mxu0 0.0
    %7969 = vmatpush2.xpose.msra.mxu0 0.0
    %7970 = vmatprep.subr.mxu0 0.0
    %7971 = vmatpush2.xpose.msra.mxu0 0.0
    %7972 = vmatprep.subr.mxu0 0.0
    %7973 = vmatpush2.xpose.msra.mxu0 0.0
    %7974 = vmatprep.subr.mxu0 0.0
    %7975 = vmatpush2.xpose.msra.mxu0 0.0
    %7976 = vmatprep.subr.mxu0 0.0
    %7977 = vmatpush2.xpose.msra.mxu0 0.0
    %7978 = vmatprep.mubr.f32.mxu0 %v1157
    %7979 = vmatmul.mubr.f32.gmra.mxu0 %v1149
    %v7980 = vpop.f32.mrf.mxu0
    %v7981 = vadd.f32 %v7911, %v7980
    %v7982 = vpop.f32.mrf.mxu0
    %7983 = vdwg.mxu0
    %7984 = vmatprep.subr.mxu0 0.0
    %7985 = vmatpush1.xpose.msra.mxu0 0.0
    %7986 = vmatprep.subr.mxu0 0.0
    %7987 = vmatpush1.xpose.msra.mxu0 0.0
    %7988 = vmatprep.subr.mxu0 0.0
    %7989 = vmatpush1.xpose.msra.mxu0 0.0
    %7990 = vmatprep.subr.mxu0 0.0
    %7991 = vmatpush1.xpose.msra.mxu0 0.0
    %7992 = vmatprep.subr.mxu0 0.0
    %7993 = vmatpush1.xpose.msra.mxu0 0.0
    %7994 = vmatprep.subr.mxu0 0.0
    %7995 = vmatpush1.xpose.msra.mxu0 0.0
    %7996 = vmatprep.subr.mxu0 0.0
    %7997 = vmatpush1.xpose.msra.mxu0 0.0
    %7998 = vmatprep.subr.mxu0 0.0
    %7999 = vmatpush1.xpose.msra.mxu0 0.0
    %8000 = vmatprep.subr.mxu0 0.0
    %8001 = vmatpush1.xpose.msra.mxu0 0.0
    %8002 = vmatprep.subr.mxu0 0.0
    %8003 = vmatpush1.xpose.msra.mxu0 0.0
    %8004 = vmatprep.subr.mxu0 0.0
    %8005 = vmatpush1.xpose.msra.mxu0 0.0
    %8006 = vmatprep.subr.mxu0 0.0
    %8007 = vmatpush1.xpose.msra.mxu0 0.0
    %8008 = vmatprep.subr.mxu0 0.0
    %8009 = vmatpush1.xpose.msra.mxu0 0.0
    %8010 = vmatprep.subr.mxu0 0.0
    %8011 = vmatpush1.xpose.msra.mxu0 0.0
    %8012 = vmatprep.subr.mxu0 0.0
    %8013 = vmatpush1.xpose.msra.mxu0 0.0
    %8014 = vmatprep.subr.mxu0 %v266
    %8015 = vmatpush1.xpose.msra.mxu0 %v265
    %8016 = vmatprep.subr.mxu0 0.0
    %8017 = vmatpush2.xpose.msra.mxu0 0.0
    %8018 = vmatprep.subr.mxu0 0.0
    %8019 = vmatpush2.xpose.msra.mxu0 0.0
    %8020 = vmatprep.subr.mxu0 0.0
    %8021 = vmatpush2.xpose.msra.mxu0 0.0
    %8022 = vmatprep.subr.mxu0 0.0
    %8023 = vmatpush2.xpose.msra.mxu0 0.0
    %8024 = vmatprep.subr.mxu0 0.0
    %8025 = vmatpush2.xpose.msra.mxu0 0.0
    %8026 = vmatprep.subr.mxu0 0.0
    %8027 = vmatpush2.xpose.msra.mxu0 0.0
    %8028 = vmatprep.subr.mxu0 0.0
    %8029 = vmatpush2.xpose.msra.mxu0 0.0
    %8030 = vmatprep.subr.mxu0 0.0
    %8031 = vmatpush2.xpose.msra.mxu0 0.0
    %8032 = vmatprep.subr.mxu0 0.0
    %8033 = vmatpush2.xpose.msra.mxu0 0.0
    %8034 = vmatprep.subr.mxu0 0.0
    %8035 = vmatpush2.xpose.msra.mxu0 0.0
    %8036 = vmatprep.subr.mxu0 0.0
    %8037 = vmatpush2.xpose.msra.mxu0 0.0
    %8038 = vmatprep.subr.mxu0 0.0
    %8039 = vmatpush2.xpose.msra.mxu0 0.0
    %8040 = vmatprep.subr.mxu0 0.0
    %8041 = vmatpush2.xpose.msra.mxu0 0.0
    %8042 = vmatprep.subr.mxu0 0.0
    %8043 = vmatpush2.xpose.msra.mxu0 0.0
    %8044 = vmatprep.subr.mxu0 0.0
    %8045 = vmatpush2.xpose.msra.mxu0 0.0
    %8046 = vmatprep.subr.mxu0 0.0
    %8047 = vmatpush2.xpose.msra.mxu0 0.0
    %8048 = vmatprep.mubr.f32.mxu0 %v1158
    %8049 = vmatmul.mubr.f32.gmra.mxu0 %v1156
    %v8050 = vpop.f32.mrf.mxu0
    %v8051 = vadd.f32 %v7981, %v8050
    %v8052 = vpop.f32.mrf.mxu0
    %8053 = vdwg.mxu0
    %8054 = vmatprep.subr.mxu0 0.0
    %8055 = vmatpush1.xpose.msra.mxu0 0.0
    %8056 = vmatprep.subr.mxu0 0.0
    %8057 = vmatpush1.xpose.msra.mxu0 0.0
    %8058 = vmatprep.subr.mxu0 0.0
    %8059 = vmatpush1.xpose.msra.mxu0 0.0
    %8060 = vmatprep.subr.mxu0 0.0
    %8061 = vmatpush1.xpose.msra.mxu0 0.0
    %8062 = vmatprep.subr.mxu0 0.0
    %8063 = vmatpush1.xpose.msra.mxu0 0.0
    %8064 = vmatprep.subr.mxu0 0.0
    %8065 = vmatpush1.xpose.msra.mxu0 0.0
    %8066 = vmatprep.subr.mxu0 0.0
    %8067 = vmatpush1.xpose.msra.mxu0 0.0
    %8068 = vmatprep.subr.mxu0 0.0
    %8069 = vmatpush1.xpose.msra.mxu0 0.0
    %8070 = vmatprep.subr.mxu0 0.0
    %8071 = vmatpush1.xpose.msra.mxu0 0.0
    %8072 = vmatprep.subr.mxu0 0.0
    %8073 = vmatpush1.xpose.msra.mxu0 0.0
    %8074 = vmatprep.subr.mxu0 0.0
    %8075 = vmatpush1.xpose.msra.mxu0 0.0
    %8076 = vmatprep.subr.mxu0 0.0
    %8077 = vmatpush1.xpose.msra.mxu0 0.0
    %8078 = vmatprep.subr.mxu0 0.0
    %8079 = vmatpush1.xpose.msra.mxu0 0.0
    %8080 = vmatprep.subr.mxu0 0.0
    %8081 = vmatpush1.xpose.msra.mxu0 0.0
    %8082 = vmatprep.subr.mxu0 0.0
    %8083 = vmatpush1.xpose.msra.mxu0 0.0
    %8084 = vmatprep.subr.mxu0 %v268
    %8085 = vmatpush1.xpose.msra.mxu0 %v267
    %8086 = vmatprep.subr.mxu0 0.0
    %8087 = vmatpush2.xpose.msra.mxu0 0.0
    %8088 = vmatprep.subr.mxu0 0.0
    %8089 = vmatpush2.xpose.msra.mxu0 0.0
    %8090 = vmatprep.subr.mxu0 0.0
    %8091 = vmatpush2.xpose.msra.mxu0 0.0
    %8092 = vmatprep.subr.mxu0 0.0
    %8093 = vmatpush2.xpose.msra.mxu0 0.0
    %8094 = vmatprep.subr.mxu0 0.0
    %8095 = vmatpush2.xpose.msra.mxu0 0.0
    %8096 = vmatprep.subr.mxu0 0.0
    %8097 = vmatpush2.xpose.msra.mxu0 0.0
    %8098 = vmatprep.subr.mxu0 0.0
    %8099 = vmatpush2.xpose.msra.mxu0 0.0
    %8100 = vmatprep.subr.mxu0 0.0
    %8101 = vmatpush2.xpose.msra.mxu0 0.0
    %8102 = vmatprep.subr.mxu0 0.0
    %8103 = vmatpush2.xpose.msra.mxu0 0.0
    %8104 = vmatprep.subr.mxu0 0.0
    %8105 = vmatpush2.xpose.msra.mxu0 0.0
    %8106 = vmatprep.subr.mxu0 0.0
    %8107 = vmatpush2.xpose.msra.mxu0 0.0
    %8108 = vmatprep.subr.mxu0 0.0
    %8109 = vmatpush2.xpose.msra.mxu0 0.0
    %8110 = vmatprep.subr.mxu0 0.0
    %8111 = vmatpush2.xpose.msra.mxu0 0.0
    %8112 = vmatprep.subr.mxu0 0.0
    %8113 = vmatpush2.xpose.msra.mxu0 0.0
    %8114 = vmatprep.subr.mxu0 0.0
    %8115 = vmatpush2.xpose.msra.mxu0 0.0
    %8116 = vmatprep.subr.mxu0 0.0
    %8117 = vmatpush2.xpose.msra.mxu0 0.0
    %8118 = vmatprep.mubr.f32.mxu0 %v1174
    %8119 = vmatmul.mubr.f32.gmra.mxu0 %v1166
    %v8120 = vpop.f32.mrf.mxu0
    %v8121 = vadd.f32 %v8051, %v8120
    %v8122 = vpop.f32.mrf.mxu0
    %8123 = vdwg.mxu0
    %8124 = vmatprep.subr.mxu0 0.0
    %8125 = vmatpush1.xpose.msra.mxu0 0.0
    %8126 = vmatprep.subr.mxu0 0.0
    %8127 = vmatpush1.xpose.msra.mxu0 0.0
    %8128 = vmatprep.subr.mxu0 0.0
    %8129 = vmatpush1.xpose.msra.mxu0 0.0
    %8130 = vmatprep.subr.mxu0 0.0
    %8131 = vmatpush1.xpose.msra.mxu0 0.0
    %8132 = vmatprep.subr.mxu0 0.0
    %8133 = vmatpush1.xpose.msra.mxu0 0.0
    %8134 = vmatprep.subr.mxu0 0.0
    %8135 = vmatpush1.xpose.msra.mxu0 0.0
    %8136 = vmatprep.subr.mxu0 0.0
    %8137 = vmatpush1.xpose.msra.mxu0 0.0
    %8138 = vmatprep.subr.mxu0 0.0
    %8139 = vmatpush1.xpose.msra.mxu0 0.0
    %8140 = vmatprep.subr.mxu0 0.0
    %8141 = vmatpush1.xpose.msra.mxu0 0.0
    %8142 = vmatprep.subr.mxu0 0.0
    %8143 = vmatpush1.xpose.msra.mxu0 0.0
    %8144 = vmatprep.subr.mxu0 0.0
    %8145 = vmatpush1.xpose.msra.mxu0 0.0
    %8146 = vmatprep.subr.mxu0 0.0
    %8147 = vmatpush1.xpose.msra.mxu0 0.0
    %8148 = vmatprep.subr.mxu0 0.0
    %8149 = vmatpush1.xpose.msra.mxu0 0.0
    %8150 = vmatprep.subr.mxu0 0.0
    %8151 = vmatpush1.xpose.msra.mxu0 0.0
    %8152 = vmatprep.subr.mxu0 0.0
    %8153 = vmatpush1.xpose.msra.mxu0 0.0
    %8154 = vmatprep.subr.mxu0 %v270
    %8155 = vmatpush1.xpose.msra.mxu0 %v269
    %8156 = vmatprep.subr.mxu0 0.0
    %8157 = vmatpush2.xpose.msra.mxu0 0.0
    %8158 = vmatprep.subr.mxu0 0.0
    %8159 = vmatpush2.xpose.msra.mxu0 0.0
    %8160 = vmatprep.subr.mxu0 0.0
    %8161 = vmatpush2.xpose.msra.mxu0 0.0
    %8162 = vmatprep.subr.mxu0 0.0
    %8163 = vmatpush2.xpose.msra.mxu0 0.0
    %8164 = vmatprep.subr.mxu0 0.0
    %8165 = vmatpush2.xpose.msra.mxu0 0.0
    %8166 = vmatprep.subr.mxu0 0.0
    %8167 = vmatpush2.xpose.msra.mxu0 0.0
    %8168 = vmatprep.subr.mxu0 0.0
    %8169 = vmatpush2.xpose.msra.mxu0 0.0
    %8170 = vmatprep.subr.mxu0 0.0
    %8171 = vmatpush2.xpose.msra.mxu0 0.0
    %8172 = vmatprep.subr.mxu0 0.0
    %8173 = vmatpush2.xpose.msra.mxu0 0.0
    %8174 = vmatprep.subr.mxu0 0.0
    %8175 = vmatpush2.xpose.msra.mxu0 0.0
    %8176 = vmatprep.subr.mxu0 0.0
    %8177 = vmatpush2.xpose.msra.mxu0 0.0
    %8178 = vmatprep.subr.mxu0 0.0
    %8179 = vmatpush2.xpose.msra.mxu0 0.0
    %8180 = vmatprep.subr.mxu0 0.0
    %8181 = vmatpush2.xpose.msra.mxu0 0.0
    %8182 = vmatprep.subr.mxu0 0.0
    %8183 = vmatpush2.xpose.msra.mxu0 0.0
    %8184 = vmatprep.subr.mxu0 0.0
    %8185 = vmatpush2.xpose.msra.mxu0 0.0
    %8186 = vmatprep.subr.mxu0 0.0
    %8187 = vmatpush2.xpose.msra.mxu0 0.0
    %8188 = vmatprep.mubr.f32.mxu0 %v1175
    %8189 = vmatmul.mubr.f32.gmra.mxu0 %v1173
    %v8190 = vpop.f32.mrf.mxu0
    %v8191 = vadd.f32 %v8121, %v8190
    %v8192 = vpop.f32.mrf.mxu0
    %8193 = vdwg.mxu0
    %8194 = vmatprep.subr.mxu0 0.0
    %8195 = vmatpush1.xpose.msra.mxu0 0.0
    %8196 = vmatprep.subr.mxu0 0.0
    %8197 = vmatpush1.xpose.msra.mxu0 0.0
    %8198 = vmatprep.subr.mxu0 0.0
    %8199 = vmatpush1.xpose.msra.mxu0 0.0
    %8200 = vmatprep.subr.mxu0 0.0
    %8201 = vmatpush1.xpose.msra.mxu0 0.0
    %8202 = vmatprep.subr.mxu0 0.0
    %8203 = vmatpush1.xpose.msra.mxu0 0.0
    %8204 = vmatprep.subr.mxu0 0.0
    %8205 = vmatpush1.xpose.msra.mxu0 0.0
    %8206 = vmatprep.subr.mxu0 0.0
    %8207 = vmatpush1.xpose.msra.mxu0 0.0
    %8208 = vmatprep.subr.mxu0 0.0
    %8209 = vmatpush1.xpose.msra.mxu0 0.0
    %8210 = vmatprep.subr.mxu0 0.0
    %8211 = vmatpush1.xpose.msra.mxu0 0.0
    %8212 = vmatprep.subr.mxu0 0.0
    %8213 = vmatpush1.xpose.msra.mxu0 0.0
    %8214 = vmatprep.subr.mxu0 0.0
    %8215 = vmatpush1.xpose.msra.mxu0 0.0
    %8216 = vmatprep.subr.mxu0 0.0
    %8217 = vmatpush1.xpose.msra.mxu0 0.0
    %8218 = vmatprep.subr.mxu0 0.0
    %8219 = vmatpush1.xpose.msra.mxu0 0.0
    %8220 = vmatprep.subr.mxu0 0.0
    %8221 = vmatpush1.xpose.msra.mxu0 0.0
    %8222 = vmatprep.subr.mxu0 0.0
    %8223 = vmatpush1.xpose.msra.mxu0 0.0
    %8224 = vmatprep.subr.mxu0 %v272
    %8225 = vmatpush1.xpose.msra.mxu0 %v271
    %8226 = vmatprep.subr.mxu0 0.0
    %8227 = vmatpush2.xpose.msra.mxu0 0.0
    %8228 = vmatprep.subr.mxu0 0.0
    %8229 = vmatpush2.xpose.msra.mxu0 0.0
    %8230 = vmatprep.subr.mxu0 0.0
    %8231 = vmatpush2.xpose.msra.mxu0 0.0
    %8232 = vmatprep.subr.mxu0 0.0
    %8233 = vmatpush2.xpose.msra.mxu0 0.0
    %8234 = vmatprep.subr.mxu0 0.0
    %8235 = vmatpush2.xpose.msra.mxu0 0.0
    %8236 = vmatprep.subr.mxu0 0.0
    %8237 = vmatpush2.xpose.msra.mxu0 0.0
    %8238 = vmatprep.subr.mxu0 0.0
    %8239 = vmatpush2.xpose.msra.mxu0 0.0
    %8240 = vmatprep.subr.mxu0 0.0
    %8241 = vmatpush2.xpose.msra.mxu0 0.0
    %8242 = vmatprep.subr.mxu0 0.0
    %8243 = vmatpush2.xpose.msra.mxu0 0.0
    %8244 = vmatprep.subr.mxu0 0.0
    %8245 = vmatpush2.xpose.msra.mxu0 0.0
    %8246 = vmatprep.subr.mxu0 0.0
    %8247 = vmatpush2.xpose.msra.mxu0 0.0
    %8248 = vmatprep.subr.mxu0 0.0
    %8249 = vmatpush2.xpose.msra.mxu0 0.0
    %8250 = vmatprep.subr.mxu0 0.0
    %8251 = vmatpush2.xpose.msra.mxu0 0.0
    %8252 = vmatprep.subr.mxu0 0.0
    %8253 = vmatpush2.xpose.msra.mxu0 0.0
    %8254 = vmatprep.subr.mxu0 0.0
    %8255 = vmatpush2.xpose.msra.mxu0 0.0
    %8256 = vmatprep.subr.mxu0 0.0
    %8257 = vmatpush2.xpose.msra.mxu0 0.0
    %8258 = vmatprep.mubr.f32.mxu0 %v1191
    %8259 = vmatmul.mubr.f32.gmra.mxu0 %v1183
    %v8260 = vpop.f32.mrf.mxu0
    %v8261 = vadd.f32 %v8191, %v8260
    %v8262 = vpop.f32.mrf.mxu0
    %8263 = vdwg.mxu0
    %8264 = vmatprep.subr.mxu0 0.0
    %8265 = vmatpush1.xpose.msra.mxu0 0.0
    %8266 = vmatprep.subr.mxu0 0.0
    %8267 = vmatpush1.xpose.msra.mxu0 0.0
    %8268 = vmatprep.subr.mxu0 0.0
    %8269 = vmatpush1.xpose.msra.mxu0 0.0
    %8270 = vmatprep.subr.mxu0 0.0
    %8271 = vmatpush1.xpose.msra.mxu0 0.0
    %8272 = vmatprep.subr.mxu0 0.0
    %8273 = vmatpush1.xpose.msra.mxu0 0.0
    %8274 = vmatprep.subr.mxu0 0.0
    %8275 = vmatpush1.xpose.msra.mxu0 0.0
    %8276 = vmatprep.subr.mxu0 0.0
    %8277 = vmatpush1.xpose.msra.mxu0 0.0
    %8278 = vmatprep.subr.mxu0 0.0
    %8279 = vmatpush1.xpose.msra.mxu0 0.0
    %8280 = vmatprep.subr.mxu0 0.0
    %8281 = vmatpush1.xpose.msra.mxu0 0.0
    %8282 = vmatprep.subr.mxu0 0.0
    %8283 = vmatpush1.xpose.msra.mxu0 0.0
    %8284 = vmatprep.subr.mxu0 0.0
    %8285 = vmatpush1.xpose.msra.mxu0 0.0
    %8286 = vmatprep.subr.mxu0 0.0
    %8287 = vmatpush1.xpose.msra.mxu0 0.0
    %8288 = vmatprep.subr.mxu0 0.0
    %8289 = vmatpush1.xpose.msra.mxu0 0.0
    %8290 = vmatprep.subr.mxu0 0.0
    %8291 = vmatpush1.xpose.msra.mxu0 0.0
    %8292 = vmatprep.subr.mxu0 0.0
    %8293 = vmatpush1.xpose.msra.mxu0 0.0
    %8294 = vmatprep.subr.mxu0 %v274
    %8295 = vmatpush1.xpose.msra.mxu0 %v273
    %8296 = vmatprep.subr.mxu0 0.0
    %8297 = vmatpush2.xpose.msra.mxu0 0.0
    %8298 = vmatprep.subr.mxu0 0.0
    %8299 = vmatpush2.xpose.msra.mxu0 0.0
    %8300 = vmatprep.subr.mxu0 0.0
    %8301 = vmatpush2.xpose.msra.mxu0 0.0
    %8302 = vmatprep.subr.mxu0 0.0
    %8303 = vmatpush2.xpose.msra.mxu0 0.0
    %8304 = vmatprep.subr.mxu0 0.0
    %8305 = vmatpush2.xpose.msra.mxu0 0.0
    %8306 = vmatprep.subr.mxu0 0.0
    %8307 = vmatpush2.xpose.msra.mxu0 0.0
    %8308 = vmatprep.subr.mxu0 0.0
    %8309 = vmatpush2.xpose.msra.mxu0 0.0
    %8310 = vmatprep.subr.mxu0 0.0
    %8311 = vmatpush2.xpose.msra.mxu0 0.0
    %8312 = vmatprep.subr.mxu0 0.0
    %8313 = vmatpush2.xpose.msra.mxu0 0.0
    %8314 = vmatprep.subr.mxu0 0.0
    %8315 = vmatpush2.xpose.msra.mxu0 0.0
    %8316 = vmatprep.subr.mxu0 0.0
    %8317 = vmatpush2.xpose.msra.mxu0 0.0
    %8318 = vmatprep.subr.mxu0 0.0
    %8319 = vmatpush2.xpose.msra.mxu0 0.0
    %8320 = vmatprep.subr.mxu0 0.0
    %8321 = vmatpush2.xpose.msra.mxu0 0.0
    %8322 = vmatprep.subr.mxu0 0.0
    %8323 = vmatpush2.xpose.msra.mxu0 0.0
    %8324 = vmatprep.subr.mxu0 0.0
    %8325 = vmatpush2.xpose.msra.mxu0 0.0
    %8326 = vmatprep.subr.mxu0 0.0
    %8327 = vmatpush2.xpose.msra.mxu0 0.0
    %8328 = vmatprep.mubr.f32.mxu0 %v1192
    %8329 = vmatmul.mubr.f32.gmra.mxu0 %v1190
    %v8330 = vpop.f32.mrf.mxu0
    %v8331 = vadd.f32 %v8261, %v8330
    %v8332 = vpop.f32.mrf.mxu0
    %8333 = vdwg.mxu0
    %8334 = vmatprep.subr.mxu0 0.0
    %8335 = vmatpush1.xpose.msra.mxu0 0.0
    %8336 = vmatprep.subr.mxu0 0.0
    %8337 = vmatpush1.xpose.msra.mxu0 0.0
    %8338 = vmatprep.subr.mxu0 0.0
    %8339 = vmatpush1.xpose.msra.mxu0 0.0
    %8340 = vmatprep.subr.mxu0 0.0
    %8341 = vmatpush1.xpose.msra.mxu0 0.0
    %8342 = vmatprep.subr.mxu0 0.0
    %8343 = vmatpush1.xpose.msra.mxu0 0.0
    %8344 = vmatprep.subr.mxu0 0.0
    %8345 = vmatpush1.xpose.msra.mxu0 0.0
    %8346 = vmatprep.subr.mxu0 0.0
    %8347 = vmatpush1.xpose.msra.mxu0 0.0
    %8348 = vmatprep.subr.mxu0 0.0
    %8349 = vmatpush1.xpose.msra.mxu0 0.0
    %8350 = vmatprep.subr.mxu0 0.0
    %8351 = vmatpush1.xpose.msra.mxu0 0.0
    %8352 = vmatprep.subr.mxu0 0.0
    %8353 = vmatpush1.xpose.msra.mxu0 0.0
    %8354 = vmatprep.subr.mxu0 0.0
    %8355 = vmatpush1.xpose.msra.mxu0 0.0
    %8356 = vmatprep.subr.mxu0 0.0
    %8357 = vmatpush1.xpose.msra.mxu0 0.0
    %8358 = vmatprep.subr.mxu0 0.0
    %8359 = vmatpush1.xpose.msra.mxu0 0.0
    %8360 = vmatprep.subr.mxu0 0.0
    %8361 = vmatpush1.xpose.msra.mxu0 0.0
    %8362 = vmatprep.subr.mxu0 0.0
    %8363 = vmatpush1.xpose.msra.mxu0 0.0
    %8364 = vmatprep.subr.mxu0 %v276
    %8365 = vmatpush1.xpose.msra.mxu0 %v275
    %8366 = vmatprep.subr.mxu0 0.0
    %8367 = vmatpush2.xpose.msra.mxu0 0.0
    %8368 = vmatprep.subr.mxu0 0.0
    %8369 = vmatpush2.xpose.msra.mxu0 0.0
    %8370 = vmatprep.subr.mxu0 0.0
    %8371 = vmatpush2.xpose.msra.mxu0 0.0
    %8372 = vmatprep.subr.mxu0 0.0
    %8373 = vmatpush2.xpose.msra.mxu0 0.0
    %8374 = vmatprep.subr.mxu0 0.0
    %8375 = vmatpush2.xpose.msra.mxu0 0.0
    %8376 = vmatprep.subr.mxu0 0.0
    %8377 = vmatpush2.xpose.msra.mxu0 0.0
    %8378 = vmatprep.subr.mxu0 0.0
    %8379 = vmatpush2.xpose.msra.mxu0 0.0
    %8380 = vmatprep.subr.mxu0 0.0
    %8381 = vmatpush2.xpose.msra.mxu0 0.0
    %8382 = vmatprep.subr.mxu0 0.0
    %8383 = vmatpush2.xpose.msra.mxu0 0.0
    %8384 = vmatprep.subr.mxu0 0.0
    %8385 = vmatpush2.xpose.msra.mxu0 0.0
    %8386 = vmatprep.subr.mxu0 0.0
    %8387 = vmatpush2.xpose.msra.mxu0 0.0
    %8388 = vmatprep.subr.mxu0 0.0
    %8389 = vmatpush2.xpose.msra.mxu0 0.0
    %8390 = vmatprep.subr.mxu0 0.0
    %8391 = vmatpush2.xpose.msra.mxu0 0.0
    %8392 = vmatprep.subr.mxu0 0.0
    %8393 = vmatpush2.xpose.msra.mxu0 0.0
    %8394 = vmatprep.subr.mxu0 0.0
    %8395 = vmatpush2.xpose.msra.mxu0 0.0
    %8396 = vmatprep.subr.mxu0 0.0
    %8397 = vmatpush2.xpose.msra.mxu0 0.0
    %8398 = vmatprep.mubr.f32.mxu0 %v1208
    %8399 = vmatmul.mubr.f32.gmra.mxu0 %v1200
    %v8400 = vpop.f32.mrf.mxu0
    %v8401 = vadd.f32 %v8331, %v8400
    %v8402 = vpop.f32.mrf.mxu0
    %8403 = vdwg.mxu0
    %8404 = vmatprep.subr.mxu0 0.0
    %8405 = vmatpush1.xpose.msra.mxu0 0.0
    %8406 = vmatprep.subr.mxu0 0.0
    %8407 = vmatpush1.xpose.msra.mxu0 0.0
    %8408 = vmatprep.subr.mxu0 0.0
    %8409 = vmatpush1.xpose.msra.mxu0 0.0
    %8410 = vmatprep.subr.mxu0 0.0
    %8411 = vmatpush1.xpose.msra.mxu0 0.0
    %8412 = vmatprep.subr.mxu0 0.0
    %8413 = vmatpush1.xpose.msra.mxu0 0.0
    %8414 = vmatprep.subr.mxu0 0.0
    %8415 = vmatpush1.xpose.msra.mxu0 0.0
    %8416 = vmatprep.subr.mxu0 0.0
    %8417 = vmatpush1.xpose.msra.mxu0 0.0
    %8418 = vmatprep.subr.mxu0 0.0
    %8419 = vmatpush1.xpose.msra.mxu0 0.0
    %8420 = vmatprep.subr.mxu0 0.0
    %8421 = vmatpush1.xpose.msra.mxu0 0.0
    %8422 = vmatprep.subr.mxu0 0.0
    %8423 = vmatpush1.xpose.msra.mxu0 0.0
    %8424 = vmatprep.subr.mxu0 0.0
    %8425 = vmatpush1.xpose.msra.mxu0 0.0
    %8426 = vmatprep.subr.mxu0 0.0
    %8427 = vmatpush1.xpose.msra.mxu0 0.0
    %8428 = vmatprep.subr.mxu0 0.0
    %8429 = vmatpush1.xpose.msra.mxu0 0.0
    %8430 = vmatprep.subr.mxu0 0.0
    %8431 = vmatpush1.xpose.msra.mxu0 0.0
    %8432 = vmatprep.subr.mxu0 0.0
    %8433 = vmatpush1.xpose.msra.mxu0 0.0
    %8434 = vmatprep.subr.mxu0 %v278
    %8435 = vmatpush1.xpose.msra.mxu0 %v277
    %8436 = vmatprep.subr.mxu0 0.0
    %8437 = vmatpush2.xpose.msra.mxu0 0.0
    %8438 = vmatprep.subr.mxu0 0.0
    %8439 = vmatpush2.xpose.msra.mxu0 0.0
    %8440 = vmatprep.subr.mxu0 0.0
    %8441 = vmatpush2.xpose.msra.mxu0 0.0
    %8442 = vmatprep.subr.mxu0 0.0
    %8443 = vmatpush2.xpose.msra.mxu0 0.0
    %8444 = vmatprep.subr.mxu0 0.0
    %8445 = vmatpush2.xpose.msra.mxu0 0.0
    %8446 = vmatprep.subr.mxu0 0.0
    %8447 = vmatpush2.xpose.msra.mxu0 0.0
    %8448 = vmatprep.subr.mxu0 0.0
    %8449 = vmatpush2.xpose.msra.mxu0 0.0
    %8450 = vmatprep.subr.mxu0 0.0
    %8451 = vmatpush2.xpose.msra.mxu0 0.0
    %8452 = vmatprep.subr.mxu0 0.0
    %8453 = vmatpush2.xpose.msra.mxu0 0.0
    %8454 = vmatprep.subr.mxu0 0.0
    %8455 = vmatpush2.xpose.msra.mxu0 0.0
    %8456 = vmatprep.subr.mxu0 0.0
    %8457 = vmatpush2.xpose.msra.mxu0 0.0
    %8458 = vmatprep.subr.mxu0 0.0
    %8459 = vmatpush2.xpose.msra.mxu0 0.0
    %8460 = vmatprep.subr.mxu0 0.0
    %8461 = vmatpush2.xpose.msra.mxu0 0.0
    %8462 = vmatprep.subr.mxu0 0.0
    %8463 = vmatpush2.xpose.msra.mxu0 0.0
    %8464 = vmatprep.subr.mxu0 0.0
    %8465 = vmatpush2.xpose.msra.mxu0 0.0
    %8466 = vmatprep.subr.mxu0 0.0
    %8467 = vmatpush2.xpose.msra.mxu0 0.0
    %8468 = vmatprep.mubr.f32.mxu0 %v1209
    %8469 = vmatmul.mubr.f32.gmra.mxu0 %v1207
    %v8470 = vpop.f32.mrf.mxu0
    %v8471 = vadd.f32 %v8401, %v8470
    %v8472 = vpop.f32.mrf.mxu0
    %8473 = vdwg.mxu0
    %8474 = vmatprep.subr.mxu0 0.0
    %8475 = vmatpush1.xpose.msra.mxu0 0.0
    %8476 = vmatprep.subr.mxu0 0.0
    %8477 = vmatpush1.xpose.msra.mxu0 0.0
    %8478 = vmatprep.subr.mxu0 0.0
    %8479 = vmatpush1.xpose.msra.mxu0 0.0
    %8480 = vmatprep.subr.mxu0 0.0
    %8481 = vmatpush1.xpose.msra.mxu0 0.0
    %8482 = vmatprep.subr.mxu0 0.0
    %8483 = vmatpush1.xpose.msra.mxu0 0.0
    %8484 = vmatprep.subr.mxu0 0.0
    %8485 = vmatpush1.xpose.msra.mxu0 0.0
    %8486 = vmatprep.subr.mxu0 0.0
    %8487 = vmatpush1.xpose.msra.mxu0 0.0
    %8488 = vmatprep.subr.mxu0 0.0
    %8489 = vmatpush1.xpose.msra.mxu0 0.0
    %8490 = vmatprep.subr.mxu0 0.0
    %8491 = vmatpush1.xpose.msra.mxu0 0.0
    %8492 = vmatprep.subr.mxu0 0.0
    %8493 = vmatpush1.xpose.msra.mxu0 0.0
    %8494 = vmatprep.subr.mxu0 0.0
    %8495 = vmatpush1.xpose.msra.mxu0 0.0
    %8496 = vmatprep.subr.mxu0 0.0
    %8497 = vmatpush1.xpose.msra.mxu0 0.0
    %8498 = vmatprep.subr.mxu0 0.0
    %8499 = vmatpush1.xpose.msra.mxu0 0.0
    %8500 = vmatprep.subr.mxu0 0.0
    %8501 = vmatpush1.xpose.msra.mxu0 0.0
    %8502 = vmatprep.subr.mxu0 0.0
    %8503 = vmatpush1.xpose.msra.mxu0 0.0
    %8504 = vmatprep.subr.mxu0 %v280
    %8505 = vmatpush1.xpose.msra.mxu0 %v279
    %8506 = vmatprep.subr.mxu0 0.0
    %8507 = vmatpush2.xpose.msra.mxu0 0.0
    %8508 = vmatprep.subr.mxu0 0.0
    %8509 = vmatpush2.xpose.msra.mxu0 0.0
    %8510 = vmatprep.subr.mxu0 0.0
    %8511 = vmatpush2.xpose.msra.mxu0 0.0
    %8512 = vmatprep.subr.mxu0 0.0
    %8513 = vmatpush2.xpose.msra.mxu0 0.0
    %8514 = vmatprep.subr.mxu0 0.0
    %8515 = vmatpush2.xpose.msra.mxu0 0.0
    %8516 = vmatprep.subr.mxu0 0.0
    %8517 = vmatpush2.xpose.msra.mxu0 0.0
    %8518 = vmatprep.subr.mxu0 0.0
    %8519 = vmatpush2.xpose.msra.mxu0 0.0
    %8520 = vmatprep.subr.mxu0 0.0
    %8521 = vmatpush2.xpose.msra.mxu0 0.0
    %8522 = vmatprep.subr.mxu0 0.0
    %8523 = vmatpush2.xpose.msra.mxu0 0.0
    %8524 = vmatprep.subr.mxu0 0.0
    %8525 = vmatpush2.xpose.msra.mxu0 0.0
    %8526 = vmatprep.subr.mxu0 0.0
    %8527 = vmatpush2.xpose.msra.mxu0 0.0
    %8528 = vmatprep.subr.mxu0 0.0
    %8529 = vmatpush2.xpose.msra.mxu0 0.0
    %8530 = vmatprep.subr.mxu0 0.0
    %8531 = vmatpush2.xpose.msra.mxu0 0.0
    %8532 = vmatprep.subr.mxu0 0.0
    %8533 = vmatpush2.xpose.msra.mxu0 0.0
    %8534 = vmatprep.subr.mxu0 0.0
    %8535 = vmatpush2.xpose.msra.mxu0 0.0
    %8536 = vmatprep.subr.mxu0 0.0
    %8537 = vmatpush2.xpose.msra.mxu0 0.0
    %8538 = vmatprep.mubr.f32.mxu0 %v1225
    %8539 = vmatmul.mubr.f32.gmra.mxu0 %v1217
    %v8540 = vpop.f32.mrf.mxu0
    %v8541 = vadd.f32 %v8471, %v8540
    %v8542 = vpop.f32.mrf.mxu0
    %8543 = vdwg.mxu0
    %8544 = vmatprep.subr.mxu0 0.0
    %8545 = vmatpush1.xpose.msra.mxu0 0.0
    %8546 = vmatprep.subr.mxu0 0.0
    %8547 = vmatpush1.xpose.msra.mxu0 0.0
    %8548 = vmatprep.subr.mxu0 0.0
    %8549 = vmatpush1.xpose.msra.mxu0 0.0
    %8550 = vmatprep.subr.mxu0 0.0
    %8551 = vmatpush1.xpose.msra.mxu0 0.0
    %8552 = vmatprep.subr.mxu0 0.0
    %8553 = vmatpush1.xpose.msra.mxu0 0.0
    %8554 = vmatprep.subr.mxu0 0.0
    %8555 = vmatpush1.xpose.msra.mxu0 0.0
    %8556 = vmatprep.subr.mxu0 0.0
    %8557 = vmatpush1.xpose.msra.mxu0 0.0
    %8558 = vmatprep.subr.mxu0 0.0
    %8559 = vmatpush1.xpose.msra.mxu0 0.0
    %8560 = vmatprep.subr.mxu0 0.0
    %8561 = vmatpush1.xpose.msra.mxu0 0.0
    %8562 = vmatprep.subr.mxu0 0.0
    %8563 = vmatpush1.xpose.msra.mxu0 0.0
    %8564 = vmatprep.subr.mxu0 0.0
    %8565 = vmatpush1.xpose.msra.mxu0 0.0
    %8566 = vmatprep.subr.mxu0 0.0
    %8567 = vmatpush1.xpose.msra.mxu0 0.0
    %8568 = vmatprep.subr.mxu0 0.0
    %8569 = vmatpush1.xpose.msra.mxu0 0.0
    %8570 = vmatprep.subr.mxu0 0.0
    %8571 = vmatpush1.xpose.msra.mxu0 0.0
    %8572 = vmatprep.subr.mxu0 0.0
    %8573 = vmatpush1.xpose.msra.mxu0 0.0
    %8574 = vmatprep.subr.mxu0 %v282
    %8575 = vmatpush1.xpose.msra.mxu0 %v281
    %8576 = vmatprep.subr.mxu0 0.0
    %8577 = vmatpush2.xpose.msra.mxu0 0.0
    %8578 = vmatprep.subr.mxu0 0.0
    %8579 = vmatpush2.xpose.msra.mxu0 0.0
    %8580 = vmatprep.subr.mxu0 0.0
    %8581 = vmatpush2.xpose.msra.mxu0 0.0
    %8582 = vmatprep.subr.mxu0 0.0
    %8583 = vmatpush2.xpose.msra.mxu0 0.0
    %8584 = vmatprep.subr.mxu0 0.0
    %8585 = vmatpush2.xpose.msra.mxu0 0.0
    %8586 = vmatprep.subr.mxu0 0.0
    %8587 = vmatpush2.xpose.msra.mxu0 0.0
    %8588 = vmatprep.subr.mxu0 0.0
    %8589 = vmatpush2.xpose.msra.mxu0 0.0
    %8590 = vmatprep.subr.mxu0 0.0
    %8591 = vmatpush2.xpose.msra.mxu0 0.0
    %8592 = vmatprep.subr.mxu0 0.0
    %8593 = vmatpush2.xpose.msra.mxu0 0.0
    %8594 = vmatprep.subr.mxu0 0.0
    %8595 = vmatpush2.xpose.msra.mxu0 0.0
    %8596 = vmatprep.subr.mxu0 0.0
    %8597 = vmatpush2.xpose.msra.mxu0 0.0
    %8598 = vmatprep.subr.mxu0 0.0
    %8599 = vmatpush2.xpose.msra.mxu0 0.0
    %8600 = vmatprep.subr.mxu0 0.0
    %8601 = vmatpush2.xpose.msra.mxu0 0.0
    %8602 = vmatprep.subr.mxu0 0.0
    %8603 = vmatpush2.xpose.msra.mxu0 0.0
    %8604 = vmatprep.subr.mxu0 0.0
    %8605 = vmatpush2.xpose.msra.mxu0 0.0
    %8606 = vmatprep.subr.mxu0 0.0
    %8607 = vmatpush2.xpose.msra.mxu0 0.0
    %8608 = vmatprep.mubr.f32.mxu0 %v1226
    %8609 = vmatmul.mubr.f32.gmra.mxu0 %v1224
    %v8610 = vpop.f32.mrf.mxu0
    %v8611 = vadd.f32 %v8541, %v8610
    %v8612 = vpop.f32.mrf.mxu0
    %8613 = vdwg.mxu0
    %8614 = vmatprep.subr.mxu0 0.0
    %8615 = vmatpush1.xpose.msra.mxu0 0.0
    %8616 = vmatprep.subr.mxu0 0.0
    %8617 = vmatpush1.xpose.msra.mxu0 0.0
    %8618 = vmatprep.subr.mxu0 0.0
    %8619 = vmatpush1.xpose.msra.mxu0 0.0
    %8620 = vmatprep.subr.mxu0 0.0
    %8621 = vmatpush1.xpose.msra.mxu0 0.0
    %8622 = vmatprep.subr.mxu0 0.0
    %8623 = vmatpush1.xpose.msra.mxu0 0.0
    %8624 = vmatprep.subr.mxu0 0.0
    %8625 = vmatpush1.xpose.msra.mxu0 0.0
    %8626 = vmatprep.subr.mxu0 0.0
    %8627 = vmatpush1.xpose.msra.mxu0 0.0
    %8628 = vmatprep.subr.mxu0 0.0
    %8629 = vmatpush1.xpose.msra.mxu0 0.0
    %8630 = vmatprep.subr.mxu0 0.0
    %8631 = vmatpush1.xpose.msra.mxu0 0.0
    %8632 = vmatprep.subr.mxu0 0.0
    %8633 = vmatpush1.xpose.msra.mxu0 0.0
    %8634 = vmatprep.subr.mxu0 0.0
    %8635 = vmatpush1.xpose.msra.mxu0 0.0
    %8636 = vmatprep.subr.mxu0 0.0
    %8637 = vmatpush1.xpose.msra.mxu0 0.0
    %8638 = vmatprep.subr.mxu0 0.0
    %8639 = vmatpush1.xpose.msra.mxu0 0.0
    %8640 = vmatprep.subr.mxu0 0.0
    %8641 = vmatpush1.xpose.msra.mxu0 0.0
    %8642 = vmatprep.subr.mxu0 0.0
    %8643 = vmatpush1.xpose.msra.mxu0 0.0
    %8644 = vmatprep.subr.mxu0 %v284
    %8645 = vmatpush1.xpose.msra.mxu0 %v283
    %8646 = vmatprep.subr.mxu0 0.0
    %8647 = vmatpush2.xpose.msra.mxu0 0.0
    %8648 = vmatprep.subr.mxu0 0.0
    %8649 = vmatpush2.xpose.msra.mxu0 0.0
    %8650 = vmatprep.subr.mxu0 0.0
    %8651 = vmatpush2.xpose.msra.mxu0 0.0
    %8652 = vmatprep.subr.mxu0 0.0
    %8653 = vmatpush2.xpose.msra.mxu0 0.0
    %8654 = vmatprep.subr.mxu0 0.0
    %8655 = vmatpush2.xpose.msra.mxu0 0.0
    %8656 = vmatprep.subr.mxu0 0.0
    %8657 = vmatpush2.xpose.msra.mxu0 0.0
    %8658 = vmatprep.subr.mxu0 0.0
    %8659 = vmatpush2.xpose.msra.mxu0 0.0
    %8660 = vmatprep.subr.mxu0 0.0
    %8661 = vmatpush2.xpose.msra.mxu0 0.0
    %8662 = vmatprep.subr.mxu0 0.0
    %8663 = vmatpush2.xpose.msra.mxu0 0.0
    %8664 = vmatprep.subr.mxu0 0.0
    %8665 = vmatpush2.xpose.msra.mxu0 0.0
    %8666 = vmatprep.subr.mxu0 0.0
    %8667 = vmatpush2.xpose.msra.mxu0 0.0
    %8668 = vmatprep.subr.mxu0 0.0
    %8669 = vmatpush2.xpose.msra.mxu0 0.0
    %8670 = vmatprep.subr.mxu0 0.0
    %8671 = vmatpush2.xpose.msra.mxu0 0.0
    %8672 = vmatprep.subr.mxu0 0.0
    %8673 = vmatpush2.xpose.msra.mxu0 0.0
    %8674 = vmatprep.subr.mxu0 0.0
    %8675 = vmatpush2.xpose.msra.mxu0 0.0
    %8676 = vmatprep.subr.mxu0 0.0
    %8677 = vmatpush2.xpose.msra.mxu0 0.0
    %8678 = vmatprep.mubr.f32.mxu0 %v1242
    %8679 = vmatmul.mubr.f32.gmra.mxu0 %v1234
    %v8680 = vpop.f32.mrf.mxu0
    %v8681 = vadd.f32 %v8611, %v8680
    %v8682 = vpop.f32.mrf.mxu0
    %8683 = vdwg.mxu0
    %8684 = vmatprep.subr.mxu0 0.0
    %8685 = vmatpush1.xpose.msra.mxu0 0.0
    %8686 = vmatprep.subr.mxu0 0.0
    %8687 = vmatpush1.xpose.msra.mxu0 0.0
    %8688 = vmatprep.subr.mxu0 0.0
    %8689 = vmatpush1.xpose.msra.mxu0 0.0
    %8690 = vmatprep.subr.mxu0 0.0
    %8691 = vmatpush1.xpose.msra.mxu0 0.0
    %8692 = vmatprep.subr.mxu0 0.0
    %8693 = vmatpush1.xpose.msra.mxu0 0.0
    %8694 = vmatprep.subr.mxu0 0.0
    %8695 = vmatpush1.xpose.msra.mxu0 0.0
    %8696 = vmatprep.subr.mxu0 0.0
    %8697 = vmatpush1.xpose.msra.mxu0 0.0
    %8698 = vmatprep.subr.mxu0 0.0
    %8699 = vmatpush1.xpose.msra.mxu0 0.0
    %8700 = vmatprep.subr.mxu0 0.0
    %8701 = vmatpush1.xpose.msra.mxu0 0.0
    %8702 = vmatprep.subr.mxu0 0.0
    %8703 = vmatpush1.xpose.msra.mxu0 0.0
    %8704 = vmatprep.subr.mxu0 0.0
    %8705 = vmatpush1.xpose.msra.mxu0 0.0
    %8706 = vmatprep.subr.mxu0 0.0
    %8707 = vmatpush1.xpose.msra.mxu0 0.0
    %8708 = vmatprep.subr.mxu0 0.0
    %8709 = vmatpush1.xpose.msra.mxu0 0.0
    %8710 = vmatprep.subr.mxu0 0.0
    %8711 = vmatpush1.xpose.msra.mxu0 0.0
    %8712 = vmatprep.subr.mxu0 0.0
    %8713 = vmatpush1.xpose.msra.mxu0 0.0
    %8714 = vmatprep.subr.mxu0 %v286
    %8715 = vmatpush1.xpose.msra.mxu0 %v285
    %8716 = vmatprep.subr.mxu0 0.0
    %8717 = vmatpush2.xpose.msra.mxu0 0.0
    %8718 = vmatprep.subr.mxu0 0.0
    %8719 = vmatpush2.xpose.msra.mxu0 0.0
    %8720 = vmatprep.subr.mxu0 0.0
    %8721 = vmatpush2.xpose.msra.mxu0 0.0
    %8722 = vmatprep.subr.mxu0 0.0
    %8723 = vmatpush2.xpose.msra.mxu0 0.0
    %8724 = vmatprep.subr.mxu0 0.0
    %8725 = vmatpush2.xpose.msra.mxu0 0.0
    %8726 = vmatprep.subr.mxu0 0.0
    %8727 = vmatpush2.xpose.msra.mxu0 0.0
    %8728 = vmatprep.subr.mxu0 0.0
    %8729 = vmatpush2.xpose.msra.mxu0 0.0
    %8730 = vmatprep.subr.mxu0 0.0
    %8731 = vmatpush2.xpose.msra.mxu0 0.0
    %8732 = vmatprep.subr.mxu0 0.0
    %8733 = vmatpush2.xpose.msra.mxu0 0.0
    %8734 = vmatprep.subr.mxu0 0.0
    %8735 = vmatpush2.xpose.msra.mxu0 0.0
    %8736 = vmatprep.subr.mxu0 0.0
    %8737 = vmatpush2.xpose.msra.mxu0 0.0
    %8738 = vmatprep.subr.mxu0 0.0
    %8739 = vmatpush2.xpose.msra.mxu0 0.0
    %8740 = vmatprep.subr.mxu0 0.0
    %8741 = vmatpush2.xpose.msra.mxu0 0.0
    %8742 = vmatprep.subr.mxu0 0.0
    %8743 = vmatpush2.xpose.msra.mxu0 0.0
    %8744 = vmatprep.subr.mxu0 0.0
    %8745 = vmatpush2.xpose.msra.mxu0 0.0
    %8746 = vmatprep.subr.mxu0 0.0
    %8747 = vmatpush2.xpose.msra.mxu0 0.0
    %8748 = vmatprep.mubr.f32.mxu0 %v1243
    %8749 = vmatmul.mubr.f32.gmra.mxu0 %v1241
    %v8750 = vpop.f32.mrf.mxu0
    %v8751 = vadd.f32 %v8681, %v8750
    %v8752 = vpop.f32.mrf.mxu0
    %8753 = vdwg.mxu0
    %8754 = vmatprep.subr.mxu0 0.0
    %8755 = vmatpush1.xpose.msra.mxu0 0.0
    %8756 = vmatprep.subr.mxu0 0.0
    %8757 = vmatpush1.xpose.msra.mxu0 0.0
    %8758 = vmatprep.subr.mxu0 0.0
    %8759 = vmatpush1.xpose.msra.mxu0 0.0
    %8760 = vmatprep.subr.mxu0 0.0
    %8761 = vmatpush1.xpose.msra.mxu0 0.0
    %8762 = vmatprep.subr.mxu0 0.0
    %8763 = vmatpush1.xpose.msra.mxu0 0.0
    %8764 = vmatprep.subr.mxu0 0.0
    %8765 = vmatpush1.xpose.msra.mxu0 0.0
    %8766 = vmatprep.subr.mxu0 0.0
    %8767 = vmatpush1.xpose.msra.mxu0 0.0
    %8768 = vmatprep.subr.mxu0 0.0
    %8769 = vmatpush1.xpose.msra.mxu0 0.0
    %8770 = vmatprep.subr.mxu0 0.0
    %8771 = vmatpush1.xpose.msra.mxu0 0.0
    %8772 = vmatprep.subr.mxu0 0.0
    %8773 = vmatpush1.xpose.msra.mxu0 0.0
    %8774 = vmatprep.subr.mxu0 0.0
    %8775 = vmatpush1.xpose.msra.mxu0 0.0
    %8776 = vmatprep.subr.mxu0 0.0
    %8777 = vmatpush1.xpose.msra.mxu0 0.0
    %8778 = vmatprep.subr.mxu0 0.0
    %8779 = vmatpush1.xpose.msra.mxu0 0.0
    %8780 = vmatprep.subr.mxu0 0.0
    %8781 = vmatpush1.xpose.msra.mxu0 0.0
    %8782 = vmatprep.subr.mxu0 0.0
    %8783 = vmatpush1.xpose.msra.mxu0 0.0
    %8784 = vmatprep.subr.mxu0 %v288
    %8785 = vmatpush1.xpose.msra.mxu0 %v287
    %8786 = vmatprep.subr.mxu0 0.0
    %8787 = vmatpush2.xpose.msra.mxu0 0.0
    %8788 = vmatprep.subr.mxu0 0.0
    %8789 = vmatpush2.xpose.msra.mxu0 0.0
    %8790 = vmatprep.subr.mxu0 0.0
    %8791 = vmatpush2.xpose.msra.mxu0 0.0
    %8792 = vmatprep.subr.mxu0 0.0
    %8793 = vmatpush2.xpose.msra.mxu0 0.0
    %8794 = vmatprep.subr.mxu0 0.0
    %8795 = vmatpush2.xpose.msra.mxu0 0.0
    %8796 = vmatprep.subr.mxu0 0.0
    %8797 = vmatpush2.xpose.msra.mxu0 0.0
    %8798 = vmatprep.subr.mxu0 0.0
    %8799 = vmatpush2.xpose.msra.mxu0 0.0
    %8800 = vmatprep.subr.mxu0 0.0
    %8801 = vmatpush2.xpose.msra.mxu0 0.0
    %8802 = vmatprep.subr.mxu0 0.0
    %8803 = vmatpush2.xpose.msra.mxu0 0.0
    %8804 = vmatprep.subr.mxu0 0.0
    %8805 = vmatpush2.xpose.msra.mxu0 0.0
    %8806 = vmatprep.subr.mxu0 0.0
    %8807 = vmatpush2.xpose.msra.mxu0 0.0
    %8808 = vmatprep.subr.mxu0 0.0
    %8809 = vmatpush2.xpose.msra.mxu0 0.0
    %8810 = vmatprep.subr.mxu0 0.0
    %8811 = vmatpush2.xpose.msra.mxu0 0.0
    %8812 = vmatprep.subr.mxu0 0.0
    %8813 = vmatpush2.xpose.msra.mxu0 0.0
    %8814 = vmatprep.subr.mxu0 0.0
    %8815 = vmatpush2.xpose.msra.mxu0 0.0
    %8816 = vmatprep.subr.mxu0 0.0
    %8817 = vmatpush2.xpose.msra.mxu0 0.0
    %8818 = vmatprep.mubr.f32.mxu0 %v1259
    %8819 = vmatmul.mubr.f32.gmra.mxu0 %v1251
    %v8820 = vpop.f32.mrf.mxu0
    %v8821 = vadd.f32 %v8751, %v8820
    %v8822 = vpop.f32.mrf.mxu0
    %8823 = vdwg.mxu0
    %8824 = vmatprep.subr.mxu0 0.0
    %8825 = vmatpush1.xpose.msra.mxu0 0.0
    %8826 = vmatprep.subr.mxu0 0.0
    %8827 = vmatpush1.xpose.msra.mxu0 0.0
    %8828 = vmatprep.subr.mxu0 0.0
    %8829 = vmatpush1.xpose.msra.mxu0 0.0
    %8830 = vmatprep.subr.mxu0 0.0
    %8831 = vmatpush1.xpose.msra.mxu0 0.0
    %8832 = vmatprep.subr.mxu0 0.0
    %8833 = vmatpush1.xpose.msra.mxu0 0.0
    %8834 = vmatprep.subr.mxu0 0.0
    %8835 = vmatpush1.xpose.msra.mxu0 0.0
    %8836 = vmatprep.subr.mxu0 0.0
    %8837 = vmatpush1.xpose.msra.mxu0 0.0
    %8838 = vmatprep.subr.mxu0 0.0
    %8839 = vmatpush1.xpose.msra.mxu0 0.0
    %8840 = vmatprep.subr.mxu0 0.0
    %8841 = vmatpush1.xpose.msra.mxu0 0.0
    %8842 = vmatprep.subr.mxu0 0.0
    %8843 = vmatpush1.xpose.msra.mxu0 0.0
    %8844 = vmatprep.subr.mxu0 0.0
    %8845 = vmatpush1.xpose.msra.mxu0 0.0
    %8846 = vmatprep.subr.mxu0 0.0
    %8847 = vmatpush1.xpose.msra.mxu0 0.0
    %8848 = vmatprep.subr.mxu0 0.0
    %8849 = vmatpush1.xpose.msra.mxu0 0.0
    %8850 = vmatprep.subr.mxu0 0.0
    %8851 = vmatpush1.xpose.msra.mxu0 0.0
    %8852 = vmatprep.subr.mxu0 0.0
    %8853 = vmatpush1.xpose.msra.mxu0 0.0
    %8854 = vmatprep.subr.mxu0 %v290
    %8855 = vmatpush1.xpose.msra.mxu0 %v289
    %8856 = vmatprep.subr.mxu0 0.0
    %8857 = vmatpush2.xpose.msra.mxu0 0.0
    %8858 = vmatprep.subr.mxu0 0.0
    %8859 = vmatpush2.xpose.msra.mxu0 0.0
    %8860 = vmatprep.subr.mxu0 0.0
    %8861 = vmatpush2.xpose.msra.mxu0 0.0
    %8862 = vmatprep.subr.mxu0 0.0
    %8863 = vmatpush2.xpose.msra.mxu0 0.0
    %8864 = vmatprep.subr.mxu0 0.0
    %8865 = vmatpush2.xpose.msra.mxu0 0.0
    %8866 = vmatprep.subr.mxu0 0.0
    %8867 = vmatpush2.xpose.msra.mxu0 0.0
    %8868 = vmatprep.subr.mxu0 0.0
    %8869 = vmatpush2.xpose.msra.mxu0 0.0
    %8870 = vmatprep.subr.mxu0 0.0
    %8871 = vmatpush2.xpose.msra.mxu0 0.0
    %8872 = vmatprep.subr.mxu0 0.0
    %8873 = vmatpush2.xpose.msra.mxu0 0.0
    %8874 = vmatprep.subr.mxu0 0.0
    %8875 = vmatpush2.xpose.msra.mxu0 0.0
    %8876 = vmatprep.subr.mxu0 0.0
    %8877 = vmatpush2.xpose.msra.mxu0 0.0
    %8878 = vmatprep.subr.mxu0 0.0
    %8879 = vmatpush2.xpose.msra.mxu0 0.0
    %8880 = vmatprep.subr.mxu0 0.0
    %8881 = vmatpush2.xpose.msra.mxu0 0.0
    %8882 = vmatprep.subr.mxu0 0.0
    %8883 = vmatpush2.xpose.msra.mxu0 0.0
    %8884 = vmatprep.subr.mxu0 0.0
    %8885 = vmatpush2.xpose.msra.mxu0 0.0
    %8886 = vmatprep.subr.mxu0 0.0
    %8887 = vmatpush2.xpose.msra.mxu0 0.0
    %8888 = vmatprep.mubr.f32.mxu0 %v1260
    %8889 = vmatmul.mubr.f32.gmra.mxu0 %v1258
    %v8890 = vpop.f32.mrf.mxu0
    %v8891 = vadd.f32 %v8821, %v8890
    %v8892 = vpop.f32.mrf.mxu0
    %8893 = vdwg.mxu0
    %8894 = vmatprep.subr.mxu0 0.0
    %8895 = vmatpush1.xpose.msra.mxu0 0.0
    %8896 = vmatprep.subr.mxu0 0.0
    %8897 = vmatpush1.xpose.msra.mxu0 0.0
    %8898 = vmatprep.subr.mxu0 0.0
    %8899 = vmatpush1.xpose.msra.mxu0 0.0
    %8900 = vmatprep.subr.mxu0 0.0
    %8901 = vmatpush1.xpose.msra.mxu0 0.0
    %8902 = vmatprep.subr.mxu0 0.0
    %8903 = vmatpush1.xpose.msra.mxu0 0.0
    %8904 = vmatprep.subr.mxu0 0.0
    %8905 = vmatpush1.xpose.msra.mxu0 0.0
    %8906 = vmatprep.subr.mxu0 0.0
    %8907 = vmatpush1.xpose.msra.mxu0 0.0
    %8908 = vmatprep.subr.mxu0 0.0
    %8909 = vmatpush1.xpose.msra.mxu0 0.0
    %8910 = vmatprep.subr.mxu0 0.0
    %8911 = vmatpush1.xpose.msra.mxu0 0.0
    %8912 = vmatprep.subr.mxu0 0.0
    %8913 = vmatpush1.xpose.msra.mxu0 0.0
    %8914 = vmatprep.subr.mxu0 0.0
    %8915 = vmatpush1.xpose.msra.mxu0 0.0
    %8916 = vmatprep.subr.mxu0 0.0
    %8917 = vmatpush1.xpose.msra.mxu0 0.0
    %8918 = vmatprep.subr.mxu0 0.0
    %8919 = vmatpush1.xpose.msra.mxu0 0.0
    %8920 = vmatprep.subr.mxu0 0.0
    %8921 = vmatpush1.xpose.msra.mxu0 0.0
    %8922 = vmatprep.subr.mxu0 0.0
    %8923 = vmatpush1.xpose.msra.mxu0 0.0
    %8924 = vmatprep.subr.mxu0 %v292
    %8925 = vmatpush1.xpose.msra.mxu0 %v291
    %8926 = vmatprep.subr.mxu0 0.0
    %8927 = vmatpush2.xpose.msra.mxu0 0.0
    %8928 = vmatprep.subr.mxu0 0.0
    %8929 = vmatpush2.xpose.msra.mxu0 0.0
    %8930 = vmatprep.subr.mxu0 0.0
    %8931 = vmatpush2.xpose.msra.mxu0 0.0
    %8932 = vmatprep.subr.mxu0 0.0
    %8933 = vmatpush2.xpose.msra.mxu0 0.0
    %8934 = vmatprep.subr.mxu0 0.0
    %8935 = vmatpush2.xpose.msra.mxu0 0.0
    %8936 = vmatprep.subr.mxu0 0.0
    %8937 = vmatpush2.xpose.msra.mxu0 0.0
    %8938 = vmatprep.subr.mxu0 0.0
    %8939 = vmatpush2.xpose.msra.mxu0 0.0
    %8940 = vmatprep.subr.mxu0 0.0
    %8941 = vmatpush2.xpose.msra.mxu0 0.0
    %8942 = vmatprep.subr.mxu0 0.0
    %8943 = vmatpush2.xpose.msra.mxu0 0.0
    %8944 = vmatprep.subr.mxu0 0.0
    %8945 = vmatpush2.xpose.msra.mxu0 0.0
    %8946 = vmatprep.subr.mxu0 0.0
    %8947 = vmatpush2.xpose.msra.mxu0 0.0
    %8948 = vmatprep.subr.mxu0 0.0
    %8949 = vmatpush2.xpose.msra.mxu0 0.0
    %8950 = vmatprep.subr.mxu0 0.0
    %8951 = vmatpush2.xpose.msra.mxu0 0.0
    %8952 = vmatprep.subr.mxu0 0.0
    %8953 = vmatpush2.xpose.msra.mxu0 0.0
    %8954 = vmatprep.subr.mxu0 0.0
    %8955 = vmatpush2.xpose.msra.mxu0 0.0
    %8956 = vmatprep.subr.mxu0 0.0
    %8957 = vmatpush2.xpose.msra.mxu0 0.0
    %8958 = vmatprep.mubr.f32.mxu0 %v1276
    %8959 = vmatmul.mubr.f32.gmra.mxu0 %v1268
    %v8960 = vpop.f32.mrf.mxu0
    %v8961 = vadd.f32 %v8891, %v8960
    %v8962 = vpop.f32.mrf.mxu0
    %8963 = vdwg.mxu0
    %8964 = vmatprep.subr.mxu0 0.0
    %8965 = vmatpush1.xpose.msra.mxu0 0.0
    %8966 = vmatprep.subr.mxu0 0.0
    %8967 = vmatpush1.xpose.msra.mxu0 0.0
    %8968 = vmatprep.subr.mxu0 0.0
    %8969 = vmatpush1.xpose.msra.mxu0 0.0
    %8970 = vmatprep.subr.mxu0 0.0
    %8971 = vmatpush1.xpose.msra.mxu0 0.0
    %8972 = vmatprep.subr.mxu0 0.0
    %8973 = vmatpush1.xpose.msra.mxu0 0.0
    %8974 = vmatprep.subr.mxu0 0.0
    %8975 = vmatpush1.xpose.msra.mxu0 0.0
    %8976 = vmatprep.subr.mxu0 0.0
    %8977 = vmatpush1.xpose.msra.mxu0 0.0
    %8978 = vmatprep.subr.mxu0 0.0
    %8979 = vmatpush1.xpose.msra.mxu0 0.0
    %8980 = vmatprep.subr.mxu0 0.0
    %8981 = vmatpush1.xpose.msra.mxu0 0.0
    %8982 = vmatprep.subr.mxu0 0.0
    %8983 = vmatpush1.xpose.msra.mxu0 0.0
    %8984 = vmatprep.subr.mxu0 0.0
    %8985 = vmatpush1.xpose.msra.mxu0 0.0
    %8986 = vmatprep.subr.mxu0 0.0
    %8987 = vmatpush1.xpose.msra.mxu0 0.0
    %8988 = vmatprep.subr.mxu0 0.0
    %8989 = vmatpush1.xpose.msra.mxu0 0.0
    %8990 = vmatprep.subr.mxu0 0.0
    %8991 = vmatpush1.xpose.msra.mxu0 0.0
    %8992 = vmatprep.subr.mxu0 0.0
    %8993 = vmatpush1.xpose.msra.mxu0 0.0
    %8994 = vmatprep.subr.mxu0 %v294
    %8995 = vmatpush1.xpose.msra.mxu0 %v293
    %8996 = vmatprep.subr.mxu0 0.0
    %8997 = vmatpush2.xpose.msra.mxu0 0.0
    %8998 = vmatprep.subr.mxu0 0.0
    %8999 = vmatpush2.xpose.msra.mxu0 0.0
    %9000 = vmatprep.subr.mxu0 0.0
    %9001 = vmatpush2.xpose.msra.mxu0 0.0
    %9002 = vmatprep.subr.mxu0 0.0
    %9003 = vmatpush2.xpose.msra.mxu0 0.0
    %9004 = vmatprep.subr.mxu0 0.0
    %9005 = vmatpush2.xpose.msra.mxu0 0.0
    %9006 = vmatprep.subr.mxu0 0.0
    %9007 = vmatpush2.xpose.msra.mxu0 0.0
    %9008 = vmatprep.subr.mxu0 0.0
    %9009 = vmatpush2.xpose.msra.mxu0 0.0
    %9010 = vmatprep.subr.mxu0 0.0
    %9011 = vmatpush2.xpose.msra.mxu0 0.0
    %9012 = vmatprep.subr.mxu0 0.0
    %9013 = vmatpush2.xpose.msra.mxu0 0.0
    %9014 = vmatprep.subr.mxu0 0.0
    %9015 = vmatpush2.xpose.msra.mxu0 0.0
    %9016 = vmatprep.subr.mxu0 0.0
    %9017 = vmatpush2.xpose.msra.mxu0 0.0
    %9018 = vmatprep.subr.mxu0 0.0
    %9019 = vmatpush2.xpose.msra.mxu0 0.0
    %9020 = vmatprep.subr.mxu0 0.0
    %9021 = vmatpush2.xpose.msra.mxu0 0.0
    %9022 = vmatprep.subr.mxu0 0.0
    %9023 = vmatpush2.xpose.msra.mxu0 0.0
    %9024 = vmatprep.subr.mxu0 0.0
    %9025 = vmatpush2.xpose.msra.mxu0 0.0
    %9026 = vmatprep.subr.mxu0 0.0
    %9027 = vmatpush2.xpose.msra.mxu0 0.0
    %9028 = vmatprep.mubr.f32.mxu0 %v1277
    %9029 = vmatmul.mubr.f32.gmra.mxu0 %v1275
    %v9030 = vpop.f32.mrf.mxu0
    %v9031 = vadd.f32 %v8961, %v9030
    %v9032 = vpop.f32.mrf.mxu0
    %9033 = vdwg.mxu0
    %9034 = vmatprep.subr.mxu0 0.0
    %9035 = vmatpush1.xpose.msra.mxu0 0.0
    %9036 = vmatprep.subr.mxu0 0.0
    %9037 = vmatpush1.xpose.msra.mxu0 0.0
    %9038 = vmatprep.subr.mxu0 0.0
    %9039 = vmatpush1.xpose.msra.mxu0 0.0
    %9040 = vmatprep.subr.mxu0 0.0
    %9041 = vmatpush1.xpose.msra.mxu0 0.0
    %9042 = vmatprep.subr.mxu0 0.0
    %9043 = vmatpush1.xpose.msra.mxu0 0.0
    %9044 = vmatprep.subr.mxu0 0.0
    %9045 = vmatpush1.xpose.msra.mxu0 0.0
    %9046 = vmatprep.subr.mxu0 0.0
    %9047 = vmatpush1.xpose.msra.mxu0 0.0
    %9048 = vmatprep.subr.mxu0 0.0
    %9049 = vmatpush1.xpose.msra.mxu0 0.0
    %9050 = vmatprep.subr.mxu0 0.0
    %9051 = vmatpush1.xpose.msra.mxu0 0.0
    %9052 = vmatprep.subr.mxu0 0.0
    %9053 = vmatpush1.xpose.msra.mxu0 0.0
    %9054 = vmatprep.subr.mxu0 0.0
    %9055 = vmatpush1.xpose.msra.mxu0 0.0
    %9056 = vmatprep.subr.mxu0 0.0
    %9057 = vmatpush1.xpose.msra.mxu0 0.0
    %9058 = vmatprep.subr.mxu0 0.0
    %9059 = vmatpush1.xpose.msra.mxu0 0.0
    %9060 = vmatprep.subr.mxu0 0.0
    %9061 = vmatpush1.xpose.msra.mxu0 0.0
    %9062 = vmatprep.subr.mxu0 0.0
    %9063 = vmatpush1.xpose.msra.mxu0 0.0
    %9064 = vmatprep.subr.mxu0 %v296
    %9065 = vmatpush1.xpose.msra.mxu0 %v295
    %9066 = vmatprep.subr.mxu0 0.0
    %9067 = vmatpush2.xpose.msra.mxu0 0.0
    %9068 = vmatprep.subr.mxu0 0.0
    %9069 = vmatpush2.xpose.msra.mxu0 0.0
    %9070 = vmatprep.subr.mxu0 0.0
    %9071 = vmatpush2.xpose.msra.mxu0 0.0
    %9072 = vmatprep.subr.mxu0 0.0
    %9073 = vmatpush2.xpose.msra.mxu0 0.0
    %9074 = vmatprep.subr.mxu0 0.0
    %9075 = vmatpush2.xpose.msra.mxu0 0.0
    %9076 = vmatprep.subr.mxu0 0.0
    %9077 = vmatpush2.xpose.msra.mxu0 0.0
    %9078 = vmatprep.subr.mxu0 0.0
    %9079 = vmatpush2.xpose.msra.mxu0 0.0
    %9080 = vmatprep.subr.mxu0 0.0
    %9081 = vmatpush2.xpose.msra.mxu0 0.0
    %9082 = vmatprep.subr.mxu0 0.0
    %9083 = vmatpush2.xpose.msra.mxu0 0.0
    %9084 = vmatprep.subr.mxu0 0.0
    %9085 = vmatpush2.xpose.msra.mxu0 0.0
    %9086 = vmatprep.subr.mxu0 0.0
    %9087 = vmatpush2.xpose.msra.mxu0 0.0
    %9088 = vmatprep.subr.mxu0 0.0
    %9089 = vmatpush2.xpose.msra.mxu0 0.0
    %9090 = vmatprep.subr.mxu0 0.0
    %9091 = vmatpush2.xpose.msra.mxu0 0.0
    %9092 = vmatprep.subr.mxu0 0.0
    %9093 = vmatpush2.xpose.msra.mxu0 0.0
    %9094 = vmatprep.subr.mxu0 0.0
    %9095 = vmatpush2.xpose.msra.mxu0 0.0
    %9096 = vmatprep.subr.mxu0 0.0
    %9097 = vmatpush2.xpose.msra.mxu0 0.0
    %9098 = vmatprep.mubr.f32.mxu0 %v1293
    %9099 = vmatmul.mubr.f32.gmra.mxu0 %v1285
    %v9100 = vpop.f32.mrf.mxu0
    %v9101 = vadd.f32 %v9031, %v9100
    %v9102 = vpop.f32.mrf.mxu0
    %9103 = vdwg.mxu0
    %9104 = vmatprep.subr.mxu0 0.0
    %9105 = vmatpush1.xpose.msra.mxu0 0.0
    %9106 = vmatprep.subr.mxu0 0.0
    %9107 = vmatpush1.xpose.msra.mxu0 0.0
    %9108 = vmatprep.subr.mxu0 0.0
    %9109 = vmatpush1.xpose.msra.mxu0 0.0
    %9110 = vmatprep.subr.mxu0 0.0
    %9111 = vmatpush1.xpose.msra.mxu0 0.0
    %9112 = vmatprep.subr.mxu0 0.0
    %9113 = vmatpush1.xpose.msra.mxu0 0.0
    %9114 = vmatprep.subr.mxu0 0.0
    %9115 = vmatpush1.xpose.msra.mxu0 0.0
    %9116 = vmatprep.subr.mxu0 0.0
    %9117 = vmatpush1.xpose.msra.mxu0 0.0
    %9118 = vmatprep.subr.mxu0 0.0
    %9119 = vmatpush1.xpose.msra.mxu0 0.0
    %9120 = vmatprep.subr.mxu0 0.0
    %9121 = vmatpush1.xpose.msra.mxu0 0.0
    %9122 = vmatprep.subr.mxu0 0.0
    %9123 = vmatpush1.xpose.msra.mxu0 0.0
    %9124 = vmatprep.subr.mxu0 0.0
    %9125 = vmatpush1.xpose.msra.mxu0 0.0
    %9126 = vmatprep.subr.mxu0 0.0
    %9127 = vmatpush1.xpose.msra.mxu0 0.0
    %9128 = vmatprep.subr.mxu0 0.0
    %9129 = vmatpush1.xpose.msra.mxu0 0.0
    %9130 = vmatprep.subr.mxu0 0.0
    %9131 = vmatpush1.xpose.msra.mxu0 0.0
    %9132 = vmatprep.subr.mxu0 0.0
    %9133 = vmatpush1.xpose.msra.mxu0 0.0
    %9134 = vmatprep.subr.mxu0 %v298
    %9135 = vmatpush1.xpose.msra.mxu0 %v297
    %9136 = vmatprep.subr.mxu0 0.0
    %9137 = vmatpush2.xpose.msra.mxu0 0.0
    %9138 = vmatprep.subr.mxu0 0.0
    %9139 = vmatpush2.xpose.msra.mxu0 0.0
    %9140 = vmatprep.subr.mxu0 0.0
    %9141 = vmatpush2.xpose.msra.mxu0 0.0
    %9142 = vmatprep.subr.mxu0 0.0
    %9143 = vmatpush2.xpose.msra.mxu0 0.0
    %9144 = vmatprep.subr.mxu0 0.0
    %9145 = vmatpush2.xpose.msra.mxu0 0.0
    %9146 = vmatprep.subr.mxu0 0.0
    %9147 = vmatpush2.xpose.msra.mxu0 0.0
    %9148 = vmatprep.subr.mxu0 0.0
    %9149 = vmatpush2.xpose.msra.mxu0 0.0
    %9150 = vmatprep.subr.mxu0 0.0
    %9151 = vmatpush2.xpose.msra.mxu0 0.0
    %9152 = vmatprep.subr.mxu0 0.0
    %9153 = vmatpush2.xpose.msra.mxu0 0.0
    %9154 = vmatprep.subr.mxu0 0.0
    %9155 = vmatpush2.xpose.msra.mxu0 0.0
    %9156 = vmatprep.subr.mxu0 0.0
    %9157 = vmatpush2.xpose.msra.mxu0 0.0
    %9158 = vmatprep.subr.mxu0 0.0
    %9159 = vmatpush2.xpose.msra.mxu0 0.0
    %9160 = vmatprep.subr.mxu0 0.0
    %9161 = vmatpush2.xpose.msra.mxu0 0.0
    %9162 = vmatprep.subr.mxu0 0.0
    %9163 = vmatpush2.xpose.msra.mxu0 0.0
    %9164 = vmatprep.subr.mxu0 0.0
    %9165 = vmatpush2.xpose.msra.mxu0 0.0
    %9166 = vmatprep.subr.mxu0 0.0
    %9167 = vmatpush2.xpose.msra.mxu0 0.0
    %9168 = vmatprep.mubr.f32.mxu0 %v1294
    %9169 = vmatmul.mubr.f32.gmra.mxu0 %v1292
    %v9170 = vpop.f32.mrf.mxu0
    %v9171 = vadd.f32 %v9101, %v9170
    %v9172 = vpop.f32.mrf.mxu0
    %9173 = vdwg.mxu0
    %9174 = vmatprep.subr.mxu0 0.0
    %9175 = vmatpush1.xpose.msra.mxu0 0.0
    %9176 = vmatprep.subr.mxu0 0.0
    %9177 = vmatpush1.xpose.msra.mxu0 0.0
    %9178 = vmatprep.subr.mxu0 0.0
    %9179 = vmatpush1.xpose.msra.mxu0 0.0
    %9180 = vmatprep.subr.mxu0 0.0
    %9181 = vmatpush1.xpose.msra.mxu0 0.0
    %9182 = vmatprep.subr.mxu0 0.0
    %9183 = vmatpush1.xpose.msra.mxu0 0.0
    %9184 = vmatprep.subr.mxu0 0.0
    %9185 = vmatpush1.xpose.msra.mxu0 0.0
    %9186 = vmatprep.subr.mxu0 0.0
    %9187 = vmatpush1.xpose.msra.mxu0 0.0
    %9188 = vmatprep.subr.mxu0 0.0
    %9189 = vmatpush1.xpose.msra.mxu0 0.0
    %9190 = vmatprep.subr.mxu0 0.0
    %9191 = vmatpush1.xpose.msra.mxu0 0.0
    %9192 = vmatprep.subr.mxu0 0.0
    %9193 = vmatpush1.xpose.msra.mxu0 0.0
    %9194 = vmatprep.subr.mxu0 0.0
    %9195 = vmatpush1.xpose.msra.mxu0 0.0
    %9196 = vmatprep.subr.mxu0 0.0
    %9197 = vmatpush1.xpose.msra.mxu0 0.0
    %9198 = vmatprep.subr.mxu0 0.0
    %9199 = vmatpush1.xpose.msra.mxu0 0.0
    %9200 = vmatprep.subr.mxu0 0.0
    %9201 = vmatpush1.xpose.msra.mxu0 0.0
    %9202 = vmatprep.subr.mxu0 0.0
    %9203 = vmatpush1.xpose.msra.mxu0 0.0
    %9204 = vmatprep.subr.mxu0 %v300
    %9205 = vmatpush1.xpose.msra.mxu0 %v299
    %9206 = vmatprep.subr.mxu0 0.0
    %9207 = vmatpush2.xpose.msra.mxu0 0.0
    %9208 = vmatprep.subr.mxu0 0.0
    %9209 = vmatpush2.xpose.msra.mxu0 0.0
    %9210 = vmatprep.subr.mxu0 0.0
    %9211 = vmatpush2.xpose.msra.mxu0 0.0
    %9212 = vmatprep.subr.mxu0 0.0
    %9213 = vmatpush2.xpose.msra.mxu0 0.0
    %9214 = vmatprep.subr.mxu0 0.0
    %9215 = vmatpush2.xpose.msra.mxu0 0.0
    %9216 = vmatprep.subr.mxu0 0.0
    %9217 = vmatpush2.xpose.msra.mxu0 0.0
    %9218 = vmatprep.subr.mxu0 0.0
    %9219 = vmatpush2.xpose.msra.mxu0 0.0
    %9220 = vmatprep.subr.mxu0 0.0
    %9221 = vmatpush2.xpose.msra.mxu0 0.0
    %9222 = vmatprep.subr.mxu0 0.0
    %9223 = vmatpush2.xpose.msra.mxu0 0.0
    %9224 = vmatprep.subr.mxu0 0.0
    %9225 = vmatpush2.xpose.msra.mxu0 0.0
    %9226 = vmatprep.subr.mxu0 0.0
    %9227 = vmatpush2.xpose.msra.mxu0 0.0
    %9228 = vmatprep.subr.mxu0 0.0
    %9229 = vmatpush2.xpose.msra.mxu0 0.0
    %9230 = vmatprep.subr.mxu0 0.0
    %9231 = vmatpush2.xpose.msra.mxu0 0.0
    %9232 = vmatprep.subr.mxu0 0.0
    %9233 = vmatpush2.xpose.msra.mxu0 0.0
    %9234 = vmatprep.subr.mxu0 0.0
    %9235 = vmatpush2.xpose.msra.mxu0 0.0
    %9236 = vmatprep.subr.mxu0 0.0
    %9237 = vmatpush2.xpose.msra.mxu0 0.0
    %9238 = vmatprep.mubr.f32.mxu0 %v1310
    %9239 = vmatmul.mubr.f32.gmra.mxu0 %v1302
    %v9240 = vpop.f32.mrf.mxu0
    %v9241 = vadd.f32 %v9171, %v9240
    %v9242 = vpop.f32.mrf.mxu0
    %9243 = vdwg.mxu0
    %9244 = vmatprep.subr.mxu0 0.0
    %9245 = vmatpush1.xpose.msra.mxu0 0.0
    %9246 = vmatprep.subr.mxu0 0.0
    %9247 = vmatpush1.xpose.msra.mxu0 0.0
    %9248 = vmatprep.subr.mxu0 0.0
    %9249 = vmatpush1.xpose.msra.mxu0 0.0
    %9250 = vmatprep.subr.mxu0 0.0
    %9251 = vmatpush1.xpose.msra.mxu0 0.0
    %9252 = vmatprep.subr.mxu0 0.0
    %9253 = vmatpush1.xpose.msra.mxu0 0.0
    %9254 = vmatprep.subr.mxu0 0.0
    %9255 = vmatpush1.xpose.msra.mxu0 0.0
    %9256 = vmatprep.subr.mxu0 0.0
    %9257 = vmatpush1.xpose.msra.mxu0 0.0
    %9258 = vmatprep.subr.mxu0 0.0
    %9259 = vmatpush1.xpose.msra.mxu0 0.0
    %9260 = vmatprep.subr.mxu0 0.0
    %9261 = vmatpush1.xpose.msra.mxu0 0.0
    %9262 = vmatprep.subr.mxu0 0.0
    %9263 = vmatpush1.xpose.msra.mxu0 0.0
    %9264 = vmatprep.subr.mxu0 0.0
    %9265 = vmatpush1.xpose.msra.mxu0 0.0
    %9266 = vmatprep.subr.mxu0 0.0
    %9267 = vmatpush1.xpose.msra.mxu0 0.0
    %9268 = vmatprep.subr.mxu0 0.0
    %9269 = vmatpush1.xpose.msra.mxu0 0.0
    %9270 = vmatprep.subr.mxu0 0.0
    %9271 = vmatpush1.xpose.msra.mxu0 0.0
    %9272 = vmatprep.subr.mxu0 0.0
    %9273 = vmatpush1.xpose.msra.mxu0 0.0
    %9274 = vmatprep.subr.mxu0 %v302
    %9275 = vmatpush1.xpose.msra.mxu0 %v301
    %9276 = vmatprep.subr.mxu0 0.0
    %9277 = vmatpush2.xpose.msra.mxu0 0.0
    %9278 = vmatprep.subr.mxu0 0.0
    %9279 = vmatpush2.xpose.msra.mxu0 0.0
    %9280 = vmatprep.subr.mxu0 0.0
    %9281 = vmatpush2.xpose.msra.mxu0 0.0
    %9282 = vmatprep.subr.mxu0 0.0
    %9283 = vmatpush2.xpose.msra.mxu0 0.0
    %9284 = vmatprep.subr.mxu0 0.0
    %9285 = vmatpush2.xpose.msra.mxu0 0.0
    %9286 = vmatprep.subr.mxu0 0.0
    %9287 = vmatpush2.xpose.msra.mxu0 0.0
    %9288 = vmatprep.subr.mxu0 0.0
    %9289 = vmatpush2.xpose.msra.mxu0 0.0
    %9290 = vmatprep.subr.mxu0 0.0
    %9291 = vmatpush2.xpose.msra.mxu0 0.0
    %9292 = vmatprep.subr.mxu0 0.0
    %9293 = vmatpush2.xpose.msra.mxu0 0.0
    %9294 = vmatprep.subr.mxu0 0.0
    %9295 = vmatpush2.xpose.msra.mxu0 0.0
    %9296 = vmatprep.subr.mxu0 0.0
    %9297 = vmatpush2.xpose.msra.mxu0 0.0
    %9298 = vmatprep.subr.mxu0 0.0
    %9299 = vmatpush2.xpose.msra.mxu0 0.0
    %9300 = vmatprep.subr.mxu0 0.0
    %9301 = vmatpush2.xpose.msra.mxu0 0.0
    %9302 = vmatprep.subr.mxu0 0.0
    %9303 = vmatpush2.xpose.msra.mxu0 0.0
    %9304 = vmatprep.subr.mxu0 0.0
    %9305 = vmatpush2.xpose.msra.mxu0 0.0
    %9306 = vmatprep.subr.mxu0 0.0
    %9307 = vmatpush2.xpose.msra.mxu0 0.0
    %9308 = vmatprep.mubr.f32.mxu0 %v1311
    %9309 = vmatmul.mubr.f32.gmra.mxu0 %v1309
    %v9310 = vpop.f32.mrf.mxu0
    %v9311 = vadd.f32 %v9241, %v9310
    %v9312 = vpop.f32.mrf.mxu0
    %9313 = vdwg.mxu0
    %9314 = vmatprep.subr.mxu0 0.0
    %9315 = vmatpush1.xpose.msra.mxu0 0.0
    %9316 = vmatprep.subr.mxu0 0.0
    %9317 = vmatpush1.xpose.msra.mxu0 0.0
    %9318 = vmatprep.subr.mxu0 0.0
    %9319 = vmatpush1.xpose.msra.mxu0 0.0
    %9320 = vmatprep.subr.mxu0 0.0
    %9321 = vmatpush1.xpose.msra.mxu0 0.0
    %9322 = vmatprep.subr.mxu0 0.0
    %9323 = vmatpush1.xpose.msra.mxu0 0.0
    %9324 = vmatprep.subr.mxu0 0.0
    %9325 = vmatpush1.xpose.msra.mxu0 0.0
    %9326 = vmatprep.subr.mxu0 0.0
    %9327 = vmatpush1.xpose.msra.mxu0 0.0
    %9328 = vmatprep.subr.mxu0 0.0
    %9329 = vmatpush1.xpose.msra.mxu0 0.0
    %9330 = vmatprep.subr.mxu0 0.0
    %9331 = vmatpush1.xpose.msra.mxu0 0.0
    %9332 = vmatprep.subr.mxu0 0.0
    %9333 = vmatpush1.xpose.msra.mxu0 0.0
    %9334 = vmatprep.subr.mxu0 0.0
    %9335 = vmatpush1.xpose.msra.mxu0 0.0
    %9336 = vmatprep.subr.mxu0 0.0
    %9337 = vmatpush1.xpose.msra.mxu0 0.0
    %9338 = vmatprep.subr.mxu0 0.0
    %9339 = vmatpush1.xpose.msra.mxu0 0.0
    %9340 = vmatprep.subr.mxu0 0.0
    %9341 = vmatpush1.xpose.msra.mxu0 0.0
    %9342 = vmatprep.subr.mxu0 0.0
    %9343 = vmatpush1.xpose.msra.mxu0 0.0
    %9344 = vmatprep.subr.mxu0 %v304
    %9345 = vmatpush1.xpose.msra.mxu0 %v303
    %9346 = vmatprep.subr.mxu0 0.0
    %9347 = vmatpush2.xpose.msra.mxu0 0.0
    %9348 = vmatprep.subr.mxu0 0.0
    %9349 = vmatpush2.xpose.msra.mxu0 0.0
    %9350 = vmatprep.subr.mxu0 0.0
    %9351 = vmatpush2.xpose.msra.mxu0 0.0
    %9352 = vmatprep.subr.mxu0 0.0
    %9353 = vmatpush2.xpose.msra.mxu0 0.0
    %9354 = vmatprep.subr.mxu0 0.0
    %9355 = vmatpush2.xpose.msra.mxu0 0.0
    %9356 = vmatprep.subr.mxu0 0.0
    %9357 = vmatpush2.xpose.msra.mxu0 0.0
    %9358 = vmatprep.subr.mxu0 0.0
    %9359 = vmatpush2.xpose.msra.mxu0 0.0
    %9360 = vmatprep.subr.mxu0 0.0
    %9361 = vmatpush2.xpose.msra.mxu0 0.0
    %9362 = vmatprep.subr.mxu0 0.0
    %9363 = vmatpush2.xpose.msra.mxu0 0.0
    %9364 = vmatprep.subr.mxu0 0.0
    %9365 = vmatpush2.xpose.msra.mxu0 0.0
    %9366 = vmatprep.subr.mxu0 0.0
    %9367 = vmatpush2.xpose.msra.mxu0 0.0
    %9368 = vmatprep.subr.mxu0 0.0
    %9369 = vmatpush2.xpose.msra.mxu0 0.0
    %9370 = vmatprep.subr.mxu0 0.0
    %9371 = vmatpush2.xpose.msra.mxu0 0.0
    %9372 = vmatprep.subr.mxu0 0.0
    %9373 = vmatpush2.xpose.msra.mxu0 0.0
    %9374 = vmatprep.subr.mxu0 0.0
    %9375 = vmatpush2.xpose.msra.mxu0 0.0
    %9376 = vmatprep.subr.mxu0 0.0
    %9377 = vmatpush2.xpose.msra.mxu0 0.0
    %9378 = vmatprep.mubr.f32.mxu0 %v1327
    %9379 = vmatmul.mubr.f32.gmra.mxu0 %v1319
    %v9380 = vpop.f32.mrf.mxu0
    %v9381 = vadd.f32 %v9311, %v9380
    %v9382 = vpop.f32.mrf.mxu0
    %9383 = vdwg.mxu0
    %9384 = vmatprep.subr.mxu0 0.0
    %9385 = vmatpush1.xpose.msra.mxu0 0.0
    %9386 = vmatprep.subr.mxu0 0.0
    %9387 = vmatpush1.xpose.msra.mxu0 0.0
    %9388 = vmatprep.subr.mxu0 0.0
    %9389 = vmatpush1.xpose.msra.mxu0 0.0
    %9390 = vmatprep.subr.mxu0 0.0
    %9391 = vmatpush1.xpose.msra.mxu0 0.0
    %9392 = vmatprep.subr.mxu0 0.0
    %9393 = vmatpush1.xpose.msra.mxu0 0.0
    %9394 = vmatprep.subr.mxu0 0.0
    %9395 = vmatpush1.xpose.msra.mxu0 0.0
    %9396 = vmatprep.subr.mxu0 0.0
    %9397 = vmatpush1.xpose.msra.mxu0 0.0
    %9398 = vmatprep.subr.mxu0 0.0
    %9399 = vmatpush1.xpose.msra.mxu0 0.0
    %9400 = vmatprep.subr.mxu0 0.0
    %9401 = vmatpush1.xpose.msra.mxu0 0.0
    %9402 = vmatprep.subr.mxu0 0.0
    %9403 = vmatpush1.xpose.msra.mxu0 0.0
    %9404 = vmatprep.subr.mxu0 0.0
    %9405 = vmatpush1.xpose.msra.mxu0 0.0
    %9406 = vmatprep.subr.mxu0 0.0
    %9407 = vmatpush1.xpose.msra.mxu0 0.0
    %9408 = vmatprep.subr.mxu0 0.0
    %9409 = vmatpush1.xpose.msra.mxu0 0.0
    %9410 = vmatprep.subr.mxu0 0.0
    %9411 = vmatpush1.xpose.msra.mxu0 0.0
    %9412 = vmatprep.subr.mxu0 0.0
    %9413 = vmatpush1.xpose.msra.mxu0 0.0
    %9414 = vmatprep.subr.mxu0 %v306
    %9415 = vmatpush1.xpose.msra.mxu0 %v305
    %9416 = vmatprep.subr.mxu0 0.0
    %9417 = vmatpush2.xpose.msra.mxu0 0.0
    %9418 = vmatprep.subr.mxu0 0.0
    %9419 = vmatpush2.xpose.msra.mxu0 0.0
    %9420 = vmatprep.subr.mxu0 0.0
    %9421 = vmatpush2.xpose.msra.mxu0 0.0
    %9422 = vmatprep.subr.mxu0 0.0
    %9423 = vmatpush2.xpose.msra.mxu0 0.0
    %9424 = vmatprep.subr.mxu0 0.0
    %9425 = vmatpush2.xpose.msra.mxu0 0.0
    %9426 = vmatprep.subr.mxu0 0.0
    %9427 = vmatpush2.xpose.msra.mxu0 0.0
    %9428 = vmatprep.subr.mxu0 0.0
    %9429 = vmatpush2.xpose.msra.mxu0 0.0
    %9430 = vmatprep.subr.mxu0 0.0
    %9431 = vmatpush2.xpose.msra.mxu0 0.0
    %9432 = vmatprep.subr.mxu0 0.0
    %9433 = vmatpush2.xpose.msra.mxu0 0.0
    %9434 = vmatprep.subr.mxu0 0.0
    %9435 = vmatpush2.xpose.msra.mxu0 0.0
    %9436 = vmatprep.subr.mxu0 0.0
    %9437 = vmatpush2.xpose.msra.mxu0 0.0
    %9438 = vmatprep.subr.mxu0 0.0
    %9439 = vmatpush2.xpose.msra.mxu0 0.0
    %9440 = vmatprep.subr.mxu0 0.0
    %9441 = vmatpush2.xpose.msra.mxu0 0.0
    %9442 = vmatprep.subr.mxu0 0.0
    %9443 = vmatpush2.xpose.msra.mxu0 0.0
    %9444 = vmatprep.subr.mxu0 0.0
    %9445 = vmatpush2.xpose.msra.mxu0 0.0
    %9446 = vmatprep.subr.mxu0 0.0
    %9447 = vmatpush2.xpose.msra.mxu0 0.0
    %9448 = vmatprep.mubr.f32.mxu0 %v1328
    %9449 = vmatmul.mubr.f32.gmra.mxu0 %v1326
    %v9450 = vpop.f32.mrf.mxu0
    %v9451 = vadd.f32 %v9381, %v9450
    %v9452 = vpop.f32.mrf.mxu0
    %9453 = vdwg.mxu0
    %9454 = vmatprep.subr.mxu0 0.0
    %9455 = vmatpush1.xpose.msra.mxu0 0.0
    %9456 = vmatprep.subr.mxu0 0.0
    %9457 = vmatpush1.xpose.msra.mxu0 0.0
    %9458 = vmatprep.subr.mxu0 0.0
    %9459 = vmatpush1.xpose.msra.mxu0 0.0
    %9460 = vmatprep.subr.mxu0 0.0
    %9461 = vmatpush1.xpose.msra.mxu0 0.0
    %9462 = vmatprep.subr.mxu0 0.0
    %9463 = vmatpush1.xpose.msra.mxu0 0.0
    %9464 = vmatprep.subr.mxu0 0.0
    %9465 = vmatpush1.xpose.msra.mxu0 0.0
    %9466 = vmatprep.subr.mxu0 0.0
    %9467 = vmatpush1.xpose.msra.mxu0 0.0
    %9468 = vmatprep.subr.mxu0 0.0
    %9469 = vmatpush1.xpose.msra.mxu0 0.0
    %9470 = vmatprep.subr.mxu0 0.0
    %9471 = vmatpush1.xpose.msra.mxu0 0.0
    %9472 = vmatprep.subr.mxu0 0.0
    %9473 = vmatpush1.xpose.msra.mxu0 0.0
    %9474 = vmatprep.subr.mxu0 0.0
    %9475 = vmatpush1.xpose.msra.mxu0 0.0
    %9476 = vmatprep.subr.mxu0 0.0
    %9477 = vmatpush1.xpose.msra.mxu0 0.0
    %9478 = vmatprep.subr.mxu0 0.0
    %9479 = vmatpush1.xpose.msra.mxu0 0.0
    %9480 = vmatprep.subr.mxu0 0.0
    %9481 = vmatpush1.xpose.msra.mxu0 0.0
    %9482 = vmatprep.subr.mxu0 0.0
    %9483 = vmatpush1.xpose.msra.mxu0 0.0
    %9484 = vmatprep.subr.mxu0 %v308
    %9485 = vmatpush1.xpose.msra.mxu0 %v307
    %9486 = vmatprep.subr.mxu0 0.0
    %9487 = vmatpush2.xpose.msra.mxu0 0.0
    %9488 = vmatprep.subr.mxu0 0.0
    %9489 = vmatpush2.xpose.msra.mxu0 0.0
    %9490 = vmatprep.subr.mxu0 0.0
    %9491 = vmatpush2.xpose.msra.mxu0 0.0
    %9492 = vmatprep.subr.mxu0 0.0
    %9493 = vmatpush2.xpose.msra.mxu0 0.0
    %9494 = vmatprep.subr.mxu0 0.0
    %9495 = vmatpush2.xpose.msra.mxu0 0.0
    %9496 = vmatprep.subr.mxu0 0.0
    %9497 = vmatpush2.xpose.msra.mxu0 0.0
    %9498 = vmatprep.subr.mxu0 0.0
    %9499 = vmatpush2.xpose.msra.mxu0 0.0
    %9500 = vmatprep.subr.mxu0 0.0
    %9501 = vmatpush2.xpose.msra.mxu0 0.0
    %9502 = vmatprep.subr.mxu0 0.0
    %9503 = vmatpush2.xpose.msra.mxu0 0.0
    %9504 = vmatprep.subr.mxu0 0.0
    %9505 = vmatpush2.xpose.msra.mxu0 0.0
    %9506 = vmatprep.subr.mxu0 0.0
    %9507 = vmatpush2.xpose.msra.mxu0 0.0
    %9508 = vmatprep.subr.mxu0 0.0
    %9509 = vmatpush2.xpose.msra.mxu0 0.0
    %9510 = vmatprep.subr.mxu0 0.0
    %9511 = vmatpush2.xpose.msra.mxu0 0.0
    %9512 = vmatprep.subr.mxu0 0.0
    %9513 = vmatpush2.xpose.msra.mxu0 0.0
    %9514 = vmatprep.subr.mxu0 0.0
    %9515 = vmatpush2.xpose.msra.mxu0 0.0
    %9516 = vmatprep.subr.mxu0 0.0
    %9517 = vmatpush2.xpose.msra.mxu0 0.0
    %9518 = vmatprep.mubr.f32.mxu0 %v1344
    %9519 = vmatmul.mubr.f32.gmra.mxu0 %v1336
    %v9520 = vpop.f32.mrf.mxu0
    %v9521 = vadd.f32 %v9451, %v9520
    %v9522 = vpop.f32.mrf.mxu0
    %9523 = vdwg.mxu0
    %9524 = vmatprep.subr.mxu0 0.0
    %9525 = vmatpush1.xpose.msra.mxu0 0.0
    %9526 = vmatprep.subr.mxu0 0.0
    %9527 = vmatpush1.xpose.msra.mxu0 0.0
    %9528 = vmatprep.subr.mxu0 0.0
    %9529 = vmatpush1.xpose.msra.mxu0 0.0
    %9530 = vmatprep.subr.mxu0 0.0
    %9531 = vmatpush1.xpose.msra.mxu0 0.0
    %9532 = vmatprep.subr.mxu0 0.0
    %9533 = vmatpush1.xpose.msra.mxu0 0.0
    %9534 = vmatprep.subr.mxu0 0.0
    %9535 = vmatpush1.xpose.msra.mxu0 0.0
    %9536 = vmatprep.subr.mxu0 0.0
    %9537 = vmatpush1.xpose.msra.mxu0 0.0
    %9538 = vmatprep.subr.mxu0 0.0
    %9539 = vmatpush1.xpose.msra.mxu0 0.0
    %9540 = vmatprep.subr.mxu0 0.0
    %9541 = vmatpush1.xpose.msra.mxu0 0.0
    %9542 = vmatprep.subr.mxu0 0.0
    %9543 = vmatpush1.xpose.msra.mxu0 0.0
    %9544 = vmatprep.subr.mxu0 0.0
    %9545 = vmatpush1.xpose.msra.mxu0 0.0
    %9546 = vmatprep.subr.mxu0 0.0
    %9547 = vmatpush1.xpose.msra.mxu0 0.0
    %9548 = vmatprep.subr.mxu0 0.0
    %9549 = vmatpush1.xpose.msra.mxu0 0.0
    %9550 = vmatprep.subr.mxu0 0.0
    %9551 = vmatpush1.xpose.msra.mxu0 0.0
    %9552 = vmatprep.subr.mxu0 0.0
    %9553 = vmatpush1.xpose.msra.mxu0 0.0
    %9554 = vmatprep.subr.mxu0 %v310
    %9555 = vmatpush1.xpose.msra.mxu0 %v309
    %9556 = vmatprep.subr.mxu0 0.0
    %9557 = vmatpush2.xpose.msra.mxu0 0.0
    %9558 = vmatprep.subr.mxu0 0.0
    %9559 = vmatpush2.xpose.msra.mxu0 0.0
    %9560 = vmatprep.subr.mxu0 0.0
    %9561 = vmatpush2.xpose.msra.mxu0 0.0
    %9562 = vmatprep.subr.mxu0 0.0
    %9563 = vmatpush2.xpose.msra.mxu0 0.0
    %9564 = vmatprep.subr.mxu0 0.0
    %9565 = vmatpush2.xpose.msra.mxu0 0.0
    %9566 = vmatprep.subr.mxu0 0.0
    %9567 = vmatpush2.xpose.msra.mxu0 0.0
    %9568 = vmatprep.subr.mxu0 0.0
    %9569 = vmatpush2.xpose.msra.mxu0 0.0
    %9570 = vmatprep.subr.mxu0 0.0
    %9571 = vmatpush2.xpose.msra.mxu0 0.0
    %9572 = vmatprep.subr.mxu0 0.0
    %9573 = vmatpush2.xpose.msra.mxu0 0.0
    %9574 = vmatprep.subr.mxu0 0.0
    %9575 = vmatpush2.xpose.msra.mxu0 0.0
    %9576 = vmatprep.subr.mxu0 0.0
    %9577 = vmatpush2.xpose.msra.mxu0 0.0
    %9578 = vmatprep.subr.mxu0 0.0
    %9579 = vmatpush2.xpose.msra.mxu0 0.0
    %9580 = vmatprep.subr.mxu0 0.0
    %9581 = vmatpush2.xpose.msra.mxu0 0.0
    %9582 = vmatprep.subr.mxu0 0.0
    %9583 = vmatpush2.xpose.msra.mxu0 0.0
    %9584 = vmatprep.subr.mxu0 0.0
    %9585 = vmatpush2.xpose.msra.mxu0 0.0
    %9586 = vmatprep.subr.mxu0 0.0
    %9587 = vmatpush2.xpose.msra.mxu0 0.0
    %9588 = vmatprep.mubr.f32.mxu0 %v1345
    %9589 = vmatmul.mubr.f32.gmra.mxu0 %v1343
    %v9590 = vpop.f32.mrf.mxu0
    %v9591 = vadd.f32 %v9521, %v9590
    %v9592 = vpop.f32.mrf.mxu0
    %9593 = vdwg.mxu0
    %9594 = vmatprep.subr.mxu0 0.0
    %9595 = vmatpush1.xpose.msra.mxu0 0.0
    %9596 = vmatprep.subr.mxu0 0.0
    %9597 = vmatpush1.xpose.msra.mxu0 0.0
    %9598 = vmatprep.subr.mxu0 0.0
    %9599 = vmatpush1.xpose.msra.mxu0 0.0
    %9600 = vmatprep.subr.mxu0 0.0
    %9601 = vmatpush1.xpose.msra.mxu0 0.0
    %9602 = vmatprep.subr.mxu0 0.0
    %9603 = vmatpush1.xpose.msra.mxu0 0.0
    %9604 = vmatprep.subr.mxu0 0.0
    %9605 = vmatpush1.xpose.msra.mxu0 0.0
    %9606 = vmatprep.subr.mxu0 0.0
    %9607 = vmatpush1.xpose.msra.mxu0 0.0
    %9608 = vmatprep.subr.mxu0 0.0
    %9609 = vmatpush1.xpose.msra.mxu0 0.0
    %9610 = vmatprep.subr.mxu0 0.0
    %9611 = vmatpush1.xpose.msra.mxu0 0.0
    %9612 = vmatprep.subr.mxu0 0.0
    %9613 = vmatpush1.xpose.msra.mxu0 0.0
    %9614 = vmatprep.subr.mxu0 0.0
    %9615 = vmatpush1.xpose.msra.mxu0 0.0
    %9616 = vmatprep.subr.mxu0 0.0
    %9617 = vmatpush1.xpose.msra.mxu0 0.0
    %9618 = vmatprep.subr.mxu0 0.0
    %9619 = vmatpush1.xpose.msra.mxu0 0.0
    %9620 = vmatprep.subr.mxu0 0.0
    %9621 = vmatpush1.xpose.msra.mxu0 0.0
    %9622 = vmatprep.subr.mxu0 0.0
    %9623 = vmatpush1.xpose.msra.mxu0 0.0
    %9624 = vmatprep.subr.mxu0 %v312
    %9625 = vmatpush1.xpose.msra.mxu0 %v311
    %9626 = vmatprep.subr.mxu0 0.0
    %9627 = vmatpush2.xpose.msra.mxu0 0.0
    %9628 = vmatprep.subr.mxu0 0.0
    %9629 = vmatpush2.xpose.msra.mxu0 0.0
    %9630 = vmatprep.subr.mxu0 0.0
    %9631 = vmatpush2.xpose.msra.mxu0 0.0
    %9632 = vmatprep.subr.mxu0 0.0
    %9633 = vmatpush2.xpose.msra.mxu0 0.0
    %9634 = vmatprep.subr.mxu0 0.0
    %9635 = vmatpush2.xpose.msra.mxu0 0.0
    %9636 = vmatprep.subr.mxu0 0.0
    %9637 = vmatpush2.xpose.msra.mxu0 0.0
    %9638 = vmatprep.subr.mxu0 0.0
    %9639 = vmatpush2.xpose.msra.mxu0 0.0
    %9640 = vmatprep.subr.mxu0 0.0
    %9641 = vmatpush2.xpose.msra.mxu0 0.0
    %9642 = vmatprep.subr.mxu0 0.0
    %9643 = vmatpush2.xpose.msra.mxu0 0.0
    %9644 = vmatprep.subr.mxu0 0.0
    %9645 = vmatpush2.xpose.msra.mxu0 0.0
    %9646 = vmatprep.subr.mxu0 0.0
    %9647 = vmatpush2.xpose.msra.mxu0 0.0
    %9648 = vmatprep.subr.mxu0 0.0
    %9649 = vmatpush2.xpose.msra.mxu0 0.0
    %9650 = vmatprep.subr.mxu0 0.0
    %9651 = vmatpush2.xpose.msra.mxu0 0.0
    %9652 = vmatprep.subr.mxu0 0.0
    %9653 = vmatpush2.xpose.msra.mxu0 0.0
    %9654 = vmatprep.subr.mxu0 0.0
    %9655 = vmatpush2.xpose.msra.mxu0 0.0
    %9656 = vmatprep.subr.mxu0 0.0
    %9657 = vmatpush2.xpose.msra.mxu0 0.0
    %9658 = vmatprep.mubr.f32.mxu0 %v1361
    %9659 = vmatmul.mubr.f32.gmra.mxu0 %v1353
    %v9660 = vpop.f32.mrf.mxu0
    %v9661 = vadd.f32 %v9591, %v9660
    %v9662 = vpop.f32.mrf.mxu0
    %9663 = vdwg.mxu0
    %9664 = vmatprep.subr.mxu0 0.0
    %9665 = vmatpush1.xpose.msra.mxu0 0.0
    %9666 = vmatprep.subr.mxu0 0.0
    %9667 = vmatpush1.xpose.msra.mxu0 0.0
    %9668 = vmatprep.subr.mxu0 0.0
    %9669 = vmatpush1.xpose.msra.mxu0 0.0
    %9670 = vmatprep.subr.mxu0 0.0
    %9671 = vmatpush1.xpose.msra.mxu0 0.0
    %9672 = vmatprep.subr.mxu0 0.0
    %9673 = vmatpush1.xpose.msra.mxu0 0.0
    %9674 = vmatprep.subr.mxu0 0.0
    %9675 = vmatpush1.xpose.msra.mxu0 0.0
    %9676 = vmatprep.subr.mxu0 0.0
    %9677 = vmatpush1.xpose.msra.mxu0 0.0
    %9678 = vmatprep.subr.mxu0 0.0
    %9679 = vmatpush1.xpose.msra.mxu0 0.0
    %9680 = vmatprep.subr.mxu0 0.0
    %9681 = vmatpush1.xpose.msra.mxu0 0.0
    %9682 = vmatprep.subr.mxu0 0.0
    %9683 = vmatpush1.xpose.msra.mxu0 0.0
    %9684 = vmatprep.subr.mxu0 0.0
    %9685 = vmatpush1.xpose.msra.mxu0 0.0
    %9686 = vmatprep.subr.mxu0 0.0
    %9687 = vmatpush1.xpose.msra.mxu0 0.0
    %9688 = vmatprep.subr.mxu0 0.0
    %9689 = vmatpush1.xpose.msra.mxu0 0.0
    %9690 = vmatprep.subr.mxu0 0.0
    %9691 = vmatpush1.xpose.msra.mxu0 0.0
    %9692 = vmatprep.subr.mxu0 0.0
    %9693 = vmatpush1.xpose.msra.mxu0 0.0
    %9694 = vmatprep.subr.mxu0 %v314
    %9695 = vmatpush1.xpose.msra.mxu0 %v313
    %9696 = vmatprep.subr.mxu0 0.0
    %9697 = vmatpush2.xpose.msra.mxu0 0.0
    %9698 = vmatprep.subr.mxu0 0.0
    %9699 = vmatpush2.xpose.msra.mxu0 0.0
    %9700 = vmatprep.subr.mxu0 0.0
    %9701 = vmatpush2.xpose.msra.mxu0 0.0
    %9702 = vmatprep.subr.mxu0 0.0
    %9703 = vmatpush2.xpose.msra.mxu0 0.0
    %9704 = vmatprep.subr.mxu0 0.0
    %9705 = vmatpush2.xpose.msra.mxu0 0.0
    %9706 = vmatprep.subr.mxu0 0.0
    %9707 = vmatpush2.xpose.msra.mxu0 0.0
    %9708 = vmatprep.subr.mxu0 0.0
    %9709 = vmatpush2.xpose.msra.mxu0 0.0
    %9710 = vmatprep.subr.mxu0 0.0
    %9711 = vmatpush2.xpose.msra.mxu0 0.0
    %9712 = vmatprep.subr.mxu0 0.0
    %9713 = vmatpush2.xpose.msra.mxu0 0.0
    %9714 = vmatprep.subr.mxu0 0.0
    %9715 = vmatpush2.xpose.msra.mxu0 0.0
    %9716 = vmatprep.subr.mxu0 0.0
    %9717 = vmatpush2.xpose.msra.mxu0 0.0
    %9718 = vmatprep.subr.mxu0 0.0
    %9719 = vmatpush2.xpose.msra.mxu0 0.0
    %9720 = vmatprep.subr.mxu0 0.0
    %9721 = vmatpush2.xpose.msra.mxu0 0.0
    %9722 = vmatprep.subr.mxu0 0.0
    %9723 = vmatpush2.xpose.msra.mxu0 0.0
    %9724 = vmatprep.subr.mxu0 0.0
    %9725 = vmatpush2.xpose.msra.mxu0 0.0
    %9726 = vmatprep.subr.mxu0 0.0
    %9727 = vmatpush2.xpose.msra.mxu0 0.0
    %9728 = vmatprep.mubr.f32.mxu0 %v1362
    %9729 = vmatmul.mubr.f32.gmra.mxu0 %v1360
    %v9730 = vpop.f32.mrf.mxu0
    %v9731 = vadd.f32 %v9661, %v9730
    %v9732 = vpop.f32.mrf.mxu0
    %9733 = vdwg.mxu0
    %9734 = vmatprep.subr.mxu0 0.0
    %9735 = vmatpush1.xpose.msra.mxu0 0.0
    %9736 = vmatprep.subr.mxu0 0.0
    %9737 = vmatpush1.xpose.msra.mxu0 0.0
    %9738 = vmatprep.subr.mxu0 0.0
    %9739 = vmatpush1.xpose.msra.mxu0 0.0
    %9740 = vmatprep.subr.mxu0 0.0
    %9741 = vmatpush1.xpose.msra.mxu0 0.0
    %9742 = vmatprep.subr.mxu0 0.0
    %9743 = vmatpush1.xpose.msra.mxu0 0.0
    %9744 = vmatprep.subr.mxu0 0.0
    %9745 = vmatpush1.xpose.msra.mxu0 0.0
    %9746 = vmatprep.subr.mxu0 0.0
    %9747 = vmatpush1.xpose.msra.mxu0 0.0
    %9748 = vmatprep.subr.mxu0 0.0
    %9749 = vmatpush1.xpose.msra.mxu0 0.0
    %9750 = vmatprep.subr.mxu0 0.0
    %9751 = vmatpush1.xpose.msra.mxu0 0.0
    %9752 = vmatprep.subr.mxu0 0.0
    %9753 = vmatpush1.xpose.msra.mxu0 0.0
    %9754 = vmatprep.subr.mxu0 0.0
    %9755 = vmatpush1.xpose.msra.mxu0 0.0
    %9756 = vmatprep.subr.mxu0 0.0
    %9757 = vmatpush1.xpose.msra.mxu0 0.0
    %9758 = vmatprep.subr.mxu0 0.0
    %9759 = vmatpush1.xpose.msra.mxu0 0.0
    %9760 = vmatprep.subr.mxu0 0.0
    %9761 = vmatpush1.xpose.msra.mxu0 0.0
    %9762 = vmatprep.subr.mxu0 0.0
    %9763 = vmatpush1.xpose.msra.mxu0 0.0
    %9764 = vmatprep.subr.mxu0 %v316
    %9765 = vmatpush1.xpose.msra.mxu0 %v315
    %9766 = vmatprep.subr.mxu0 0.0
    %9767 = vmatpush2.xpose.msra.mxu0 0.0
    %9768 = vmatprep.subr.mxu0 0.0
    %9769 = vmatpush2.xpose.msra.mxu0 0.0
    %9770 = vmatprep.subr.mxu0 0.0
    %9771 = vmatpush2.xpose.msra.mxu0 0.0
    %9772 = vmatprep.subr.mxu0 0.0
    %9773 = vmatpush2.xpose.msra.mxu0 0.0
    %9774 = vmatprep.subr.mxu0 0.0
    %9775 = vmatpush2.xpose.msra.mxu0 0.0
    %9776 = vmatprep.subr.mxu0 0.0
    %9777 = vmatpush2.xpose.msra.mxu0 0.0
    %9778 = vmatprep.subr.mxu0 0.0
    %9779 = vmatpush2.xpose.msra.mxu0 0.0
    %9780 = vmatprep.subr.mxu0 0.0
    %9781 = vmatpush2.xpose.msra.mxu0 0.0
    %9782 = vmatprep.subr.mxu0 0.0
    %9783 = vmatpush2.xpose.msra.mxu0 0.0
    %9784 = vmatprep.subr.mxu0 0.0
    %9785 = vmatpush2.xpose.msra.mxu0 0.0
    %9786 = vmatprep.subr.mxu0 0.0
    %9787 = vmatpush2.xpose.msra.mxu0 0.0
    %9788 = vmatprep.subr.mxu0 0.0
    %9789 = vmatpush2.xpose.msra.mxu0 0.0
    %9790 = vmatprep.subr.mxu0 0.0
    %9791 = vmatpush2.xpose.msra.mxu0 0.0
    %9792 = vmatprep.subr.mxu0 0.0
    %9793 = vmatpush2.xpose.msra.mxu0 0.0
    %9794 = vmatprep.subr.mxu0 0.0
    %9795 = vmatpush2.xpose.msra.mxu0 0.0
    %9796 = vmatprep.subr.mxu0 0.0
    %9797 = vmatpush2.xpose.msra.mxu0 0.0
    %9798 = vmatprep.mubr.f32.mxu0 %v1378
    %9799 = vmatmul.mubr.f32.gmra.mxu0 %v1370
    %v9800 = vpop.f32.mrf.mxu0
    %v9801 = vadd.f32 %v9731, %v9800
    %v9802 = vpop.f32.mrf.mxu0
    %9803 = vdwg.mxu0
    %9804 = vmatprep.subr.mxu0 0.0
    %9805 = vmatpush1.xpose.msra.mxu0 0.0
    %9806 = vmatprep.subr.mxu0 0.0
    %9807 = vmatpush1.xpose.msra.mxu0 0.0
    %9808 = vmatprep.subr.mxu0 0.0
    %9809 = vmatpush1.xpose.msra.mxu0 0.0
    %9810 = vmatprep.subr.mxu0 0.0
    %9811 = vmatpush1.xpose.msra.mxu0 0.0
    %9812 = vmatprep.subr.mxu0 0.0
    %9813 = vmatpush1.xpose.msra.mxu0 0.0
    %9814 = vmatprep.subr.mxu0 0.0
    %9815 = vmatpush1.xpose.msra.mxu0 0.0
    %9816 = vmatprep.subr.mxu0 0.0
    %9817 = vmatpush1.xpose.msra.mxu0 0.0
    %9818 = vmatprep.subr.mxu0 0.0
    %9819 = vmatpush1.xpose.msra.mxu0 0.0
    %9820 = vmatprep.subr.mxu0 0.0
    %9821 = vmatpush1.xpose.msra.mxu0 0.0
    %9822 = vmatprep.subr.mxu0 0.0
    %9823 = vmatpush1.xpose.msra.mxu0 0.0
    %9824 = vmatprep.subr.mxu0 0.0
    %9825 = vmatpush1.xpose.msra.mxu0 0.0
    %9826 = vmatprep.subr.mxu0 0.0
    %9827 = vmatpush1.xpose.msra.mxu0 0.0
    %9828 = vmatprep.subr.mxu0 0.0
    %9829 = vmatpush1.xpose.msra.mxu0 0.0
    %9830 = vmatprep.subr.mxu0 0.0
    %9831 = vmatpush1.xpose.msra.mxu0 0.0
    %9832 = vmatprep.subr.mxu0 0.0
    %9833 = vmatpush1.xpose.msra.mxu0 0.0
    %9834 = vmatprep.subr.mxu0 0.0
    %9835 = vmatpush1.xpose.msra.mxu0 %v317
    %9836 = vmatprep.subr.mxu0 0.0
    %9837 = vmatpush2.xpose.msra.mxu0 0.0
    %9838 = vmatprep.subr.mxu0 0.0
    %9839 = vmatpush2.xpose.msra.mxu0 0.0
    %9840 = vmatprep.subr.mxu0 0.0
    %9841 = vmatpush2.xpose.msra.mxu0 0.0
    %9842 = vmatprep.subr.mxu0 0.0
    %9843 = vmatpush2.xpose.msra.mxu0 0.0
    %9844 = vmatprep.subr.mxu0 0.0
    %9845 = vmatpush2.xpose.msra.mxu0 0.0
    %9846 = vmatprep.subr.mxu0 0.0
    %9847 = vmatpush2.xpose.msra.mxu0 0.0
    %9848 = vmatprep.subr.mxu0 0.0
    %9849 = vmatpush2.xpose.msra.mxu0 0.0
    %9850 = vmatprep.subr.mxu0 0.0
    %9851 = vmatpush2.xpose.msra.mxu0 0.0
    %9852 = vmatprep.subr.mxu0 0.0
    %9853 = vmatpush2.xpose.msra.mxu0 0.0
    %9854 = vmatprep.subr.mxu0 0.0
    %9855 = vmatpush2.xpose.msra.mxu0 0.0
    %9856 = vmatprep.subr.mxu0 0.0
    %9857 = vmatpush2.xpose.msra.mxu0 0.0
    %9858 = vmatprep.subr.mxu0 0.0
    %9859 = vmatpush2.xpose.msra.mxu0 0.0
    %9860 = vmatprep.subr.mxu0 0.0
    %9861 = vmatpush2.xpose.msra.mxu0 0.0
    %9862 = vmatprep.subr.mxu0 0.0
    %9863 = vmatpush2.xpose.msra.mxu0 0.0
    %9864 = vmatprep.subr.mxu0 0.0
    %9865 = vmatpush2.xpose.msra.mxu0 0.0
    %9866 = vmatprep.subr.mxu0 0.0
    %9867 = vmatpush2.xpose.msra.mxu0 0.0
    %9868 = vmatprep.mubr.f32.mxu0 0.0
    %9869 = vmatmul.mubr.f32.gmra.mxu0 %v1377
    %v9870 = vpop.f32.mrf.mxu0
    %v9871 = vadd.f32 %v9801, %v9870
    %v9872 = vpop.f32.mrf.mxu0
    %9873 = vdwg.mxu0
    %v9874 = vsub.f32 0.0, %v9871
    %v9875 = vmul.f32 %v9874, 1.442695
    %v9876 = vpow.pop %v9875
    %v9877 = vadd.f32 %v9876, 1.0
    %v9878 = vrcp.pop %v9877
    %v9879 = vmul.f32 1.0, %v9878
    %vm9880 = vcmask 58368
    %9881 = vst.msk [vmem:[#allocation5] sm:$0x3] %vm9880, %v9879
    // Predicated region
    $region14: #{visual_sensory_forward.1} parent=1 // pred_check
      _
    $region15: #{visual_sensory_forward.1} parent=1 // pred_check_branch
      %9883 = sbr.rel (0) target = $region17
    $region16: #{visual_sensory_forward.1} parent=1 // pred_region
      %s9885 = ssub.s32 32, 32
      %9886 = vsyncadd [#allocation4], %s9885
      %s9888 = sshll.u32 [#allocation5], 4
      %s9889 = int_to_ptr.vmem [resolvable:$true] %s9888
      %9891 = dma.vmem_to_hbm [thread:$0]  %s9889, 32, %s2, [#allocation4]
    $region17: #{visual_sensory_forward.1} parent=1 // pred_fallthru
      _
    // Predicated region
    $region18: #{visual_sensory_forward.1} parent=1 // pred_check
      _
    $region19: #{visual_sensory_forward.1} parent=1 // pred_check_branch
      %9893 = sbr.rel (0) target = $region21
    $region20: #{visual_sensory_forward.1} parent=1 // pred_region
      %9894 = dma.done [#allocation4], 32
    $region21: #{visual_sensory_forward.1} parent=1 // pred_fallthru
      _
    %9895 = vsyncpa [#allocation3], 1
    %9896 = vsyncpa [#allocation4], 1

</llo_original>
